<compile_context>
chip_gen: v7x
topology: tpu7x:2x2x1
jax: 0.10.0
libtpu: 0.0.40
codegen_flags: <defaults>
</compile_context>

<pallas_src>
import functools

import numpy as np
import jax
import jax.numpy as jnp
from jax import lax
from jax.experimental import pallas as pl
from jax.experimental.pallas import tpu as pltpu

K = 7
PAD = (K - 1) // 2


def _round_up(x, m):
    return (x + m - 1) // m * m


# ----------------------------- in-kernel helper ----------------------------- #

def _conv_mix(src_rows, cin, cout, shifts, mask_rows, m_ref, w_ref, b_ref, f):
    """Shifted-tap 1-D conv + channel mix on flat lane-dense rows.

    src_rows : list of `cin` values, each (1, f) f32 (flat spatial on lanes)
    shifts   : K static flat shifts s_t;   out[i] += w[o,c,t] * src[c][i + s_t]
    mask_rows: K entries: row index into m_ref (0/1 column mask applied to the
               shifted source) or None
    w_ref    : SMEM f32[cout*cin*K], layout [o, c, t] row-major
    b_ref    : SMEM f32[cout]
    returns  : list of `cout` values, each (1, f) f32 (bias included)
    """
    k = len(shifts)
    accs = [None] * cout
    for t in range(k):
        s = shifts[t]
        if mask_rows[t] is None:
            m = None
        else:
            m = m_ref[mask_rows[t]:mask_rows[t] + 1, :]
        taps = []
        for c in range(cin):
            v = src_rows[c]
            if s != 0:
                # y[i] = x[i + s]  (jnp.roll semantics -> shift by -s mod f)
                v = pltpu.roll(v, (-s) % f, axis=1)
            if m is not None:
                v = v * m
            taps.append(v)
        # scalar-broadcast VPU FMAs (weights from SMEM); taps consumed here so
        # their live range is one tap, not the whole conv.
        for o in range(cout):
            for c in range(cin):
                term = w_ref[(o * cin + c) * k + t] * taps[c]
                accs[o] = term if accs[o] is None else accs[o] + term
    return [accs[o] + b_ref[o] for o in range(cout)]


# ------------------------------- fused kernel ------------------------------- #

def _make_gcn_kernel(C, OC, H, W, F):
    HW = H * W
    h_shifts = [t * W for t in range(K)]        # conv along H: shift whole rows
    w_shifts = [t - PAD for t in range(K)]      # conv along W: shift columns
    no_mask = [None] * K
    w_mask = [None if t == PAD else t for t in range(K)]   # rows of m_ref

    def kernel(x_ref, m_ref, wl1_ref, bl1_ref, wl2_ref, bl2_ref,
               wr1_ref, br1_ref, wr2_ref, br2_ref, o_ref):
        # Per-input-channel flat rows (1, F): H-padded image, H-major flatten.
        xp = [x_ref[c:c + 1, :] for c in range(C)]

        # ---- stage 1 (both branches read the H-padded input) ----------------
        # left : (K,1) conv along H; "same" thanks to the pre-applied H pad.
        a1 = _conv_mix(xp, C, OC, h_shifts, no_mask, m_ref, wl1_ref, bl1_ref, F)
        # right: (1,K) VALID conv along W, re-embedded at column offset PAD
        #        with zero padding (center mask) == conv_r1 output already
        #        padded for conv_r2; bias lands only inside the valid band.
        b1 = _conv_mix(xp, C, OC, w_shifts, no_mask, m_ref, wr1_ref, br1_ref, F)
        center = m_ref[K:K + 1, :]
        b1 = [v * center for v in b1]

        # ---- stage 2 ---------------------------------------------------------
        # left : (1,K) conv along W with SAME zero padding -> per-tap masks.
        a2 = _conv_mix(a1, OC, OC, w_shifts, w_mask, m_ref, wl2_ref, bl2_ref, F)
        # right: (K,1) VALID conv along H over the H+6 rows held in b1.
        b2 = _conv_mix(b1, OC, OC, h_shifts, no_mask, m_ref, wr2_ref, br2_ref, F)

        # ---- fused residual add + lane-dense store ---------------------------
        for o in range(OC):
            o_ref[o:o + 1, :] = (a2[o] + b2[o])[:, :HW]

    return kernel


# ------------------------------- host wrapper ------------------------------- #

def _build_masks(W, F):
    """(K+1, F) f32 0/1 masks. Row t: valid source column for tap offset t-PAD
    of a SAME conv along W. Row K: 'center' band [PAD, W-1-PAD]."""
    col = np.arange(F, dtype=np.int64) % W
    rows = []
    for t in range(K):
        d = t - PAD
        if d > 0:
            rows.append(col <= (W - 1 - d))
        elif d < 0:
            rows.append(col >= -d)
        else:
            rows.append(np.ones(F, dtype=bool))
    rows.append((col >= PAD) & (col <= W - 1 - PAD))
    return jnp.asarray(np.stack(rows).astype(np.float32))


@jax.jit
def gcn_forward(x, params):
    N, C, H, W = x.shape
    OC = params["w_l1"].shape[0]
    Hp = H + 2 * PAD
    HW = H * W
    F = _round_up(Hp * W, 128)                  # lane-aligned flat length

    # Pad H once, flatten (Hp, W) row-major onto the lane axis, pad the tail
    # so the flat axis is a multiple of 128 lanes.  This (plus the final
    # reshape) is the only glue outside the kernel; intermediates stay in VMEM.
    xp = jnp.pad(x.astype(jnp.float32), ((0, 0), (0, 0), (PAD, PAD), (0, 0)))
    xp = xp.reshape(N, C, Hp * W)
    xp = jnp.pad(xp, ((0, 0), (0, 0), (0, F - Hp * W)))

    masks = _build_masks(W, F)

    # Weights as flat [o, c, t] f32 vectors for SMEM scalar reads.
    wl1 = params["w_l1"][:, :, :, 0].astype(jnp.float32).reshape(-1)
    wl2 = params["w_l2"][:, :, 0, :].astype(jnp.float32).reshape(-1)
    wr1 = params["w_r1"][:, :, 0, :].astype(jnp.float32).reshape(-1)
    wr2 = params["w_r2"][:, :, :, 0].astype(jnp.float32).reshape(-1)
    bl1 = params["b_l1"].astype(jnp.float32)
    bl2 = params["b_l2"].astype(jnp.float32)
    br1 = params["b_r1"].astype(jnp.float32)
    br2 = params["b_r2"].astype(jnp.float32)

    smem = functools.partial(pl.BlockSpec, memory_space=pltpu.MemorySpace.SMEM)
    out = pl.pallas_call(
        _make_gcn_kernel(C, OC, H, W, F),
        out_shape=jax.ShapeDtypeStruct((N, OC, HW), jnp.float32),
        grid=(N,),
        in_specs=[
            pl.BlockSpec((None, C, F), lambda n: (n, 0, 0)),    # image n
            pl.BlockSpec((K + 1, F), lambda n: (0, 0)),         # column masks
            smem(), smem(), smem(), smem(),                     # wl1 bl1 wl2 bl2
            smem(), smem(), smem(), smem(),                     # wr1 br1 wr2 br2
        ],
        out_specs=pl.BlockSpec((None, OC, HW), lambda n: (n, 0, 0)),
        compiler_params=pltpu.CompilerParams(
            dimension_semantics=("parallel",)),                 # v7x: 2 TCs
    )(xp, masks, wl1, bl1, wl2, bl2, wr1, br1, wr2, br2)
    return out.reshape(N, OC, H, W)


# ------------------------------ plain-JAX ref ------------------------------- #

def _conv_ref(x, w, b, pad_h, pad_w):
    out = lax.conv_general_dilated(
        x, w, window_strides=(1, 1),
        padding=[(pad_h, pad_h), (pad_w, pad_w)],
        dimension_numbers=("NCHW", "OIHW", "NCHW"))
    return out + b.reshape(1, -1, 1, 1)


def gcn_ref(x, p):
    x_l = _conv_ref(x, p["w_l1"], p["b_l1"], PAD, 0)
    x_l = _conv_ref(x_l, p["w_l2"], p["b_l2"], 0, PAD)
    x_r = _conv_ref(x, p["w_r1"], p["b_r1"], PAD, 0)
    x_r = _conv_ref(x_r, p["w_r2"], p["b_r2"], 0, PAD)
    return x_l + x_r


# ---------------------------------- main ------------------------------------ #

if __name__ == "__main__":
    c, out_c = 4, 4
    N, H, W = 2, 16, 16

    key = jax.random.PRNGKey(0)
    ks = jax.random.split(key, 9)
    params = {
        "w_l1": 0.1 * jax.random.normal(ks[0], (out_c, c, K, 1), jnp.float32),
        "b_l1": 0.1 * jax.random.normal(ks[1], (out_c,), jnp.float32),
        "w_l2": 0.1 * jax.random.normal(ks[2], (out_c, out_c, 1, K), jnp.float32),
        "b_l2": 0.1 * jax.random.normal(ks[3], (out_c,), jnp.float32),
        "w_r1": 0.1 * jax.random.normal(ks[4], (out_c, c, 1, K), jnp.float32),
        "b_r1": 0.1 * jax.random.normal(ks[5], (out_c,), jnp.float32),
        "w_r2": 0.1 * jax.random.normal(ks[6], (out_c, out_c, K, 1), jnp.float32),
        "b_r2": 0.1 * jax.random.normal(ks[7], (out_c,), jnp.float32),
    }
    x = jax.random.normal(ks[8], (N, c, H, W), jnp.float32)

    out = jax.block_until_ready(gcn_forward(x, params))
    ref = jax.block_until_ready(gcn_ref(x, params))

    assert out.shape == (N, out_c, H, W), out.shape
    assert jnp.allclose(out, ref, atol=1e-4, rtol=1e-4), \
        float(jnp.max(jnp.abs(out - ref)))

    print("KERNEL_OK")
</pallas_src>

<mosaic_0001>
module attributes {stable_mosaic.version = 11 : i64} {
  func.func @kernel(%arg0: i32, %arg1: memref<1x4x384xf32, #tpu.memory_space<vmem>>, %arg2: memref<8x384xf32, #tpu.memory_space<vmem>>, %arg3: memref<112xf32, #tpu.memory_space<smem>>, %arg4: memref<4xf32, #tpu.memory_space<smem>>, %arg5: memref<112xf32, #tpu.memory_space<smem>>, %arg6: memref<4xf32, #tpu.memory_space<smem>>, %arg7: memref<112xf32, #tpu.memory_space<smem>>, %arg8: memref<4xf32, #tpu.memory_space<smem>>, %arg9: memref<112xf32, #tpu.memory_space<smem>>, %arg10: memref<4xf32, #tpu.memory_space<smem>>, %arg11: memref<1x4x256xf32, #tpu.memory_space<vmem>>) attributes {dimension_semantics = [#tpu.dimension_semantics<parallel>], iteration_bounds = array<i64: 2>, scalar_prefetch = 0 : i64, scratch_operands = 0 : i64, tpu.core_type = #tpu.core_type<tc>, window_params = [{transform_indices = @transform_0, window_bounds = array<i64: 1, 4, 384>}, {pipeline_mode = #tpu.pipeline_mode<synchronous>, transform_indices = @transform_1, window_bounds = array<i64: 8, 384>}, {transform_indices = @transform_2, window_bounds = array<i64: 112>}, {transform_indices = @transform_3, window_bounds = array<i64: 4>}, {transform_indices = @transform_4, window_bounds = array<i64: 112>}, {transform_indices = @transform_5, window_bounds = array<i64: 4>}, {transform_indices = @transform_6, window_bounds = array<i64: 112>}, {transform_indices = @transform_7, window_bounds = array<i64: 4>}, {transform_indices = @transform_8, window_bounds = array<i64: 112>}, {transform_indices = @transform_9, window_bounds = array<i64: 4>}, {transform_indices = @transform_10, window_bounds = array<i64: 1, 4, 256>}]} {
    %c0 = arith.constant 0 : index
    %c0_0 = arith.constant 0 : index
    %c0_1 = arith.constant 0 : index
    %0 = vector.load %arg1[%c0, %c0_0, %c0_1] : memref<1x4x384xf32, #tpu.memory_space<vmem>>, vector<1x1x384xf32>
    %1 = vector.shape_cast %0 : vector<1x1x384xf32> to vector<1x384xf32>
    %c0_2 = arith.constant 0 : index
    %c1 = arith.constant 1 : index
    %c0_3 = arith.constant 0 : index
    %2 = vector.load %arg1[%c0_2, %c1, %c0_3] : memref<1x4x384xf32, #tpu.memory_space<vmem>>, vector<1x1x384xf32>
    %3 = vector.shape_cast %2 : vector<1x1x384xf32> to vector<1x384xf32>
    %c0_4 = arith.constant 0 : index
    %c2 = arith.constant 2 : index
    %c0_5 = arith.constant 0 : index
    %4 = vector.load %arg1[%c0_4, %c2, %c0_5] : memref<1x4x384xf32, #tpu.memory_space<vmem>>, vector<1x1x384xf32>
    %5 = vector.shape_cast %4 : vector<1x1x384xf32> to vector<1x384xf32>
    %c0_6 = arith.constant 0 : index
    %c3 = arith.constant 3 : index
    %c0_7 = arith.constant 0 : index
    %6 = vector.load %arg1[%c0_6, %c3, %c0_7] : memref<1x4x384xf32, #tpu.memory_space<vmem>>, vector<1x1x384xf32>
    %7 = vector.shape_cast %6 : vector<1x1x384xf32> to vector<1x384xf32>
    %c0_8 = arith.constant 0 : index
    %8 = memref.load %arg3[%c0_8] : memref<112xf32, #tpu.memory_space<smem>>
    %9 = vector.broadcast %8 : f32 to vector<1x384xf32>
    %10 = arith.mulf %9, %1 : vector<1x384xf32>
    %c7 = arith.constant 7 : index
    %11 = memref.load %arg3[%c7] : memref<112xf32, #tpu.memory_space<smem>>
    %12 = vector.broadcast %11 : f32 to vector<1x384xf32>
    %13 = arith.mulf %12, %3 : vector<1x384xf32>
    %14 = arith.addf %10, %13 : vector<1x384xf32>
    %c14 = arith.constant 14 : index
    %15 = memref.load %arg3[%c14] : memref<112xf32, #tpu.memory_space<smem>>
    %16 = vector.broadcast %15 : f32 to vector<1x384xf32>
    %17 = arith.mulf %16, %5 : vector<1x384xf32>
    %18 = arith.addf %14, %17 : vector<1x384xf32>
    %c21 = arith.constant 21 : index
    %19 = memref.load %arg3[%c21] : memref<112xf32, #tpu.memory_space<smem>>
    %20 = vector.broadcast %19 : f32 to vector<1x384xf32>
    %21 = arith.mulf %20, %7 : vector<1x384xf32>
    %22 = arith.addf %18, %21 : vector<1x384xf32>
    %c28 = arith.constant 28 : index
    %23 = memref.load %arg3[%c28] : memref<112xf32, #tpu.memory_space<smem>>
    %24 = vector.broadcast %23 : f32 to vector<1x384xf32>
    %25 = arith.mulf %24, %1 : vector<1x384xf32>
    %c35 = arith.constant 35 : index
    %26 = memref.load %arg3[%c35] : memref<112xf32, #tpu.memory_space<smem>>
    %27 = vector.broadcast %26 : f32 to vector<1x384xf32>
    %28 = arith.mulf %27, %3 : vector<1x384xf32>
    %29 = arith.addf %25, %28 : vector<1x384xf32>
    %c42 = arith.constant 42 : index
    %30 = memref.load %arg3[%c42] : memref<112xf32, #tpu.memory_space<smem>>
    %31 = vector.broadcast %30 : f32 to vector<1x384xf32>
    %32 = arith.mulf %31, %5 : vector<1x384xf32>
    %33 = arith.addf %29, %32 : vector<1x384xf32>
    %c49 = arith.constant 49 : index
    %34 = memref.load %arg3[%c49] : memref<112xf32, #tpu.memory_space<smem>>
    %35 = vector.broadcast %34 : f32 to vector<1x384xf32>
    %36 = arith.mulf %35, %7 : vector<1x384xf32>
    %37 = arith.addf %33, %36 : vector<1x384xf32>
    %c56 = arith.constant 56 : index
    %38 = memref.load %arg3[%c56] : memref<112xf32, #tpu.memory_space<smem>>
    %39 = vector.broadcast %38 : f32 to vector<1x384xf32>
    %40 = arith.mulf %39, %1 : vector<1x384xf32>
    %c63 = arith.constant 63 : index
    %41 = memref.load %arg3[%c63] : memref<112xf32, #tpu.memory_space<smem>>
    %42 = vector.broadcast %41 : f32 to vector<1x384xf32>
    %43 = arith.mulf %42, %3 : vector<1x384xf32>
    %44 = arith.addf %40, %43 : vector<1x384xf32>
    %c70 = arith.constant 70 : index
    %45 = memref.load %arg3[%c70] : memref<112xf32, #tpu.memory_space<smem>>
    %46 = vector.broadcast %45 : f32 to vector<1x384xf32>
    %47 = arith.mulf %46, %5 : vector<1x384xf32>
    %48 = arith.addf %44, %47 : vector<1x384xf32>
    %c77 = arith.constant 77 : index
    %49 = memref.load %arg3[%c77] : memref<112xf32, #tpu.memory_space<smem>>
    %50 = vector.broadcast %49 : f32 to vector<1x384xf32>
    %51 = arith.mulf %50, %7 : vector<1x384xf32>
    %52 = arith.addf %48, %51 : vector<1x384xf32>
    %c84 = arith.constant 84 : index
    %53 = memref.load %arg3[%c84] : memref<112xf32, #tpu.memory_space<smem>>
    %54 = vector.broadcast %53 : f32 to vector<1x384xf32>
    %55 = arith.mulf %54, %1 : vector<1x384xf32>
    %c91 = arith.constant 91 : index
    %56 = memref.load %arg3[%c91] : memref<112xf32, #tpu.memory_space<smem>>
    %57 = vector.broadcast %56 : f32 to vector<1x384xf32>
    %58 = arith.mulf %57, %3 : vector<1x384xf32>
    %59 = arith.addf %55, %58 : vector<1x384xf32>
    %c98 = arith.constant 98 : index
    %60 = memref.load %arg3[%c98] : memref<112xf32, #tpu.memory_space<smem>>
    %61 = vector.broadcast %60 : f32 to vector<1x384xf32>
    %62 = arith.mulf %61, %5 : vector<1x384xf32>
    %63 = arith.addf %59, %62 : vector<1x384xf32>
    %c105 = arith.constant 105 : index
    %64 = memref.load %arg3[%c105] : memref<112xf32, #tpu.memory_space<smem>>
    %65 = vector.broadcast %64 : f32 to vector<1x384xf32>
    %66 = arith.mulf %65, %7 : vector<1x384xf32>
    %67 = arith.addf %63, %66 : vector<1x384xf32>
    %c368_i32 = arith.constant 368 : i32
    %68 = tpu.dynamic_rotate %1 by %c368_i32 dim 1 : vector<1x384xf32>, i32 -> vector<1x384xf32>
    %c368_i32_9 = arith.constant 368 : i32
    %69 = tpu.dynamic_rotate %3 by %c368_i32_9 dim 1 : vector<1x384xf32>, i32 -> vector<1x384xf32>
    %c368_i32_10 = arith.constant 368 : i32
    %70 = tpu.dynamic_rotate %5 by %c368_i32_10 dim 1 : vector<1x384xf32>, i32 -> vector<1x384xf32>
    %c368_i32_11 = arith.constant 368 : i32
    %71 = tpu.dynamic_rotate %7 by %c368_i32_11 dim 1 : vector<1x384xf32>, i32 -> vector<1x384xf32>
    %c1_12 = arith.constant 1 : index
    %72 = memref.load %arg3[%c1_12] : memref<112xf32, #tpu.memory_space<smem>>
    %73 = vector.broadcast %72 : f32 to vector<1x384xf32>
    %74 = arith.mulf %73, %68 : vector<1x384xf32>
    %75 = arith.addf %22, %74 : vector<1x384xf32>
    %c8 = arith.constant 8 : index
    %76 = memref.load %arg3[%c8] : memref<112xf32, #tpu.memory_space<smem>>
    %77 = vector.broadcast %76 : f32 to vector<1x384xf32>
    %78 = arith.mulf %77, %69 : vector<1x384xf32>
    %79 = arith.addf %75, %78 : vector<1x384xf32>
    %c15 = arith.constant 15 : index
    %80 = memref.load %arg3[%c15] : memref<112xf32, #tpu.memory_space<smem>>
    %81 = vector.broadcast %80 : f32 to vector<1x384xf32>
    %82 = arith.mulf %81, %70 : vector<1x384xf32>
    %83 = arith.addf %79, %82 : vector<1x384xf32>
    %c22 = arith.constant 22 : index
    %84 = memref.load %arg3[%c22] : memref<112xf32, #tpu.memory_space<smem>>
    %85 = vector.broadcast %84 : f32 to vector<1x384xf32>
    %86 = arith.mulf %85, %71 : vector<1x384xf32>
    %87 = arith.addf %83, %86 : vector<1x384xf32>
    %c29 = arith.constant 29 : index
    %88 = memref.load %arg3[%c29] : memref<112xf32, #tpu.memory_space<smem>>
    %89 = vector.broadcast %88 : f32 to vector<1x384xf32>
    %90 = arith.mulf %89, %68 : vector<1x384xf32>
    %91 = arith.addf %37, %90 : vector<1x384xf32>
    %c36 = arith.constant 36 : index
    %92 = memref.load %arg3[%c36] : memref<112xf32, #tpu.memory_space<smem>>
    %93 = vector.broadcast %92 : f32 to vector<1x384xf32>
    %94 = arith.mulf %93, %69 : vector<1x384xf32>
    %95 = arith.addf %91, %94 : vector<1x384xf32>
    %c43 = arith.constant 43 : index
    %96 = memref.load %arg3[%c43] : memref<112xf32, #tpu.memory_space<smem>>
    %97 = vector.broadcast %96 : f32 to vector<1x384xf32>
    %98 = arith.mulf %97, %70 : vector<1x384xf32>
    %99 = arith.addf %95, %98 : vector<1x384xf32>
    %c50 = arith.constant 50 : index
    %100 = memref.load %arg3[%c50] : memref<112xf32, #tpu.memory_space<smem>>
    %101 = vector.broadcast %100 : f32 to vector<1x384xf32>
    %102 = arith.mulf %101, %71 : vector<1x384xf32>
    %103 = arith.addf %99, %102 : vector<1x384xf32>
    %c57 = arith.constant 57 : index
    %104 = memref.load %arg3[%c57] : memref<112xf32, #tpu.memory_space<smem>>
    %105 = vector.broadcast %104 : f32 to vector<1x384xf32>
    %106 = arith.mulf %105, %68 : vector<1x384xf32>
    %107 = arith.addf %52, %106 : vector<1x384xf32>
    %c64 = arith.constant 64 : index
    %108 = memref.load %arg3[%c64] : memref<112xf32, #tpu.memory_space<smem>>
    %109 = vector.broadcast %108 : f32 to vector<1x384xf32>
    %110 = arith.mulf %109, %69 : vector<1x384xf32>
    %111 = arith.addf %107, %110 : vector<1x384xf32>
    %c71 = arith.constant 71 : index
    %112 = memref.load %arg3[%c71] : memref<112xf32, #tpu.memory_space<smem>>
    %113 = vector.broadcast %112 : f32 to vector<1x384xf32>
    %114 = arith.mulf %113, %70 : vector<1x384xf32>
    %115 = arith.addf %111, %114 : vector<1x384xf32>
    %c78 = arith.constant 78 : index
    %116 = memref.load %arg3[%c78] : memref<112xf32, #tpu.memory_space<smem>>
    %117 = vector.broadcast %116 : f32 to vector<1x384xf32>
    %118 = arith.mulf %117, %71 : vector<1x384xf32>
    %119 = arith.addf %115, %118 : vector<1x384xf32>
    %c85 = arith.constant 85 : index
    %120 = memref.load %arg3[%c85] : memref<112xf32, #tpu.memory_space<smem>>
    %121 = vector.broadcast %120 : f32 to vector<1x384xf32>
    %122 = arith.mulf %121, %68 : vector<1x384xf32>
    %123 = arith.addf %67, %122 : vector<1x384xf32>
    %c92 = arith.constant 92 : index
    %124 = memref.load %arg3[%c92] : memref<112xf32, #tpu.memory_space<smem>>
    %125 = vector.broadcast %124 : f32 to vector<1x384xf32>
    %126 = arith.mulf %125, %69 : vector<1x384xf32>
    %127 = arith.addf %123, %126 : vector<1x384xf32>
    %c99 = arith.constant 99 : index
    %128 = memref.load %arg3[%c99] : memref<112xf32, #tpu.memory_space<smem>>
    %129 = vector.broadcast %128 : f32 to vector<1x384xf32>
    %130 = arith.mulf %129, %70 : vector<1x384xf32>
    %131 = arith.addf %127, %130 : vector<1x384xf32>
    %c106 = arith.constant 106 : index
    %132 = memref.load %arg3[%c106] : memref<112xf32, #tpu.memory_space<smem>>
    %133 = vector.broadcast %132 : f32 to vector<1x384xf32>
    %134 = arith.mulf %133, %71 : vector<1x384xf32>
    %135 = arith.addf %131, %134 : vector<1x384xf32>
    %c352_i32 = arith.constant 352 : i32
    %136 = tpu.dynamic_rotate %1 by %c352_i32 dim 1 : vector<1x384xf32>, i32 -> vector<1x384xf32>
    %c352_i32_13 = arith.constant 352 : i32
    %137 = tpu.dynamic_rotate %3 by %c352_i32_13 dim 1 : vector<1x384xf32>, i32 -> vector<1x384xf32>
    %c352_i32_14 = arith.constant 352 : i32
    %138 = tpu.dynamic_rotate %5 by %c352_i32_14 dim 1 : vector<1x384xf32>, i32 -> vector<1x384xf32>
    %c352_i32_15 = arith.constant 352 : i32
    %139 = tpu.dynamic_rotate %7 by %c352_i32_15 dim 1 : vector<1x384xf32>, i32 -> vector<1x384xf32>
    %c2_16 = arith.constant 2 : index
    %140 = memref.load %arg3[%c2_16] : memref<112xf32, #tpu.memory_space<smem>>
    %141 = vector.broadcast %140 : f32 to vector<1x384xf32>
    %142 = arith.mulf %141, %136 : vector<1x384xf32>
    %143 = arith.addf %87, %142 : vector<1x384xf32>
    %c9 = arith.constant 9 : index
    %144 = memref.load %arg3[%c9] : memref<112xf32, #tpu.memory_space<smem>>
    %145 = vector.broadcast %144 : f32 to vector<1x384xf32>
    %146 = arith.mulf %145, %137 : vector<1x384xf32>
    %147 = arith.addf %143, %146 : vector<1x384xf32>
    %c16 = arith.constant 16 : index
    %148 = memref.load %arg3[%c16] : memref<112xf32, #tpu.memory_space<smem>>
    %149 = vector.broadcast %148 : f32 to vector<1x384xf32>
    %150 = arith.mulf %149, %138 : vector<1x384xf32>
    %151 = arith.addf %147, %150 : vector<1x384xf32>
    %c23 = arith.constant 23 : index
    %152 = memref.load %arg3[%c23] : memref<112xf32, #tpu.memory_space<smem>>
    %153 = vector.broadcast %152 : f32 to vector<1x384xf32>
    %154 = arith.mulf %153, %139 : vector<1x384xf32>
    %155 = arith.addf %151, %154 : vector<1x384xf32>
    %c30 = arith.constant 30 : index
    %156 = memref.load %arg3[%c30] : memref<112xf32, #tpu.memory_space<smem>>
    %157 = vector.broadcast %156 : f32 to vector<1x384xf32>
    %158 = arith.mulf %157, %136 : vector<1x384xf32>
    %159 = arith.addf %103, %158 : vector<1x384xf32>
    %c37 = arith.constant 37 : index
    %160 = memref.load %arg3[%c37] : memref<112xf32, #tpu.memory_space<smem>>
    %161 = vector.broadcast %160 : f32 to vector<1x384xf32>
    %162 = arith.mulf %161, %137 : vector<1x384xf32>
    %163 = arith.addf %159, %162 : vector<1x384xf32>
    %c44 = arith.constant 44 : index
    %164 = memref.load %arg3[%c44] : memref<112xf32, #tpu.memory_space<smem>>
    %165 = vector.broadcast %164 : f32 to vector<1x384xf32>
    %166 = arith.mulf %165, %138 : vector<1x384xf32>
    %167 = arith.addf %163, %166 : vector<1x384xf32>
    %c51 = arith.constant 51 : index
    %168 = memref.load %arg3[%c51] : memref<112xf32, #tpu.memory_space<smem>>
    %169 = vector.broadcast %168 : f32 to vector<1x384xf32>
    %170 = arith.mulf %169, %139 : vector<1x384xf32>
    %171 = arith.addf %167, %170 : vector<1x384xf32>
    %c58 = arith.constant 58 : index
    %172 = memref.load %arg3[%c58] : memref<112xf32, #tpu.memory_space<smem>>
    %173 = vector.broadcast %172 : f32 to vector<1x384xf32>
    %174 = arith.mulf %173, %136 : vector<1x384xf32>
    %175 = arith.addf %119, %174 : vector<1x384xf32>
    %c65 = arith.constant 65 : index
    %176 = memref.load %arg3[%c65] : memref<112xf32, #tpu.memory_space<smem>>
    %177 = vector.broadcast %176 : f32 to vector<1x384xf32>
    %178 = arith.mulf %177, %137 : vector<1x384xf32>
    %179 = arith.addf %175, %178 : vector<1x384xf32>
    %c72 = arith.constant 72 : index
    %180 = memref.load %arg3[%c72] : memref<112xf32, #tpu.memory_space<smem>>
    %181 = vector.broadcast %180 : f32 to vector<1x384xf32>
    %182 = arith.mulf %181, %138 : vector<1x384xf32>
    %183 = arith.addf %179, %182 : vector<1x384xf32>
    %c79 = arith.constant 79 : index
    %184 = memref.load %arg3[%c79] : memref<112xf32, #tpu.memory_space<smem>>
    %185 = vector.broadcast %184 : f32 to vector<1x384xf32>
    %186 = arith.mulf %185, %139 : vector<1x384xf32>
    %187 = arith.addf %183, %186 : vector<1x384xf32>
    %c86 = arith.constant 86 : index
    %188 = memref.load %arg3[%c86] : memref<112xf32, #tpu.memory_space<smem>>
    %189 = vector.broadcast %188 : f32 to vector<1x384xf32>
    %190 = arith.mulf %189, %136 : vector<1x384xf32>
    %191 = arith.addf %135, %190 : vector<1x384xf32>
    %c93 = arith.constant 93 : index
    %192 = memref.load %arg3[%c93] : memref<112xf32, #tpu.memory_space<smem>>
    %193 = vector.broadcast %192 : f32 to vector<1x384xf32>
    %194 = arith.mulf %193, %137 : vector<1x384xf32>
    %195 = arith.addf %191, %194 : vector<1x384xf32>
    %c100 = arith.constant 100 : index
    %196 = memref.load %arg3[%c100] : memref<112xf32, #tpu.memory_space<smem>>
    %197 = vector.broadcast %196 : f32 to vector<1x384xf32>
    %198 = arith.mulf %197, %138 : vector<1x384xf32>
    %199 = arith.addf %195, %198 : vector<1x384xf32>
    %c107 = arith.constant 107 : index
    %200 = memref.load %arg3[%c107] : memref<112xf32, #tpu.memory_space<smem>>
    %201 = vector.broadcast %200 : f32 to vector<1x384xf32>
    %202 = arith.mulf %201, %139 : vector<1x384xf32>
    %203 = arith.addf %199, %202 : vector<1x384xf32>
    %c336_i32 = arith.constant 336 : i32
    %204 = tpu.dynamic_rotate %1 by %c336_i32 dim 1 : vector<1x384xf32>, i32 -> vector<1x384xf32>
    %c336_i32_17 = arith.constant 336 : i32
    %205 = tpu.dynamic_rotate %3 by %c336_i32_17 dim 1 : vector<1x384xf32>, i32 -> vector<1x384xf32>
    %c336_i32_18 = arith.constant 336 : i32
    %206 = tpu.dynamic_rotate %5 by %c336_i32_18 dim 1 : vector<1x384xf32>, i32 -> vector<1x384xf32>
    %c336_i32_19 = arith.constant 336 : i32
    %207 = tpu.dynamic_rotate %7 by %c336_i32_19 dim 1 : vector<1x384xf32>, i32 -> vector<1x384xf32>
    %c3_20 = arith.constant 3 : index
    %208 = memref.load %arg3[%c3_20] : memref<112xf32, #tpu.memory_space<smem>>
    %209 = vector.broadcast %208 : f32 to vector<1x384xf32>
    %210 = arith.mulf %209, %204 : vector<1x384xf32>
    %211 = arith.addf %155, %210 : vector<1x384xf32>
    %c10 = arith.constant 10 : index
    %212 = memref.load %arg3[%c10] : memref<112xf32, #tpu.memory_space<smem>>
    %213 = vector.broadcast %212 : f32 to vector<1x384xf32>
    %214 = arith.mulf %213, %205 : vector<1x384xf32>
    %215 = arith.addf %211, %214 : vector<1x384xf32>
    %c17 = arith.constant 17 : index
    %216 = memref.load %arg3[%c17] : memref<112xf32, #tpu.memory_space<smem>>
    %217 = vector.broadcast %216 : f32 to vector<1x384xf32>
    %218 = arith.mulf %217, %206 : vector<1x384xf32>
    %219 = arith.addf %215, %218 : vector<1x384xf32>
    %c24 = arith.constant 24 : index
    %220 = memref.load %arg3[%c24] : memref<112xf32, #tpu.memory_space<smem>>
    %221 = vector.broadcast %220 : f32 to vector<1x384xf32>
    %222 = arith.mulf %221, %207 : vector<1x384xf32>
    %223 = arith.addf %219, %222 : vector<1x384xf32>
    %c31 = arith.constant 31 : index
    %224 = memref.load %arg3[%c31] : memref<112xf32, #tpu.memory_space<smem>>
    %225 = vector.broadcast %224 : f32 to vector<1x384xf32>
    %226 = arith.mulf %225, %204 : vector<1x384xf32>
    %227 = arith.addf %171, %226 : vector<1x384xf32>
    %c38 = arith.constant 38 : index
    %228 = memref.load %arg3[%c38] : memref<112xf32, #tpu.memory_space<smem>>
    %229 = vector.broadcast %228 : f32 to vector<1x384xf32>
    %230 = arith.mulf %229, %205 : vector<1x384xf32>
    %231 = arith.addf %227, %230 : vector<1x384xf32>
    %c45 = arith.constant 45 : index
    %232 = memref.load %arg3[%c45] : memref<112xf32, #tpu.memory_space<smem>>
    %233 = vector.broadcast %232 : f32 to vector<1x384xf32>
    %234 = arith.mulf %233, %206 : vector<1x384xf32>
    %235 = arith.addf %231, %234 : vector<1x384xf32>
    %c52 = arith.constant 52 : index
    %236 = memref.load %arg3[%c52] : memref<112xf32, #tpu.memory_space<smem>>
    %237 = vector.broadcast %236 : f32 to vector<1x384xf32>
    %238 = arith.mulf %237, %207 : vector<1x384xf32>
    %239 = arith.addf %235, %238 : vector<1x384xf32>
    %c59 = arith.constant 59 : index
    %240 = memref.load %arg3[%c59] : memref<112xf32, #tpu.memory_space<smem>>
    %241 = vector.broadcast %240 : f32 to vector<1x384xf32>
    %242 = arith.mulf %241, %204 : vector<1x384xf32>
    %243 = arith.addf %187, %242 : vector<1x384xf32>
    %c66 = arith.constant 66 : index
    %244 = memref.load %arg3[%c66] : memref<112xf32, #tpu.memory_space<smem>>
    %245 = vector.broadcast %244 : f32 to vector<1x384xf32>
    %246 = arith.mulf %245, %205 : vector<1x384xf32>
    %247 = arith.addf %243, %246 : vector<1x384xf32>
    %c73 = arith.constant 73 : index
    %248 = memref.load %arg3[%c73] : memref<112xf32, #tpu.memory_space<smem>>
    %249 = vector.broadcast %248 : f32 to vector<1x384xf32>
    %250 = arith.mulf %249, %206 : vector<1x384xf32>
    %251 = arith.addf %247, %250 : vector<1x384xf32>
    %c80 = arith.constant 80 : index
    %252 = memref.load %arg3[%c80] : memref<112xf32, #tpu.memory_space<smem>>
    %253 = vector.broadcast %252 : f32 to vector<1x384xf32>
    %254 = arith.mulf %253, %207 : vector<1x384xf32>
    %255 = arith.addf %251, %254 : vector<1x384xf32>
    %c87 = arith.constant 87 : index
    %256 = memref.load %arg3[%c87] : memref<112xf32, #tpu.memory_space<smem>>
    %257 = vector.broadcast %256 : f32 to vector<1x384xf32>
    %258 = arith.mulf %257, %204 : vector<1x384xf32>
    %259 = arith.addf %203, %258 : vector<1x384xf32>
    %c94 = arith.constant 94 : index
    %260 = memref.load %arg3[%c94] : memref<112xf32, #tpu.memory_space<smem>>
    %261 = vector.broadcast %260 : f32 to vector<1x384xf32>
    %262 = arith.mulf %261, %205 : vector<1x384xf32>
    %263 = arith.addf %259, %262 : vector<1x384xf32>
    %c101 = arith.constant 101 : index
    %264 = memref.load %arg3[%c101] : memref<112xf32, #tpu.memory_space<smem>>
    %265 = vector.broadcast %264 : f32 to vector<1x384xf32>
    %266 = arith.mulf %265, %206 : vector<1x384xf32>
    %267 = arith.addf %263, %266 : vector<1x384xf32>
    %c108 = arith.constant 108 : index
    %268 = memref.load %arg3[%c108] : memref<112xf32, #tpu.memory_space<smem>>
    %269 = vector.broadcast %268 : f32 to vector<1x384xf32>
    %270 = arith.mulf %269, %207 : vector<1x384xf32>
    %271 = arith.addf %267, %270 : vector<1x384xf32>
    %c320_i32 = arith.constant 320 : i32
    %272 = tpu.dynamic_rotate %1 by %c320_i32 dim 1 : vector<1x384xf32>, i32 -> vector<1x384xf32>
    %c320_i32_21 = arith.constant 320 : i32
    %273 = tpu.dynamic_rotate %3 by %c320_i32_21 dim 1 : vector<1x384xf32>, i32 -> vector<1x384xf32>
    %c320_i32_22 = arith.constant 320 : i32
    %274 = tpu.dynamic_rotate %5 by %c320_i32_22 dim 1 : vector<1x384xf32>, i32 -> vector<1x384xf32>
    %c320_i32_23 = arith.constant 320 : i32
    %275 = tpu.dynamic_rotate %7 by %c320_i32_23 dim 1 : vector<1x384xf32>, i32 -> vector<1x384xf32>
    %c4 = arith.constant 4 : index
    %276 = memref.load %arg3[%c4] : memref<112xf32, #tpu.memory_space<smem>>
    %277 = vector.broadcast %276 : f32 to vector<1x384xf32>
    %278 = arith.mulf %277, %272 : vector<1x384xf32>
    %279 = arith.addf %223, %278 : vector<1x384xf32>
    %c11 = arith.constant 11 : index
    %280 = memref.load %arg3[%c11] : memref<112xf32, #tpu.memory_space<smem>>
    %281 = vector.broadcast %280 : f32 to vector<1x384xf32>
    %282 = arith.mulf %281, %273 : vector<1x384xf32>
    %283 = arith.addf %279, %282 : vector<1x384xf32>
    %c18 = arith.constant 18 : index
    %284 = memref.load %arg3[%c18] : memref<112xf32, #tpu.memory_space<smem>>
    %285 = vector.broadcast %284 : f32 to vector<1x384xf32>
    %286 = arith.mulf %285, %274 : vector<1x384xf32>
    %287 = arith.addf %283, %286 : vector<1x384xf32>
    %c25 = arith.constant 25 : index
    %288 = memref.load %arg3[%c25] : memref<112xf32, #tpu.memory_space<smem>>
    %289 = vector.broadcast %288 : f32 to vector<1x384xf32>
    %290 = arith.mulf %289, %275 : vector<1x384xf32>
    %291 = arith.addf %287, %290 : vector<1x384xf32>
    %c32 = arith.constant 32 : index
    %292 = memref.load %arg3[%c32] : memref<112xf32, #tpu.memory_space<smem>>
    %293 = vector.broadcast %292 : f32 to vector<1x384xf32>
    %294 = arith.mulf %293, %272 : vector<1x384xf32>
    %295 = arith.addf %239, %294 : vector<1x384xf32>
    %c39 = arith.constant 39 : index
    %296 = memref.load %arg3[%c39] : memref<112xf32, #tpu.memory_space<smem>>
    %297 = vector.broadcast %296 : f32 to vector<1x384xf32>
    %298 = arith.mulf %297, %273 : vector<1x384xf32>
    %299 = arith.addf %295, %298 : vector<1x384xf32>
    %c46 = arith.constant 46 : index
    %300 = memref.load %arg3[%c46] : memref<112xf32, #tpu.memory_space<smem>>
    %301 = vector.broadcast %300 : f32 to vector<1x384xf32>
    %302 = arith.mulf %301, %274 : vector<1x384xf32>
    %303 = arith.addf %299, %302 : vector<1x384xf32>
    %c53 = arith.constant 53 : index
    %304 = memref.load %arg3[%c53] : memref<112xf32, #tpu.memory_space<smem>>
    %305 = vector.broadcast %304 : f32 to vector<1x384xf32>
    %306 = arith.mulf %305, %275 : vector<1x384xf32>
    %307 = arith.addf %303, %306 : vector<1x384xf32>
    %c60 = arith.constant 60 : index
    %308 = memref.load %arg3[%c60] : memref<112xf32, #tpu.memory_space<smem>>
    %309 = vector.broadcast %308 : f32 to vector<1x384xf32>
    %310 = arith.mulf %309, %272 : vector<1x384xf32>
    %311 = arith.addf %255, %310 : vector<1x384xf32>
    %c67 = arith.constant 67 : index
    %312 = memref.load %arg3[%c67] : memref<112xf32, #tpu.memory_space<smem>>
    %313 = vector.broadcast %312 : f32 to vector<1x384xf32>
    %314 = arith.mulf %313, %273 : vector<1x384xf32>
    %315 = arith.addf %311, %314 : vector<1x384xf32>
    %c74 = arith.constant 74 : index
    %316 = memref.load %arg3[%c74] : memref<112xf32, #tpu.memory_space<smem>>
    %317 = vector.broadcast %316 : f32 to vector<1x384xf32>
    %318 = arith.mulf %317, %274 : vector<1x384xf32>
    %319 = arith.addf %315, %318 : vector<1x384xf32>
    %c81 = arith.constant 81 : index
    %320 = memref.load %arg3[%c81] : memref<112xf32, #tpu.memory_space<smem>>
    %321 = vector.broadcast %320 : f32 to vector<1x384xf32>
    %322 = arith.mulf %321, %275 : vector<1x384xf32>
    %323 = arith.addf %319, %322 : vector<1x384xf32>
    %c88 = arith.constant 88 : index
    %324 = memref.load %arg3[%c88] : memref<112xf32, #tpu.memory_space<smem>>
    %325 = vector.broadcast %324 : f32 to vector<1x384xf32>
    %326 = arith.mulf %325, %272 : vector<1x384xf32>
    %327 = arith.addf %271, %326 : vector<1x384xf32>
    %c95 = arith.constant 95 : index
    %328 = memref.load %arg3[%c95] : memref<112xf32, #tpu.memory_space<smem>>
    %329 = vector.broadcast %328 : f32 to vector<1x384xf32>
    %330 = arith.mulf %329, %273 : vector<1x384xf32>
    %331 = arith.addf %327, %330 : vector<1x384xf32>
    %c102 = arith.constant 102 : index
    %332 = memref.load %arg3[%c102] : memref<112xf32, #tpu.memory_space<smem>>
    %333 = vector.broadcast %332 : f32 to vector<1x384xf32>
    %334 = arith.mulf %333, %274 : vector<1x384xf32>
    %335 = arith.addf %331, %334 : vector<1x384xf32>
    %c109 = arith.constant 109 : index
    %336 = memref.load %arg3[%c109] : memref<112xf32, #tpu.memory_space<smem>>
    %337 = vector.broadcast %336 : f32 to vector<1x384xf32>
    %338 = arith.mulf %337, %275 : vector<1x384xf32>
    %339 = arith.addf %335, %338 : vector<1x384xf32>
    %c304_i32 = arith.constant 304 : i32
    %340 = tpu.dynamic_rotate %1 by %c304_i32 dim 1 : vector<1x384xf32>, i32 -> vector<1x384xf32>
    %c304_i32_24 = arith.constant 304 : i32
    %341 = tpu.dynamic_rotate %3 by %c304_i32_24 dim 1 : vector<1x384xf32>, i32 -> vector<1x384xf32>
    %c304_i32_25 = arith.constant 304 : i32
    %342 = tpu.dynamic_rotate %5 by %c304_i32_25 dim 1 : vector<1x384xf32>, i32 -> vector<1x384xf32>
    %c304_i32_26 = arith.constant 304 : i32
    %343 = tpu.dynamic_rotate %7 by %c304_i32_26 dim 1 : vector<1x384xf32>, i32 -> vector<1x384xf32>
    %c5 = arith.constant 5 : index
    %344 = memref.load %arg3[%c5] : memref<112xf32, #tpu.memory_space<smem>>
    %345 = vector.broadcast %344 : f32 to vector<1x384xf32>
    %346 = arith.mulf %345, %340 : vector<1x384xf32>
    %347 = arith.addf %291, %346 : vector<1x384xf32>
    %c12 = arith.constant 12 : index
    %348 = memref.load %arg3[%c12] : memref<112xf32, #tpu.memory_space<smem>>
    %349 = vector.broadcast %348 : f32 to vector<1x384xf32>
    %350 = arith.mulf %349, %341 : vector<1x384xf32>
    %351 = arith.addf %347, %350 : vector<1x384xf32>
    %c19 = arith.constant 19 : index
    %352 = memref.load %arg3[%c19] : memref<112xf32, #tpu.memory_space<smem>>
    %353 = vector.broadcast %352 : f32 to vector<1x384xf32>
    %354 = arith.mulf %353, %342 : vector<1x384xf32>
    %355 = arith.addf %351, %354 : vector<1x384xf32>
    %c26 = arith.constant 26 : index
    %356 = memref.load %arg3[%c26] : memref<112xf32, #tpu.memory_space<smem>>
    %357 = vector.broadcast %356 : f32 to vector<1x384xf32>
    %358 = arith.mulf %357, %343 : vector<1x384xf32>
    %359 = arith.addf %355, %358 : vector<1x384xf32>
    %c33 = arith.constant 33 : index
    %360 = memref.load %arg3[%c33] : memref<112xf32, #tpu.memory_space<smem>>
    %361 = vector.broadcast %360 : f32 to vector<1x384xf32>
    %362 = arith.mulf %361, %340 : vector<1x384xf32>
    %363 = arith.addf %307, %362 : vector<1x384xf32>
    %c40 = arith.constant 40 : index
    %364 = memref.load %arg3[%c40] : memref<112xf32, #tpu.memory_space<smem>>
    %365 = vector.broadcast %364 : f32 to vector<1x384xf32>
    %366 = arith.mulf %365, %341 : vector<1x384xf32>
    %367 = arith.addf %363, %366 : vector<1x384xf32>
    %c47 = arith.constant 47 : index
    %368 = memref.load %arg3[%c47] : memref<112xf32, #tpu.memory_space<smem>>
    %369 = vector.broadcast %368 : f32 to vector<1x384xf32>
    %370 = arith.mulf %369, %342 : vector<1x384xf32>
    %371 = arith.addf %367, %370 : vector<1x384xf32>
    %c54 = arith.constant 54 : index
    %372 = memref.load %arg3[%c54] : memref<112xf32, #tpu.memory_space<smem>>
    %373 = vector.broadcast %372 : f32 to vector<1x384xf32>
    %374 = arith.mulf %373, %343 : vector<1x384xf32>
    %375 = arith.addf %371, %374 : vector<1x384xf32>
    %c61 = arith.constant 61 : index
    %376 = memref.load %arg3[%c61] : memref<112xf32, #tpu.memory_space<smem>>
    %377 = vector.broadcast %376 : f32 to vector<1x384xf32>
    %378 = arith.mulf %377, %340 : vector<1x384xf32>
    %379 = arith.addf %323, %378 : vector<1x384xf32>
    %c68 = arith.constant 68 : index
    %380 = memref.load %arg3[%c68] : memref<112xf32, #tpu.memory_space<smem>>
    %381 = vector.broadcast %380 : f32 to vector<1x384xf32>
    %382 = arith.mulf %381, %341 : vector<1x384xf32>
    %383 = arith.addf %379, %382 : vector<1x384xf32>
    %c75 = arith.constant 75 : index
    %384 = memref.load %arg3[%c75] : memref<112xf32, #tpu.memory_space<smem>>
    %385 = vector.broadcast %384 : f32 to vector<1x384xf32>
    %386 = arith.mulf %385, %342 : vector<1x384xf32>
    %387 = arith.addf %383, %386 : vector<1x384xf32>
    %c82 = arith.constant 82 : index
    %388 = memref.load %arg3[%c82] : memref<112xf32, #tpu.memory_space<smem>>
    %389 = vector.broadcast %388 : f32 to vector<1x384xf32>
    %390 = arith.mulf %389, %343 : vector<1x384xf32>
    %391 = arith.addf %387, %390 : vector<1x384xf32>
    %c89 = arith.constant 89 : index
    %392 = memref.load %arg3[%c89] : memref<112xf32, #tpu.memory_space<smem>>
    %393 = vector.broadcast %392 : f32 to vector<1x384xf32>
    %394 = arith.mulf %393, %340 : vector<1x384xf32>
    %395 = arith.addf %339, %394 : vector<1x384xf32>
    %c96 = arith.constant 96 : index
    %396 = memref.load %arg3[%c96] : memref<112xf32, #tpu.memory_space<smem>>
    %397 = vector.broadcast %396 : f32 to vector<1x384xf32>
    %398 = arith.mulf %397, %341 : vector<1x384xf32>
    %399 = arith.addf %395, %398 : vector<1x384xf32>
    %c103 = arith.constant 103 : index
    %400 = memref.load %arg3[%c103] : memref<112xf32, #tpu.memory_space<smem>>
    %401 = vector.broadcast %400 : f32 to vector<1x384xf32>
    %402 = arith.mulf %401, %342 : vector<1x384xf32>
    %403 = arith.addf %399, %402 : vector<1x384xf32>
    %c110 = arith.constant 110 : index
    %404 = memref.load %arg3[%c110] : memref<112xf32, #tpu.memory_space<smem>>
    %405 = vector.broadcast %404 : f32 to vector<1x384xf32>
    %406 = arith.mulf %405, %343 : vector<1x384xf32>
    %407 = arith.addf %403, %406 : vector<1x384xf32>
    %c288_i32 = arith.constant 288 : i32
    %408 = tpu.dynamic_rotate %1 by %c288_i32 dim 1 : vector<1x384xf32>, i32 -> vector<1x384xf32>
    %c288_i32_27 = arith.constant 288 : i32
    %409 = tpu.dynamic_rotate %3 by %c288_i32_27 dim 1 : vector<1x384xf32>, i32 -> vector<1x384xf32>
    %c288_i32_28 = arith.constant 288 : i32
    %410 = tpu.dynamic_rotate %5 by %c288_i32_28 dim 1 : vector<1x384xf32>, i32 -> vector<1x384xf32>
    %c288_i32_29 = arith.constant 288 : i32
    %411 = tpu.dynamic_rotate %7 by %c288_i32_29 dim 1 : vector<1x384xf32>, i32 -> vector<1x384xf32>
    %c6 = arith.constant 6 : index
    %412 = memref.load %arg3[%c6] : memref<112xf32, #tpu.memory_space<smem>>
    %413 = vector.broadcast %412 : f32 to vector<1x384xf32>
    %414 = arith.mulf %413, %408 : vector<1x384xf32>
    %415 = arith.addf %359, %414 : vector<1x384xf32>
    %c13 = arith.constant 13 : index
    %416 = memref.load %arg3[%c13] : memref<112xf32, #tpu.memory_space<smem>>
    %417 = vector.broadcast %416 : f32 to vector<1x384xf32>
    %418 = arith.mulf %417, %409 : vector<1x384xf32>
    %419 = arith.addf %415, %418 : vector<1x384xf32>
    %c20 = arith.constant 20 : index
    %420 = memref.load %arg3[%c20] : memref<112xf32, #tpu.memory_space<smem>>
    %421 = vector.broadcast %420 : f32 to vector<1x384xf32>
    %422 = arith.mulf %421, %410 : vector<1x384xf32>
    %423 = arith.addf %419, %422 : vector<1x384xf32>
    %c27 = arith.constant 27 : index
    %424 = memref.load %arg3[%c27] : memref<112xf32, #tpu.memory_space<smem>>
    %425 = vector.broadcast %424 : f32 to vector<1x384xf32>
    %426 = arith.mulf %425, %411 : vector<1x384xf32>
    %427 = arith.addf %423, %426 : vector<1x384xf32>
    %c34 = arith.constant 34 : index
    %428 = memref.load %arg3[%c34] : memref<112xf32, #tpu.memory_space<smem>>
    %429 = vector.broadcast %428 : f32 to vector<1x384xf32>
    %430 = arith.mulf %429, %408 : vector<1x384xf32>
    %431 = arith.addf %375, %430 : vector<1x384xf32>
    %c41 = arith.constant 41 : index
    %432 = memref.load %arg3[%c41] : memref<112xf32, #tpu.memory_space<smem>>
    %433 = vector.broadcast %432 : f32 to vector<1x384xf32>
    %434 = arith.mulf %433, %409 : vector<1x384xf32>
    %435 = arith.addf %431, %434 : vector<1x384xf32>
    %c48 = arith.constant 48 : index
    %436 = memref.load %arg3[%c48] : memref<112xf32, #tpu.memory_space<smem>>
    %437 = vector.broadcast %436 : f32 to vector<1x384xf32>
    %438 = arith.mulf %437, %410 : vector<1x384xf32>
    %439 = arith.addf %435, %438 : vector<1x384xf32>
    %c55 = arith.constant 55 : index
    %440 = memref.load %arg3[%c55] : memref<112xf32, #tpu.memory_space<smem>>
    %441 = vector.broadcast %440 : f32 to vector<1x384xf32>
    %442 = arith.mulf %441, %411 : vector<1x384xf32>
    %443 = arith.addf %439, %442 : vector<1x384xf32>
    %c62 = arith.constant 62 : index
    %444 = memref.load %arg3[%c62] : memref<112xf32, #tpu.memory_space<smem>>
    %445 = vector.broadcast %444 : f32 to vector<1x384xf32>
    %446 = arith.mulf %445, %408 : vector<1x384xf32>
    %447 = arith.addf %391, %446 : vector<1x384xf32>
    %c69 = arith.constant 69 : index
    %448 = memref.load %arg3[%c69] : memref<112xf32, #tpu.memory_space<smem>>
    %449 = vector.broadcast %448 : f32 to vector<1x384xf32>
    %450 = arith.mulf %449, %409 : vector<1x384xf32>
    %451 = arith.addf %447, %450 : vector<1x384xf32>
    %c76 = arith.constant 76 : index
    %452 = memref.load %arg3[%c76] : memref<112xf32, #tpu.memory_space<smem>>
    %453 = vector.broadcast %452 : f32 to vector<1x384xf32>
    %454 = arith.mulf %453, %410 : vector<1x384xf32>
    %455 = arith.addf %451, %454 : vector<1x384xf32>
    %c83 = arith.constant 83 : index
    %456 = memref.load %arg3[%c83] : memref<112xf32, #tpu.memory_space<smem>>
    %457 = vector.broadcast %456 : f32 to vector<1x384xf32>
    %458 = arith.mulf %457, %411 : vector<1x384xf32>
    %459 = arith.addf %455, %458 : vector<1x384xf32>
    %c90 = arith.constant 90 : index
    %460 = memref.load %arg3[%c90] : memref<112xf32, #tpu.memory_space<smem>>
    %461 = vector.broadcast %460 : f32 to vector<1x384xf32>
    %462 = arith.mulf %461, %408 : vector<1x384xf32>
    %463 = arith.addf %407, %462 : vector<1x384xf32>
    %c97 = arith.constant 97 : index
    %464 = memref.load %arg3[%c97] : memref<112xf32, #tpu.memory_space<smem>>
    %465 = vector.broadcast %464 : f32 to vector<1x384xf32>
    %466 = arith.mulf %465, %409 : vector<1x384xf32>
    %467 = arith.addf %463, %466 : vector<1x384xf32>
    %c104 = arith.constant 104 : index
    %468 = memref.load %arg3[%c104] : memref<112xf32, #tpu.memory_space<smem>>
    %469 = vector.broadcast %468 : f32 to vector<1x384xf32>
    %470 = arith.mulf %469, %410 : vector<1x384xf32>
    %471 = arith.addf %467, %470 : vector<1x384xf32>
    %c111 = arith.constant 111 : index
    %472 = memref.load %arg3[%c111] : memref<112xf32, #tpu.memory_space<smem>>
    %473 = vector.broadcast %472 : f32 to vector<1x384xf32>
    %474 = arith.mulf %473, %411 : vector<1x384xf32>
    %475 = arith.addf %471, %474 : vector<1x384xf32>
    %c0_30 = arith.constant 0 : index
    %476 = memref.load %arg4[%c0_30] : memref<4xf32, #tpu.memory_space<smem>>
    %477 = vector.broadcast %476 : f32 to vector<1x384xf32>
    %478 = arith.addf %427, %477 : vector<1x384xf32>
    %c1_31 = arith.constant 1 : index
    %479 = memref.load %arg4[%c1_31] : memref<4xf32, #tpu.memory_space<smem>>
    %480 = vector.broadcast %479 : f32 to vector<1x384xf32>
    %481 = arith.addf %443, %480 : vector<1x384xf32>
    %c2_32 = arith.constant 2 : index
    %482 = memref.load %arg4[%c2_32] : memref<4xf32, #tpu.memory_space<smem>>
    %483 = vector.broadcast %482 : f32 to vector<1x384xf32>
    %484 = arith.addf %459, %483 : vector<1x384xf32>
    %c3_33 = arith.constant 3 : index
    %485 = memref.load %arg4[%c3_33] : memref<4xf32, #tpu.memory_space<smem>>
    %486 = vector.broadcast %485 : f32 to vector<1x384xf32>
    %487 = arith.addf %475, %486 : vector<1x384xf32>
    %c3_i32 = arith.constant 3 : i32
    %488 = tpu.dynamic_rotate %1 by %c3_i32 dim 1 : vector<1x384xf32>, i32 -> vector<1x384xf32>
    %c3_i32_34 = arith.constant 3 : i32
    %489 = tpu.dynamic_rotate %3 by %c3_i32_34 dim 1 : vector<1x384xf32>, i32 -> vector<1x384xf32>
    %c3_i32_35 = arith.constant 3 : i32
    %490 = tpu.dynamic_rotate %5 by %c3_i32_35 dim 1 : vector<1x384xf32>, i32 -> vector<1x384xf32>
    %c3_i32_36 = arith.constant 3 : i32
    %491 = tpu.dynamic_rotate %7 by %c3_i32_36 dim 1 : vector<1x384xf32>, i32 -> vector<1x384xf32>
    %c0_37 = arith.constant 0 : index
    %492 = memref.load %arg7[%c0_37] : memref<112xf32, #tpu.memory_space<smem>>
    %493 = vector.broadcast %492 : f32 to vector<1x384xf32>
    %494 = arith.mulf %493, %488 : vector<1x384xf32>
    %c7_38 = arith.constant 7 : index
    %495 = memref.load %arg7[%c7_38] : memref<112xf32, #tpu.memory_space<smem>>
    %496 = vector.broadcast %495 : f32 to vector<1x384xf32>
    %497 = arith.mulf %496, %489 : vector<1x384xf32>
    %498 = arith.addf %494, %497 : vector<1x384xf32>
    %c14_39 = arith.constant 14 : index
    %499 = memref.load %arg7[%c14_39] : memref<112xf32, #tpu.memory_space<smem>>
    %500 = vector.broadcast %499 : f32 to vector<1x384xf32>
    %501 = arith.mulf %500, %490 : vector<1x384xf32>
    %502 = arith.addf %498, %501 : vector<1x384xf32>
    %c21_40 = arith.constant 21 : index
    %503 = memref.load %arg7[%c21_40] : memref<112xf32, #tpu.memory_space<smem>>
    %504 = vector.broadcast %503 : f32 to vector<1x384xf32>
    %505 = arith.mulf %504, %491 : vector<1x384xf32>
    %506 = arith.addf %502, %505 : vector<1x384xf32>
    %c28_41 = arith.constant 28 : index
    %507 = memref.load %arg7[%c28_41] : memref<112xf32, #tpu.memory_space<smem>>
    %508 = vector.broadcast %507 : f32 to vector<1x384xf32>
    %509 = arith.mulf %508, %488 : vector<1x384xf32>
    %c35_42 = arith.constant 35 : index
    %510 = memref.load %arg7[%c35_42] : memref<112xf32, #tpu.memory_space<smem>>
    %511 = vector.broadcast %510 : f32 to vector<1x384xf32>
    %512 = arith.mulf %511, %489 : vector<1x384xf32>
    %513 = arith.addf %509, %512 : vector<1x384xf32>
    %c42_43 = arith.constant 42 : index
    %514 = memref.load %arg7[%c42_43] : memref<112xf32, #tpu.memory_space<smem>>
    %515 = vector.broadcast %514 : f32 to vector<1x384xf32>
    %516 = arith.mulf %515, %490 : vector<1x384xf32>
    %517 = arith.addf %513, %516 : vector<1x384xf32>
    %c49_44 = arith.constant 49 : index
    %518 = memref.load %arg7[%c49_44] : memref<112xf32, #tpu.memory_space<smem>>
    %519 = vector.broadcast %518 : f32 to vector<1x384xf32>
    %520 = arith.mulf %519, %491 : vector<1x384xf32>
    %521 = arith.addf %517, %520 : vector<1x384xf32>
    %c56_45 = arith.constant 56 : index
    %522 = memref.load %arg7[%c56_45] : memref<112xf32, #tpu.memory_space<smem>>
    %523 = vector.broadcast %522 : f32 to vector<1x384xf32>
    %524 = arith.mulf %523, %488 : vector<1x384xf32>
    %c63_46 = arith.constant 63 : index
    %525 = memref.load %arg7[%c63_46] : memref<112xf32, #tpu.memory_space<smem>>
    %526 = vector.broadcast %525 : f32 to vector<1x384xf32>
    %527 = arith.mulf %526, %489 : vector<1x384xf32>
    %528 = arith.addf %524, %527 : vector<1x384xf32>
    %c70_47 = arith.constant 70 : index
    %529 = memref.load %arg7[%c70_47] : memref<112xf32, #tpu.memory_space<smem>>
    %530 = vector.broadcast %529 : f32 to vector<1x384xf32>
    %531 = arith.mulf %530, %490 : vector<1x384xf32>
    %532 = arith.addf %528, %531 : vector<1x384xf32>
    %c77_48 = arith.constant 77 : index
    %533 = memref.load %arg7[%c77_48] : memref<112xf32, #tpu.memory_space<smem>>
    %534 = vector.broadcast %533 : f32 to vector<1x384xf32>
    %535 = arith.mulf %534, %491 : vector<1x384xf32>
    %536 = arith.addf %532, %535 : vector<1x384xf32>
    %c84_49 = arith.constant 84 : index
    %537 = memref.load %arg7[%c84_49] : memref<112xf32, #tpu.memory_space<smem>>
    %538 = vector.broadcast %537 : f32 to vector<1x384xf32>
    %539 = arith.mulf %538, %488 : vector<1x384xf32>
    %c91_50 = arith.constant 91 : index
    %540 = memref.load %arg7[%c91_50] : memref<112xf32, #tpu.memory_space<smem>>
    %541 = vector.broadcast %540 : f32 to vector<1x384xf32>
    %542 = arith.mulf %541, %489 : vector<1x384xf32>
    %543 = arith.addf %539, %542 : vector<1x384xf32>
    %c98_51 = arith.constant 98 : index
    %544 = memref.load %arg7[%c98_51] : memref<112xf32, #tpu.memory_space<smem>>
    %545 = vector.broadcast %544 : f32 to vector<1x384xf32>
    %546 = arith.mulf %545, %490 : vector<1x384xf32>
    %547 = arith.addf %543, %546 : vector<1x384xf32>
    %c105_52 = arith.constant 105 : index
    %548 = memref.load %arg7[%c105_52] : memref<112xf32, #tpu.memory_space<smem>>
    %549 = vector.broadcast %548 : f32 to vector<1x384xf32>
    %550 = arith.mulf %549, %491 : vector<1x384xf32>
    %551 = arith.addf %547, %550 : vector<1x384xf32>
    %c2_i32 = arith.constant 2 : i32
    %552 = tpu.dynamic_rotate %1 by %c2_i32 dim 1 : vector<1x384xf32>, i32 -> vector<1x384xf32>
    %c2_i32_53 = arith.constant 2 : i32
    %553 = tpu.dynamic_rotate %3 by %c2_i32_53 dim 1 : vector<1x384xf32>, i32 -> vector<1x384xf32>
    %c2_i32_54 = arith.constant 2 : i32
    %554 = tpu.dynamic_rotate %5 by %c2_i32_54 dim 1 : vector<1x384xf32>, i32 -> vector<1x384xf32>
    %c2_i32_55 = arith.constant 2 : i32
    %555 = tpu.dynamic_rotate %7 by %c2_i32_55 dim 1 : vector<1x384xf32>, i32 -> vector<1x384xf32>
    %c1_56 = arith.constant 1 : index
    %556 = memref.load %arg7[%c1_56] : memref<112xf32, #tpu.memory_space<smem>>
    %557 = vector.broadcast %556 : f32 to vector<1x384xf32>
    %558 = arith.mulf %557, %552 : vector<1x384xf32>
    %559 = arith.addf %506, %558 : vector<1x384xf32>
    %c8_57 = arith.constant 8 : index
    %560 = memref.load %arg7[%c8_57] : memref<112xf32, #tpu.memory_space<smem>>
    %561 = vector.broadcast %560 : f32 to vector<1x384xf32>
    %562 = arith.mulf %561, %553 : vector<1x384xf32>
    %563 = arith.addf %559, %562 : vector<1x384xf32>
    %c15_58 = arith.constant 15 : index
    %564 = memref.load %arg7[%c15_58] : memref<112xf32, #tpu.memory_space<smem>>
    %565 = vector.broadcast %564 : f32 to vector<1x384xf32>
    %566 = arith.mulf %565, %554 : vector<1x384xf32>
    %567 = arith.addf %563, %566 : vector<1x384xf32>
    %c22_59 = arith.constant 22 : index
    %568 = memref.load %arg7[%c22_59] : memref<112xf32, #tpu.memory_space<smem>>
    %569 = vector.broadcast %568 : f32 to vector<1x384xf32>
    %570 = arith.mulf %569, %555 : vector<1x384xf32>
    %571 = arith.addf %567, %570 : vector<1x384xf32>
    %c29_60 = arith.constant 29 : index
    %572 = memref.load %arg7[%c29_60] : memref<112xf32, #tpu.memory_space<smem>>
    %573 = vector.broadcast %572 : f32 to vector<1x384xf32>
    %574 = arith.mulf %573, %552 : vector<1x384xf32>
    %575 = arith.addf %521, %574 : vector<1x384xf32>
    %c36_61 = arith.constant 36 : index
    %576 = memref.load %arg7[%c36_61] : memref<112xf32, #tpu.memory_space<smem>>
    %577 = vector.broadcast %576 : f32 to vector<1x384xf32>
    %578 = arith.mulf %577, %553 : vector<1x384xf32>
    %579 = arith.addf %575, %578 : vector<1x384xf32>
    %c43_62 = arith.constant 43 : index
    %580 = memref.load %arg7[%c43_62] : memref<112xf32, #tpu.memory_space<smem>>
    %581 = vector.broadcast %580 : f32 to vector<1x384xf32>
    %582 = arith.mulf %581, %554 : vector<1x384xf32>
    %583 = arith.addf %579, %582 : vector<1x384xf32>
    %c50_63 = arith.constant 50 : index
    %584 = memref.load %arg7[%c50_63] : memref<112xf32, #tpu.memory_space<smem>>
    %585 = vector.broadcast %584 : f32 to vector<1x384xf32>
    %586 = arith.mulf %585, %555 : vector<1x384xf32>
    %587 = arith.addf %583, %586 : vector<1x384xf32>
    %c57_64 = arith.constant 57 : index
    %588 = memref.load %arg7[%c57_64] : memref<112xf32, #tpu.memory_space<smem>>
    %589 = vector.broadcast %588 : f32 to vector<1x384xf32>
    %590 = arith.mulf %589, %552 : vector<1x384xf32>
    %591 = arith.addf %536, %590 : vector<1x384xf32>
    %c64_65 = arith.constant 64 : index
    %592 = memref.load %arg7[%c64_65] : memref<112xf32, #tpu.memory_space<smem>>
    %593 = vector.broadcast %592 : f32 to vector<1x384xf32>
    %594 = arith.mulf %593, %553 : vector<1x384xf32>
    %595 = arith.addf %591, %594 : vector<1x384xf32>
    %c71_66 = arith.constant 71 : index
    %596 = memref.load %arg7[%c71_66] : memref<112xf32, #tpu.memory_space<smem>>
    %597 = vector.broadcast %596 : f32 to vector<1x384xf32>
    %598 = arith.mulf %597, %554 : vector<1x384xf32>
    %599 = arith.addf %595, %598 : vector<1x384xf32>
    %c78_67 = arith.constant 78 : index
    %600 = memref.load %arg7[%c78_67] : memref<112xf32, #tpu.memory_space<smem>>
    %601 = vector.broadcast %600 : f32 to vector<1x384xf32>
    %602 = arith.mulf %601, %555 : vector<1x384xf32>
    %603 = arith.addf %599, %602 : vector<1x384xf32>
    %c85_68 = arith.constant 85 : index
    %604 = memref.load %arg7[%c85_68] : memref<112xf32, #tpu.memory_space<smem>>
    %605 = vector.broadcast %604 : f32 to vector<1x384xf32>
    %606 = arith.mulf %605, %552 : vector<1x384xf32>
    %607 = arith.addf %551, %606 : vector<1x384xf32>
    %c92_69 = arith.constant 92 : index
    %608 = memref.load %arg7[%c92_69] : memref<112xf32, #tpu.memory_space<smem>>
    %609 = vector.broadcast %608 : f32 to vector<1x384xf32>
    %610 = arith.mulf %609, %553 : vector<1x384xf32>
    %611 = arith.addf %607, %610 : vector<1x384xf32>
    %c99_70 = arith.constant 99 : index
    %612 = memref.load %arg7[%c99_70] : memref<112xf32, #tpu.memory_space<smem>>
    %613 = vector.broadcast %612 : f32 to vector<1x384xf32>
    %614 = arith.mulf %613, %554 : vector<1x384xf32>
    %615 = arith.addf %611, %614 : vector<1x384xf32>
    %c106_71 = arith.constant 106 : index
    %616 = memref.load %arg7[%c106_71] : memref<112xf32, #tpu.memory_space<smem>>
    %617 = vector.broadcast %616 : f32 to vector<1x384xf32>
    %618 = arith.mulf %617, %555 : vector<1x384xf32>
    %619 = arith.addf %615, %618 : vector<1x384xf32>
    %c1_i32 = arith.constant 1 : i32
    %620 = tpu.dynamic_rotate %1 by %c1_i32 dim 1 : vector<1x384xf32>, i32 -> vector<1x384xf32>
    %c1_i32_72 = arith.constant 1 : i32
    %621 = tpu.dynamic_rotate %3 by %c1_i32_72 dim 1 : vector<1x384xf32>, i32 -> vector<1x384xf32>
    %c1_i32_73 = arith.constant 1 : i32
    %622 = tpu.dynamic_rotate %5 by %c1_i32_73 dim 1 : vector<1x384xf32>, i32 -> vector<1x384xf32>
    %c1_i32_74 = arith.constant 1 : i32
    %623 = tpu.dynamic_rotate %7 by %c1_i32_74 dim 1 : vector<1x384xf32>, i32 -> vector<1x384xf32>
    %c2_75 = arith.constant 2 : index
    %624 = memref.load %arg7[%c2_75] : memref<112xf32, #tpu.memory_space<smem>>
    %625 = vector.broadcast %624 : f32 to vector<1x384xf32>
    %626 = arith.mulf %625, %620 : vector<1x384xf32>
    %627 = arith.addf %571, %626 : vector<1x384xf32>
    %c9_76 = arith.constant 9 : index
    %628 = memref.load %arg7[%c9_76] : memref<112xf32, #tpu.memory_space<smem>>
    %629 = vector.broadcast %628 : f32 to vector<1x384xf32>
    %630 = arith.mulf %629, %621 : vector<1x384xf32>
    %631 = arith.addf %627, %630 : vector<1x384xf32>
    %c16_77 = arith.constant 16 : index
    %632 = memref.load %arg7[%c16_77] : memref<112xf32, #tpu.memory_space<smem>>
    %633 = vector.broadcast %632 : f32 to vector<1x384xf32>
    %634 = arith.mulf %633, %622 : vector<1x384xf32>
    %635 = arith.addf %631, %634 : vector<1x384xf32>
    %c23_78 = arith.constant 23 : index
    %636 = memref.load %arg7[%c23_78] : memref<112xf32, #tpu.memory_space<smem>>
    %637 = vector.broadcast %636 : f32 to vector<1x384xf32>
    %638 = arith.mulf %637, %623 : vector<1x384xf32>
    %639 = arith.addf %635, %638 : vector<1x384xf32>
    %c30_79 = arith.constant 30 : index
    %640 = memref.load %arg7[%c30_79] : memref<112xf32, #tpu.memory_space<smem>>
    %641 = vector.broadcast %640 : f32 to vector<1x384xf32>
    %642 = arith.mulf %641, %620 : vector<1x384xf32>
    %643 = arith.addf %587, %642 : vector<1x384xf32>
    %c37_80 = arith.constant 37 : index
    %644 = memref.load %arg7[%c37_80] : memref<112xf32, #tpu.memory_space<smem>>
    %645 = vector.broadcast %644 : f32 to vector<1x384xf32>
    %646 = arith.mulf %645, %621 : vector<1x384xf32>
    %647 = arith.addf %643, %646 : vector<1x384xf32>
    %c44_81 = arith.constant 44 : index
    %648 = memref.load %arg7[%c44_81] : memref<112xf32, #tpu.memory_space<smem>>
    %649 = vector.broadcast %648 : f32 to vector<1x384xf32>
    %650 = arith.mulf %649, %622 : vector<1x384xf32>
    %651 = arith.addf %647, %650 : vector<1x384xf32>
    %c51_82 = arith.constant 51 : index
    %652 = memref.load %arg7[%c51_82] : memref<112xf32, #tpu.memory_space<smem>>
    %653 = vector.broadcast %652 : f32 to vector<1x384xf32>
    %654 = arith.mulf %653, %623 : vector<1x384xf32>
    %655 = arith.addf %651, %654 : vector<1x384xf32>
    %c58_83 = arith.constant 58 : index
    %656 = memref.load %arg7[%c58_83] : memref<112xf32, #tpu.memory_space<smem>>
    %657 = vector.broadcast %656 : f32 to vector<1x384xf32>
    %658 = arith.mulf %657, %620 : vector<1x384xf32>
    %659 = arith.addf %603, %658 : vector<1x384xf32>
    %c65_84 = arith.constant 65 : index
    %660 = memref.load %arg7[%c65_84] : memref<112xf32, #tpu.memory_space<smem>>
    %661 = vector.broadcast %660 : f32 to vector<1x384xf32>
    %662 = arith.mulf %661, %621 : vector<1x384xf32>
    %663 = arith.addf %659, %662 : vector<1x384xf32>
    %c72_85 = arith.constant 72 : index
    %664 = memref.load %arg7[%c72_85] : memref<112xf32, #tpu.memory_space<smem>>
    %665 = vector.broadcast %664 : f32 to vector<1x384xf32>
    %666 = arith.mulf %665, %622 : vector<1x384xf32>
    %667 = arith.addf %663, %666 : vector<1x384xf32>
    %c79_86 = arith.constant 79 : index
    %668 = memref.load %arg7[%c79_86] : memref<112xf32, #tpu.memory_space<smem>>
    %669 = vector.broadcast %668 : f32 to vector<1x384xf32>
    %670 = arith.mulf %669, %623 : vector<1x384xf32>
    %671 = arith.addf %667, %670 : vector<1x384xf32>
    %c86_87 = arith.constant 86 : index
    %672 = memref.load %arg7[%c86_87] : memref<112xf32, #tpu.memory_space<smem>>
    %673 = vector.broadcast %672 : f32 to vector<1x384xf32>
    %674 = arith.mulf %673, %620 : vector<1x384xf32>
    %675 = arith.addf %619, %674 : vector<1x384xf32>
    %c93_88 = arith.constant 93 : index
    %676 = memref.load %arg7[%c93_88] : memref<112xf32, #tpu.memory_space<smem>>
    %677 = vector.broadcast %676 : f32 to vector<1x384xf32>
    %678 = arith.mulf %677, %621 : vector<1x384xf32>
    %679 = arith.addf %675, %678 : vector<1x384xf32>
    %c100_89 = arith.constant 100 : index
    %680 = memref.load %arg7[%c100_89] : memref<112xf32, #tpu.memory_space<smem>>
    %681 = vector.broadcast %680 : f32 to vector<1x384xf32>
    %682 = arith.mulf %681, %622 : vector<1x384xf32>
    %683 = arith.addf %679, %682 : vector<1x384xf32>
    %c107_90 = arith.constant 107 : index
    %684 = memref.load %arg7[%c107_90] : memref<112xf32, #tpu.memory_space<smem>>
    %685 = vector.broadcast %684 : f32 to vector<1x384xf32>
    %686 = arith.mulf %685, %623 : vector<1x384xf32>
    %687 = arith.addf %683, %686 : vector<1x384xf32>
    %c3_91 = arith.constant 3 : index
    %688 = memref.load %arg7[%c3_91] : memref<112xf32, #tpu.memory_space<smem>>
    %689 = vector.broadcast %688 : f32 to vector<1x384xf32>
    %690 = arith.mulf %689, %1 : vector<1x384xf32>
    %691 = arith.addf %639, %690 : vector<1x384xf32>
    %c10_92 = arith.constant 10 : index
    %692 = memref.load %arg7[%c10_92] : memref<112xf32, #tpu.memory_space<smem>>
    %693 = vector.broadcast %692 : f32 to vector<1x384xf32>
    %694 = arith.mulf %693, %3 : vector<1x384xf32>
    %695 = arith.addf %691, %694 : vector<1x384xf32>
    %c17_93 = arith.constant 17 : index
    %696 = memref.load %arg7[%c17_93] : memref<112xf32, #tpu.memory_space<smem>>
    %697 = vector.broadcast %696 : f32 to vector<1x384xf32>
    %698 = arith.mulf %697, %5 : vector<1x384xf32>
    %699 = arith.addf %695, %698 : vector<1x384xf32>
    %c24_94 = arith.constant 24 : index
    %700 = memref.load %arg7[%c24_94] : memref<112xf32, #tpu.memory_space<smem>>
    %701 = vector.broadcast %700 : f32 to vector<1x384xf32>
    %702 = arith.mulf %701, %7 : vector<1x384xf32>
    %703 = arith.addf %699, %702 : vector<1x384xf32>
    %c31_95 = arith.constant 31 : index
    %704 = memref.load %arg7[%c31_95] : memref<112xf32, #tpu.memory_space<smem>>
    %705 = vector.broadcast %704 : f32 to vector<1x384xf32>
    %706 = arith.mulf %705, %1 : vector<1x384xf32>
    %707 = arith.addf %655, %706 : vector<1x384xf32>
    %c38_96 = arith.constant 38 : index
    %708 = memref.load %arg7[%c38_96] : memref<112xf32, #tpu.memory_space<smem>>
    %709 = vector.broadcast %708 : f32 to vector<1x384xf32>
    %710 = arith.mulf %709, %3 : vector<1x384xf32>
    %711 = arith.addf %707, %710 : vector<1x384xf32>
    %c45_97 = arith.constant 45 : index
    %712 = memref.load %arg7[%c45_97] : memref<112xf32, #tpu.memory_space<smem>>
    %713 = vector.broadcast %712 : f32 to vector<1x384xf32>
    %714 = arith.mulf %713, %5 : vector<1x384xf32>
    %715 = arith.addf %711, %714 : vector<1x384xf32>
    %c52_98 = arith.constant 52 : index
    %716 = memref.load %arg7[%c52_98] : memref<112xf32, #tpu.memory_space<smem>>
    %717 = vector.broadcast %716 : f32 to vector<1x384xf32>
    %718 = arith.mulf %717, %7 : vector<1x384xf32>
    %719 = arith.addf %715, %718 : vector<1x384xf32>
    %c59_99 = arith.constant 59 : index
    %720 = memref.load %arg7[%c59_99] : memref<112xf32, #tpu.memory_space<smem>>
    %721 = vector.broadcast %720 : f32 to vector<1x384xf32>
    %722 = arith.mulf %721, %1 : vector<1x384xf32>
    %723 = arith.addf %671, %722 : vector<1x384xf32>
    %c66_100 = arith.constant 66 : index
    %724 = memref.load %arg7[%c66_100] : memref<112xf32, #tpu.memory_space<smem>>
    %725 = vector.broadcast %724 : f32 to vector<1x384xf32>
    %726 = arith.mulf %725, %3 : vector<1x384xf32>
    %727 = arith.addf %723, %726 : vector<1x384xf32>
    %c73_101 = arith.constant 73 : index
    %728 = memref.load %arg7[%c73_101] : memref<112xf32, #tpu.memory_space<smem>>
    %729 = vector.broadcast %728 : f32 to vector<1x384xf32>
    %730 = arith.mulf %729, %5 : vector<1x384xf32>
    %731 = arith.addf %727, %730 : vector<1x384xf32>
    %c80_102 = arith.constant 80 : index
    %732 = memref.load %arg7[%c80_102] : memref<112xf32, #tpu.memory_space<smem>>
    %733 = vector.broadcast %732 : f32 to vector<1x384xf32>
    %734 = arith.mulf %733, %7 : vector<1x384xf32>
    %735 = arith.addf %731, %734 : vector<1x384xf32>
    %c87_103 = arith.constant 87 : index
    %736 = memref.load %arg7[%c87_103] : memref<112xf32, #tpu.memory_space<smem>>
    %737 = vector.broadcast %736 : f32 to vector<1x384xf32>
    %738 = arith.mulf %737, %1 : vector<1x384xf32>
    %739 = arith.addf %687, %738 : vector<1x384xf32>
    %c94_104 = arith.constant 94 : index
    %740 = memref.load %arg7[%c94_104] : memref<112xf32, #tpu.memory_space<smem>>
    %741 = vector.broadcast %740 : f32 to vector<1x384xf32>
    %742 = arith.mulf %741, %3 : vector<1x384xf32>
    %743 = arith.addf %739, %742 : vector<1x384xf32>
    %c101_105 = arith.constant 101 : index
    %744 = memref.load %arg7[%c101_105] : memref<112xf32, #tpu.memory_space<smem>>
    %745 = vector.broadcast %744 : f32 to vector<1x384xf32>
    %746 = arith.mulf %745, %5 : vector<1x384xf32>
    %747 = arith.addf %743, %746 : vector<1x384xf32>
    %c108_106 = arith.constant 108 : index
    %748 = memref.load %arg7[%c108_106] : memref<112xf32, #tpu.memory_space<smem>>
    %749 = vector.broadcast %748 : f32 to vector<1x384xf32>
    %750 = arith.mulf %749, %7 : vector<1x384xf32>
    %751 = arith.addf %747, %750 : vector<1x384xf32>
    %c383_i32 = arith.constant 383 : i32
    %752 = tpu.dynamic_rotate %1 by %c383_i32 dim 1 : vector<1x384xf32>, i32 -> vector<1x384xf32>
    %c383_i32_107 = arith.constant 383 : i32
    %753 = tpu.dynamic_rotate %3 by %c383_i32_107 dim 1 : vector<1x384xf32>, i32 -> vector<1x384xf32>
    %c383_i32_108 = arith.constant 383 : i32
    %754 = tpu.dynamic_rotate %5 by %c383_i32_108 dim 1 : vector<1x384xf32>, i32 -> vector<1x384xf32>
    %c383_i32_109 = arith.constant 383 : i32
    %755 = tpu.dynamic_rotate %7 by %c383_i32_109 dim 1 : vector<1x384xf32>, i32 -> vector<1x384xf32>
    %c4_110 = arith.constant 4 : index
    %756 = memref.load %arg7[%c4_110] : memref<112xf32, #tpu.memory_space<smem>>
    %757 = vector.broadcast %756 : f32 to vector<1x384xf32>
    %758 = arith.mulf %757, %752 : vector<1x384xf32>
    %759 = arith.addf %703, %758 : vector<1x384xf32>
    %c11_111 = arith.constant 11 : index
    %760 = memref.load %arg7[%c11_111] : memref<112xf32, #tpu.memory_space<smem>>
    %761 = vector.broadcast %760 : f32 to vector<1x384xf32>
    %762 = arith.mulf %761, %753 : vector<1x384xf32>
    %763 = arith.addf %759, %762 : vector<1x384xf32>
    %c18_112 = arith.constant 18 : index
    %764 = memref.load %arg7[%c18_112] : memref<112xf32, #tpu.memory_space<smem>>
    %765 = vector.broadcast %764 : f32 to vector<1x384xf32>
    %766 = arith.mulf %765, %754 : vector<1x384xf32>
    %767 = arith.addf %763, %766 : vector<1x384xf32>
    %c25_113 = arith.constant 25 : index
    %768 = memref.load %arg7[%c25_113] : memref<112xf32, #tpu.memory_space<smem>>
    %769 = vector.broadcast %768 : f32 to vector<1x384xf32>
    %770 = arith.mulf %769, %755 : vector<1x384xf32>
    %771 = arith.addf %767, %770 : vector<1x384xf32>
    %c32_114 = arith.constant 32 : index
    %772 = memref.load %arg7[%c32_114] : memref<112xf32, #tpu.memory_space<smem>>
    %773 = vector.broadcast %772 : f32 to vector<1x384xf32>
    %774 = arith.mulf %773, %752 : vector<1x384xf32>
    %775 = arith.addf %719, %774 : vector<1x384xf32>
    %c39_115 = arith.constant 39 : index
    %776 = memref.load %arg7[%c39_115] : memref<112xf32, #tpu.memory_space<smem>>
    %777 = vector.broadcast %776 : f32 to vector<1x384xf32>
    %778 = arith.mulf %777, %753 : vector<1x384xf32>
    %779 = arith.addf %775, %778 : vector<1x384xf32>
    %c46_116 = arith.constant 46 : index
    %780 = memref.load %arg7[%c46_116] : memref<112xf32, #tpu.memory_space<smem>>
    %781 = vector.broadcast %780 : f32 to vector<1x384xf32>
    %782 = arith.mulf %781, %754 : vector<1x384xf32>
    %783 = arith.addf %779, %782 : vector<1x384xf32>
    %c53_117 = arith.constant 53 : index
    %784 = memref.load %arg7[%c53_117] : memref<112xf32, #tpu.memory_space<smem>>
    %785 = vector.broadcast %784 : f32 to vector<1x384xf32>
    %786 = arith.mulf %785, %755 : vector<1x384xf32>
    %787 = arith.addf %783, %786 : vector<1x384xf32>
    %c60_118 = arith.constant 60 : index
    %788 = memref.load %arg7[%c60_118] : memref<112xf32, #tpu.memory_space<smem>>
    %789 = vector.broadcast %788 : f32 to vector<1x384xf32>
    %790 = arith.mulf %789, %752 : vector<1x384xf32>
    %791 = arith.addf %735, %790 : vector<1x384xf32>
    %c67_119 = arith.constant 67 : index
    %792 = memref.load %arg7[%c67_119] : memref<112xf32, #tpu.memory_space<smem>>
    %793 = vector.broadcast %792 : f32 to vector<1x384xf32>
    %794 = arith.mulf %793, %753 : vector<1x384xf32>
    %795 = arith.addf %791, %794 : vector<1x384xf32>
    %c74_120 = arith.constant 74 : index
    %796 = memref.load %arg7[%c74_120] : memref<112xf32, #tpu.memory_space<smem>>
    %797 = vector.broadcast %796 : f32 to vector<1x384xf32>
    %798 = arith.mulf %797, %754 : vector<1x384xf32>
    %799 = arith.addf %795, %798 : vector<1x384xf32>
    %c81_121 = arith.constant 81 : index
    %800 = memref.load %arg7[%c81_121] : memref<112xf32, #tpu.memory_space<smem>>
    %801 = vector.broadcast %800 : f32 to vector<1x384xf32>
    %802 = arith.mulf %801, %755 : vector<1x384xf32>
    %803 = arith.addf %799, %802 : vector<1x384xf32>
    %c88_122 = arith.constant 88 : index
    %804 = memref.load %arg7[%c88_122] : memref<112xf32, #tpu.memory_space<smem>>
    %805 = vector.broadcast %804 : f32 to vector<1x384xf32>
    %806 = arith.mulf %805, %752 : vector<1x384xf32>
    %807 = arith.addf %751, %806 : vector<1x384xf32>
    %c95_123 = arith.constant 95 : index
    %808 = memref.load %arg7[%c95_123] : memref<112xf32, #tpu.memory_space<smem>>
    %809 = vector.broadcast %808 : f32 to vector<1x384xf32>
    %810 = arith.mulf %809, %753 : vector<1x384xf32>
    %811 = arith.addf %807, %810 : vector<1x384xf32>
    %c102_124 = arith.constant 102 : index
    %812 = memref.load %arg7[%c102_124] : memref<112xf32, #tpu.memory_space<smem>>
    %813 = vector.broadcast %812 : f32 to vector<1x384xf32>
    %814 = arith.mulf %813, %754 : vector<1x384xf32>
    %815 = arith.addf %811, %814 : vector<1x384xf32>
    %c109_125 = arith.constant 109 : index
    %816 = memref.load %arg7[%c109_125] : memref<112xf32, #tpu.memory_space<smem>>
    %817 = vector.broadcast %816 : f32 to vector<1x384xf32>
    %818 = arith.mulf %817, %755 : vector<1x384xf32>
    %819 = arith.addf %815, %818 : vector<1x384xf32>
    %c382_i32 = arith.constant 382 : i32
    %820 = tpu.dynamic_rotate %1 by %c382_i32 dim 1 : vector<1x384xf32>, i32 -> vector<1x384xf32>
    %c382_i32_126 = arith.constant 382 : i32
    %821 = tpu.dynamic_rotate %3 by %c382_i32_126 dim 1 : vector<1x384xf32>, i32 -> vector<1x384xf32>
    %c382_i32_127 = arith.constant 382 : i32
    %822 = tpu.dynamic_rotate %5 by %c382_i32_127 dim 1 : vector<1x384xf32>, i32 -> vector<1x384xf32>
    %c382_i32_128 = arith.constant 382 : i32
    %823 = tpu.dynamic_rotate %7 by %c382_i32_128 dim 1 : vector<1x384xf32>, i32 -> vector<1x384xf32>
    %c5_129 = arith.constant 5 : index
    %824 = memref.load %arg7[%c5_129] : memref<112xf32, #tpu.memory_space<smem>>
    %825 = vector.broadcast %824 : f32 to vector<1x384xf32>
    %826 = arith.mulf %825, %820 : vector<1x384xf32>
    %827 = arith.addf %771, %826 : vector<1x384xf32>
    %c12_130 = arith.constant 12 : index
    %828 = memref.load %arg7[%c12_130] : memref<112xf32, #tpu.memory_space<smem>>
    %829 = vector.broadcast %828 : f32 to vector<1x384xf32>
    %830 = arith.mulf %829, %821 : vector<1x384xf32>
    %831 = arith.addf %827, %830 : vector<1x384xf32>
    %c19_131 = arith.constant 19 : index
    %832 = memref.load %arg7[%c19_131] : memref<112xf32, #tpu.memory_space<smem>>
    %833 = vector.broadcast %832 : f32 to vector<1x384xf32>
    %834 = arith.mulf %833, %822 : vector<1x384xf32>
    %835 = arith.addf %831, %834 : vector<1x384xf32>
    %c26_132 = arith.constant 26 : index
    %836 = memref.load %arg7[%c26_132] : memref<112xf32, #tpu.memory_space<smem>>
    %837 = vector.broadcast %836 : f32 to vector<1x384xf32>
    %838 = arith.mulf %837, %823 : vector<1x384xf32>
    %839 = arith.addf %835, %838 : vector<1x384xf32>
    %c33_133 = arith.constant 33 : index
    %840 = memref.load %arg7[%c33_133] : memref<112xf32, #tpu.memory_space<smem>>
    %841 = vector.broadcast %840 : f32 to vector<1x384xf32>
    %842 = arith.mulf %841, %820 : vector<1x384xf32>
    %843 = arith.addf %787, %842 : vector<1x384xf32>
    %c40_134 = arith.constant 40 : index
    %844 = memref.load %arg7[%c40_134] : memref<112xf32, #tpu.memory_space<smem>>
    %845 = vector.broadcast %844 : f32 to vector<1x384xf32>
    %846 = arith.mulf %845, %821 : vector<1x384xf32>
    %847 = arith.addf %843, %846 : vector<1x384xf32>
    %c47_135 = arith.constant 47 : index
    %848 = memref.load %arg7[%c47_135] : memref<112xf32, #tpu.memory_space<smem>>
    %849 = vector.broadcast %848 : f32 to vector<1x384xf32>
    %850 = arith.mulf %849, %822 : vector<1x384xf32>
    %851 = arith.addf %847, %850 : vector<1x384xf32>
    %c54_136 = arith.constant 54 : index
    %852 = memref.load %arg7[%c54_136] : memref<112xf32, #tpu.memory_space<smem>>
    %853 = vector.broadcast %852 : f32 to vector<1x384xf32>
    %854 = arith.mulf %853, %823 : vector<1x384xf32>
    %855 = arith.addf %851, %854 : vector<1x384xf32>
    %c61_137 = arith.constant 61 : index
    %856 = memref.load %arg7[%c61_137] : memref<112xf32, #tpu.memory_space<smem>>
    %857 = vector.broadcast %856 : f32 to vector<1x384xf32>
    %858 = arith.mulf %857, %820 : vector<1x384xf32>
    %859 = arith.addf %803, %858 : vector<1x384xf32>
    %c68_138 = arith.constant 68 : index
    %860 = memref.load %arg7[%c68_138] : memref<112xf32, #tpu.memory_space<smem>>
    %861 = vector.broadcast %860 : f32 to vector<1x384xf32>
    %862 = arith.mulf %861, %821 : vector<1x384xf32>
    %863 = arith.addf %859, %862 : vector<1x384xf32>
    %c75_139 = arith.constant 75 : index
    %864 = memref.load %arg7[%c75_139] : memref<112xf32, #tpu.memory_space<smem>>
    %865 = vector.broadcast %864 : f32 to vector<1x384xf32>
    %866 = arith.mulf %865, %822 : vector<1x384xf32>
    %867 = arith.addf %863, %866 : vector<1x384xf32>
    %c82_140 = arith.constant 82 : index
    %868 = memref.load %arg7[%c82_140] : memref<112xf32, #tpu.memory_space<smem>>
    %869 = vector.broadcast %868 : f32 to vector<1x384xf32>
    %870 = arith.mulf %869, %823 : vector<1x384xf32>
    %871 = arith.addf %867, %870 : vector<1x384xf32>
    %c89_141 = arith.constant 89 : index
    %872 = memref.load %arg7[%c89_141] : memref<112xf32, #tpu.memory_space<smem>>
    %873 = vector.broadcast %872 : f32 to vector<1x384xf32>
    %874 = arith.mulf %873, %820 : vector<1x384xf32>
    %875 = arith.addf %819, %874 : vector<1x384xf32>
    %c96_142 = arith.constant 96 : index
    %876 = memref.load %arg7[%c96_142] : memref<112xf32, #tpu.memory_space<smem>>
    %877 = vector.broadcast %876 : f32 to vector<1x384xf32>
    %878 = arith.mulf %877, %821 : vector<1x384xf32>
    %879 = arith.addf %875, %878 : vector<1x384xf32>
    %c103_143 = arith.constant 103 : index
    %880 = memref.load %arg7[%c103_143] : memref<112xf32, #tpu.memory_space<smem>>
    %881 = vector.broadcast %880 : f32 to vector<1x384xf32>
    %882 = arith.mulf %881, %822 : vector<1x384xf32>
    %883 = arith.addf %879, %882 : vector<1x384xf32>
    %c110_144 = arith.constant 110 : index
    %884 = memref.load %arg7[%c110_144] : memref<112xf32, #tpu.memory_space<smem>>
    %885 = vector.broadcast %884 : f32 to vector<1x384xf32>
    %886 = arith.mulf %885, %823 : vector<1x384xf32>
    %887 = arith.addf %883, %886 : vector<1x384xf32>
    %c381_i32 = arith.constant 381 : i32
    %888 = tpu.dynamic_rotate %1 by %c381_i32 dim 1 : vector<1x384xf32>, i32 -> vector<1x384xf32>
    %c381_i32_145 = arith.constant 381 : i32
    %889 = tpu.dynamic_rotate %3 by %c381_i32_145 dim 1 : vector<1x384xf32>, i32 -> vector<1x384xf32>
    %c381_i32_146 = arith.constant 381 : i32
    %890 = tpu.dynamic_rotate %5 by %c381_i32_146 dim 1 : vector<1x384xf32>, i32 -> vector<1x384xf32>
    %c381_i32_147 = arith.constant 381 : i32
    %891 = tpu.dynamic_rotate %7 by %c381_i32_147 dim 1 : vector<1x384xf32>, i32 -> vector<1x384xf32>
    %c6_148 = arith.constant 6 : index
    %892 = memref.load %arg7[%c6_148] : memref<112xf32, #tpu.memory_space<smem>>
    %893 = vector.broadcast %892 : f32 to vector<1x384xf32>
    %894 = arith.mulf %893, %888 : vector<1x384xf32>
    %895 = arith.addf %839, %894 : vector<1x384xf32>
    %c13_149 = arith.constant 13 : index
    %896 = memref.load %arg7[%c13_149] : memref<112xf32, #tpu.memory_space<smem>>
    %897 = vector.broadcast %896 : f32 to vector<1x384xf32>
    %898 = arith.mulf %897, %889 : vector<1x384xf32>
    %899 = arith.addf %895, %898 : vector<1x384xf32>
    %c20_150 = arith.constant 20 : index
    %900 = memref.load %arg7[%c20_150] : memref<112xf32, #tpu.memory_space<smem>>
    %901 = vector.broadcast %900 : f32 to vector<1x384xf32>
    %902 = arith.mulf %901, %890 : vector<1x384xf32>
    %903 = arith.addf %899, %902 : vector<1x384xf32>
    %c27_151 = arith.constant 27 : index
    %904 = memref.load %arg7[%c27_151] : memref<112xf32, #tpu.memory_space<smem>>
    %905 = vector.broadcast %904 : f32 to vector<1x384xf32>
    %906 = arith.mulf %905, %891 : vector<1x384xf32>
    %907 = arith.addf %903, %906 : vector<1x384xf32>
    %c34_152 = arith.constant 34 : index
    %908 = memref.load %arg7[%c34_152] : memref<112xf32, #tpu.memory_space<smem>>
    %909 = vector.broadcast %908 : f32 to vector<1x384xf32>
    %910 = arith.mulf %909, %888 : vector<1x384xf32>
    %911 = arith.addf %855, %910 : vector<1x384xf32>
    %c41_153 = arith.constant 41 : index
    %912 = memref.load %arg7[%c41_153] : memref<112xf32, #tpu.memory_space<smem>>
    %913 = vector.broadcast %912 : f32 to vector<1x384xf32>
    %914 = arith.mulf %913, %889 : vector<1x384xf32>
    %915 = arith.addf %911, %914 : vector<1x384xf32>
    %c48_154 = arith.constant 48 : index
    %916 = memref.load %arg7[%c48_154] : memref<112xf32, #tpu.memory_space<smem>>
    %917 = vector.broadcast %916 : f32 to vector<1x384xf32>
    %918 = arith.mulf %917, %890 : vector<1x384xf32>
    %919 = arith.addf %915, %918 : vector<1x384xf32>
    %c55_155 = arith.constant 55 : index
    %920 = memref.load %arg7[%c55_155] : memref<112xf32, #tpu.memory_space<smem>>
    %921 = vector.broadcast %920 : f32 to vector<1x384xf32>
    %922 = arith.mulf %921, %891 : vector<1x384xf32>
    %923 = arith.addf %919, %922 : vector<1x384xf32>
    %c62_156 = arith.constant 62 : index
    %924 = memref.load %arg7[%c62_156] : memref<112xf32, #tpu.memory_space<smem>>
    %925 = vector.broadcast %924 : f32 to vector<1x384xf32>
    %926 = arith.mulf %925, %888 : vector<1x384xf32>
    %927 = arith.addf %871, %926 : vector<1x384xf32>
    %c69_157 = arith.constant 69 : index
    %928 = memref.load %arg7[%c69_157] : memref<112xf32, #tpu.memory_space<smem>>
    %929 = vector.broadcast %928 : f32 to vector<1x384xf32>
    %930 = arith.mulf %929, %889 : vector<1x384xf32>
    %931 = arith.addf %927, %930 : vector<1x384xf32>
    %c76_158 = arith.constant 76 : index
    %932 = memref.load %arg7[%c76_158] : memref<112xf32, #tpu.memory_space<smem>>
    %933 = vector.broadcast %932 : f32 to vector<1x384xf32>
    %934 = arith.mulf %933, %890 : vector<1x384xf32>
    %935 = arith.addf %931, %934 : vector<1x384xf32>
    %c83_159 = arith.constant 83 : index
    %936 = memref.load %arg7[%c83_159] : memref<112xf32, #tpu.memory_space<smem>>
    %937 = vector.broadcast %936 : f32 to vector<1x384xf32>
    %938 = arith.mulf %937, %891 : vector<1x384xf32>
    %939 = arith.addf %935, %938 : vector<1x384xf32>
    %c90_160 = arith.constant 90 : index
    %940 = memref.load %arg7[%c90_160] : memref<112xf32, #tpu.memory_space<smem>>
    %941 = vector.broadcast %940 : f32 to vector<1x384xf32>
    %942 = arith.mulf %941, %888 : vector<1x384xf32>
    %943 = arith.addf %887, %942 : vector<1x384xf32>
    %c97_161 = arith.constant 97 : index
    %944 = memref.load %arg7[%c97_161] : memref<112xf32, #tpu.memory_space<smem>>
    %945 = vector.broadcast %944 : f32 to vector<1x384xf32>
    %946 = arith.mulf %945, %889 : vector<1x384xf32>
    %947 = arith.addf %943, %946 : vector<1x384xf32>
    %c104_162 = arith.constant 104 : index
    %948 = memref.load %arg7[%c104_162] : memref<112xf32, #tpu.memory_space<smem>>
    %949 = vector.broadcast %948 : f32 to vector<1x384xf32>
    %950 = arith.mulf %949, %890 : vector<1x384xf32>
    %951 = arith.addf %947, %950 : vector<1x384xf32>
    %c111_163 = arith.constant 111 : index
    %952 = memref.load %arg7[%c111_163] : memref<112xf32, #tpu.memory_space<smem>>
    %953 = vector.broadcast %952 : f32 to vector<1x384xf32>
    %954 = arith.mulf %953, %891 : vector<1x384xf32>
    %955 = arith.addf %951, %954 : vector<1x384xf32>
    %c0_164 = arith.constant 0 : index
    %956 = memref.load %arg8[%c0_164] : memref<4xf32, #tpu.memory_space<smem>>
    %957 = vector.broadcast %956 : f32 to vector<1x384xf32>
    %958 = arith.addf %907, %957 : vector<1x384xf32>
    %c1_165 = arith.constant 1 : index
    %959 = memref.load %arg8[%c1_165] : memref<4xf32, #tpu.memory_space<smem>>
    %960 = vector.broadcast %959 : f32 to vector<1x384xf32>
    %961 = arith.addf %923, %960 : vector<1x384xf32>
    %c2_166 = arith.constant 2 : index
    %962 = memref.load %arg8[%c2_166] : memref<4xf32, #tpu.memory_space<smem>>
    %963 = vector.broadcast %962 : f32 to vector<1x384xf32>
    %964 = arith.addf %939, %963 : vector<1x384xf32>
    %c3_167 = arith.constant 3 : index
    %965 = memref.load %arg8[%c3_167] : memref<4xf32, #tpu.memory_space<smem>>
    %966 = vector.broadcast %965 : f32 to vector<1x384xf32>
    %967 = arith.addf %955, %966 : vector<1x384xf32>
    %c7_168 = arith.constant 7 : index
    %c0_169 = arith.constant 0 : index
    %968 = vector.load %arg2[%c7_168, %c0_169] : memref<8x384xf32, #tpu.memory_space<vmem>>, vector<1x384xf32>
    %969 = arith.mulf %958, %968 : vector<1x384xf32>
    %970 = arith.mulf %961, %968 : vector<1x384xf32>
    %971 = arith.mulf %964, %968 : vector<1x384xf32>
    %972 = arith.mulf %967, %968 : vector<1x384xf32>
    %c0_170 = arith.constant 0 : index
    %c0_171 = arith.constant 0 : index
    %973 = vector.load %arg2[%c0_170, %c0_171] : memref<8x384xf32, #tpu.memory_space<vmem>>, vector<1x384xf32>
    %c3_i32_172 = arith.constant 3 : i32
    %974 = tpu.dynamic_rotate %478 by %c3_i32_172 dim 1 : vector<1x384xf32>, i32 -> vector<1x384xf32>
    %975 = arith.mulf %974, %973 : vector<1x384xf32>
    %c3_i32_173 = arith.constant 3 : i32
    %976 = tpu.dynamic_rotate %481 by %c3_i32_173 dim 1 : vector<1x384xf32>, i32 -> vector<1x384xf32>
    %977 = arith.mulf %976, %973 : vector<1x384xf32>
    %c3_i32_174 = arith.constant 3 : i32
    %978 = tpu.dynamic_rotate %484 by %c3_i32_174 dim 1 : vector<1x384xf32>, i32 -> vector<1x384xf32>
    %979 = arith.mulf %978, %973 : vector<1x384xf32>
    %c3_i32_175 = arith.constant 3 : i32
    %980 = tpu.dynamic_rotate %487 by %c3_i32_175 dim 1 : vector<1x384xf32>, i32 -> vector<1x384xf32>
    %981 = arith.mulf %980, %973 : vector<1x384xf32>
    %c0_176 = arith.constant 0 : index
    %982 = memref.load %arg5[%c0_176] : memref<112xf32, #tpu.memory_space<smem>>
    %983 = vector.broadcast %982 : f32 to vector<1x384xf32>
    %984 = arith.mulf %983, %975 : vector<1x384xf32>
    %c7_177 = arith.constant 7 : index
    %985 = memref.load %arg5[%c7_177] : memref<112xf32, #tpu.memory_space<smem>>
    %986 = vector.broadcast %985 : f32 to vector<1x384xf32>
    %987 = arith.mulf %986, %977 : vector<1x384xf32>
    %988 = arith.addf %984, %987 : vector<1x384xf32>
    %c14_178 = arith.constant 14 : index
    %989 = memref.load %arg5[%c14_178] : memref<112xf32, #tpu.memory_space<smem>>
    %990 = vector.broadcast %989 : f32 to vector<1x384xf32>
    %991 = arith.mulf %990, %979 : vector<1x384xf32>
    %992 = arith.addf %988, %991 : vector<1x384xf32>
    %c21_179 = arith.constant 21 : index
    %993 = memref.load %arg5[%c21_179] : memref<112xf32, #tpu.memory_space<smem>>
    %994 = vector.broadcast %993 : f32 to vector<1x384xf32>
    %995 = arith.mulf %994, %981 : vector<1x384xf32>
    %996 = arith.addf %992, %995 : vector<1x384xf32>
    %c28_180 = arith.constant 28 : index
    %997 = memref.load %arg5[%c28_180] : memref<112xf32, #tpu.memory_space<smem>>
    %998 = vector.broadcast %997 : f32 to vector<1x384xf32>
    %999 = arith.mulf %998, %975 : vector<1x384xf32>
    %c35_181 = arith.constant 35 : index
    %1000 = memref.load %arg5[%c35_181] : memref<112xf32, #tpu.memory_space<smem>>
    %1001 = vector.broadcast %1000 : f32 to vector<1x384xf32>
    %1002 = arith.mulf %1001, %977 : vector<1x384xf32>
    %1003 = arith.addf %999, %1002 : vector<1x384xf32>
    %c42_182 = arith.constant 42 : index
    %1004 = memref.load %arg5[%c42_182] : memref<112xf32, #tpu.memory_space<smem>>
    %1005 = vector.broadcast %1004 : f32 to vector<1x384xf32>
    %1006 = arith.mulf %1005, %979 : vector<1x384xf32>
    %1007 = arith.addf %1003, %1006 : vector<1x384xf32>
    %c49_183 = arith.constant 49 : index
    %1008 = memref.load %arg5[%c49_183] : memref<112xf32, #tpu.memory_space<smem>>
    %1009 = vector.broadcast %1008 : f32 to vector<1x384xf32>
    %1010 = arith.mulf %1009, %981 : vector<1x384xf32>
    %1011 = arith.addf %1007, %1010 : vector<1x384xf32>
    %c56_184 = arith.constant 56 : index
    %1012 = memref.load %arg5[%c56_184] : memref<112xf32, #tpu.memory_space<smem>>
    %1013 = vector.broadcast %1012 : f32 to vector<1x384xf32>
    %1014 = arith.mulf %1013, %975 : vector<1x384xf32>
    %c63_185 = arith.constant 63 : index
    %1015 = memref.load %arg5[%c63_185] : memref<112xf32, #tpu.memory_space<smem>>
    %1016 = vector.broadcast %1015 : f32 to vector<1x384xf32>
    %1017 = arith.mulf %1016, %977 : vector<1x384xf32>
    %1018 = arith.addf %1014, %1017 : vector<1x384xf32>
    %c70_186 = arith.constant 70 : index
    %1019 = memref.load %arg5[%c70_186] : memref<112xf32, #tpu.memory_space<smem>>
    %1020 = vector.broadcast %1019 : f32 to vector<1x384xf32>
    %1021 = arith.mulf %1020, %979 : vector<1x384xf32>
    %1022 = arith.addf %1018, %1021 : vector<1x384xf32>
    %c77_187 = arith.constant 77 : index
    %1023 = memref.load %arg5[%c77_187] : memref<112xf32, #tpu.memory_space<smem>>
    %1024 = vector.broadcast %1023 : f32 to vector<1x384xf32>
    %1025 = arith.mulf %1024, %981 : vector<1x384xf32>
    %1026 = arith.addf %1022, %1025 : vector<1x384xf32>
    %c84_188 = arith.constant 84 : index
    %1027 = memref.load %arg5[%c84_188] : memref<112xf32, #tpu.memory_space<smem>>
    %1028 = vector.broadcast %1027 : f32 to vector<1x384xf32>
    %1029 = arith.mulf %1028, %975 : vector<1x384xf32>
    %c91_189 = arith.constant 91 : index
    %1030 = memref.load %arg5[%c91_189] : memref<112xf32, #tpu.memory_space<smem>>
    %1031 = vector.broadcast %1030 : f32 to vector<1x384xf32>
    %1032 = arith.mulf %1031, %977 : vector<1x384xf32>
    %1033 = arith.addf %1029, %1032 : vector<1x384xf32>
    %c98_190 = arith.constant 98 : index
    %1034 = memref.load %arg5[%c98_190] : memref<112xf32, #tpu.memory_space<smem>>
    %1035 = vector.broadcast %1034 : f32 to vector<1x384xf32>
    %1036 = arith.mulf %1035, %979 : vector<1x384xf32>
    %1037 = arith.addf %1033, %1036 : vector<1x384xf32>
    %c105_191 = arith.constant 105 : index
    %1038 = memref.load %arg5[%c105_191] : memref<112xf32, #tpu.memory_space<smem>>
    %1039 = vector.broadcast %1038 : f32 to vector<1x384xf32>
    %1040 = arith.mulf %1039, %981 : vector<1x384xf32>
    %1041 = arith.addf %1037, %1040 : vector<1x384xf32>
    %c1_192 = arith.constant 1 : index
    %c0_193 = arith.constant 0 : index
    %1042 = vector.load %arg2[%c1_192, %c0_193] : memref<8x384xf32, #tpu.memory_space<vmem>>, vector<1x384xf32>
    %c2_i32_194 = arith.constant 2 : i32
    %1043 = tpu.dynamic_rotate %478 by %c2_i32_194 dim 1 : vector<1x384xf32>, i32 -> vector<1x384xf32>
    %1044 = arith.mulf %1043, %1042 : vector<1x384xf32>
    %c2_i32_195 = arith.constant 2 : i32
    %1045 = tpu.dynamic_rotate %481 by %c2_i32_195 dim 1 : vector<1x384xf32>, i32 -> vector<1x384xf32>
    %1046 = arith.mulf %1045, %1042 : vector<1x384xf32>
    %c2_i32_196 = arith.constant 2 : i32
    %1047 = tpu.dynamic_rotate %484 by %c2_i32_196 dim 1 : vector<1x384xf32>, i32 -> vector<1x384xf32>
    %1048 = arith.mulf %1047, %1042 : vector<1x384xf32>
    %c2_i32_197 = arith.constant 2 : i32
    %1049 = tpu.dynamic_rotate %487 by %c2_i32_197 dim 1 : vector<1x384xf32>, i32 -> vector<1x384xf32>
    %1050 = arith.mulf %1049, %1042 : vector<1x384xf32>
    %c1_198 = arith.constant 1 : index
    %1051 = memref.load %arg5[%c1_198] : memref<112xf32, #tpu.memory_space<smem>>
    %1052 = vector.broadcast %1051 : f32 to vector<1x384xf32>
    %1053 = arith.mulf %1052, %1044 : vector<1x384xf32>
    %1054 = arith.addf %996, %1053 : vector<1x384xf32>
    %c8_199 = arith.constant 8 : index
    %1055 = memref.load %arg5[%c8_199] : memref<112xf32, #tpu.memory_space<smem>>
    %1056 = vector.broadcast %1055 : f32 to vector<1x384xf32>
    %1057 = arith.mulf %1056, %1046 : vector<1x384xf32>
    %1058 = arith.addf %1054, %1057 : vector<1x384xf32>
    %c15_200 = arith.constant 15 : index
    %1059 = memref.load %arg5[%c15_200] : memref<112xf32, #tpu.memory_space<smem>>
    %1060 = vector.broadcast %1059 : f32 to vector<1x384xf32>
    %1061 = arith.mulf %1060, %1048 : vector<1x384xf32>
    %1062 = arith.addf %1058, %1061 : vector<1x384xf32>
    %c22_201 = arith.constant 22 : index
    %1063 = memref.load %arg5[%c22_201] : memref<112xf32, #tpu.memory_space<smem>>
    %1064 = vector.broadcast %1063 : f32 to vector<1x384xf32>
    %1065 = arith.mulf %1064, %1050 : vector<1x384xf32>
    %1066 = arith.addf %1062, %1065 : vector<1x384xf32>
    %c29_202 = arith.constant 29 : index
    %1067 = memref.load %arg5[%c29_202] : memref<112xf32, #tpu.memory_space<smem>>
    %1068 = vector.broadcast %1067 : f32 to vector<1x384xf32>
    %1069 = arith.mulf %1068, %1044 : vector<1x384xf32>
    %1070 = arith.addf %1011, %1069 : vector<1x384xf32>
    %c36_203 = arith.constant 36 : index
    %1071 = memref.load %arg5[%c36_203] : memref<112xf32, #tpu.memory_space<smem>>
    %1072 = vector.broadcast %1071 : f32 to vector<1x384xf32>
    %1073 = arith.mulf %1072, %1046 : vector<1x384xf32>
    %1074 = arith.addf %1070, %1073 : vector<1x384xf32>
    %c43_204 = arith.constant 43 : index
    %1075 = memref.load %arg5[%c43_204] : memref<112xf32, #tpu.memory_space<smem>>
    %1076 = vector.broadcast %1075 : f32 to vector<1x384xf32>
    %1077 = arith.mulf %1076, %1048 : vector<1x384xf32>
    %1078 = arith.addf %1074, %1077 : vector<1x384xf32>
    %c50_205 = arith.constant 50 : index
    %1079 = memref.load %arg5[%c50_205] : memref<112xf32, #tpu.memory_space<smem>>
    %1080 = vector.broadcast %1079 : f32 to vector<1x384xf32>
    %1081 = arith.mulf %1080, %1050 : vector<1x384xf32>
    %1082 = arith.addf %1078, %1081 : vector<1x384xf32>
    %c57_206 = arith.constant 57 : index
    %1083 = memref.load %arg5[%c57_206] : memref<112xf32, #tpu.memory_space<smem>>
    %1084 = vector.broadcast %1083 : f32 to vector<1x384xf32>
    %1085 = arith.mulf %1084, %1044 : vector<1x384xf32>
    %1086 = arith.addf %1026, %1085 : vector<1x384xf32>
    %c64_207 = arith.constant 64 : index
    %1087 = memref.load %arg5[%c64_207] : memref<112xf32, #tpu.memory_space<smem>>
    %1088 = vector.broadcast %1087 : f32 to vector<1x384xf32>
    %1089 = arith.mulf %1088, %1046 : vector<1x384xf32>
    %1090 = arith.addf %1086, %1089 : vector<1x384xf32>
    %c71_208 = arith.constant 71 : index
    %1091 = memref.load %arg5[%c71_208] : memref<112xf32, #tpu.memory_space<smem>>
    %1092 = vector.broadcast %1091 : f32 to vector<1x384xf32>
    %1093 = arith.mulf %1092, %1048 : vector<1x384xf32>
    %1094 = arith.addf %1090, %1093 : vector<1x384xf32>
    %c78_209 = arith.constant 78 : index
    %1095 = memref.load %arg5[%c78_209] : memref<112xf32, #tpu.memory_space<smem>>
    %1096 = vector.broadcast %1095 : f32 to vector<1x384xf32>
    %1097 = arith.mulf %1096, %1050 : vector<1x384xf32>
    %1098 = arith.addf %1094, %1097 : vector<1x384xf32>
    %c85_210 = arith.constant 85 : index
    %1099 = memref.load %arg5[%c85_210] : memref<112xf32, #tpu.memory_space<smem>>
    %1100 = vector.broadcast %1099 : f32 to vector<1x384xf32>
    %1101 = arith.mulf %1100, %1044 : vector<1x384xf32>
    %1102 = arith.addf %1041, %1101 : vector<1x384xf32>
    %c92_211 = arith.constant 92 : index
    %1103 = memref.load %arg5[%c92_211] : memref<112xf32, #tpu.memory_space<smem>>
    %1104 = vector.broadcast %1103 : f32 to vector<1x384xf32>
    %1105 = arith.mulf %1104, %1046 : vector<1x384xf32>
    %1106 = arith.addf %1102, %1105 : vector<1x384xf32>
    %c99_212 = arith.constant 99 : index
    %1107 = memref.load %arg5[%c99_212] : memref<112xf32, #tpu.memory_space<smem>>
    %1108 = vector.broadcast %1107 : f32 to vector<1x384xf32>
    %1109 = arith.mulf %1108, %1048 : vector<1x384xf32>
    %1110 = arith.addf %1106, %1109 : vector<1x384xf32>
    %c106_213 = arith.constant 106 : index
    %1111 = memref.load %arg5[%c106_213] : memref<112xf32, #tpu.memory_space<smem>>
    %1112 = vector.broadcast %1111 : f32 to vector<1x384xf32>
    %1113 = arith.mulf %1112, %1050 : vector<1x384xf32>
    %1114 = arith.addf %1110, %1113 : vector<1x384xf32>
    %c2_214 = arith.constant 2 : index
    %c0_215 = arith.constant 0 : index
    %1115 = vector.load %arg2[%c2_214, %c0_215] : memref<8x384xf32, #tpu.memory_space<vmem>>, vector<1x384xf32>
    %c1_i32_216 = arith.constant 1 : i32
    %1116 = tpu.dynamic_rotate %478 by %c1_i32_216 dim 1 : vector<1x384xf32>, i32 -> vector<1x384xf32>
    %1117 = arith.mulf %1116, %1115 : vector<1x384xf32>
    %c1_i32_217 = arith.constant 1 : i32
    %1118 = tpu.dynamic_rotate %481 by %c1_i32_217 dim 1 : vector<1x384xf32>, i32 -> vector<1x384xf32>
    %1119 = arith.mulf %1118, %1115 : vector<1x384xf32>
    %c1_i32_218 = arith.constant 1 : i32
    %1120 = tpu.dynamic_rotate %484 by %c1_i32_218 dim 1 : vector<1x384xf32>, i32 -> vector<1x384xf32>
    %1121 = arith.mulf %1120, %1115 : vector<1x384xf32>
    %c1_i32_219 = arith.constant 1 : i32
    %1122 = tpu.dynamic_rotate %487 by %c1_i32_219 dim 1 : vector<1x384xf32>, i32 -> vector<1x384xf32>
    %1123 = arith.mulf %1122, %1115 : vector<1x384xf32>
    %c2_220 = arith.constant 2 : index
    %1124 = memref.load %arg5[%c2_220] : memref<112xf32, #tpu.memory_space<smem>>
    %1125 = vector.broadcast %1124 : f32 to vector<1x384xf32>
    %1126 = arith.mulf %1125, %1117 : vector<1x384xf32>
    %1127 = arith.addf %1066, %1126 : vector<1x384xf32>
    %c9_221 = arith.constant 9 : index
    %1128 = memref.load %arg5[%c9_221] : memref<112xf32, #tpu.memory_space<smem>>
    %1129 = vector.broadcast %1128 : f32 to vector<1x384xf32>
    %1130 = arith.mulf %1129, %1119 : vector<1x384xf32>
    %1131 = arith.addf %1127, %1130 : vector<1x384xf32>
    %c16_222 = arith.constant 16 : index
    %1132 = memref.load %arg5[%c16_222] : memref<112xf32, #tpu.memory_space<smem>>
    %1133 = vector.broadcast %1132 : f32 to vector<1x384xf32>
    %1134 = arith.mulf %1133, %1121 : vector<1x384xf32>
    %1135 = arith.addf %1131, %1134 : vector<1x384xf32>
    %c23_223 = arith.constant 23 : index
    %1136 = memref.load %arg5[%c23_223] : memref<112xf32, #tpu.memory_space<smem>>
    %1137 = vector.broadcast %1136 : f32 to vector<1x384xf32>
    %1138 = arith.mulf %1137, %1123 : vector<1x384xf32>
    %1139 = arith.addf %1135, %1138 : vector<1x384xf32>
    %c30_224 = arith.constant 30 : index
    %1140 = memref.load %arg5[%c30_224] : memref<112xf32, #tpu.memory_space<smem>>
    %1141 = vector.broadcast %1140 : f32 to vector<1x384xf32>
    %1142 = arith.mulf %1141, %1117 : vector<1x384xf32>
    %1143 = arith.addf %1082, %1142 : vector<1x384xf32>
    %c37_225 = arith.constant 37 : index
    %1144 = memref.load %arg5[%c37_225] : memref<112xf32, #tpu.memory_space<smem>>
    %1145 = vector.broadcast %1144 : f32 to vector<1x384xf32>
    %1146 = arith.mulf %1145, %1119 : vector<1x384xf32>
    %1147 = arith.addf %1143, %1146 : vector<1x384xf32>
    %c44_226 = arith.constant 44 : index
    %1148 = memref.load %arg5[%c44_226] : memref<112xf32, #tpu.memory_space<smem>>
    %1149 = vector.broadcast %1148 : f32 to vector<1x384xf32>
    %1150 = arith.mulf %1149, %1121 : vector<1x384xf32>
    %1151 = arith.addf %1147, %1150 : vector<1x384xf32>
    %c51_227 = arith.constant 51 : index
    %1152 = memref.load %arg5[%c51_227] : memref<112xf32, #tpu.memory_space<smem>>
    %1153 = vector.broadcast %1152 : f32 to vector<1x384xf32>
    %1154 = arith.mulf %1153, %1123 : vector<1x384xf32>
    %1155 = arith.addf %1151, %1154 : vector<1x384xf32>
    %c58_228 = arith.constant 58 : index
    %1156 = memref.load %arg5[%c58_228] : memref<112xf32, #tpu.memory_space<smem>>
    %1157 = vector.broadcast %1156 : f32 to vector<1x384xf32>
    %1158 = arith.mulf %1157, %1117 : vector<1x384xf32>
    %1159 = arith.addf %1098, %1158 : vector<1x384xf32>
    %c65_229 = arith.constant 65 : index
    %1160 = memref.load %arg5[%c65_229] : memref<112xf32, #tpu.memory_space<smem>>
    %1161 = vector.broadcast %1160 : f32 to vector<1x384xf32>
    %1162 = arith.mulf %1161, %1119 : vector<1x384xf32>
    %1163 = arith.addf %1159, %1162 : vector<1x384xf32>
    %c72_230 = arith.constant 72 : index
    %1164 = memref.load %arg5[%c72_230] : memref<112xf32, #tpu.memory_space<smem>>
    %1165 = vector.broadcast %1164 : f32 to vector<1x384xf32>
    %1166 = arith.mulf %1165, %1121 : vector<1x384xf32>
    %1167 = arith.addf %1163, %1166 : vector<1x384xf32>
    %c79_231 = arith.constant 79 : index
    %1168 = memref.load %arg5[%c79_231] : memref<112xf32, #tpu.memory_space<smem>>
    %1169 = vector.broadcast %1168 : f32 to vector<1x384xf32>
    %1170 = arith.mulf %1169, %1123 : vector<1x384xf32>
    %1171 = arith.addf %1167, %1170 : vector<1x384xf32>
    %c86_232 = arith.constant 86 : index
    %1172 = memref.load %arg5[%c86_232] : memref<112xf32, #tpu.memory_space<smem>>
    %1173 = vector.broadcast %1172 : f32 to vector<1x384xf32>
    %1174 = arith.mulf %1173, %1117 : vector<1x384xf32>
    %1175 = arith.addf %1114, %1174 : vector<1x384xf32>
    %c93_233 = arith.constant 93 : index
    %1176 = memref.load %arg5[%c93_233] : memref<112xf32, #tpu.memory_space<smem>>
    %1177 = vector.broadcast %1176 : f32 to vector<1x384xf32>
    %1178 = arith.mulf %1177, %1119 : vector<1x384xf32>
    %1179 = arith.addf %1175, %1178 : vector<1x384xf32>
    %c100_234 = arith.constant 100 : index
    %1180 = memref.load %arg5[%c100_234] : memref<112xf32, #tpu.memory_space<smem>>
    %1181 = vector.broadcast %1180 : f32 to vector<1x384xf32>
    %1182 = arith.mulf %1181, %1121 : vector<1x384xf32>
    %1183 = arith.addf %1179, %1182 : vector<1x384xf32>
    %c107_235 = arith.constant 107 : index
    %1184 = memref.load %arg5[%c107_235] : memref<112xf32, #tpu.memory_space<smem>>
    %1185 = vector.broadcast %1184 : f32 to vector<1x384xf32>
    %1186 = arith.mulf %1185, %1123 : vector<1x384xf32>
    %1187 = arith.addf %1183, %1186 : vector<1x384xf32>
    %c3_236 = arith.constant 3 : index
    %1188 = memref.load %arg5[%c3_236] : memref<112xf32, #tpu.memory_space<smem>>
    %1189 = vector.broadcast %1188 : f32 to vector<1x384xf32>
    %1190 = arith.mulf %1189, %478 : vector<1x384xf32>
    %1191 = arith.addf %1139, %1190 : vector<1x384xf32>
    %c10_237 = arith.constant 10 : index
    %1192 = memref.load %arg5[%c10_237] : memref<112xf32, #tpu.memory_space<smem>>
    %1193 = vector.broadcast %1192 : f32 to vector<1x384xf32>
    %1194 = arith.mulf %1193, %481 : vector<1x384xf32>
    %1195 = arith.addf %1191, %1194 : vector<1x384xf32>
    %c17_238 = arith.constant 17 : index
    %1196 = memref.load %arg5[%c17_238] : memref<112xf32, #tpu.memory_space<smem>>
    %1197 = vector.broadcast %1196 : f32 to vector<1x384xf32>
    %1198 = arith.mulf %1197, %484 : vector<1x384xf32>
    %1199 = arith.addf %1195, %1198 : vector<1x384xf32>
    %c24_239 = arith.constant 24 : index
    %1200 = memref.load %arg5[%c24_239] : memref<112xf32, #tpu.memory_space<smem>>
    %1201 = vector.broadcast %1200 : f32 to vector<1x384xf32>
    %1202 = arith.mulf %1201, %487 : vector<1x384xf32>
    %1203 = arith.addf %1199, %1202 : vector<1x384xf32>
    %c31_240 = arith.constant 31 : index
    %1204 = memref.load %arg5[%c31_240] : memref<112xf32, #tpu.memory_space<smem>>
    %1205 = vector.broadcast %1204 : f32 to vector<1x384xf32>
    %1206 = arith.mulf %1205, %478 : vector<1x384xf32>
    %1207 = arith.addf %1155, %1206 : vector<1x384xf32>
    %c38_241 = arith.constant 38 : index
    %1208 = memref.load %arg5[%c38_241] : memref<112xf32, #tpu.memory_space<smem>>
    %1209 = vector.broadcast %1208 : f32 to vector<1x384xf32>
    %1210 = arith.mulf %1209, %481 : vector<1x384xf32>
    %1211 = arith.addf %1207, %1210 : vector<1x384xf32>
    %c45_242 = arith.constant 45 : index
    %1212 = memref.load %arg5[%c45_242] : memref<112xf32, #tpu.memory_space<smem>>
    %1213 = vector.broadcast %1212 : f32 to vector<1x384xf32>
    %1214 = arith.mulf %1213, %484 : vector<1x384xf32>
    %1215 = arith.addf %1211, %1214 : vector<1x384xf32>
    %c52_243 = arith.constant 52 : index
    %1216 = memref.load %arg5[%c52_243] : memref<112xf32, #tpu.memory_space<smem>>
    %1217 = vector.broadcast %1216 : f32 to vector<1x384xf32>
    %1218 = arith.mulf %1217, %487 : vector<1x384xf32>
    %1219 = arith.addf %1215, %1218 : vector<1x384xf32>
    %c59_244 = arith.constant 59 : index
    %1220 = memref.load %arg5[%c59_244] : memref<112xf32, #tpu.memory_space<smem>>
    %1221 = vector.broadcast %1220 : f32 to vector<1x384xf32>
    %1222 = arith.mulf %1221, %478 : vector<1x384xf32>
    %1223 = arith.addf %1171, %1222 : vector<1x384xf32>
    %c66_245 = arith.constant 66 : index
    %1224 = memref.load %arg5[%c66_245] : memref<112xf32, #tpu.memory_space<smem>>
    %1225 = vector.broadcast %1224 : f32 to vector<1x384xf32>
    %1226 = arith.mulf %1225, %481 : vector<1x384xf32>
    %1227 = arith.addf %1223, %1226 : vector<1x384xf32>
    %c73_246 = arith.constant 73 : index
    %1228 = memref.load %arg5[%c73_246] : memref<112xf32, #tpu.memory_space<smem>>
    %1229 = vector.broadcast %1228 : f32 to vector<1x384xf32>
    %1230 = arith.mulf %1229, %484 : vector<1x384xf32>
    %1231 = arith.addf %1227, %1230 : vector<1x384xf32>
    %c80_247 = arith.constant 80 : index
    %1232 = memref.load %arg5[%c80_247] : memref<112xf32, #tpu.memory_space<smem>>
    %1233 = vector.broadcast %1232 : f32 to vector<1x384xf32>
    %1234 = arith.mulf %1233, %487 : vector<1x384xf32>
    %1235 = arith.addf %1231, %1234 : vector<1x384xf32>
    %c87_248 = arith.constant 87 : index
    %1236 = memref.load %arg5[%c87_248] : memref<112xf32, #tpu.memory_space<smem>>
    %1237 = vector.broadcast %1236 : f32 to vector<1x384xf32>
    %1238 = arith.mulf %1237, %478 : vector<1x384xf32>
    %1239 = arith.addf %1187, %1238 : vector<1x384xf32>
    %c94_249 = arith.constant 94 : index
    %1240 = memref.load %arg5[%c94_249] : memref<112xf32, #tpu.memory_space<smem>>
    %1241 = vector.broadcast %1240 : f32 to vector<1x384xf32>
    %1242 = arith.mulf %1241, %481 : vector<1x384xf32>
    %1243 = arith.addf %1239, %1242 : vector<1x384xf32>
    %c101_250 = arith.constant 101 : index
    %1244 = memref.load %arg5[%c101_250] : memref<112xf32, #tpu.memory_space<smem>>
    %1245 = vector.broadcast %1244 : f32 to vector<1x384xf32>
    %1246 = arith.mulf %1245, %484 : vector<1x384xf32>
    %1247 = arith.addf %1243, %1246 : vector<1x384xf32>
    %c108_251 = arith.constant 108 : index
    %1248 = memref.load %arg5[%c108_251] : memref<112xf32, #tpu.memory_space<smem>>
    %1249 = vector.broadcast %1248 : f32 to vector<1x384xf32>
    %1250 = arith.mulf %1249, %487 : vector<1x384xf32>
    %1251 = arith.addf %1247, %1250 : vector<1x384xf32>
    %c4_252 = arith.constant 4 : index
    %c0_253 = arith.constant 0 : index
    %1252 = vector.load %arg2[%c4_252, %c0_253] : memref<8x384xf32, #tpu.memory_space<vmem>>, vector<1x384xf32>
    %c383_i32_254 = arith.constant 383 : i32
    %1253 = tpu.dynamic_rotate %478 by %c383_i32_254 dim 1 : vector<1x384xf32>, i32 -> vector<1x384xf32>
    %1254 = arith.mulf %1253, %1252 : vector<1x384xf32>
    %c383_i32_255 = arith.constant 383 : i32
    %1255 = tpu.dynamic_rotate %481 by %c383_i32_255 dim 1 : vector<1x384xf32>, i32 -> vector<1x384xf32>
    %1256 = arith.mulf %1255, %1252 : vector<1x384xf32>
    %c383_i32_256 = arith.constant 383 : i32
    %1257 = tpu.dynamic_rotate %484 by %c383_i32_256 dim 1 : vector<1x384xf32>, i32 -> vector<1x384xf32>
    %1258 = arith.mulf %1257, %1252 : vector<1x384xf32>
    %c383_i32_257 = arith.constant 383 : i32
    %1259 = tpu.dynamic_rotate %487 by %c383_i32_257 dim 1 : vector<1x384xf32>, i32 -> vector<1x384xf32>
    %1260 = arith.mulf %1259, %1252 : vector<1x384xf32>
    %c4_258 = arith.constant 4 : index
    %1261 = memref.load %arg5[%c4_258] : memref<112xf32, #tpu.memory_space<smem>>
    %1262 = vector.broadcast %1261 : f32 to vector<1x384xf32>
    %1263 = arith.mulf %1262, %1254 : vector<1x384xf32>
    %1264 = arith.addf %1203, %1263 : vector<1x384xf32>
    %c11_259 = arith.constant 11 : index
    %1265 = memref.load %arg5[%c11_259] : memref<112xf32, #tpu.memory_space<smem>>
    %1266 = vector.broadcast %1265 : f32 to vector<1x384xf32>
    %1267 = arith.mulf %1266, %1256 : vector<1x384xf32>
    %1268 = arith.addf %1264, %1267 : vector<1x384xf32>
    %c18_260 = arith.constant 18 : index
    %1269 = memref.load %arg5[%c18_260] : memref<112xf32, #tpu.memory_space<smem>>
    %1270 = vector.broadcast %1269 : f32 to vector<1x384xf32>
    %1271 = arith.mulf %1270, %1258 : vector<1x384xf32>
    %1272 = arith.addf %1268, %1271 : vector<1x384xf32>
    %c25_261 = arith.constant 25 : index
    %1273 = memref.load %arg5[%c25_261] : memref<112xf32, #tpu.memory_space<smem>>
    %1274 = vector.broadcast %1273 : f32 to vector<1x384xf32>
    %1275 = arith.mulf %1274, %1260 : vector<1x384xf32>
    %1276 = arith.addf %1272, %1275 : vector<1x384xf32>
    %c32_262 = arith.constant 32 : index
    %1277 = memref.load %arg5[%c32_262] : memref<112xf32, #tpu.memory_space<smem>>
    %1278 = vector.broadcast %1277 : f32 to vector<1x384xf32>
    %1279 = arith.mulf %1278, %1254 : vector<1x384xf32>
    %1280 = arith.addf %1219, %1279 : vector<1x384xf32>
    %c39_263 = arith.constant 39 : index
    %1281 = memref.load %arg5[%c39_263] : memref<112xf32, #tpu.memory_space<smem>>
    %1282 = vector.broadcast %1281 : f32 to vector<1x384xf32>
    %1283 = arith.mulf %1282, %1256 : vector<1x384xf32>
    %1284 = arith.addf %1280, %1283 : vector<1x384xf32>
    %c46_264 = arith.constant 46 : index
    %1285 = memref.load %arg5[%c46_264] : memref<112xf32, #tpu.memory_space<smem>>
    %1286 = vector.broadcast %1285 : f32 to vector<1x384xf32>
    %1287 = arith.mulf %1286, %1258 : vector<1x384xf32>
    %1288 = arith.addf %1284, %1287 : vector<1x384xf32>
    %c53_265 = arith.constant 53 : index
    %1289 = memref.load %arg5[%c53_265] : memref<112xf32, #tpu.memory_space<smem>>
    %1290 = vector.broadcast %1289 : f32 to vector<1x384xf32>
    %1291 = arith.mulf %1290, %1260 : vector<1x384xf32>
    %1292 = arith.addf %1288, %1291 : vector<1x384xf32>
    %c60_266 = arith.constant 60 : index
    %1293 = memref.load %arg5[%c60_266] : memref<112xf32, #tpu.memory_space<smem>>
    %1294 = vector.broadcast %1293 : f32 to vector<1x384xf32>
    %1295 = arith.mulf %1294, %1254 : vector<1x384xf32>
    %1296 = arith.addf %1235, %1295 : vector<1x384xf32>
    %c67_267 = arith.constant 67 : index
    %1297 = memref.load %arg5[%c67_267] : memref<112xf32, #tpu.memory_space<smem>>
    %1298 = vector.broadcast %1297 : f32 to vector<1x384xf32>
    %1299 = arith.mulf %1298, %1256 : vector<1x384xf32>
    %1300 = arith.addf %1296, %1299 : vector<1x384xf32>
    %c74_268 = arith.constant 74 : index
    %1301 = memref.load %arg5[%c74_268] : memref<112xf32, #tpu.memory_space<smem>>
    %1302 = vector.broadcast %1301 : f32 to vector<1x384xf32>
    %1303 = arith.mulf %1302, %1258 : vector<1x384xf32>
    %1304 = arith.addf %1300, %1303 : vector<1x384xf32>
    %c81_269 = arith.constant 81 : index
    %1305 = memref.load %arg5[%c81_269] : memref<112xf32, #tpu.memory_space<smem>>
    %1306 = vector.broadcast %1305 : f32 to vector<1x384xf32>
    %1307 = arith.mulf %1306, %1260 : vector<1x384xf32>
    %1308 = arith.addf %1304, %1307 : vector<1x384xf32>
    %c88_270 = arith.constant 88 : index
    %1309 = memref.load %arg5[%c88_270] : memref<112xf32, #tpu.memory_space<smem>>
    %1310 = vector.broadcast %1309 : f32 to vector<1x384xf32>
    %1311 = arith.mulf %1310, %1254 : vector<1x384xf32>
    %1312 = arith.addf %1251, %1311 : vector<1x384xf32>
    %c95_271 = arith.constant 95 : index
    %1313 = memref.load %arg5[%c95_271] : memref<112xf32, #tpu.memory_space<smem>>
    %1314 = vector.broadcast %1313 : f32 to vector<1x384xf32>
    %1315 = arith.mulf %1314, %1256 : vector<1x384xf32>
    %1316 = arith.addf %1312, %1315 : vector<1x384xf32>
    %c102_272 = arith.constant 102 : index
    %1317 = memref.load %arg5[%c102_272] : memref<112xf32, #tpu.memory_space<smem>>
    %1318 = vector.broadcast %1317 : f32 to vector<1x384xf32>
    %1319 = arith.mulf %1318, %1258 : vector<1x384xf32>
    %1320 = arith.addf %1316, %1319 : vector<1x384xf32>
    %c109_273 = arith.constant 109 : index
    %1321 = memref.load %arg5[%c109_273] : memref<112xf32, #tpu.memory_space<smem>>
    %1322 = vector.broadcast %1321 : f32 to vector<1x384xf32>
    %1323 = arith.mulf %1322, %1260 : vector<1x384xf32>
    %1324 = arith.addf %1320, %1323 : vector<1x384xf32>
    %c5_274 = arith.constant 5 : index
    %c0_275 = arith.constant 0 : index
    %1325 = vector.load %arg2[%c5_274, %c0_275] : memref<8x384xf32, #tpu.memory_space<vmem>>, vector<1x384xf32>
    %c382_i32_276 = arith.constant 382 : i32
    %1326 = tpu.dynamic_rotate %478 by %c382_i32_276 dim 1 : vector<1x384xf32>, i32 -> vector<1x384xf32>
    %1327 = arith.mulf %1326, %1325 : vector<1x384xf32>
    %c382_i32_277 = arith.constant 382 : i32
    %1328 = tpu.dynamic_rotate %481 by %c382_i32_277 dim 1 : vector<1x384xf32>, i32 -> vector<1x384xf32>
    %1329 = arith.mulf %1328, %1325 : vector<1x384xf32>
    %c382_i32_278 = arith.constant 382 : i32
    %1330 = tpu.dynamic_rotate %484 by %c382_i32_278 dim 1 : vector<1x384xf32>, i32 -> vector<1x384xf32>
    %1331 = arith.mulf %1330, %1325 : vector<1x384xf32>
    %c382_i32_279 = arith.constant 382 : i32
    %1332 = tpu.dynamic_rotate %487 by %c382_i32_279 dim 1 : vector<1x384xf32>, i32 -> vector<1x384xf32>
    %1333 = arith.mulf %1332, %1325 : vector<1x384xf32>
    %c5_280 = arith.constant 5 : index
    %1334 = memref.load %arg5[%c5_280] : memref<112xf32, #tpu.memory_space<smem>>
    %1335 = vector.broadcast %1334 : f32 to vector<1x384xf32>
    %1336 = arith.mulf %1335, %1327 : vector<1x384xf32>
    %1337 = arith.addf %1276, %1336 : vector<1x384xf32>
    %c12_281 = arith.constant 12 : index
    %1338 = memref.load %arg5[%c12_281] : memref<112xf32, #tpu.memory_space<smem>>
    %1339 = vector.broadcast %1338 : f32 to vector<1x384xf32>
    %1340 = arith.mulf %1339, %1329 : vector<1x384xf32>
    %1341 = arith.addf %1337, %1340 : vector<1x384xf32>
    %c19_282 = arith.constant 19 : index
    %1342 = memref.load %arg5[%c19_282] : memref<112xf32, #tpu.memory_space<smem>>
    %1343 = vector.broadcast %1342 : f32 to vector<1x384xf32>
    %1344 = arith.mulf %1343, %1331 : vector<1x384xf32>
    %1345 = arith.addf %1341, %1344 : vector<1x384xf32>
    %c26_283 = arith.constant 26 : index
    %1346 = memref.load %arg5[%c26_283] : memref<112xf32, #tpu.memory_space<smem>>
    %1347 = vector.broadcast %1346 : f32 to vector<1x384xf32>
    %1348 = arith.mulf %1347, %1333 : vector<1x384xf32>
    %1349 = arith.addf %1345, %1348 : vector<1x384xf32>
    %c33_284 = arith.constant 33 : index
    %1350 = memref.load %arg5[%c33_284] : memref<112xf32, #tpu.memory_space<smem>>
    %1351 = vector.broadcast %1350 : f32 to vector<1x384xf32>
    %1352 = arith.mulf %1351, %1327 : vector<1x384xf32>
    %1353 = arith.addf %1292, %1352 : vector<1x384xf32>
    %c40_285 = arith.constant 40 : index
    %1354 = memref.load %arg5[%c40_285] : memref<112xf32, #tpu.memory_space<smem>>
    %1355 = vector.broadcast %1354 : f32 to vector<1x384xf32>
    %1356 = arith.mulf %1355, %1329 : vector<1x384xf32>
    %1357 = arith.addf %1353, %1356 : vector<1x384xf32>
    %c47_286 = arith.constant 47 : index
    %1358 = memref.load %arg5[%c47_286] : memref<112xf32, #tpu.memory_space<smem>>
    %1359 = vector.broadcast %1358 : f32 to vector<1x384xf32>
    %1360 = arith.mulf %1359, %1331 : vector<1x384xf32>
    %1361 = arith.addf %1357, %1360 : vector<1x384xf32>
    %c54_287 = arith.constant 54 : index
    %1362 = memref.load %arg5[%c54_287] : memref<112xf32, #tpu.memory_space<smem>>
    %1363 = vector.broadcast %1362 : f32 to vector<1x384xf32>
    %1364 = arith.mulf %1363, %1333 : vector<1x384xf32>
    %1365 = arith.addf %1361, %1364 : vector<1x384xf32>
    %c61_288 = arith.constant 61 : index
    %1366 = memref.load %arg5[%c61_288] : memref<112xf32, #tpu.memory_space<smem>>
    %1367 = vector.broadcast %1366 : f32 to vector<1x384xf32>
    %1368 = arith.mulf %1367, %1327 : vector<1x384xf32>
    %1369 = arith.addf %1308, %1368 : vector<1x384xf32>
    %c68_289 = arith.constant 68 : index
    %1370 = memref.load %arg5[%c68_289] : memref<112xf32, #tpu.memory_space<smem>>
    %1371 = vector.broadcast %1370 : f32 to vector<1x384xf32>
    %1372 = arith.mulf %1371, %1329 : vector<1x384xf32>
    %1373 = arith.addf %1369, %1372 : vector<1x384xf32>
    %c75_290 = arith.constant 75 : index
    %1374 = memref.load %arg5[%c75_290] : memref<112xf32, #tpu.memory_space<smem>>
    %1375 = vector.broadcast %1374 : f32 to vector<1x384xf32>
    %1376 = arith.mulf %1375, %1331 : vector<1x384xf32>
    %1377 = arith.addf %1373, %1376 : vector<1x384xf32>
    %c82_291 = arith.constant 82 : index
    %1378 = memref.load %arg5[%c82_291] : memref<112xf32, #tpu.memory_space<smem>>
    %1379 = vector.broadcast %1378 : f32 to vector<1x384xf32>
    %1380 = arith.mulf %1379, %1333 : vector<1x384xf32>
    %1381 = arith.addf %1377, %1380 : vector<1x384xf32>
    %c89_292 = arith.constant 89 : index
    %1382 = memref.load %arg5[%c89_292] : memref<112xf32, #tpu.memory_space<smem>>
    %1383 = vector.broadcast %1382 : f32 to vector<1x384xf32>
    %1384 = arith.mulf %1383, %1327 : vector<1x384xf32>
    %1385 = arith.addf %1324, %1384 : vector<1x384xf32>
    %c96_293 = arith.constant 96 : index
    %1386 = memref.load %arg5[%c96_293] : memref<112xf32, #tpu.memory_space<smem>>
    %1387 = vector.broadcast %1386 : f32 to vector<1x384xf32>
    %1388 = arith.mulf %1387, %1329 : vector<1x384xf32>
    %1389 = arith.addf %1385, %1388 : vector<1x384xf32>
    %c103_294 = arith.constant 103 : index
    %1390 = memref.load %arg5[%c103_294] : memref<112xf32, #tpu.memory_space<smem>>
    %1391 = vector.broadcast %1390 : f32 to vector<1x384xf32>
    %1392 = arith.mulf %1391, %1331 : vector<1x384xf32>
    %1393 = arith.addf %1389, %1392 : vector<1x384xf32>
    %c110_295 = arith.constant 110 : index
    %1394 = memref.load %arg5[%c110_295] : memref<112xf32, #tpu.memory_space<smem>>
    %1395 = vector.broadcast %1394 : f32 to vector<1x384xf32>
    %1396 = arith.mulf %1395, %1333 : vector<1x384xf32>
    %1397 = arith.addf %1393, %1396 : vector<1x384xf32>
    %c6_296 = arith.constant 6 : index
    %c0_297 = arith.constant 0 : index
    %1398 = vector.load %arg2[%c6_296, %c0_297] : memref<8x384xf32, #tpu.memory_space<vmem>>, vector<1x384xf32>
    %c381_i32_298 = arith.constant 381 : i32
    %1399 = tpu.dynamic_rotate %478 by %c381_i32_298 dim 1 : vector<1x384xf32>, i32 -> vector<1x384xf32>
    %1400 = arith.mulf %1399, %1398 : vector<1x384xf32>
    %c381_i32_299 = arith.constant 381 : i32
    %1401 = tpu.dynamic_rotate %481 by %c381_i32_299 dim 1 : vector<1x384xf32>, i32 -> vector<1x384xf32>
    %1402 = arith.mulf %1401, %1398 : vector<1x384xf32>
    %c381_i32_300 = arith.constant 381 : i32
    %1403 = tpu.dynamic_rotate %484 by %c381_i32_300 dim 1 : vector<1x384xf32>, i32 -> vector<1x384xf32>
    %1404 = arith.mulf %1403, %1398 : vector<1x384xf32>
    %c381_i32_301 = arith.constant 381 : i32
    %1405 = tpu.dynamic_rotate %487 by %c381_i32_301 dim 1 : vector<1x384xf32>, i32 -> vector<1x384xf32>
    %1406 = arith.mulf %1405, %1398 : vector<1x384xf32>
    %c6_302 = arith.constant 6 : index
    %1407 = memref.load %arg5[%c6_302] : memref<112xf32, #tpu.memory_space<smem>>
    %1408 = vector.broadcast %1407 : f32 to vector<1x384xf32>
    %1409 = arith.mulf %1408, %1400 : vector<1x384xf32>
    %1410 = arith.addf %1349, %1409 : vector<1x384xf32>
    %c13_303 = arith.constant 13 : index
    %1411 = memref.load %arg5[%c13_303] : memref<112xf32, #tpu.memory_space<smem>>
    %1412 = vector.broadcast %1411 : f32 to vector<1x384xf32>
    %1413 = arith.mulf %1412, %1402 : vector<1x384xf32>
    %1414 = arith.addf %1410, %1413 : vector<1x384xf32>
    %c20_304 = arith.constant 20 : index
    %1415 = memref.load %arg5[%c20_304] : memref<112xf32, #tpu.memory_space<smem>>
    %1416 = vector.broadcast %1415 : f32 to vector<1x384xf32>
    %1417 = arith.mulf %1416, %1404 : vector<1x384xf32>
    %1418 = arith.addf %1414, %1417 : vector<1x384xf32>
    %c27_305 = arith.constant 27 : index
    %1419 = memref.load %arg5[%c27_305] : memref<112xf32, #tpu.memory_space<smem>>
    %1420 = vector.broadcast %1419 : f32 to vector<1x384xf32>
    %1421 = arith.mulf %1420, %1406 : vector<1x384xf32>
    %1422 = arith.addf %1418, %1421 : vector<1x384xf32>
    %c34_306 = arith.constant 34 : index
    %1423 = memref.load %arg5[%c34_306] : memref<112xf32, #tpu.memory_space<smem>>
    %1424 = vector.broadcast %1423 : f32 to vector<1x384xf32>
    %1425 = arith.mulf %1424, %1400 : vector<1x384xf32>
    %1426 = arith.addf %1365, %1425 : vector<1x384xf32>
    %c41_307 = arith.constant 41 : index
    %1427 = memref.load %arg5[%c41_307] : memref<112xf32, #tpu.memory_space<smem>>
    %1428 = vector.broadcast %1427 : f32 to vector<1x384xf32>
    %1429 = arith.mulf %1428, %1402 : vector<1x384xf32>
    %1430 = arith.addf %1426, %1429 : vector<1x384xf32>
    %c48_308 = arith.constant 48 : index
    %1431 = memref.load %arg5[%c48_308] : memref<112xf32, #tpu.memory_space<smem>>
    %1432 = vector.broadcast %1431 : f32 to vector<1x384xf32>
    %1433 = arith.mulf %1432, %1404 : vector<1x384xf32>
    %1434 = arith.addf %1430, %1433 : vector<1x384xf32>
    %c55_309 = arith.constant 55 : index
    %1435 = memref.load %arg5[%c55_309] : memref<112xf32, #tpu.memory_space<smem>>
    %1436 = vector.broadcast %1435 : f32 to vector<1x384xf32>
    %1437 = arith.mulf %1436, %1406 : vector<1x384xf32>
    %1438 = arith.addf %1434, %1437 : vector<1x384xf32>
    %c62_310 = arith.constant 62 : index
    %1439 = memref.load %arg5[%c62_310] : memref<112xf32, #tpu.memory_space<smem>>
    %1440 = vector.broadcast %1439 : f32 to vector<1x384xf32>
    %1441 = arith.mulf %1440, %1400 : vector<1x384xf32>
    %1442 = arith.addf %1381, %1441 : vector<1x384xf32>
    %c69_311 = arith.constant 69 : index
    %1443 = memref.load %arg5[%c69_311] : memref<112xf32, #tpu.memory_space<smem>>
    %1444 = vector.broadcast %1443 : f32 to vector<1x384xf32>
    %1445 = arith.mulf %1444, %1402 : vector<1x384xf32>
    %1446 = arith.addf %1442, %1445 : vector<1x384xf32>
    %c76_312 = arith.constant 76 : index
    %1447 = memref.load %arg5[%c76_312] : memref<112xf32, #tpu.memory_space<smem>>
    %1448 = vector.broadcast %1447 : f32 to vector<1x384xf32>
    %1449 = arith.mulf %1448, %1404 : vector<1x384xf32>
    %1450 = arith.addf %1446, %1449 : vector<1x384xf32>
    %c83_313 = arith.constant 83 : index
    %1451 = memref.load %arg5[%c83_313] : memref<112xf32, #tpu.memory_space<smem>>
    %1452 = vector.broadcast %1451 : f32 to vector<1x384xf32>
    %1453 = arith.mulf %1452, %1406 : vector<1x384xf32>
    %1454 = arith.addf %1450, %1453 : vector<1x384xf32>
    %c90_314 = arith.constant 90 : index
    %1455 = memref.load %arg5[%c90_314] : memref<112xf32, #tpu.memory_space<smem>>
    %1456 = vector.broadcast %1455 : f32 to vector<1x384xf32>
    %1457 = arith.mulf %1456, %1400 : vector<1x384xf32>
    %1458 = arith.addf %1397, %1457 : vector<1x384xf32>
    %c97_315 = arith.constant 97 : index
    %1459 = memref.load %arg5[%c97_315] : memref<112xf32, #tpu.memory_space<smem>>
    %1460 = vector.broadcast %1459 : f32 to vector<1x384xf32>
    %1461 = arith.mulf %1460, %1402 : vector<1x384xf32>
    %1462 = arith.addf %1458, %1461 : vector<1x384xf32>
    %c104_316 = arith.constant 104 : index
    %1463 = memref.load %arg5[%c104_316] : memref<112xf32, #tpu.memory_space<smem>>
    %1464 = vector.broadcast %1463 : f32 to vector<1x384xf32>
    %1465 = arith.mulf %1464, %1404 : vector<1x384xf32>
    %1466 = arith.addf %1462, %1465 : vector<1x384xf32>
    %c111_317 = arith.constant 111 : index
    %1467 = memref.load %arg5[%c111_317] : memref<112xf32, #tpu.memory_space<smem>>
    %1468 = vector.broadcast %1467 : f32 to vector<1x384xf32>
    %1469 = arith.mulf %1468, %1406 : vector<1x384xf32>
    %1470 = arith.addf %1466, %1469 : vector<1x384xf32>
    %c0_318 = arith.constant 0 : index
    %1471 = memref.load %arg6[%c0_318] : memref<4xf32, #tpu.memory_space<smem>>
    %1472 = vector.broadcast %1471 : f32 to vector<1x384xf32>
    %1473 = arith.addf %1422, %1472 : vector<1x384xf32>
    %c1_319 = arith.constant 1 : index
    %1474 = memref.load %arg6[%c1_319] : memref<4xf32, #tpu.memory_space<smem>>
    %1475 = vector.broadcast %1474 : f32 to vector<1x384xf32>
    %1476 = arith.addf %1438, %1475 : vector<1x384xf32>
    %c2_320 = arith.constant 2 : index
    %1477 = memref.load %arg6[%c2_320] : memref<4xf32, #tpu.memory_space<smem>>
    %1478 = vector.broadcast %1477 : f32 to vector<1x384xf32>
    %1479 = arith.addf %1454, %1478 : vector<1x384xf32>
    %c3_321 = arith.constant 3 : index
    %1480 = memref.load %arg6[%c3_321] : memref<4xf32, #tpu.memory_space<smem>>
    %1481 = vector.broadcast %1480 : f32 to vector<1x384xf32>
    %1482 = arith.addf %1470, %1481 : vector<1x384xf32>
    %c0_322 = arith.constant 0 : index
    %1483 = memref.load %arg9[%c0_322] : memref<112xf32, #tpu.memory_space<smem>>
    %1484 = vector.broadcast %1483 : f32 to vector<1x384xf32>
    %1485 = arith.mulf %1484, %969 : vector<1x384xf32>
    %c7_323 = arith.constant 7 : index
    %1486 = memref.load %arg9[%c7_323] : memref<112xf32, #tpu.memory_space<smem>>
    %1487 = vector.broadcast %1486 : f32 to vector<1x384xf32>
    %1488 = arith.mulf %1487, %970 : vector<1x384xf32>
    %1489 = arith.addf %1485, %1488 : vector<1x384xf32>
    %c14_324 = arith.constant 14 : index
    %1490 = memref.load %arg9[%c14_324] : memref<112xf32, #tpu.memory_space<smem>>
    %1491 = vector.broadcast %1490 : f32 to vector<1x384xf32>
    %1492 = arith.mulf %1491, %971 : vector<1x384xf32>
    %1493 = arith.addf %1489, %1492 : vector<1x384xf32>
    %c21_325 = arith.constant 21 : index
    %1494 = memref.load %arg9[%c21_325] : memref<112xf32, #tpu.memory_space<smem>>
    %1495 = vector.broadcast %1494 : f32 to vector<1x384xf32>
    %1496 = arith.mulf %1495, %972 : vector<1x384xf32>
    %1497 = arith.addf %1493, %1496 : vector<1x384xf32>
    %c28_326 = arith.constant 28 : index
    %1498 = memref.load %arg9[%c28_326] : memref<112xf32, #tpu.memory_space<smem>>
    %1499 = vector.broadcast %1498 : f32 to vector<1x384xf32>
    %1500 = arith.mulf %1499, %969 : vector<1x384xf32>
    %c35_327 = arith.constant 35 : index
    %1501 = memref.load %arg9[%c35_327] : memref<112xf32, #tpu.memory_space<smem>>
    %1502 = vector.broadcast %1501 : f32 to vector<1x384xf32>
    %1503 = arith.mulf %1502, %970 : vector<1x384xf32>
    %1504 = arith.addf %1500, %1503 : vector<1x384xf32>
    %c42_328 = arith.constant 42 : index
    %1505 = memref.load %arg9[%c42_328] : memref<112xf32, #tpu.memory_space<smem>>
    %1506 = vector.broadcast %1505 : f32 to vector<1x384xf32>
    %1507 = arith.mulf %1506, %971 : vector<1x384xf32>
    %1508 = arith.addf %1504, %1507 : vector<1x384xf32>
    %c49_329 = arith.constant 49 : index
    %1509 = memref.load %arg9[%c49_329] : memref<112xf32, #tpu.memory_space<smem>>
    %1510 = vector.broadcast %1509 : f32 to vector<1x384xf32>
    %1511 = arith.mulf %1510, %972 : vector<1x384xf32>
    %1512 = arith.addf %1508, %1511 : vector<1x384xf32>
    %c56_330 = arith.constant 56 : index
    %1513 = memref.load %arg9[%c56_330] : memref<112xf32, #tpu.memory_space<smem>>
    %1514 = vector.broadcast %1513 : f32 to vector<1x384xf32>
    %1515 = arith.mulf %1514, %969 : vector<1x384xf32>
    %c63_331 = arith.constant 63 : index
    %1516 = memref.load %arg9[%c63_331] : memref<112xf32, #tpu.memory_space<smem>>
    %1517 = vector.broadcast %1516 : f32 to vector<1x384xf32>
    %1518 = arith.mulf %1517, %970 : vector<1x384xf32>
    %1519 = arith.addf %1515, %1518 : vector<1x384xf32>
    %c70_332 = arith.constant 70 : index
    %1520 = memref.load %arg9[%c70_332] : memref<112xf32, #tpu.memory_space<smem>>
    %1521 = vector.broadcast %1520 : f32 to vector<1x384xf32>
    %1522 = arith.mulf %1521, %971 : vector<1x384xf32>
    %1523 = arith.addf %1519, %1522 : vector<1x384xf32>
    %c77_333 = arith.constant 77 : index
    %1524 = memref.load %arg9[%c77_333] : memref<112xf32, #tpu.memory_space<smem>>
    %1525 = vector.broadcast %1524 : f32 to vector<1x384xf32>
    %1526 = arith.mulf %1525, %972 : vector<1x384xf32>
    %1527 = arith.addf %1523, %1526 : vector<1x384xf32>
    %c84_334 = arith.constant 84 : index
    %1528 = memref.load %arg9[%c84_334] : memref<112xf32, #tpu.memory_space<smem>>
    %1529 = vector.broadcast %1528 : f32 to vector<1x384xf32>
    %1530 = arith.mulf %1529, %969 : vector<1x384xf32>
    %c91_335 = arith.constant 91 : index
    %1531 = memref.load %arg9[%c91_335] : memref<112xf32, #tpu.memory_space<smem>>
    %1532 = vector.broadcast %1531 : f32 to vector<1x384xf32>
    %1533 = arith.mulf %1532, %970 : vector<1x384xf32>
    %1534 = arith.addf %1530, %1533 : vector<1x384xf32>
    %c98_336 = arith.constant 98 : index
    %1535 = memref.load %arg9[%c98_336] : memref<112xf32, #tpu.memory_space<smem>>
    %1536 = vector.broadcast %1535 : f32 to vector<1x384xf32>
    %1537 = arith.mulf %1536, %971 : vector<1x384xf32>
    %1538 = arith.addf %1534, %1537 : vector<1x384xf32>
    %c105_337 = arith.constant 105 : index
    %1539 = memref.load %arg9[%c105_337] : memref<112xf32, #tpu.memory_space<smem>>
    %1540 = vector.broadcast %1539 : f32 to vector<1x384xf32>
    %1541 = arith.mulf %1540, %972 : vector<1x384xf32>
    %1542 = arith.addf %1538, %1541 : vector<1x384xf32>
    %c368_i32_338 = arith.constant 368 : i32
    %1543 = tpu.dynamic_rotate %969 by %c368_i32_338 dim 1 : vector<1x384xf32>, i32 -> vector<1x384xf32>
    %c368_i32_339 = arith.constant 368 : i32
    %1544 = tpu.dynamic_rotate %970 by %c368_i32_339 dim 1 : vector<1x384xf32>, i32 -> vector<1x384xf32>
    %c368_i32_340 = arith.constant 368 : i32
    %1545 = tpu.dynamic_rotate %971 by %c368_i32_340 dim 1 : vector<1x384xf32>, i32 -> vector<1x384xf32>
    %c368_i32_341 = arith.constant 368 : i32
    %1546 = tpu.dynamic_rotate %972 by %c368_i32_341 dim 1 : vector<1x384xf32>, i32 -> vector<1x384xf32>
    %c1_342 = arith.constant 1 : index
    %1547 = memref.load %arg9[%c1_342] : memref<112xf32, #tpu.memory_space<smem>>
    %1548 = vector.broadcast %1547 : f32 to vector<1x384xf32>
    %1549 = arith.mulf %1548, %1543 : vector<1x384xf32>
    %1550 = arith.addf %1497, %1549 : vector<1x384xf32>
    %c8_343 = arith.constant 8 : index
    %1551 = memref.load %arg9[%c8_343] : memref<112xf32, #tpu.memory_space<smem>>
    %1552 = vector.broadcast %1551 : f32 to vector<1x384xf32>
    %1553 = arith.mulf %1552, %1544 : vector<1x384xf32>
    %1554 = arith.addf %1550, %1553 : vector<1x384xf32>
    %c15_344 = arith.constant 15 : index
    %1555 = memref.load %arg9[%c15_344] : memref<112xf32, #tpu.memory_space<smem>>
    %1556 = vector.broadcast %1555 : f32 to vector<1x384xf32>
    %1557 = arith.mulf %1556, %1545 : vector<1x384xf32>
    %1558 = arith.addf %1554, %1557 : vector<1x384xf32>
    %c22_345 = arith.constant 22 : index
    %1559 = memref.load %arg9[%c22_345] : memref<112xf32, #tpu.memory_space<smem>>
    %1560 = vector.broadcast %1559 : f32 to vector<1x384xf32>
    %1561 = arith.mulf %1560, %1546 : vector<1x384xf32>
    %1562 = arith.addf %1558, %1561 : vector<1x384xf32>
    %c29_346 = arith.constant 29 : index
    %1563 = memref.load %arg9[%c29_346] : memref<112xf32, #tpu.memory_space<smem>>
    %1564 = vector.broadcast %1563 : f32 to vector<1x384xf32>
    %1565 = arith.mulf %1564, %1543 : vector<1x384xf32>
    %1566 = arith.addf %1512, %1565 : vector<1x384xf32>
    %c36_347 = arith.constant 36 : index
    %1567 = memref.load %arg9[%c36_347] : memref<112xf32, #tpu.memory_space<smem>>
    %1568 = vector.broadcast %1567 : f32 to vector<1x384xf32>
    %1569 = arith.mulf %1568, %1544 : vector<1x384xf32>
    %1570 = arith.addf %1566, %1569 : vector<1x384xf32>
    %c43_348 = arith.constant 43 : index
    %1571 = memref.load %arg9[%c43_348] : memref<112xf32, #tpu.memory_space<smem>>
    %1572 = vector.broadcast %1571 : f32 to vector<1x384xf32>
    %1573 = arith.mulf %1572, %1545 : vector<1x384xf32>
    %1574 = arith.addf %1570, %1573 : vector<1x384xf32>
    %c50_349 = arith.constant 50 : index
    %1575 = memref.load %arg9[%c50_349] : memref<112xf32, #tpu.memory_space<smem>>
    %1576 = vector.broadcast %1575 : f32 to vector<1x384xf32>
    %1577 = arith.mulf %1576, %1546 : vector<1x384xf32>
    %1578 = arith.addf %1574, %1577 : vector<1x384xf32>
    %c57_350 = arith.constant 57 : index
    %1579 = memref.load %arg9[%c57_350] : memref<112xf32, #tpu.memory_space<smem>>
    %1580 = vector.broadcast %1579 : f32 to vector<1x384xf32>
    %1581 = arith.mulf %1580, %1543 : vector<1x384xf32>
    %1582 = arith.addf %1527, %1581 : vector<1x384xf32>
    %c64_351 = arith.constant 64 : index
    %1583 = memref.load %arg9[%c64_351] : memref<112xf32, #tpu.memory_space<smem>>
    %1584 = vector.broadcast %1583 : f32 to vector<1x384xf32>
    %1585 = arith.mulf %1584, %1544 : vector<1x384xf32>
    %1586 = arith.addf %1582, %1585 : vector<1x384xf32>
    %c71_352 = arith.constant 71 : index
    %1587 = memref.load %arg9[%c71_352] : memref<112xf32, #tpu.memory_space<smem>>
    %1588 = vector.broadcast %1587 : f32 to vector<1x384xf32>
    %1589 = arith.mulf %1588, %1545 : vector<1x384xf32>
    %1590 = arith.addf %1586, %1589 : vector<1x384xf32>
    %c78_353 = arith.constant 78 : index
    %1591 = memref.load %arg9[%c78_353] : memref<112xf32, #tpu.memory_space<smem>>
    %1592 = vector.broadcast %1591 : f32 to vector<1x384xf32>
    %1593 = arith.mulf %1592, %1546 : vector<1x384xf32>
    %1594 = arith.addf %1590, %1593 : vector<1x384xf32>
    %c85_354 = arith.constant 85 : index
    %1595 = memref.load %arg9[%c85_354] : memref<112xf32, #tpu.memory_space<smem>>
    %1596 = vector.broadcast %1595 : f32 to vector<1x384xf32>
    %1597 = arith.mulf %1596, %1543 : vector<1x384xf32>
    %1598 = arith.addf %1542, %1597 : vector<1x384xf32>
    %c92_355 = arith.constant 92 : index
    %1599 = memref.load %arg9[%c92_355] : memref<112xf32, #tpu.memory_space<smem>>
    %1600 = vector.broadcast %1599 : f32 to vector<1x384xf32>
    %1601 = arith.mulf %1600, %1544 : vector<1x384xf32>
    %1602 = arith.addf %1598, %1601 : vector<1x384xf32>
    %c99_356 = arith.constant 99 : index
    %1603 = memref.load %arg9[%c99_356] : memref<112xf32, #tpu.memory_space<smem>>
    %1604 = vector.broadcast %1603 : f32 to vector<1x384xf32>
    %1605 = arith.mulf %1604, %1545 : vector<1x384xf32>
    %1606 = arith.addf %1602, %1605 : vector<1x384xf32>
    %c106_357 = arith.constant 106 : index
    %1607 = memref.load %arg9[%c106_357] : memref<112xf32, #tpu.memory_space<smem>>
    %1608 = vector.broadcast %1607 : f32 to vector<1x384xf32>
    %1609 = arith.mulf %1608, %1546 : vector<1x384xf32>
    %1610 = arith.addf %1606, %1609 : vector<1x384xf32>
    %c352_i32_358 = arith.constant 352 : i32
    %1611 = tpu.dynamic_rotate %969 by %c352_i32_358 dim 1 : vector<1x384xf32>, i32 -> vector<1x384xf32>
    %c352_i32_359 = arith.constant 352 : i32
    %1612 = tpu.dynamic_rotate %970 by %c352_i32_359 dim 1 : vector<1x384xf32>, i32 -> vector<1x384xf32>
    %c352_i32_360 = arith.constant 352 : i32
    %1613 = tpu.dynamic_rotate %971 by %c352_i32_360 dim 1 : vector<1x384xf32>, i32 -> vector<1x384xf32>
    %c352_i32_361 = arith.constant 352 : i32
    %1614 = tpu.dynamic_rotate %972 by %c352_i32_361 dim 1 : vector<1x384xf32>, i32 -> vector<1x384xf32>
    %c2_362 = arith.constant 2 : index
    %1615 = memref.load %arg9[%c2_362] : memref<112xf32, #tpu.memory_space<smem>>
    %1616 = vector.broadcast %1615 : f32 to vector<1x384xf32>
    %1617 = arith.mulf %1616, %1611 : vector<1x384xf32>
    %1618 = arith.addf %1562, %1617 : vector<1x384xf32>
    %c9_363 = arith.constant 9 : index
    %1619 = memref.load %arg9[%c9_363] : memref<112xf32, #tpu.memory_space<smem>>
    %1620 = vector.broadcast %1619 : f32 to vector<1x384xf32>
    %1621 = arith.mulf %1620, %1612 : vector<1x384xf32>
    %1622 = arith.addf %1618, %1621 : vector<1x384xf32>
    %c16_364 = arith.constant 16 : index
    %1623 = memref.load %arg9[%c16_364] : memref<112xf32, #tpu.memory_space<smem>>
    %1624 = vector.broadcast %1623 : f32 to vector<1x384xf32>
    %1625 = arith.mulf %1624, %1613 : vector<1x384xf32>
    %1626 = arith.addf %1622, %1625 : vector<1x384xf32>
    %c23_365 = arith.constant 23 : index
    %1627 = memref.load %arg9[%c23_365] : memref<112xf32, #tpu.memory_space<smem>>
    %1628 = vector.broadcast %1627 : f32 to vector<1x384xf32>
    %1629 = arith.mulf %1628, %1614 : vector<1x384xf32>
    %1630 = arith.addf %1626, %1629 : vector<1x384xf32>
    %c30_366 = arith.constant 30 : index
    %1631 = memref.load %arg9[%c30_366] : memref<112xf32, #tpu.memory_space<smem>>
    %1632 = vector.broadcast %1631 : f32 to vector<1x384xf32>
    %1633 = arith.mulf %1632, %1611 : vector<1x384xf32>
    %1634 = arith.addf %1578, %1633 : vector<1x384xf32>
    %c37_367 = arith.constant 37 : index
    %1635 = memref.load %arg9[%c37_367] : memref<112xf32, #tpu.memory_space<smem>>
    %1636 = vector.broadcast %1635 : f32 to vector<1x384xf32>
    %1637 = arith.mulf %1636, %1612 : vector<1x384xf32>
    %1638 = arith.addf %1634, %1637 : vector<1x384xf32>
    %c44_368 = arith.constant 44 : index
    %1639 = memref.load %arg9[%c44_368] : memref<112xf32, #tpu.memory_space<smem>>
    %1640 = vector.broadcast %1639 : f32 to vector<1x384xf32>
    %1641 = arith.mulf %1640, %1613 : vector<1x384xf32>
    %1642 = arith.addf %1638, %1641 : vector<1x384xf32>
    %c51_369 = arith.constant 51 : index
    %1643 = memref.load %arg9[%c51_369] : memref<112xf32, #tpu.memory_space<smem>>
    %1644 = vector.broadcast %1643 : f32 to vector<1x384xf32>
    %1645 = arith.mulf %1644, %1614 : vector<1x384xf32>
    %1646 = arith.addf %1642, %1645 : vector<1x384xf32>
    %c58_370 = arith.constant 58 : index
    %1647 = memref.load %arg9[%c58_370] : memref<112xf32, #tpu.memory_space<smem>>
    %1648 = vector.broadcast %1647 : f32 to vector<1x384xf32>
    %1649 = arith.mulf %1648, %1611 : vector<1x384xf32>
    %1650 = arith.addf %1594, %1649 : vector<1x384xf32>
    %c65_371 = arith.constant 65 : index
    %1651 = memref.load %arg9[%c65_371] : memref<112xf32, #tpu.memory_space<smem>>
    %1652 = vector.broadcast %1651 : f32 to vector<1x384xf32>
    %1653 = arith.mulf %1652, %1612 : vector<1x384xf32>
    %1654 = arith.addf %1650, %1653 : vector<1x384xf32>
    %c72_372 = arith.constant 72 : index
    %1655 = memref.load %arg9[%c72_372] : memref<112xf32, #tpu.memory_space<smem>>
    %1656 = vector.broadcast %1655 : f32 to vector<1x384xf32>
    %1657 = arith.mulf %1656, %1613 : vector<1x384xf32>
    %1658 = arith.addf %1654, %1657 : vector<1x384xf32>
    %c79_373 = arith.constant 79 : index
    %1659 = memref.load %arg9[%c79_373] : memref<112xf32, #tpu.memory_space<smem>>
    %1660 = vector.broadcast %1659 : f32 to vector<1x384xf32>
    %1661 = arith.mulf %1660, %1614 : vector<1x384xf32>
    %1662 = arith.addf %1658, %1661 : vector<1x384xf32>
    %c86_374 = arith.constant 86 : index
    %1663 = memref.load %arg9[%c86_374] : memref<112xf32, #tpu.memory_space<smem>>
    %1664 = vector.broadcast %1663 : f32 to vector<1x384xf32>
    %1665 = arith.mulf %1664, %1611 : vector<1x384xf32>
    %1666 = arith.addf %1610, %1665 : vector<1x384xf32>
    %c93_375 = arith.constant 93 : index
    %1667 = memref.load %arg9[%c93_375] : memref<112xf32, #tpu.memory_space<smem>>
    %1668 = vector.broadcast %1667 : f32 to vector<1x384xf32>
    %1669 = arith.mulf %1668, %1612 : vector<1x384xf32>
    %1670 = arith.addf %1666, %1669 : vector<1x384xf32>
    %c100_376 = arith.constant 100 : index
    %1671 = memref.load %arg9[%c100_376] : memref<112xf32, #tpu.memory_space<smem>>
    %1672 = vector.broadcast %1671 : f32 to vector<1x384xf32>
    %1673 = arith.mulf %1672, %1613 : vector<1x384xf32>
    %1674 = arith.addf %1670, %1673 : vector<1x384xf32>
    %c107_377 = arith.constant 107 : index
    %1675 = memref.load %arg9[%c107_377] : memref<112xf32, #tpu.memory_space<smem>>
    %1676 = vector.broadcast %1675 : f32 to vector<1x384xf32>
    %1677 = arith.mulf %1676, %1614 : vector<1x384xf32>
    %1678 = arith.addf %1674, %1677 : vector<1x384xf32>
    %c336_i32_378 = arith.constant 336 : i32
    %1679 = tpu.dynamic_rotate %969 by %c336_i32_378 dim 1 : vector<1x384xf32>, i32 -> vector<1x384xf32>
    %c336_i32_379 = arith.constant 336 : i32
    %1680 = tpu.dynamic_rotate %970 by %c336_i32_379 dim 1 : vector<1x384xf32>, i32 -> vector<1x384xf32>
    %c336_i32_380 = arith.constant 336 : i32
    %1681 = tpu.dynamic_rotate %971 by %c336_i32_380 dim 1 : vector<1x384xf32>, i32 -> vector<1x384xf32>
    %c336_i32_381 = arith.constant 336 : i32
    %1682 = tpu.dynamic_rotate %972 by %c336_i32_381 dim 1 : vector<1x384xf32>, i32 -> vector<1x384xf32>
    %c3_382 = arith.constant 3 : index
    %1683 = memref.load %arg9[%c3_382] : memref<112xf32, #tpu.memory_space<smem>>
    %1684 = vector.broadcast %1683 : f32 to vector<1x384xf32>
    %1685 = arith.mulf %1684, %1679 : vector<1x384xf32>
    %1686 = arith.addf %1630, %1685 : vector<1x384xf32>
    %c10_383 = arith.constant 10 : index
    %1687 = memref.load %arg9[%c10_383] : memref<112xf32, #tpu.memory_space<smem>>
    %1688 = vector.broadcast %1687 : f32 to vector<1x384xf32>
    %1689 = arith.mulf %1688, %1680 : vector<1x384xf32>
    %1690 = arith.addf %1686, %1689 : vector<1x384xf32>
    %c17_384 = arith.constant 17 : index
    %1691 = memref.load %arg9[%c17_384] : memref<112xf32, #tpu.memory_space<smem>>
    %1692 = vector.broadcast %1691 : f32 to vector<1x384xf32>
    %1693 = arith.mulf %1692, %1681 : vector<1x384xf32>
    %1694 = arith.addf %1690, %1693 : vector<1x384xf32>
    %c24_385 = arith.constant 24 : index
    %1695 = memref.load %arg9[%c24_385] : memref<112xf32, #tpu.memory_space<smem>>
    %1696 = vector.broadcast %1695 : f32 to vector<1x384xf32>
    %1697 = arith.mulf %1696, %1682 : vector<1x384xf32>
    %1698 = arith.addf %1694, %1697 : vector<1x384xf32>
    %c31_386 = arith.constant 31 : index
    %1699 = memref.load %arg9[%c31_386] : memref<112xf32, #tpu.memory_space<smem>>
    %1700 = vector.broadcast %1699 : f32 to vector<1x384xf32>
    %1701 = arith.mulf %1700, %1679 : vector<1x384xf32>
    %1702 = arith.addf %1646, %1701 : vector<1x384xf32>
    %c38_387 = arith.constant 38 : index
    %1703 = memref.load %arg9[%c38_387] : memref<112xf32, #tpu.memory_space<smem>>
    %1704 = vector.broadcast %1703 : f32 to vector<1x384xf32>
    %1705 = arith.mulf %1704, %1680 : vector<1x384xf32>
    %1706 = arith.addf %1702, %1705 : vector<1x384xf32>
    %c45_388 = arith.constant 45 : index
    %1707 = memref.load %arg9[%c45_388] : memref<112xf32, #tpu.memory_space<smem>>
    %1708 = vector.broadcast %1707 : f32 to vector<1x384xf32>
    %1709 = arith.mulf %1708, %1681 : vector<1x384xf32>
    %1710 = arith.addf %1706, %1709 : vector<1x384xf32>
    %c52_389 = arith.constant 52 : index
    %1711 = memref.load %arg9[%c52_389] : memref<112xf32, #tpu.memory_space<smem>>
    %1712 = vector.broadcast %1711 : f32 to vector<1x384xf32>
    %1713 = arith.mulf %1712, %1682 : vector<1x384xf32>
    %1714 = arith.addf %1710, %1713 : vector<1x384xf32>
    %c59_390 = arith.constant 59 : index
    %1715 = memref.load %arg9[%c59_390] : memref<112xf32, #tpu.memory_space<smem>>
    %1716 = vector.broadcast %1715 : f32 to vector<1x384xf32>
    %1717 = arith.mulf %1716, %1679 : vector<1x384xf32>
    %1718 = arith.addf %1662, %1717 : vector<1x384xf32>
    %c66_391 = arith.constant 66 : index
    %1719 = memref.load %arg9[%c66_391] : memref<112xf32, #tpu.memory_space<smem>>
    %1720 = vector.broadcast %1719 : f32 to vector<1x384xf32>
    %1721 = arith.mulf %1720, %1680 : vector<1x384xf32>
    %1722 = arith.addf %1718, %1721 : vector<1x384xf32>
    %c73_392 = arith.constant 73 : index
    %1723 = memref.load %arg9[%c73_392] : memref<112xf32, #tpu.memory_space<smem>>
    %1724 = vector.broadcast %1723 : f32 to vector<1x384xf32>
    %1725 = arith.mulf %1724, %1681 : vector<1x384xf32>
    %1726 = arith.addf %1722, %1725 : vector<1x384xf32>
    %c80_393 = arith.constant 80 : index
    %1727 = memref.load %arg9[%c80_393] : memref<112xf32, #tpu.memory_space<smem>>
    %1728 = vector.broadcast %1727 : f32 to vector<1x384xf32>
    %1729 = arith.mulf %1728, %1682 : vector<1x384xf32>
    %1730 = arith.addf %1726, %1729 : vector<1x384xf32>
    %c87_394 = arith.constant 87 : index
    %1731 = memref.load %arg9[%c87_394] : memref<112xf32, #tpu.memory_space<smem>>
    %1732 = vector.broadcast %1731 : f32 to vector<1x384xf32>
    %1733 = arith.mulf %1732, %1679 : vector<1x384xf32>
    %1734 = arith.addf %1678, %1733 : vector<1x384xf32>
    %c94_395 = arith.constant 94 : index
    %1735 = memref.load %arg9[%c94_395] : memref<112xf32, #tpu.memory_space<smem>>
    %1736 = vector.broadcast %1735 : f32 to vector<1x384xf32>
    %1737 = arith.mulf %1736, %1680 : vector<1x384xf32>
    %1738 = arith.addf %1734, %1737 : vector<1x384xf32>
    %c101_396 = arith.constant 101 : index
    %1739 = memref.load %arg9[%c101_396] : memref<112xf32, #tpu.memory_space<smem>>
    %1740 = vector.broadcast %1739 : f32 to vector<1x384xf32>
    %1741 = arith.mulf %1740, %1681 : vector<1x384xf32>
    %1742 = arith.addf %1738, %1741 : vector<1x384xf32>
    %c108_397 = arith.constant 108 : index
    %1743 = memref.load %arg9[%c108_397] : memref<112xf32, #tpu.memory_space<smem>>
    %1744 = vector.broadcast %1743 : f32 to vector<1x384xf32>
    %1745 = arith.mulf %1744, %1682 : vector<1x384xf32>
    %1746 = arith.addf %1742, %1745 : vector<1x384xf32>
    %c320_i32_398 = arith.constant 320 : i32
    %1747 = tpu.dynamic_rotate %969 by %c320_i32_398 dim 1 : vector<1x384xf32>, i32 -> vector<1x384xf32>
    %c320_i32_399 = arith.constant 320 : i32
    %1748 = tpu.dynamic_rotate %970 by %c320_i32_399 dim 1 : vector<1x384xf32>, i32 -> vector<1x384xf32>
    %c320_i32_400 = arith.constant 320 : i32
    %1749 = tpu.dynamic_rotate %971 by %c320_i32_400 dim 1 : vector<1x384xf32>, i32 -> vector<1x384xf32>
    %c320_i32_401 = arith.constant 320 : i32
    %1750 = tpu.dynamic_rotate %972 by %c320_i32_401 dim 1 : vector<1x384xf32>, i32 -> vector<1x384xf32>
    %c4_402 = arith.constant 4 : index
    %1751 = memref.load %arg9[%c4_402] : memref<112xf32, #tpu.memory_space<smem>>
    %1752 = vector.broadcast %1751 : f32 to vector<1x384xf32>
    %1753 = arith.mulf %1752, %1747 : vector<1x384xf32>
    %1754 = arith.addf %1698, %1753 : vector<1x384xf32>
    %c11_403 = arith.constant 11 : index
    %1755 = memref.load %arg9[%c11_403] : memref<112xf32, #tpu.memory_space<smem>>
    %1756 = vector.broadcast %1755 : f32 to vector<1x384xf32>
    %1757 = arith.mulf %1756, %1748 : vector<1x384xf32>
    %1758 = arith.addf %1754, %1757 : vector<1x384xf32>
    %c18_404 = arith.constant 18 : index
    %1759 = memref.load %arg9[%c18_404] : memref<112xf32, #tpu.memory_space<smem>>
    %1760 = vector.broadcast %1759 : f32 to vector<1x384xf32>
    %1761 = arith.mulf %1760, %1749 : vector<1x384xf32>
    %1762 = arith.addf %1758, %1761 : vector<1x384xf32>
    %c25_405 = arith.constant 25 : index
    %1763 = memref.load %arg9[%c25_405] : memref<112xf32, #tpu.memory_space<smem>>
    %1764 = vector.broadcast %1763 : f32 to vector<1x384xf32>
    %1765 = arith.mulf %1764, %1750 : vector<1x384xf32>
    %1766 = arith.addf %1762, %1765 : vector<1x384xf32>
    %c32_406 = arith.constant 32 : index
    %1767 = memref.load %arg9[%c32_406] : memref<112xf32, #tpu.memory_space<smem>>
    %1768 = vector.broadcast %1767 : f32 to vector<1x384xf32>
    %1769 = arith.mulf %1768, %1747 : vector<1x384xf32>
    %1770 = arith.addf %1714, %1769 : vector<1x384xf32>
    %c39_407 = arith.constant 39 : index
    %1771 = memref.load %arg9[%c39_407] : memref<112xf32, #tpu.memory_space<smem>>
    %1772 = vector.broadcast %1771 : f32 to vector<1x384xf32>
    %1773 = arith.mulf %1772, %1748 : vector<1x384xf32>
    %1774 = arith.addf %1770, %1773 : vector<1x384xf32>
    %c46_408 = arith.constant 46 : index
    %1775 = memref.load %arg9[%c46_408] : memref<112xf32, #tpu.memory_space<smem>>
    %1776 = vector.broadcast %1775 : f32 to vector<1x384xf32>
    %1777 = arith.mulf %1776, %1749 : vector<1x384xf32>
    %1778 = arith.addf %1774, %1777 : vector<1x384xf32>
    %c53_409 = arith.constant 53 : index
    %1779 = memref.load %arg9[%c53_409] : memref<112xf32, #tpu.memory_space<smem>>
    %1780 = vector.broadcast %1779 : f32 to vector<1x384xf32>
    %1781 = arith.mulf %1780, %1750 : vector<1x384xf32>
    %1782 = arith.addf %1778, %1781 : vector<1x384xf32>
    %c60_410 = arith.constant 60 : index
    %1783 = memref.load %arg9[%c60_410] : memref<112xf32, #tpu.memory_space<smem>>
    %1784 = vector.broadcast %1783 : f32 to vector<1x384xf32>
    %1785 = arith.mulf %1784, %1747 : vector<1x384xf32>
    %1786 = arith.addf %1730, %1785 : vector<1x384xf32>
    %c67_411 = arith.constant 67 : index
    %1787 = memref.load %arg9[%c67_411] : memref<112xf32, #tpu.memory_space<smem>>
    %1788 = vector.broadcast %1787 : f32 to vector<1x384xf32>
    %1789 = arith.mulf %1788, %1748 : vector<1x384xf32>
    %1790 = arith.addf %1786, %1789 : vector<1x384xf32>
    %c74_412 = arith.constant 74 : index
    %1791 = memref.load %arg9[%c74_412] : memref<112xf32, #tpu.memory_space<smem>>
    %1792 = vector.broadcast %1791 : f32 to vector<1x384xf32>
    %1793 = arith.mulf %1792, %1749 : vector<1x384xf32>
    %1794 = arith.addf %1790, %1793 : vector<1x384xf32>
    %c81_413 = arith.constant 81 : index
    %1795 = memref.load %arg9[%c81_413] : memref<112xf32, #tpu.memory_space<smem>>
    %1796 = vector.broadcast %1795 : f32 to vector<1x384xf32>
    %1797 = arith.mulf %1796, %1750 : vector<1x384xf32>
    %1798 = arith.addf %1794, %1797 : vector<1x384xf32>
    %c88_414 = arith.constant 88 : index
    %1799 = memref.load %arg9[%c88_414] : memref<112xf32, #tpu.memory_space<smem>>
    %1800 = vector.broadcast %1799 : f32 to vector<1x384xf32>
    %1801 = arith.mulf %1800, %1747 : vector<1x384xf32>
    %1802 = arith.addf %1746, %1801 : vector<1x384xf32>
    %c95_415 = arith.constant 95 : index
    %1803 = memref.load %arg9[%c95_415] : memref<112xf32, #tpu.memory_space<smem>>
    %1804 = vector.broadcast %1803 : f32 to vector<1x384xf32>
    %1805 = arith.mulf %1804, %1748 : vector<1x384xf32>
    %1806 = arith.addf %1802, %1805 : vector<1x384xf32>
    %c102_416 = arith.constant 102 : index
    %1807 = memref.load %arg9[%c102_416] : memref<112xf32, #tpu.memory_space<smem>>
    %1808 = vector.broadcast %1807 : f32 to vector<1x384xf32>
    %1809 = arith.mulf %1808, %1749 : vector<1x384xf32>
    %1810 = arith.addf %1806, %1809 : vector<1x384xf32>
    %c109_417 = arith.constant 109 : index
    %1811 = memref.load %arg9[%c109_417] : memref<112xf32, #tpu.memory_space<smem>>
    %1812 = vector.broadcast %1811 : f32 to vector<1x384xf32>
    %1813 = arith.mulf %1812, %1750 : vector<1x384xf32>
    %1814 = arith.addf %1810, %1813 : vector<1x384xf32>
    %c304_i32_418 = arith.constant 304 : i32
    %1815 = tpu.dynamic_rotate %969 by %c304_i32_418 dim 1 : vector<1x384xf32>, i32 -> vector<1x384xf32>
    %c304_i32_419 = arith.constant 304 : i32
    %1816 = tpu.dynamic_rotate %970 by %c304_i32_419 dim 1 : vector<1x384xf32>, i32 -> vector<1x384xf32>
    %c304_i32_420 = arith.constant 304 : i32
    %1817 = tpu.dynamic_rotate %971 by %c304_i32_420 dim 1 : vector<1x384xf32>, i32 -> vector<1x384xf32>
    %c304_i32_421 = arith.constant 304 : i32
    %1818 = tpu.dynamic_rotate %972 by %c304_i32_421 dim 1 : vector<1x384xf32>, i32 -> vector<1x384xf32>
    %c5_422 = arith.constant 5 : index
    %1819 = memref.load %arg9[%c5_422] : memref<112xf32, #tpu.memory_space<smem>>
    %1820 = vector.broadcast %1819 : f32 to vector<1x384xf32>
    %1821 = arith.mulf %1820, %1815 : vector<1x384xf32>
    %1822 = arith.addf %1766, %1821 : vector<1x384xf32>
    %c12_423 = arith.constant 12 : index
    %1823 = memref.load %arg9[%c12_423] : memref<112xf32, #tpu.memory_space<smem>>
    %1824 = vector.broadcast %1823 : f32 to vector<1x384xf32>
    %1825 = arith.mulf %1824, %1816 : vector<1x384xf32>
    %1826 = arith.addf %1822, %1825 : vector<1x384xf32>
    %c19_424 = arith.constant 19 : index
    %1827 = memref.load %arg9[%c19_424] : memref<112xf32, #tpu.memory_space<smem>>
    %1828 = vector.broadcast %1827 : f32 to vector<1x384xf32>
    %1829 = arith.mulf %1828, %1817 : vector<1x384xf32>
    %1830 = arith.addf %1826, %1829 : vector<1x384xf32>
    %c26_425 = arith.constant 26 : index
    %1831 = memref.load %arg9[%c26_425] : memref<112xf32, #tpu.memory_space<smem>>
    %1832 = vector.broadcast %1831 : f32 to vector<1x384xf32>
    %1833 = arith.mulf %1832, %1818 : vector<1x384xf32>
    %1834 = arith.addf %1830, %1833 : vector<1x384xf32>
    %c33_426 = arith.constant 33 : index
    %1835 = memref.load %arg9[%c33_426] : memref<112xf32, #tpu.memory_space<smem>>
    %1836 = vector.broadcast %1835 : f32 to vector<1x384xf32>
    %1837 = arith.mulf %1836, %1815 : vector<1x384xf32>
    %1838 = arith.addf %1782, %1837 : vector<1x384xf32>
    %c40_427 = arith.constant 40 : index
    %1839 = memref.load %arg9[%c40_427] : memref<112xf32, #tpu.memory_space<smem>>
    %1840 = vector.broadcast %1839 : f32 to vector<1x384xf32>
    %1841 = arith.mulf %1840, %1816 : vector<1x384xf32>
    %1842 = arith.addf %1838, %1841 : vector<1x384xf32>
    %c47_428 = arith.constant 47 : index
    %1843 = memref.load %arg9[%c47_428] : memref<112xf32, #tpu.memory_space<smem>>
    %1844 = vector.broadcast %1843 : f32 to vector<1x384xf32>
    %1845 = arith.mulf %1844, %1817 : vector<1x384xf32>
    %1846 = arith.addf %1842, %1845 : vector<1x384xf32>
    %c54_429 = arith.constant 54 : index
    %1847 = memref.load %arg9[%c54_429] : memref<112xf32, #tpu.memory_space<smem>>
    %1848 = vector.broadcast %1847 : f32 to vector<1x384xf32>
    %1849 = arith.mulf %1848, %1818 : vector<1x384xf32>
    %1850 = arith.addf %1846, %1849 : vector<1x384xf32>
    %c61_430 = arith.constant 61 : index
    %1851 = memref.load %arg9[%c61_430] : memref<112xf32, #tpu.memory_space<smem>>
    %1852 = vector.broadcast %1851 : f32 to vector<1x384xf32>
    %1853 = arith.mulf %1852, %1815 : vector<1x384xf32>
    %1854 = arith.addf %1798, %1853 : vector<1x384xf32>
    %c68_431 = arith.constant 68 : index
    %1855 = memref.load %arg9[%c68_431] : memref<112xf32, #tpu.memory_space<smem>>
    %1856 = vector.broadcast %1855 : f32 to vector<1x384xf32>
    %1857 = arith.mulf %1856, %1816 : vector<1x384xf32>
    %1858 = arith.addf %1854, %1857 : vector<1x384xf32>
    %c75_432 = arith.constant 75 : index
    %1859 = memref.load %arg9[%c75_432] : memref<112xf32, #tpu.memory_space<smem>>
    %1860 = vector.broadcast %1859 : f32 to vector<1x384xf32>
    %1861 = arith.mulf %1860, %1817 : vector<1x384xf32>
    %1862 = arith.addf %1858, %1861 : vector<1x384xf32>
    %c82_433 = arith.constant 82 : index
    %1863 = memref.load %arg9[%c82_433] : memref<112xf32, #tpu.memory_space<smem>>
    %1864 = vector.broadcast %1863 : f32 to vector<1x384xf32>
    %1865 = arith.mulf %1864, %1818 : vector<1x384xf32>
    %1866 = arith.addf %1862, %1865 : vector<1x384xf32>
    %c89_434 = arith.constant 89 : index
    %1867 = memref.load %arg9[%c89_434] : memref<112xf32, #tpu.memory_space<smem>>
    %1868 = vector.broadcast %1867 : f32 to vector<1x384xf32>
    %1869 = arith.mulf %1868, %1815 : vector<1x384xf32>
    %1870 = arith.addf %1814, %1869 : vector<1x384xf32>
    %c96_435 = arith.constant 96 : index
    %1871 = memref.load %arg9[%c96_435] : memref<112xf32, #tpu.memory_space<smem>>
    %1872 = vector.broadcast %1871 : f32 to vector<1x384xf32>
    %1873 = arith.mulf %1872, %1816 : vector<1x384xf32>
    %1874 = arith.addf %1870, %1873 : vector<1x384xf32>
    %c103_436 = arith.constant 103 : index
    %1875 = memref.load %arg9[%c103_436] : memref<112xf32, #tpu.memory_space<smem>>
    %1876 = vector.broadcast %1875 : f32 to vector<1x384xf32>
    %1877 = arith.mulf %1876, %1817 : vector<1x384xf32>
    %1878 = arith.addf %1874, %1877 : vector<1x384xf32>
    %c110_437 = arith.constant 110 : index
    %1879 = memref.load %arg9[%c110_437] : memref<112xf32, #tpu.memory_space<smem>>
    %1880 = vector.broadcast %1879 : f32 to vector<1x384xf32>
    %1881 = arith.mulf %1880, %1818 : vector<1x384xf32>
    %1882 = arith.addf %1878, %1881 : vector<1x384xf32>
    %c288_i32_438 = arith.constant 288 : i32
    %1883 = tpu.dynamic_rotate %969 by %c288_i32_438 dim 1 : vector<1x384xf32>, i32 -> vector<1x384xf32>
    %c288_i32_439 = arith.constant 288 : i32
    %1884 = tpu.dynamic_rotate %970 by %c288_i32_439 dim 1 : vector<1x384xf32>, i32 -> vector<1x384xf32>
    %c288_i32_440 = arith.constant 288 : i32
    %1885 = tpu.dynamic_rotate %971 by %c288_i32_440 dim 1 : vector<1x384xf32>, i32 -> vector<1x384xf32>
    %c288_i32_441 = arith.constant 288 : i32
    %1886 = tpu.dynamic_rotate %972 by %c288_i32_441 dim 1 : vector<1x384xf32>, i32 -> vector<1x384xf32>
    %c6_442 = arith.constant 6 : index
    %1887 = memref.load %arg9[%c6_442] : memref<112xf32, #tpu.memory_space<smem>>
    %1888 = vector.broadcast %1887 : f32 to vector<1x384xf32>
    %1889 = arith.mulf %1888, %1883 : vector<1x384xf32>
    %1890 = arith.addf %1834, %1889 : vector<1x384xf32>
    %c13_443 = arith.constant 13 : index
    %1891 = memref.load %arg9[%c13_443] : memref<112xf32, #tpu.memory_space<smem>>
    %1892 = vector.broadcast %1891 : f32 to vector<1x384xf32>
    %1893 = arith.mulf %1892, %1884 : vector<1x384xf32>
    %1894 = arith.addf %1890, %1893 : vector<1x384xf32>
    %c20_444 = arith.constant 20 : index
    %1895 = memref.load %arg9[%c20_444] : memref<112xf32, #tpu.memory_space<smem>>
    %1896 = vector.broadcast %1895 : f32 to vector<1x384xf32>
    %1897 = arith.mulf %1896, %1885 : vector<1x384xf32>
    %1898 = arith.addf %1894, %1897 : vector<1x384xf32>
    %c27_445 = arith.constant 27 : index
    %1899 = memref.load %arg9[%c27_445] : memref<112xf32, #tpu.memory_space<smem>>
    %1900 = vector.broadcast %1899 : f32 to vector<1x384xf32>
    %1901 = arith.mulf %1900, %1886 : vector<1x384xf32>
    %1902 = arith.addf %1898, %1901 : vector<1x384xf32>
    %c34_446 = arith.constant 34 : index
    %1903 = memref.load %arg9[%c34_446] : memref<112xf32, #tpu.memory_space<smem>>
    %1904 = vector.broadcast %1903 : f32 to vector<1x384xf32>
    %1905 = arith.mulf %1904, %1883 : vector<1x384xf32>
    %1906 = arith.addf %1850, %1905 : vector<1x384xf32>
    %c41_447 = arith.constant 41 : index
    %1907 = memref.load %arg9[%c41_447] : memref<112xf32, #tpu.memory_space<smem>>
    %1908 = vector.broadcast %1907 : f32 to vector<1x384xf32>
    %1909 = arith.mulf %1908, %1884 : vector<1x384xf32>
    %1910 = arith.addf %1906, %1909 : vector<1x384xf32>
    %c48_448 = arith.constant 48 : index
    %1911 = memref.load %arg9[%c48_448] : memref<112xf32, #tpu.memory_space<smem>>
    %1912 = vector.broadcast %1911 : f32 to vector<1x384xf32>
    %1913 = arith.mulf %1912, %1885 : vector<1x384xf32>
    %1914 = arith.addf %1910, %1913 : vector<1x384xf32>
    %c55_449 = arith.constant 55 : index
    %1915 = memref.load %arg9[%c55_449] : memref<112xf32, #tpu.memory_space<smem>>
    %1916 = vector.broadcast %1915 : f32 to vector<1x384xf32>
    %1917 = arith.mulf %1916, %1886 : vector<1x384xf32>
    %1918 = arith.addf %1914, %1917 : vector<1x384xf32>
    %c62_450 = arith.constant 62 : index
    %1919 = memref.load %arg9[%c62_450] : memref<112xf32, #tpu.memory_space<smem>>
    %1920 = vector.broadcast %1919 : f32 to vector<1x384xf32>
    %1921 = arith.mulf %1920, %1883 : vector<1x384xf32>
    %1922 = arith.addf %1866, %1921 : vector<1x384xf32>
    %c69_451 = arith.constant 69 : index
    %1923 = memref.load %arg9[%c69_451] : memref<112xf32, #tpu.memory_space<smem>>
    %1924 = vector.broadcast %1923 : f32 to vector<1x384xf32>
    %1925 = arith.mulf %1924, %1884 : vector<1x384xf32>
    %1926 = arith.addf %1922, %1925 : vector<1x384xf32>
    %c76_452 = arith.constant 76 : index
    %1927 = memref.load %arg9[%c76_452] : memref<112xf32, #tpu.memory_space<smem>>
    %1928 = vector.broadcast %1927 : f32 to vector<1x384xf32>
    %1929 = arith.mulf %1928, %1885 : vector<1x384xf32>
    %1930 = arith.addf %1926, %1929 : vector<1x384xf32>
    %c83_453 = arith.constant 83 : index
    %1931 = memref.load %arg9[%c83_453] : memref<112xf32, #tpu.memory_space<smem>>
    %1932 = vector.broadcast %1931 : f32 to vector<1x384xf32>
    %1933 = arith.mulf %1932, %1886 : vector<1x384xf32>
    %1934 = arith.addf %1930, %1933 : vector<1x384xf32>
    %c90_454 = arith.constant 90 : index
    %1935 = memref.load %arg9[%c90_454] : memref<112xf32, #tpu.memory_space<smem>>
    %1936 = vector.broadcast %1935 : f32 to vector<1x384xf32>
    %1937 = arith.mulf %1936, %1883 : vector<1x384xf32>
    %1938 = arith.addf %1882, %1937 : vector<1x384xf32>
    %c97_455 = arith.constant 97 : index
    %1939 = memref.load %arg9[%c97_455] : memref<112xf32, #tpu.memory_space<smem>>
    %1940 = vector.broadcast %1939 : f32 to vector<1x384xf32>
    %1941 = arith.mulf %1940, %1884 : vector<1x384xf32>
    %1942 = arith.addf %1938, %1941 : vector<1x384xf32>
    %c104_456 = arith.constant 104 : index
    %1943 = memref.load %arg9[%c104_456] : memref<112xf32, #tpu.memory_space<smem>>
    %1944 = vector.broadcast %1943 : f32 to vector<1x384xf32>
    %1945 = arith.mulf %1944, %1885 : vector<1x384xf32>
    %1946 = arith.addf %1942, %1945 : vector<1x384xf32>
    %c111_457 = arith.constant 111 : index
    %1947 = memref.load %arg9[%c111_457] : memref<112xf32, #tpu.memory_space<smem>>
    %1948 = vector.broadcast %1947 : f32 to vector<1x384xf32>
    %1949 = arith.mulf %1948, %1886 : vector<1x384xf32>
    %1950 = arith.addf %1946, %1949 : vector<1x384xf32>
    %c0_458 = arith.constant 0 : index
    %1951 = memref.load %arg10[%c0_458] : memref<4xf32, #tpu.memory_space<smem>>
    %1952 = vector.broadcast %1951 : f32 to vector<1x384xf32>
    %1953 = arith.addf %1902, %1952 : vector<1x384xf32>
    %c1_459 = arith.constant 1 : index
    %1954 = memref.load %arg10[%c1_459] : memref<4xf32, #tpu.memory_space<smem>>
    %1955 = vector.broadcast %1954 : f32 to vector<1x384xf32>
    %1956 = arith.addf %1918, %1955 : vector<1x384xf32>
    %c2_460 = arith.constant 2 : index
    %1957 = memref.load %arg10[%c2_460] : memref<4xf32, #tpu.memory_space<smem>>
    %1958 = vector.broadcast %1957 : f32 to vector<1x384xf32>
    %1959 = arith.addf %1934, %1958 : vector<1x384xf32>
    %c3_461 = arith.constant 3 : index
    %1960 = memref.load %arg10[%c3_461] : memref<4xf32, #tpu.memory_space<smem>>
    %1961 = vector.broadcast %1960 : f32 to vector<1x384xf32>
    %1962 = arith.addf %1950, %1961 : vector<1x384xf32>
    %1963 = arith.addf %1473, %1953 : vector<1x384xf32>
    %1964 = vector.extract_strided_slice %1963 {offsets = [0, 0], sizes = [1, 256], strides = [1, 1]} : vector<1x384xf32> to vector<1x256xf32>
    %c0_462 = arith.constant 0 : index
    %c0_463 = arith.constant 0 : index
    %c0_464 = arith.constant 0 : index
    %1965 = vector.load %arg11[%c0_462, %c0_463, %c0_464] : memref<1x4x256xf32, #tpu.memory_space<vmem>>, vector<1x1x256xf32>
    %1966 = vector.shape_cast %1965 : vector<1x1x256xf32> to vector<1x256xf32>
    %1967 = vector.shape_cast %1964 : vector<1x256xf32> to vector<1x1x256xf32>
    tpu.vector_store %arg11[%c0_462, %c0_463, %c0_464], %1967 {strides = array<i32>} : memref<1x4x256xf32, #tpu.memory_space<vmem>>, vector<1x1x256xf32>,
    %1968 = arith.addf %1476, %1956 : vector<1x384xf32>
    %1969 = vector.extract_strided_slice %1968 {offsets = [0, 0], sizes = [1, 256], strides = [1, 1]} : vector<1x384xf32> to vector<1x256xf32>
    %c0_465 = arith.constant 0 : index
    %c1_466 = arith.constant 1 : index
    %c0_467 = arith.constant 0 : index
    %1970 = vector.load %arg11[%c0_465, %c1_466, %c0_467] : memref<1x4x256xf32, #tpu.memory_space<vmem>>, vector<1x1x256xf32>
    %1971 = vector.shape_cast %1970 : vector<1x1x256xf32> to vector<1x256xf32>
    %1972 = vector.shape_cast %1969 : vector<1x256xf32> to vector<1x1x256xf32>
    tpu.vector_store %arg11[%c0_465, %c1_466, %c0_467], %1972 {strides = array<i32>} : memref<1x4x256xf32, #tpu.memory_space<vmem>>, vector<1x1x256xf32>,
    %1973 = arith.addf %1479, %1959 : vector<1x384xf32>
    %1974 = vector.extract_strided_slice %1973 {offsets = [0, 0], sizes = [1, 256], strides = [1, 1]} : vector<1x384xf32> to vector<1x256xf32>
    %c0_468 = arith.constant 0 : index
    %c2_469 = arith.constant 2 : index
    %c0_470 = arith.constant 0 : index
    %1975 = vector.load %arg11[%c0_468, %c2_469, %c0_470] : memref<1x4x256xf32, #tpu.memory_space<vmem>>, vector<1x1x256xf32>
    %1976 = vector.shape_cast %1975 : vector<1x1x256xf32> to vector<1x256xf32>
    %1977 = vector.shape_cast %1974 : vector<1x256xf32> to vector<1x1x256xf32>
    tpu.vector_store %arg11[%c0_468, %c2_469, %c0_470], %1977 {strides = array<i32>} : memref<1x4x256xf32, #tpu.memory_space<vmem>>, vector<1x1x256xf32>,
    %1978 = arith.addf %1482, %1962 : vector<1x384xf32>
    %1979 = vector.extract_strided_slice %1978 {offsets = [0, 0], sizes = [1, 256], strides = [1, 1]} : vector<1x384xf32> to vector<1x256xf32>
    %c0_471 = arith.constant 0 : index
    %c3_472 = arith.constant 3 : index
    %c0_473 = arith.constant 0 : index
    %1980 = vector.load %arg11[%c0_471, %c3_472, %c0_473] : memref<1x4x256xf32, #tpu.memory_space<vmem>>, vector<1x1x256xf32>
    %1981 = vector.shape_cast %1980 : vector<1x1x256xf32> to vector<1x256xf32>
    %1982 = vector.shape_cast %1979 : vector<1x256xf32> to vector<1x1x256xf32>
    tpu.vector_store %arg11[%c0_471, %c3_472, %c0_473], %1982 {strides = array<i32>} : memref<1x4x256xf32, #tpu.memory_space<vmem>>, vector<1x1x256xf32>,
    return
  }
  func.func @transform_0(%arg0: i32) -> (i32, i32, i32) {
    %c0_i32 = arith.constant 0 : i32
    %c0_i32_0 = arith.constant 0 : i32
    %c0_i32_1 = arith.constant 0 : i32
    return %arg0, %c0_i32, %c0_i32_0 : i32, i32, i32
  }
  func.func @transform_1(%arg0: i32) -> (i32, i32) {
    %c0_i32 = arith.constant 0 : i32
    %c0_i32_0 = arith.constant 0 : i32
    %c0_i32_1 = arith.constant 0 : i32
    return %c0_i32, %c0_i32_0 : i32, i32
  }
  func.func @transform_2(%arg0: i32) -> i32 {
    %c0_i32 = arith.constant 0 : i32
    %c0_i32_0 = arith.constant 0 : i32
    return %c0_i32 : i32
  }
  func.func @transform_3(%arg0: i32) -> i32 {
    %c0_i32 = arith.constant 0 : i32
    %c0_i32_0 = arith.constant 0 : i32
    return %c0_i32 : i32
  }
  func.func @transform_4(%arg0: i32) -> i32 {
    %c0_i32 = arith.constant 0 : i32
    %c0_i32_0 = arith.constant 0 : i32
    return %c0_i32 : i32
  }
  func.func @transform_5(%arg0: i32) -> i32 {
    %c0_i32 = arith.constant 0 : i32
    %c0_i32_0 = arith.constant 0 : i32
    return %c0_i32 : i32
  }
  func.func @transform_6(%arg0: i32) -> i32 {
    %c0_i32 = arith.constant 0 : i32
    %c0_i32_0 = arith.constant 0 : i32
    return %c0_i32 : i32
  }
  func.func @transform_7(%arg0: i32) -> i32 {
    %c0_i32 = arith.constant 0 : i32
    %c0_i32_0 = arith.constant 0 : i32
    return %c0_i32 : i32
  }
  func.func @transform_8(%arg0: i32) -> i32 {
    %c0_i32 = arith.constant 0 : i32
    %c0_i32_0 = arith.constant 0 : i32
    return %c0_i32 : i32
  }
  func.func @transform_9(%arg0: i32) -> i32 {
    %c0_i32 = arith.constant 0 : i32
    %c0_i32_0 = arith.constant 0 : i32
    return %c0_i32 : i32
  }
  func.func @transform_10(%arg0: i32) -> (i32, i32, i32) {
    %c0_i32 = arith.constant 0 : i32
    %c0_i32_0 = arith.constant 0 : i32
    %c0_i32_1 = arith.constant 0 : i32
    return %arg0, %c0_i32, %c0_i32_0 : i32, i32, i32
  }
}

</mosaic_0001>

<llo_original>
// kernel: squeeze.4
$region0: #{squeeze.4}
  %s0 = inlined_call_operand.vmem [shape: f32[4,4,7], index: 0, kind: input, shape index: {}]
  %s1 = inlined_call_operand.vmem [shape: f32[112], index: 1, kind: output, shape index: {}]
  $region1: #{squeeze.4} parent=0
    #allocation0 [shape = 'u8[4096]{0}', space=vmem, size = 0x1000, scoped, tag = 'scoped mem for output reshape']
    #allocation1 [shape = 'u8[16384]{0}', space=vmem, size = 0x4000, scoped, tag = 'scoped mem for input reshape']
    %s3 = sshllo.u32 0, 4
    %s4 = smul.addr 4, 3
    %s5 = scalar_lea.vmem %s0, %s4
    %v6 = vld [vmem:[%s5] sm:%s3]
    %s7 = scalar_lea.vmem [#allocation1], 24
    %8 = vst [vmem:[%s7] sm:%s3] %v6
    %s9 = smul.addr 4, 2
    %s10 = scalar_lea.vmem %s0, %s9
    %v11 = vld [vmem:[%s10] sm:%s3]
    %s12 = scalar_lea.vmem [#allocation1], 16
    %13 = vst [vmem:[%s12] sm:%s3] %v11
    %s14 = scalar_lea.vmem %s0, 4
    %v15 = vld [vmem:[%s14] sm:%s3]
    %s16 = scalar_lea.vmem [#allocation1], 8
    %17 = vst [vmem:[%s16] sm:%s3] %v15
    %v18 = vld [vmem:[%s0] sm:%s3]
    %19 = vst [vmem:[#allocation1] sm:%s3] %v18
    %v20 = vld [vmem:[#allocation1] sm:$0x1]
    %vm21 = vcmask 56320
    %22 = vst.msk [vmem:[#allocation0] sm:$0x1] %vm21, %v20
    %s23 = scalar_lea.vmem [#allocation1], 27
    %v24 = vld [vmem:[%s23] sm:$0x1]
    %25 = vrot.lane.b32.xlu0 %v24, 105
    %v26 = vpop.permute.xlu0 %25
    %vm27 = vcmask 917320
    %28 = vst.msk [vmem:[#allocation0] sm:$0x1] %vm27, %v26
    %s29 = scalar_lea.vmem [#allocation1], 26
    %v30 = vld [vmem:[%s29] sm:$0x1]
    %31 = vrot.lane.b32.xlu0 %v30, 98
    %v32 = vpop.permute.xlu0 %31
    %vm33 = vcmask 859920
    %34 = vst.msk [vmem:[#allocation0] sm:$0x1] %vm33, %v32
    %s35 = scalar_lea.vmem [#allocation1], 25
    %v36 = vld [vmem:[%s35] sm:$0x1]
    %37 = vrot.lane.b32.xlu0 %v36, 91
    %v38 = vpop.permute.xlu0 %37
    %vm39 = vcmask 802520
    %40 = vst.msk [vmem:[#allocation0] sm:$0x1] %vm39, %v38
    %s41 = scalar_lea.vmem [#allocation1], 24
    %v42 = vld [vmem:[%s41] sm:$0x1]
    %43 = vrot.lane.b32.xlu0 %v42, 84
    %v44 = vpop.permute.xlu0 %43
    %vm45 = vcmask 745120
    %46 = vst.msk [vmem:[#allocation0] sm:$0x1] %vm45, %v44
    %s47 = scalar_lea.vmem [#allocation1], 19
    %v48 = vld [vmem:[%s47] sm:$0x1]
    %49 = vrot.lane.b32.xlu0 %v48, 77
    %v50 = vpop.permute.xlu0 %49
    %vm51 = vcmask 687720
    %52 = vst.msk [vmem:[#allocation0] sm:$0x1] %vm51, %v50
    %s53 = scalar_lea.vmem [#allocation1], 18
    %v54 = vld [vmem:[%s53] sm:$0x1]
    %55 = vrot.lane.b32.xlu0 %v54, 70
    %v56 = vpop.permute.xlu0 %55
    %vm57 = vcmask 630320
    %58 = vst.msk [vmem:[#allocation0] sm:$0x1] %vm57, %v56
    %s59 = scalar_lea.vmem [#allocation1], 17
    %v60 = vld [vmem:[%s59] sm:$0x1]
    %61 = vrot.lane.b32.xlu0 %v60, 63
    %v62 = vpop.permute.xlu0 %61
    %vm63 = vcmask 572920
    %64 = vst.msk [vmem:[#allocation0] sm:$0x1] %vm63, %v62
    %s65 = scalar_lea.vmem [#allocation1], 16
    %v66 = vld [vmem:[%s65] sm:$0x1]
    %67 = vrot.lane.b32.xlu0 %v66, 56
    %v68 = vpop.permute.xlu0 %67
    %vm69 = vcmask 515520
    %70 = vst.msk [vmem:[#allocation0] sm:$0x1] %vm69, %v68
    %s71 = scalar_lea.vmem [#allocation1], 11
    %v72 = vld [vmem:[%s71] sm:$0x1]
    %73 = vrot.lane.b32.xlu0 %v72, 49
    %v74 = vpop.permute.xlu0 %73
    %vm75 = vcmask 458120
    %76 = vst.msk [vmem:[#allocation0] sm:$0x1] %vm75, %v74
    %s77 = scalar_lea.vmem [#allocation1], 10
    %v78 = vld [vmem:[%s77] sm:$0x1]
    %79 = vrot.lane.b32.xlu0 %v78, 42
    %v80 = vpop.permute.xlu0 %79
    %vm81 = vcmask 400720
    %82 = vst.msk [vmem:[#allocation0] sm:$0x1] %vm81, %v80
    %s83 = scalar_lea.vmem [#allocation1], 9
    %v84 = vld [vmem:[%s83] sm:$0x1]
    %85 = vrot.lane.b32.xlu0 %v84, 35
    %v86 = vpop.permute.xlu0 %85
    %vm87 = vcmask 343320
    %88 = vst.msk [vmem:[#allocation0] sm:$0x1] %vm87, %v86
    %s89 = scalar_lea.vmem [#allocation1], 8
    %v90 = vld [vmem:[%s89] sm:$0x1]
    %91 = vrot.lane.b32.xlu0 %v90, 28
    %v92 = vpop.permute.xlu0 %91
    %vm93 = vcmask 285920
    %94 = vst.msk [vmem:[#allocation0] sm:$0x1] %vm93, %v92
    %s95 = scalar_lea.vmem [#allocation1], 3
    %v96 = vld [vmem:[%s95] sm:$0x1]
    %97 = vrot.lane.b32.xlu0 %v96, 21
    %v98 = vpop.permute.xlu0 %97
    %vm99 = vcmask 228520
    %100 = vst.msk [vmem:[#allocation0] sm:$0x1] %vm99, %v98
    %s101 = scalar_lea.vmem [#allocation1], 2
    %v102 = vld [vmem:[%s101] sm:$0x1]
    %103 = vrot.lane.b32.xlu0 %v102, 14
    %v104 = vpop.permute.xlu0 %103
    %vm105 = vcmask 171120
    %106 = vst.msk [vmem:[#allocation0] sm:$0x1] %vm105, %v104
    %s107 = scalar_lea.vmem [#allocation1], 1
    %v108 = vld [vmem:[%s107] sm:$0x1]
    %109 = vrot.lane.b32.xlu0 %v108, 7
    %v110 = vpop.permute.xlu0 %109
    %vm111 = vcmask 113720
    %112 = vst.msk [vmem:[#allocation0] sm:$0x1] %vm111, %v110
    %s114 = sshllo.u32 0, 1
    %v116 = vld [vmem:[#allocation0] sm:%s114]
    %s117 = sshllo.u32 0, 1
    %118 = vst [vmem:[%s1] sm:%s117] %v116

// kernel: gcn_forward.1
$region0: #{gcn_forward.1}
  #allocation0 [shape = 'u32[]', space=smem, size = 0x4, offset = 0x4, fixed_abs, tag = 'smem constant byte address 0x4 - core index']
  #allocation1 [shape = 'u32[144,128]{1,0:T(1,128)}', space=vmem, size = 0x12000, scoped, tag = 'internal scratch']
  %s0 = inlined_call_operand.vmem [shape: f32[2,4,384], index: 0, kind: input, shape index: {}]
  %s1 = inlined_call_operand.vmem [shape: f32[8,384], index: 1, kind: input, shape index: {}]
  %s2 = inlined_call_operand.vmem [shape: f32[112], index: 2, kind: input, shape index: {}]
  %s3 = inlined_call_operand.vmem [shape: f32[4], index: 3, kind: input, shape index: {}]
  %s4 = inlined_call_operand.vmem [shape: f32[112], index: 4, kind: input, shape index: {}]
  %s5 = inlined_call_operand.vmem [shape: f32[4], index: 5, kind: input, shape index: {}]
  %s6 = inlined_call_operand.vmem [shape: f32[112], index: 6, kind: input, shape index: {}]
  %s7 = inlined_call_operand.vmem [shape: f32[4], index: 7, kind: input, shape index: {}]
  %s8 = inlined_call_operand.vmem [shape: f32[112], index: 8, kind: input, shape index: {}]
  %s9 = inlined_call_operand.vmem [shape: f32[4], index: 9, kind: input, shape index: {}]
  %s10 = inlined_call_operand.vmem [shape: f32[2,4,256], index: 10, kind: output, shape index: {}]
  %s11 = sld [smem:[#allocation0]]
  $region105: #{gcn_forward.1} parent=0
    _
  %s13 = ssub.s32 1, %s11
  %s14 = scalar_select 0, %s13, %s11
  $region1: #{gcn_forward.1} parent=0
    #allocation2 [shape = 'u8[512]{0}', space=smem, size = 0x200, scoped, tag = 'input window, operand 2, single buffered']
    #allocation3 [shape = 's32[2]{0}', space=sflag, size = 0x8, scoped, tag = 'scoped memory for gcn_forward.1']
    #allocation4 [shape = 'u8[512]{0}', space=smem, size = 0x200, scoped, tag = 'input window, operand 3, single buffered']
    #allocation5 [shape = 's32[1]{0}', space=sflag, size = 0x4, scoped, tag = 'scoped memory for gcn_forward.1']
    #allocation6 [shape = 'u8[512]{0}', space=smem, size = 0x200, scoped, tag = 'input window, operand 4, single buffered']
    #allocation7 [shape = 'u8[512]{0}', space=smem, size = 0x200, scoped, tag = 'input window, operand 5, single buffered']
    #allocation8 [shape = 's32[1]{0}', space=sflag, size = 0x4, scoped, tag = 'scoped memory for gcn_forward.1']
    #allocation9 [shape = 'u8[512]{0}', space=smem, size = 0x200, scoped, tag = 'input window, operand 6, single buffered']
    #allocation10 [shape = 'u8[512]{0}', space=smem, size = 0x200, scoped, tag = 'input window, operand 7, single buffered']
    #allocation11 [shape = 's32[1]{0}', space=sflag, size = 0x4, scoped, tag = 'scoped memory for gcn_forward.1']
    #allocation12 [shape = 'u8[512]{0}', space=smem, size = 0x200, scoped, tag = 'input window, operand 8, single buffered']
    #allocation13 [shape = 'u8[512]{0}', space=smem, size = 0x200, scoped, tag = 'input window, operand 9, single buffered']
    #allocation14 [shape = 's32[1]{0}', space=sflag, size = 0x4, scoped, tag = 'scoped memory for gcn_forward.1']
    %15 = vsyncpa [#allocation3], 0
    %16 = vsyncpa [#allocation5], 0
    %17 = vsyncpa [#allocation8], 0
    %18 = vsyncpa [#allocation11], 0
    %19 = vsyncpa [#allocation14], 0
    loop: start=0, step=1, limit=4
    $region2: #{gcn_forward.1} parent=1 // loop_pre_header
      _
    $region3: #{gcn_forward.1} parent=1 // loop_header
      %s21 = sphi 0, %s25
      %p22 = scmp.ge.s32.totalorder %s21, 4
      %s31 = sphi 0, %s33
      %s34 = sphi 0, %s31
      %s35 = sphi 0, %s34
      %s51 = sphi 0, %s35
      %s55 = sphi 0, %s55
      %s57 = sphi 0, %s55
      %s58 = sphi 0, %s57
      %s72 = sphi 0, %s58
      %s76 = sphi 0, %s76
      %s78 = sphi 0, %s76
      %s79 = sphi 0, %s78
      %s93 = sphi 0, %s79
      %s97 = sphi 0, %s97
      %s99 = sphi 0, %s97
      %s100 = sphi 0, %s99
      %s114 = sphi 0, %s100
      %s118 = sphi 0, %s118
      %s120 = sphi 0, %s118
      %s121 = sphi 0, %s120
      %s135 = sphi 0, %s121
      %s139 = sphi 0, %s139
      %s141 = sphi 0, %s139
      %s142 = sphi 0, %s141
      %s156 = sphi 0, %s142
      %s160 = sphi 0, %s160
      %s162 = sphi 0, %s160
      %s163 = sphi 0, %s162
      %s177 = sphi 0, %s163
      %s181 = sphi 0, %s181
      %s183 = sphi 0, %s181
      %s184 = sphi 0, %s183
      %s198 = sphi 0, %s184
      %s202 = sphi 0, %s202
      %s204 = sphi 0, %s202
      %s205 = sphi 0, %s204
      %s219 = sphi 0, %s205
      %s223 = sphi 0, %s223
      %s225 = sphi 0, %s223
      %s226 = sphi 0, %s225
      %s240 = sphi 0, %s226
      %s246 = sphi 0, %s248
      %s249 = sphi 0, %s246
      %s250 = sphi 0, %s249
      %s266 = sphi 0, %s250
    $region4: #{gcn_forward.1} parent=1 // loop_header_branch
      %24 = sbr.rel (%p22) target = $region8
    $region5: #{gcn_forward.1} parent=1 // loop_body
      %s26 = ssub.s32 %s21, 1
      %s27 = ssub.s32 %s21, 2
      %s28 = sadd.s32 %s21, 1
      %s29 = ssub.s32 %s21, %s28
      %p30 = scmp.eq.s32.totalorder %s29, 0
      %s32 = sadd.s32 %s31, 1
      %s33 = scalar_select %p30, %s31, %s32
      %p36 = pneg %p30
      %p37 = scmp.eq.s32.totalorder %s21, 1
      %p38 = por %p36, %p37
      %p39 = scmp.ne.s32.totalorder %s31, %s34
      %p40 = scmp.eq.s32.totalorder %s21, 0
      %p41 = por %p39, %p40
      %p42 = scmp.ne.s32.totalorder %s31, %s34
      %p43 = scmp.eq.s32.totalorder %s26, 1
      %p44 = por %p42, %p43
      %p45 = scmp.ne.s32.totalorder %s34, %s35
      %p46 = scmp.eq.s32.totalorder %s26, 0
      %p47 = por %p45, %p46
      %p48 = scmp.ne.s32.totalorder %s34, %s35
      %p49 = scmp.eq.s32.totalorder %s27, 1
      %p50 = por %p48, %p49
      %p52 = scmp.ne.s32.totalorder %s35, %s51
      %p53 = scmp.eq.s32.totalorder %s27, 0
      %p54 = por %p52, %p53
      %s56 = sadd.s32 %s55, 1
      %p59 = scmp.eq.s32.totalorder %s21, 1
      %p60 = scmp.ne.s32.totalorder %s55, %s57
      %p61 = scmp.eq.s32.totalorder %s21, 0
      %p62 = por %p60, %p61
      %p63 = scmp.ne.s32.totalorder %s55, %s57
      %p64 = scmp.eq.s32.totalorder %s26, 1
      %p65 = por %p63, %p64
      %p66 = scmp.ne.s32.totalorder %s57, %s58
      %p67 = scmp.eq.s32.totalorder %s26, 0
      %p68 = por %p66, %p67
      %p69 = scmp.ne.s32.totalorder %s57, %s58
      %p70 = scmp.eq.s32.totalorder %s27, 1
      %p71 = por %p69, %p70
      %p73 = scmp.ne.s32.totalorder %s58, %s72
      %p74 = scmp.eq.s32.totalorder %s27, 0
      %p75 = por %p73, %p74
      %s77 = sadd.s32 %s76, 1
      %p80 = scmp.eq.s32.totalorder %s21, 1
      %p81 = scmp.ne.s32.totalorder %s76, %s78
      %p82 = scmp.eq.s32.totalorder %s21, 0
      %p83 = por %p81, %p82
      %p84 = scmp.ne.s32.totalorder %s76, %s78
      %p85 = scmp.eq.s32.totalorder %s26, 1
      %p86 = por %p84, %p85
      %p87 = scmp.ne.s32.totalorder %s78, %s79
      %p88 = scmp.eq.s32.totalorder %s26, 0
      %p89 = por %p87, %p88
      %p90 = scmp.ne.s32.totalorder %s78, %s79
      %p91 = scmp.eq.s32.totalorder %s27, 1
      %p92 = por %p90, %p91
      %p94 = scmp.ne.s32.totalorder %s79, %s93
      %p95 = scmp.eq.s32.totalorder %s27, 0
      %p96 = por %p94, %p95
      %s98 = sadd.s32 %s97, 1
      %p101 = scmp.eq.s32.totalorder %s21, 1
      %p102 = scmp.ne.s32.totalorder %s97, %s99
      %p103 = scmp.eq.s32.totalorder %s21, 0
      %p104 = por %p102, %p103
      %p105 = scmp.ne.s32.totalorder %s97, %s99
      %p106 = scmp.eq.s32.totalorder %s26, 1
      %p107 = por %p105, %p106
      %p108 = scmp.ne.s32.totalorder %s99, %s100
      %p109 = scmp.eq.s32.totalorder %s26, 0
      %p110 = por %p108, %p109
      %p111 = scmp.ne.s32.totalorder %s99, %s100
      %p112 = scmp.eq.s32.totalorder %s27, 1
      %p113 = por %p111, %p112
      %p115 = scmp.ne.s32.totalorder %s100, %s114
      %p116 = scmp.eq.s32.totalorder %s27, 0
      %p117 = por %p115, %p116
      %s119 = sadd.s32 %s118, 1
      %p122 = scmp.eq.s32.totalorder %s21, 1
      %p123 = scmp.ne.s32.totalorder %s118, %s120
      %p124 = scmp.eq.s32.totalorder %s21, 0
      %p125 = por %p123, %p124
      %p126 = scmp.ne.s32.totalorder %s118, %s120
      %p127 = scmp.eq.s32.totalorder %s26, 1
      %p128 = por %p126, %p127
      %p129 = scmp.ne.s32.totalorder %s120, %s121
      %p130 = scmp.eq.s32.totalorder %s26, 0
      %p131 = por %p129, %p130
      %p132 = scmp.ne.s32.totalorder %s120, %s121
      %p133 = scmp.eq.s32.totalorder %s27, 1
      %p134 = por %p132, %p133
      %p136 = scmp.ne.s32.totalorder %s121, %s135
      %p137 = scmp.eq.s32.totalorder %s27, 0
      %p138 = por %p136, %p137
      %s140 = sadd.s32 %s139, 1
      %p143 = scmp.eq.s32.totalorder %s21, 1
      %p144 = scmp.ne.s32.totalorder %s139, %s141
      %p145 = scmp.eq.s32.totalorder %s21, 0
      %p146 = por %p144, %p145
      %p147 = scmp.ne.s32.totalorder %s139, %s141
      %p148 = scmp.eq.s32.totalorder %s26, 1
      %p149 = por %p147, %p148
      %p150 = scmp.ne.s32.totalorder %s141, %s142
      %p151 = scmp.eq.s32.totalorder %s26, 0
      %p152 = por %p150, %p151
      %p153 = scmp.ne.s32.totalorder %s141, %s142
      %p154 = scmp.eq.s32.totalorder %s27, 1
      %p155 = por %p153, %p154
      %p157 = scmp.ne.s32.totalorder %s142, %s156
      %p158 = scmp.eq.s32.totalorder %s27, 0
      %p159 = por %p157, %p158
      %s161 = sadd.s32 %s160, 1
      %p164 = scmp.eq.s32.totalorder %s21, 1
      %p165 = scmp.ne.s32.totalorder %s160, %s162
      %p166 = scmp.eq.s32.totalorder %s21, 0
      %p167 = por %p165, %p166
      %p168 = scmp.ne.s32.totalorder %s160, %s162
      %p169 = scmp.eq.s32.totalorder %s26, 1
      %p170 = por %p168, %p169
      %p171 = scmp.ne.s32.totalorder %s162, %s163
      %p172 = scmp.eq.s32.totalorder %s26, 0
      %p173 = por %p171, %p172
      %p174 = scmp.ne.s32.totalorder %s162, %s163
      %p175 = scmp.eq.s32.totalorder %s27, 1
      %p176 = por %p174, %p175
      %p178 = scmp.ne.s32.totalorder %s163, %s177
      %p179 = scmp.eq.s32.totalorder %s27, 0
      %p180 = por %p178, %p179
      %s182 = sadd.s32 %s181, 1
      %p185 = scmp.eq.s32.totalorder %s21, 1
      %p186 = scmp.ne.s32.totalorder %s181, %s183
      %p187 = scmp.eq.s32.totalorder %s21, 0
      %p188 = por %p186, %p187
      %p189 = scmp.ne.s32.totalorder %s181, %s183
      %p190 = scmp.eq.s32.totalorder %s26, 1
      %p191 = por %p189, %p190
      %p192 = scmp.ne.s32.totalorder %s183, %s184
      %p193 = scmp.eq.s32.totalorder %s26, 0
      %p194 = por %p192, %p193
      %p195 = scmp.ne.s32.totalorder %s183, %s184
      %p196 = scmp.eq.s32.totalorder %s27, 1
      %p197 = por %p195, %p196
      %p199 = scmp.ne.s32.totalorder %s184, %s198
      %p200 = scmp.eq.s32.totalorder %s27, 0
      %p201 = por %p199, %p200
      %s203 = sadd.s32 %s202, 1
      %p206 = scmp.eq.s32.totalorder %s21, 1
      %p207 = scmp.ne.s32.totalorder %s202, %s204
      %p208 = scmp.eq.s32.totalorder %s21, 0
      %p209 = por %p207, %p208
      %p210 = scmp.ne.s32.totalorder %s202, %s204
      %p211 = scmp.eq.s32.totalorder %s26, 1
      %p212 = por %p210, %p211
      %p213 = scmp.ne.s32.totalorder %s204, %s205
      %p214 = scmp.eq.s32.totalorder %s26, 0
      %p215 = por %p213, %p214
      %p216 = scmp.ne.s32.totalorder %s204, %s205
      %p217 = scmp.eq.s32.totalorder %s27, 1
      %p218 = por %p216, %p217
      %p220 = scmp.ne.s32.totalorder %s205, %s219
      %p221 = scmp.eq.s32.totalorder %s27, 0
      %p222 = por %p220, %p221
      %s224 = sadd.s32 %s223, 1
      %p227 = scmp.eq.s32.totalorder %s21, 1
      %p228 = scmp.ne.s32.totalorder %s223, %s225
      %p229 = scmp.eq.s32.totalorder %s21, 0
      %p230 = por %p228, %p229
      %p231 = scmp.ne.s32.totalorder %s223, %s225
      %p232 = scmp.eq.s32.totalorder %s26, 1
      %p233 = por %p231, %p232
      %p234 = scmp.ne.s32.totalorder %s225, %s226
      %p235 = scmp.eq.s32.totalorder %s26, 0
      %p236 = por %p234, %p235
      %p237 = scmp.ne.s32.totalorder %s225, %s226
      %p238 = scmp.eq.s32.totalorder %s27, 1
      %p239 = por %p237, %p238
      %p241 = scmp.ne.s32.totalorder %s226, %s240
      %p242 = scmp.eq.s32.totalorder %s27, 0
      %p243 = por %p241, %p242
      %s244 = ssub.s32 %s21, %s28
      %p245 = scmp.eq.s32.totalorder %s244, 0
      %s247 = sadd.s32 %s246, 1
      %s248 = scalar_select %p245, %s246, %s247
      %p251 = pneg %p245
      %p252 = scmp.eq.s32.totalorder %s21, 1
      %p253 = por %p251, %p252
      %p254 = scmp.ne.s32.totalorder %s246, %s249
      %p255 = scmp.eq.s32.totalorder %s21, 0
      %p256 = por %p254, %p255
      %p257 = scmp.ne.s32.totalorder %s246, %s249
      %p258 = scmp.eq.s32.totalorder %s26, 1
      %p259 = por %p257, %p258
      %p260 = scmp.ne.s32.totalorder %s249, %s250
      %p261 = scmp.eq.s32.totalorder %s26, 0
      %p262 = por %p260, %p261
      %p263 = scmp.ne.s32.totalorder %s249, %s250
      %p264 = scmp.eq.s32.totalorder %s27, 1
      %p265 = por %p263, %p264
      %p267 = scmp.ne.s32.totalorder %s250, %s266
      %p268 = scmp.eq.s32.totalorder %s27, 0
      %p269 = por %p267, %p268
      %p270 = scmp.le.s32.totalorder 1, %s21
      %p271 = scmp.lt.s32.totalorder %s21, 3
      %p272 = pnand %p270, %p271
      %p273 = pneg %p272
      // Predicated region
      $region9: #{gcn_forward.1} parent=5 // pred_check
        _
      $region10: #{gcn_forward.1} parent=5 // pred_check_branch
        %275 = sbr.rel (%p272) target = $region12
      $region11: #{gcn_forward.1} parent=5 // pred_region
        %s276 = ssub.s32 %s21, 1
        // Predicated region
        $region13: #{gcn_forward.1} parent=11 // pred_check
          %p277 = pneg %p68
        $region14: #{gcn_forward.1} parent=11 // pred_check_branch
          %279 = sbr.rel (%p277) target = $region16
        $region15: #{gcn_forward.1} parent=11 // pred_region
          _
        $region16: #{gcn_forward.1} parent=11 // pred_fallthru
          _
        // Predicated region
        $region17: #{gcn_forward.1} parent=11 // pred_check
          %p280 = pneg %p89
        $region18: #{gcn_forward.1} parent=11 // pred_check_branch
          %282 = sbr.rel (%p280) target = $region20
        $region19: #{gcn_forward.1} parent=11 // pred_region
          %s284 = ssub.s32 16, 16
          %285 = vsyncadd [#allocation3], %s284
          %s287 = sshll.u32 %s2, 4
          %s288 = int_to_ptr.vmem [resolvable:$true] %s287
          %290 = dma.vmem_to_smem %s288, 16, [#allocation2], [#allocation3]
        $region20: #{gcn_forward.1} parent=11 // pred_fallthru
          _
        // Predicated region
        $region21: #{gcn_forward.1} parent=11 // pred_check
          %p291 = pneg %p110
        $region22: #{gcn_forward.1} parent=11 // pred_check_branch
          %293 = sbr.rel (%p291) target = $region24
        $region23: #{gcn_forward.1} parent=11 // pred_region
          %s295 = ssub.s32 16, 16
          %296 = vsyncadd [#allocation5], %s295
          %s298 = sshll.u32 %s3, 4
          %s299 = int_to_ptr.vmem [resolvable:$true] %s298
          %301 = dma.vmem_to_smem %s299, 16, [#allocation4], [#allocation5]
        $region24: #{gcn_forward.1} parent=11 // pred_fallthru
          _
        // Predicated region
        $region25: #{gcn_forward.1} parent=11 // pred_check
          %p302 = pneg %p131
        $region26: #{gcn_forward.1} parent=11 // pred_check_branch
          %304 = sbr.rel (%p302) target = $region28
        $region27: #{gcn_forward.1} parent=11 // pred_region
          %s306 = ssub.s32 16, 16
          %307 = vsyncadd [#allocation5], %s306
          %s309 = sshll.u32 %s4, 4
          %s310 = int_to_ptr.vmem [resolvable:$true] %s309
          %312 = dma.vmem_to_smem %s310, 16, [#allocation6], [#allocation5]
        $region28: #{gcn_forward.1} parent=11 // pred_fallthru
          _
        // Predicated region
        $region29: #{gcn_forward.1} parent=11 // pred_check
          %p313 = pneg %p152
        $region30: #{gcn_forward.1} parent=11 // pred_check_branch
          %315 = sbr.rel (%p313) target = $region32
        $region31: #{gcn_forward.1} parent=11 // pred_region
          %s317 = ssub.s32 16, 16
          %318 = vsyncadd [#allocation8], %s317
          %s320 = sshll.u32 %s5, 4
          %s321 = int_to_ptr.vmem [resolvable:$true] %s320
          %323 = dma.vmem_to_smem %s321, 16, [#allocation7], [#allocation8]
        $region32: #{gcn_forward.1} parent=11 // pred_fallthru
          _
        // Predicated region
        $region33: #{gcn_forward.1} parent=11 // pred_check
          %p324 = pneg %p173
        $region34: #{gcn_forward.1} parent=11 // pred_check_branch
          %326 = sbr.rel (%p324) target = $region36
        $region35: #{gcn_forward.1} parent=11 // pred_region
          %s328 = ssub.s32 16, 16
          %329 = vsyncadd [#allocation8], %s328
          %s331 = sshll.u32 %s6, 4
          %s332 = int_to_ptr.vmem [resolvable:$true] %s331
          %334 = dma.vmem_to_smem %s332, 16, [#allocation9], [#allocation8]
        $region36: #{gcn_forward.1} parent=11 // pred_fallthru
          _
        // Predicated region
        $region37: #{gcn_forward.1} parent=11 // pred_check
          %p335 = pneg %p194
        $region38: #{gcn_forward.1} parent=11 // pred_check_branch
          %337 = sbr.rel (%p335) target = $region40
        $region39: #{gcn_forward.1} parent=11 // pred_region
          %s339 = ssub.s32 16, 16
          %340 = vsyncadd [#allocation11], %s339
          %s342 = sshll.u32 %s7, 4
          %s343 = int_to_ptr.vmem [resolvable:$true] %s342
          %345 = dma.vmem_to_smem %s343, 16, [#allocation10], [#allocation11]
        $region40: #{gcn_forward.1} parent=11 // pred_fallthru
          _
        // Predicated region
        $region41: #{gcn_forward.1} parent=11 // pred_check
          %p346 = pneg %p215
        $region42: #{gcn_forward.1} parent=11 // pred_check_branch
          %348 = sbr.rel (%p346) target = $region44
        $region43: #{gcn_forward.1} parent=11 // pred_region
          %s350 = ssub.s32 16, 16
          %351 = vsyncadd [#allocation11], %s350
          %s353 = sshll.u32 %s8, 4
          %s354 = int_to_ptr.vmem [resolvable:$true] %s353
          %356 = dma.vmem_to_smem %s354, 16, [#allocation12], [#allocation11]
        $region44: #{gcn_forward.1} parent=11 // pred_fallthru
          _
        // Predicated region
        $region45: #{gcn_forward.1} parent=11 // pred_check
          %p357 = pneg %p236
        $region46: #{gcn_forward.1} parent=11 // pred_check_branch
          %359 = sbr.rel (%p357) target = $region48
        $region47: #{gcn_forward.1} parent=11 // pred_region
          %s361 = ssub.s32 16, 16
          %362 = vsyncadd [#allocation14], %s361
          %s364 = sshll.u32 %s9, 4
          %s365 = int_to_ptr.vmem [resolvable:$true] %s364
          %367 = dma.vmem_to_smem %s365, 16, [#allocation13], [#allocation14]
        $region48: #{gcn_forward.1} parent=11 // pred_fallthru
          _
      $region12: #{gcn_forward.1} parent=5 // pred_fallthru
        _
      %p368 = scmp.lt.s32.totalorder %s21, 2
      // Predicated region
      $region49: #{gcn_forward.1} parent=5 // pred_check
        %p369 = pneg %p368
      $region50: #{gcn_forward.1} parent=5 // pred_check_branch
        %371 = sbr.rel (%p369) target = $region52
      $region51: #{gcn_forward.1} parent=5 // pred_region
        // Predicated region
        $region53: #{gcn_forward.1} parent=51 // pred_check
          %p372 = pneg %p41
        $region54: #{gcn_forward.1} parent=51 // pred_check_branch
          %374 = sbr.rel (%p372) target = $region56
        $region55: #{gcn_forward.1} parent=51 // pred_region
          %p375 = scmp.lt.s32.totalorder %s21, 1
          %s376 = scalar_select %p375, %s21, 1
          %s377 = smul.addr %s376, 3
          %s378 = smul.addr %s377, 4
          %s379 = scalar_lea.vmem %s0, %s378
        $region56: #{gcn_forward.1} parent=51 // pred_fallthru
          _
      $region52: #{gcn_forward.1} parent=5 // pred_fallthru
        _
      %p380 = scmp.le.s32.totalorder 1, %s21
      %p381 = scmp.lt.s32.totalorder %s21, 3
      %p382 = pnand %p380, %p381
      %p383 = pneg %p382
      // Predicated region
      $region57: #{gcn_forward.1} parent=5 // pred_check
        _
      $region58: #{gcn_forward.1} parent=5 // pred_check_branch
        %385 = sbr.rel (%p382) target = $region60
      $region59: #{gcn_forward.1} parent=5 // pred_region
        %s386 = ssub.s32 %s21, 1
        // Predicated region
        $region61: #{gcn_forward.1} parent=59 // pred_check
          %p387 = pneg %p89
        $region62: #{gcn_forward.1} parent=59 // pred_check_branch
          %389 = sbr.rel (%p387) target = $region64
        $region63: #{gcn_forward.1} parent=59 // pred_region
          %390 = dma.done [#allocation3], 16
        $region64: #{gcn_forward.1} parent=59 // pred_fallthru
          _
        // Predicated region
        $region65: #{gcn_forward.1} parent=59 // pred_check
          %p391 = pneg %p110
        $region66: #{gcn_forward.1} parent=59 // pred_check_branch
          %393 = sbr.rel (%p391) target = $region68
        $region67: #{gcn_forward.1} parent=59 // pred_region
          %394 = dma.done [#allocation5], 16
        $region68: #{gcn_forward.1} parent=59 // pred_fallthru
          _
        // Predicated region
        $region69: #{gcn_forward.1} parent=59 // pred_check
          %p395 = pneg %p131
        $region70: #{gcn_forward.1} parent=59 // pred_check_branch
          %397 = sbr.rel (%p395) target = $region72
        $region71: #{gcn_forward.1} parent=59 // pred_region
          %398 = dma.done [#allocation5], 16
        $region72: #{gcn_forward.1} parent=59 // pred_fallthru
          _
        // Predicated region
        $region73: #{gcn_forward.1} parent=59 // pred_check
          %p399 = pneg %p152
        $region74: #{gcn_forward.1} parent=59 // pred_check_branch
          %401 = sbr.rel (%p399) target = $region76
        $region75: #{gcn_forward.1} parent=59 // pred_region
          %402 = dma.done [#allocation8], 16
        $region76: #{gcn_forward.1} parent=59 // pred_fallthru
          _
        // Predicated region
        $region77: #{gcn_forward.1} parent=59 // pred_check
          %p403 = pneg %p173
        $region78: #{gcn_forward.1} parent=59 // pred_check_branch
          %405 = sbr.rel (%p403) target = $region80
        $region79: #{gcn_forward.1} parent=59 // pred_region
          %406 = dma.done [#allocation8], 16
        $region80: #{gcn_forward.1} parent=59 // pred_fallthru
          _
        // Predicated region
        $region81: #{gcn_forward.1} parent=59 // pred_check
          %p407 = pneg %p194
        $region82: #{gcn_forward.1} parent=59 // pred_check_branch
          %409 = sbr.rel (%p407) target = $region84
        $region83: #{gcn_forward.1} parent=59 // pred_region
          %410 = dma.done [#allocation11], 16
        $region84: #{gcn_forward.1} parent=59 // pred_fallthru
          _
        // Predicated region
        $region85: #{gcn_forward.1} parent=59 // pred_check
          %p411 = pneg %p215
        $region86: #{gcn_forward.1} parent=59 // pred_check_branch
          %413 = sbr.rel (%p411) target = $region88
        $region87: #{gcn_forward.1} parent=59 // pred_region
          %414 = dma.done [#allocation11], 16
        $region88: #{gcn_forward.1} parent=59 // pred_fallthru
          _
        // Predicated region
        $region89: #{gcn_forward.1} parent=59 // pred_check
          %p415 = pneg %p236
        $region90: #{gcn_forward.1} parent=59 // pred_check_branch
          %417 = sbr.rel (%p415) target = $region92
        $region91: #{gcn_forward.1} parent=59 // pred_region
          %418 = dma.done [#allocation14], 16
        $region92: #{gcn_forward.1} parent=59 // pred_fallthru
          _
        %419 = sfence
        %p420 = scmp.lt.s32.totalorder %s26, 1
        %s421 = scalar_select %p420, %s26, 1
        %s422 = smul.addr %s421, 3
        %s423 = smul.addr %s422, 4
        %s424 = scalar_lea.vmem %s0, %s423
        %p425 = pneg %p47
        %p426 = pneg %p44
        %p427 = pneg %p68
        %p428 = pneg %p65
        %p429 = pneg %p89
        %p430 = pneg %p86
        %p431 = pneg %p110
        %p432 = pneg %p107
        %p433 = pneg %p131
        %p434 = pneg %p128
        %p435 = pneg %p152
        %p436 = pneg %p149
        %p437 = pneg %p173
        %p438 = pneg %p170
        %p439 = pneg %p194
        %p440 = pneg %p191
        %p441 = pneg %p215
        %p442 = pneg %p212
        %p443 = pneg %p236
        %p444 = pneg %p233
        %p445 = pneg %p262
        %p446 = pneg %p259
        %p447 = scmp.lt.s32.totalorder %s26, 1
        %s448 = scalar_select %p447, %s26, 1
        %s449 = smul.addr %s448, 2
        %s450 = smul.addr %s449, 4
        %s451 = scalar_lea.vmem %s10, %s450
        %p452 = scmp.lt.s32.totalorder %s26, 1
        %s453 = scalar_select %p452, %s26, 1
        %s454 = smul.addr %s453, 3
        %s455 = smul.addr %s454, 4
        %s456 = scalar_lea.vmem %s0, %s455
        %p457 = scmp.lt.s32.totalorder %s26, 1
        %s458 = scalar_select %p457, %s26, 1
        %s459 = smul.addr %s458, 2
        %s460 = smul.addr %s459, 4
        %s461 = scalar_lea.vmem %s10, %s460
        %v462 = vld [vmem:[%s456] ss:$4 sm:$0x7]
        %s463 = scalar_lea.vmem %s456, 1
        %v464 = vld [vmem:[%s463] ss:$4 sm:$0x7]
        %s465 = scalar_lea.vmem %s456, 2
        %v466 = vld [vmem:[%s465] ss:$4 sm:$0x7]
        %s467 = scalar_lea.vmem %s456, 3
        %v468 = vld [vmem:[%s467] ss:$4 sm:$0x7]
        %s469 = sld [smem:[#allocation2]]
        %v470 = vstv %s469
        %v471 = vmul.f32 %v470, %v462
        %s472 = sld [smem:[#allocation2 + $0x7]]
        %v473 = vstv %s472
        %v474 = vmul.f32 %v473, %v464
        %v475 = vadd.f32 %v471, %v474
        %s476 = sld [smem:[#allocation2 + $0xe]]
        %v477 = vstv %s476
        %v478 = vmul.f32 %v477, %v466
        %v479 = vadd.f32 %v475, %v478
        %s480 = sld [smem:[#allocation2 + $0x15]]
        %v481 = vstv %s480
        %v482 = vmul.f32 %v481, %v468
        %v483 = vadd.f32 %v479, %v482
        %s484 = sld [smem:[#allocation2 + $0x1c]]
        %v485 = vstv %s484
        %v486 = vmul.f32 %v485, %v462
        %s487 = sld [smem:[#allocation2 + $0x23]]
        %v488 = vstv %s487
        %v489 = vmul.f32 %v488, %v464
        %v490 = vadd.f32 %v486, %v489
        %s491 = sld [smem:[#allocation2 + $0x2a]]
        %v492 = vstv %s491
        %v493 = vmul.f32 %v492, %v466
        %v494 = vadd.f32 %v490, %v493
        %s495 = sld [smem:[#allocation2 + $0x31]]
        %v496 = vstv %s495
        %v497 = vmul.f32 %v496, %v468
        %v498 = vadd.f32 %v494, %v497
        %s499 = sld [smem:[#allocation2 + $0x38]]
        %v500 = vstv %s499
        %v501 = vmul.f32 %v500, %v462
        %s502 = sld [smem:[#allocation2 + $0x3f]]
        %v503 = vstv %s502
        %v504 = vmul.f32 %v503, %v464
        %v505 = vadd.f32 %v501, %v504
        %s506 = sld [smem:[#allocation2 + $0x46]]
        %v507 = vstv %s506
        %v508 = vmul.f32 %v507, %v466
        %v509 = vadd.f32 %v505, %v508
        %s510 = sld [smem:[#allocation2 + $0x4d]]
        %v511 = vstv %s510
        %v512 = vmul.f32 %v511, %v468
        %v513 = vadd.f32 %v509, %v512
        %s514 = sld [smem:[#allocation2 + $0x54]]
        %v515 = vstv %s514
        %v516 = vmul.f32 %v515, %v462
        %s517 = sld [smem:[#allocation2 + $0x5b]]
        %v518 = vstv %s517
        %v519 = vmul.f32 %v518, %v464
        %v520 = vadd.f32 %v516, %v519
        %s521 = sld [smem:[#allocation2 + $0x62]]
        %v522 = vstv %s521
        %v523 = vmul.f32 %v522, %v466
        %v524 = vadd.f32 %v520, %v523
        %s525 = sld [smem:[#allocation2 + $0x69]]
        %v526 = vstv %s525
        %v527 = vmul.f32 %v526, %v468
        %v528 = vadd.f32 %v524, %v527
        %v530 = vlaneseq
        %v531 = vshrl.u32 %v530, 7
        %v532 = vsub.s32 0, %v531
        %v533 = vrot.slane %v462, %v532
        %v534 = vlaneseq
        %v535 = vshrl.u32 %v534, 7
        %v536 = vsub.s32 1, %v535
        %v537 = vrot.slane %v462, %v536
        %v538 = vlaneseq
        %v539 = vshrl.u32 %v538, 7
        %v540 = vsub.s32 2, %v539
        %v541 = vrot.slane %v462, %v540
        %545 = vrot.lane.b32.xlu0 %v533, 112
        %v546 = vpop.permute.xlu0 %545
        %547 = vrot.lane.b32.xlu0 %v537, 112
        %v548 = vpop.permute.xlu0 %547
        %549 = vrot.lane.b32.xlu0 %v541, 112
        %v550 = vpop.permute.xlu0 %549
        %v551 = vlaneseq
        %v552 = vand.u32 %v551, 127
        %vm553 = vcmp.lt.s32.totalorder %v552, 112
        %v554 = vsel %vm553, %v548, %v550
        %v555 = vsel %vm553, %v546, %v548
        %v556 = vsel %vm553, %v550, %v546
        %v558 = vlaneseq
        %v559 = vshrl.u32 %v558, 7
        %v560 = vsub.s32 0, %v559
        %v561 = vrot.slane %v464, %v560
        %v562 = vlaneseq
        %v563 = vshrl.u32 %v562, 7
        %v564 = vsub.s32 1, %v563
        %v565 = vrot.slane %v464, %v564
        %v566 = vlaneseq
        %v567 = vshrl.u32 %v566, 7
        %v568 = vsub.s32 2, %v567
        %v569 = vrot.slane %v464, %v568
        %573 = vrot.lane.b32.xlu0 %v561, 112
        %v574 = vpop.permute.xlu0 %573
        %575 = vrot.lane.b32.xlu0 %v565, 112
        %v576 = vpop.permute.xlu0 %575
        %577 = vrot.lane.b32.xlu0 %v569, 112
        %v578 = vpop.permute.xlu0 %577
        %v579 = vsel %vm553, %v576, %v578
        %v580 = vsel %vm553, %v574, %v576
        %v581 = vsel %vm553, %v578, %v574
        %v583 = vlaneseq
        %v584 = vshrl.u32 %v583, 7
        %v585 = vsub.s32 0, %v584
        %v586 = vrot.slane %v466, %v585
        %v587 = vlaneseq
        %v588 = vshrl.u32 %v587, 7
        %v589 = vsub.s32 1, %v588
        %v590 = vrot.slane %v466, %v589
        %v591 = vlaneseq
        %v592 = vshrl.u32 %v591, 7
        %v593 = vsub.s32 2, %v592
        %v594 = vrot.slane %v466, %v593
        %598 = vrot.lane.b32.xlu0 %v586, 112
        %v599 = vpop.permute.xlu0 %598
        %600 = vrot.lane.b32.xlu0 %v590, 112
        %v601 = vpop.permute.xlu0 %600
        %602 = vrot.lane.b32.xlu0 %v594, 112
        %v603 = vpop.permute.xlu0 %602
        %v604 = vsel %vm553, %v601, %v603
        %v605 = vsel %vm553, %v599, %v601
        %v606 = vsel %vm553, %v603, %v599
        %v608 = vlaneseq
        %v609 = vshrl.u32 %v608, 7
        %v610 = vsub.s32 0, %v609
        %v611 = vrot.slane %v468, %v610
        %v612 = vlaneseq
        %v613 = vshrl.u32 %v612, 7
        %v614 = vsub.s32 1, %v613
        %v615 = vrot.slane %v468, %v614
        %v616 = vlaneseq
        %v617 = vshrl.u32 %v616, 7
        %v618 = vsub.s32 2, %v617
        %v619 = vrot.slane %v468, %v618
        %623 = vrot.lane.b32.xlu0 %v611, 112
        %v624 = vpop.permute.xlu0 %623
        %625 = vrot.lane.b32.xlu0 %v615, 112
        %v626 = vpop.permute.xlu0 %625
        %627 = vrot.lane.b32.xlu0 %v619, 112
        %v628 = vpop.permute.xlu0 %627
        %v629 = vsel %vm553, %v626, %v628
        %v630 = vsel %vm553, %v624, %v626
        %v631 = vsel %vm553, %v628, %v624
        %s632 = sld [smem:[#allocation2 + $0x1]]
        %v633 = vstv %s632
        %v634 = vmul.f32 %v633, %v555
        %v635 = vmul.f32 %v633, %v554
        %v636 = vmul.f32 %v633, %v556
        %v640 = vcombine.low %v634, %v635
        %v642 = vunpack.c.l.s4 1966171168
        %v643 = vunpack.c.0.s8 %v642
        %v644 = vlaneseq
        %v645 = vshrl.u32 %v644, 7
        %v646 = vsub.s32 %v643, %v645
        %v647 = vrot.slane %v640, %v646
        %v649 = vunpack.c.l.s4 1966171168
        %v650 = vunpack.c.0.s8 %v649
        %v651 = vlaneseq
        %v652 = vshrl.u32 %v651, 7
        %v653 = vsub.s32 %v650, %v652
        %v654 = vrot.slane %v636, %v653
        %v655 = vcombine.low %v647, %v654
        %v657 = vunpack.c.l.s4 1966171168
        %v658 = vunpack.c.0.s8 %v657
        %v659 = vlaneseq
        %v660 = vshrl.u32 %v659, 7
        %v661 = vsub.s32 %v658, %v660
        %v662 = vrot.slane %v655, %v661
        %v664 = vadd.f32 %v483, %v662
        %s665 = sld [smem:[#allocation2 + $0x8]]
        %v666 = vstv %s665
        %v667 = vmul.f32 %v666, %v580
        %v668 = vmul.f32 %v666, %v579
        %v669 = vmul.f32 %v666, %v581
        %v673 = vcombine.low %v667, %v668
        %v675 = vunpack.c.l.s4 1966171168
        %v676 = vunpack.c.0.s8 %v675
        %v677 = vlaneseq
        %v678 = vshrl.u32 %v677, 7
        %v679 = vsub.s32 %v676, %v678
        %v680 = vrot.slane %v673, %v679
        %v682 = vunpack.c.l.s4 1966171168
        %v683 = vunpack.c.0.s8 %v682
        %v684 = vlaneseq
        %v685 = vshrl.u32 %v684, 7
        %v686 = vsub.s32 %v683, %v685
        %v687 = vrot.slane %v669, %v686
        %v688 = vcombine.low %v680, %v687
        %v690 = vunpack.c.l.s4 1966171168
        %v691 = vunpack.c.0.s8 %v690
        %v692 = vlaneseq
        %v693 = vshrl.u32 %v692, 7
        %v694 = vsub.s32 %v691, %v693
        %v695 = vrot.slane %v688, %v694
        %v697 = vadd.f32 %v664, %v695
        %s698 = sld [smem:[#allocation2 + $0xf]]
        %v699 = vstv %s698
        %v700 = vmul.f32 %v699, %v605
        %v701 = vmul.f32 %v699, %v604
        %v702 = vmul.f32 %v699, %v606
        %v706 = vcombine.low %v700, %v701
        %v708 = vunpack.c.l.s4 1966171168
        %v709 = vunpack.c.0.s8 %v708
        %v710 = vlaneseq
        %v711 = vshrl.u32 %v710, 7
        %v712 = vsub.s32 %v709, %v711
        %v713 = vrot.slane %v706, %v712
        %v715 = vunpack.c.l.s4 1966171168
        %v716 = vunpack.c.0.s8 %v715
        %v717 = vlaneseq
        %v718 = vshrl.u32 %v717, 7
        %v719 = vsub.s32 %v716, %v718
        %v720 = vrot.slane %v702, %v719
        %v721 = vcombine.low %v713, %v720
        %v723 = vunpack.c.l.s4 1966171168
        %v724 = vunpack.c.0.s8 %v723
        %v725 = vlaneseq
        %v726 = vshrl.u32 %v725, 7
        %v727 = vsub.s32 %v724, %v726
        %v728 = vrot.slane %v721, %v727
        %v730 = vadd.f32 %v697, %v728
        %s731 = sld [smem:[#allocation2 + $0x16]]
        %v732 = vstv %s731
        %v733 = vmul.f32 %v732, %v630
        %v734 = vmul.f32 %v732, %v629
        %v735 = vmul.f32 %v732, %v631
        %v739 = vcombine.low %v733, %v734
        %v741 = vunpack.c.l.s4 1966171168
        %v742 = vunpack.c.0.s8 %v741
        %v743 = vlaneseq
        %v744 = vshrl.u32 %v743, 7
        %v745 = vsub.s32 %v742, %v744
        %v746 = vrot.slane %v739, %v745
        %v748 = vunpack.c.l.s4 1966171168
        %v749 = vunpack.c.0.s8 %v748
        %v750 = vlaneseq
        %v751 = vshrl.u32 %v750, 7
        %v752 = vsub.s32 %v749, %v751
        %v753 = vrot.slane %v735, %v752
        %v754 = vcombine.low %v746, %v753
        %v756 = vunpack.c.l.s4 1966171168
        %v757 = vunpack.c.0.s8 %v756
        %v758 = vlaneseq
        %v759 = vshrl.u32 %v758, 7
        %v760 = vsub.s32 %v757, %v759
        %v761 = vrot.slane %v754, %v760
        %v763 = vadd.f32 %v730, %v761
        %s764 = sld [smem:[#allocation2 + $0x1d]]
        %v765 = vstv %s764
        %v766 = vmul.f32 %v765, %v555
        %v767 = vmul.f32 %v765, %v554
        %v768 = vmul.f32 %v765, %v556
        %v772 = vcombine.low %v766, %v767
        %v774 = vunpack.c.l.s4 1966171168
        %v775 = vunpack.c.0.s8 %v774
        %v776 = vlaneseq
        %v777 = vshrl.u32 %v776, 7
        %v778 = vsub.s32 %v775, %v777
        %v779 = vrot.slane %v772, %v778
        %v781 = vunpack.c.l.s4 1966171168
        %v782 = vunpack.c.0.s8 %v781
        %v783 = vlaneseq
        %v784 = vshrl.u32 %v783, 7
        %v785 = vsub.s32 %v782, %v784
        %v786 = vrot.slane %v768, %v785
        %v787 = vcombine.low %v779, %v786
        %v789 = vunpack.c.l.s4 1966171168
        %v790 = vunpack.c.0.s8 %v789
        %v791 = vlaneseq
        %v792 = vshrl.u32 %v791, 7
        %v793 = vsub.s32 %v790, %v792
        %v794 = vrot.slane %v787, %v793
        %v796 = vadd.f32 %v498, %v794
        %s797 = sld [smem:[#allocation2 + $0x24]]
        %v798 = vstv %s797
        %v799 = vmul.f32 %v798, %v580
        %v800 = vmul.f32 %v798, %v579
        %v801 = vmul.f32 %v798, %v581
        %v805 = vcombine.low %v799, %v800
        %v807 = vunpack.c.l.s4 1966171168
        %v808 = vunpack.c.0.s8 %v807
        %v809 = vlaneseq
        %v810 = vshrl.u32 %v809, 7
        %v811 = vsub.s32 %v808, %v810
        %v812 = vrot.slane %v805, %v811
        %v814 = vunpack.c.l.s4 1966171168
        %v815 = vunpack.c.0.s8 %v814
        %v816 = vlaneseq
        %v817 = vshrl.u32 %v816, 7
        %v818 = vsub.s32 %v815, %v817
        %v819 = vrot.slane %v801, %v818
        %v820 = vcombine.low %v812, %v819
        %v822 = vunpack.c.l.s4 1966171168
        %v823 = vunpack.c.0.s8 %v822
        %v824 = vlaneseq
        %v825 = vshrl.u32 %v824, 7
        %v826 = vsub.s32 %v823, %v825
        %v827 = vrot.slane %v820, %v826
        %v829 = vadd.f32 %v796, %v827
        %s830 = sld [smem:[#allocation2 + $0x2b]]
        %v831 = vstv %s830
        %v832 = vmul.f32 %v831, %v605
        %v833 = vmul.f32 %v831, %v604
        %v834 = vmul.f32 %v831, %v606
        %v838 = vcombine.low %v832, %v833
        %v840 = vunpack.c.l.s4 1966171168
        %v841 = vunpack.c.0.s8 %v840
        %v842 = vlaneseq
        %v843 = vshrl.u32 %v842, 7
        %v844 = vsub.s32 %v841, %v843
        %v845 = vrot.slane %v838, %v844
        %v847 = vunpack.c.l.s4 1966171168
        %v848 = vunpack.c.0.s8 %v847
        %v849 = vlaneseq
        %v850 = vshrl.u32 %v849, 7
        %v851 = vsub.s32 %v848, %v850
        %v852 = vrot.slane %v834, %v851
        %v853 = vcombine.low %v845, %v852
        %v855 = vunpack.c.l.s4 1966171168
        %v856 = vunpack.c.0.s8 %v855
        %v857 = vlaneseq
        %v858 = vshrl.u32 %v857, 7
        %v859 = vsub.s32 %v856, %v858
        %v860 = vrot.slane %v853, %v859
        %v862 = vadd.f32 %v829, %v860
        %s863 = sld [smem:[#allocation2 + $0x32]]
        %v864 = vstv %s863
        %v865 = vmul.f32 %v864, %v630
        %v866 = vmul.f32 %v864, %v629
        %v867 = vmul.f32 %v864, %v631
        %v871 = vcombine.low %v865, %v866
        %v873 = vunpack.c.l.s4 1966171168
        %v874 = vunpack.c.0.s8 %v873
        %v875 = vlaneseq
        %v876 = vshrl.u32 %v875, 7
        %v877 = vsub.s32 %v874, %v876
        %v878 = vrot.slane %v871, %v877
        %v880 = vunpack.c.l.s4 1966171168
        %v881 = vunpack.c.0.s8 %v880
        %v882 = vlaneseq
        %v883 = vshrl.u32 %v882, 7
        %v884 = vsub.s32 %v881, %v883
        %v885 = vrot.slane %v867, %v884
        %v886 = vcombine.low %v878, %v885
        %v888 = vunpack.c.l.s4 1966171168
        %v889 = vunpack.c.0.s8 %v888
        %v890 = vlaneseq
        %v891 = vshrl.u32 %v890, 7
        %v892 = vsub.s32 %v889, %v891
        %v893 = vrot.slane %v886, %v892
        %v895 = vadd.f32 %v862, %v893
        %s896 = sld [smem:[#allocation2 + $0x39]]
        %v897 = vstv %s896
        %v898 = vmul.f32 %v897, %v555
        %v899 = vmul.f32 %v897, %v554
        %v900 = vmul.f32 %v897, %v556
        %v904 = vcombine.low %v898, %v899
        %v906 = vunpack.c.l.s4 1966171168
        %v907 = vunpack.c.0.s8 %v906
        %v908 = vlaneseq
        %v909 = vshrl.u32 %v908, 7
        %v910 = vsub.s32 %v907, %v909
        %v911 = vrot.slane %v904, %v910
        %v913 = vunpack.c.l.s4 1966171168
        %v914 = vunpack.c.0.s8 %v913
        %v915 = vlaneseq
        %v916 = vshrl.u32 %v915, 7
        %v917 = vsub.s32 %v914, %v916
        %v918 = vrot.slane %v900, %v917
        %v919 = vcombine.low %v911, %v918
        %v921 = vunpack.c.l.s4 1966171168
        %v922 = vunpack.c.0.s8 %v921
        %v923 = vlaneseq
        %v924 = vshrl.u32 %v923, 7
        %v925 = vsub.s32 %v922, %v924
        %v926 = vrot.slane %v919, %v925
        %v928 = vadd.f32 %v513, %v926
        %s929 = sld [smem:[#allocation2 + $0x40]]
        %v930 = vstv %s929
        %v931 = vmul.f32 %v930, %v580
        %v932 = vmul.f32 %v930, %v579
        %v933 = vmul.f32 %v930, %v581
        %v937 = vcombine.low %v931, %v932
        %v939 = vunpack.c.l.s4 1966171168
        %v940 = vunpack.c.0.s8 %v939
        %v941 = vlaneseq
        %v942 = vshrl.u32 %v941, 7
        %v943 = vsub.s32 %v940, %v942
        %v944 = vrot.slane %v937, %v943
        %v946 = vunpack.c.l.s4 1966171168
        %v947 = vunpack.c.0.s8 %v946
        %v948 = vlaneseq
        %v949 = vshrl.u32 %v948, 7
        %v950 = vsub.s32 %v947, %v949
        %v951 = vrot.slane %v933, %v950
        %v952 = vcombine.low %v944, %v951
        %v954 = vunpack.c.l.s4 1966171168
        %v955 = vunpack.c.0.s8 %v954
        %v956 = vlaneseq
        %v957 = vshrl.u32 %v956, 7
        %v958 = vsub.s32 %v955, %v957
        %v959 = vrot.slane %v952, %v958
        %v961 = vadd.f32 %v928, %v959
        %s962 = sld [smem:[#allocation2 + $0x47]]
        %v963 = vstv %s962
        %v964 = vmul.f32 %v963, %v605
        %v965 = vmul.f32 %v963, %v604
        %v966 = vmul.f32 %v963, %v606
        %v970 = vcombine.low %v964, %v965
        %v972 = vunpack.c.l.s4 1966171168
        %v973 = vunpack.c.0.s8 %v972
        %v974 = vlaneseq
        %v975 = vshrl.u32 %v974, 7
        %v976 = vsub.s32 %v973, %v975
        %v977 = vrot.slane %v970, %v976
        %v979 = vunpack.c.l.s4 1966171168
        %v980 = vunpack.c.0.s8 %v979
        %v981 = vlaneseq
        %v982 = vshrl.u32 %v981, 7
        %v983 = vsub.s32 %v980, %v982
        %v984 = vrot.slane %v966, %v983
        %v985 = vcombine.low %v977, %v984
        %v987 = vunpack.c.l.s4 1966171168
        %v988 = vunpack.c.0.s8 %v987
        %v989 = vlaneseq
        %v990 = vshrl.u32 %v989, 7
        %v991 = vsub.s32 %v988, %v990
        %v992 = vrot.slane %v985, %v991
        %v994 = vadd.f32 %v961, %v992
        %s995 = sld [smem:[#allocation2 + $0x4e]]
        %v996 = vstv %s995
        %v997 = vmul.f32 %v996, %v630
        %v998 = vmul.f32 %v996, %v629
        %v999 = vmul.f32 %v996, %v631
        %v1003 = vcombine.low %v997, %v998
        %v1005 = vunpack.c.l.s4 1966171168
        %v1006 = vunpack.c.0.s8 %v1005
        %v1007 = vlaneseq
        %v1008 = vshrl.u32 %v1007, 7
        %v1009 = vsub.s32 %v1006, %v1008
        %v1010 = vrot.slane %v1003, %v1009
        %v1012 = vunpack.c.l.s4 1966171168
        %v1013 = vunpack.c.0.s8 %v1012
        %v1014 = vlaneseq
        %v1015 = vshrl.u32 %v1014, 7
        %v1016 = vsub.s32 %v1013, %v1015
        %v1017 = vrot.slane %v999, %v1016
        %v1018 = vcombine.low %v1010, %v1017
        %v1020 = vunpack.c.l.s4 1966171168
        %v1021 = vunpack.c.0.s8 %v1020
        %v1022 = vlaneseq
        %v1023 = vshrl.u32 %v1022, 7
        %v1024 = vsub.s32 %v1021, %v1023
        %v1025 = vrot.slane %v1018, %v1024
        %v1027 = vadd.f32 %v994, %v1025
        %s1028 = sld [smem:[#allocation2 + $0x55]]
        %v1029 = vstv %s1028
        %v1030 = vmul.f32 %v1029, %v555
        %v1031 = vmul.f32 %v1029, %v554
        %v1032 = vmul.f32 %v1029, %v556
        %v1036 = vcombine.low %v1030, %v1031
        %v1038 = vunpack.c.l.s4 1966171168
        %v1039 = vunpack.c.0.s8 %v1038
        %v1040 = vlaneseq
        %v1041 = vshrl.u32 %v1040, 7
        %v1042 = vsub.s32 %v1039, %v1041
        %v1043 = vrot.slane %v1036, %v1042
        %v1045 = vunpack.c.l.s4 1966171168
        %v1046 = vunpack.c.0.s8 %v1045
        %v1047 = vlaneseq
        %v1048 = vshrl.u32 %v1047, 7
        %v1049 = vsub.s32 %v1046, %v1048
        %v1050 = vrot.slane %v1032, %v1049
        %v1051 = vcombine.low %v1043, %v1050
        %v1053 = vunpack.c.l.s4 1966171168
        %v1054 = vunpack.c.0.s8 %v1053
        %v1055 = vlaneseq
        %v1056 = vshrl.u32 %v1055, 7
        %v1057 = vsub.s32 %v1054, %v1056
        %v1058 = vrot.slane %v1051, %v1057
        %v1060 = vadd.f32 %v528, %v1058
        %s1061 = sld [smem:[#allocation2 + $0x5c]]
        %v1062 = vstv %s1061
        %v1063 = vmul.f32 %v1062, %v580
        %v1064 = vmul.f32 %v1062, %v579
        %v1065 = vmul.f32 %v1062, %v581
        %v1069 = vcombine.low %v1063, %v1064
        %v1071 = vunpack.c.l.s4 1966171168
        %v1072 = vunpack.c.0.s8 %v1071
        %v1073 = vlaneseq
        %v1074 = vshrl.u32 %v1073, 7
        %v1075 = vsub.s32 %v1072, %v1074
        %v1076 = vrot.slane %v1069, %v1075
        %v1078 = vunpack.c.l.s4 1966171168
        %v1079 = vunpack.c.0.s8 %v1078
        %v1080 = vlaneseq
        %v1081 = vshrl.u32 %v1080, 7
        %v1082 = vsub.s32 %v1079, %v1081
        %v1083 = vrot.slane %v1065, %v1082
        %v1084 = vcombine.low %v1076, %v1083
        %v1086 = vunpack.c.l.s4 1966171168
        %v1087 = vunpack.c.0.s8 %v1086
        %v1088 = vlaneseq
        %v1089 = vshrl.u32 %v1088, 7
        %v1090 = vsub.s32 %v1087, %v1089
        %v1091 = vrot.slane %v1084, %v1090
        %v1093 = vadd.f32 %v1060, %v1091
        %s1094 = sld [smem:[#allocation2 + $0x63]]
        %v1095 = vstv %s1094
        %v1096 = vmul.f32 %v1095, %v605
        %v1097 = vmul.f32 %v1095, %v604
        %v1098 = vmul.f32 %v1095, %v606
        %v1102 = vcombine.low %v1096, %v1097
        %v1104 = vunpack.c.l.s4 1966171168
        %v1105 = vunpack.c.0.s8 %v1104
        %v1106 = vlaneseq
        %v1107 = vshrl.u32 %v1106, 7
        %v1108 = vsub.s32 %v1105, %v1107
        %v1109 = vrot.slane %v1102, %v1108
        %v1111 = vunpack.c.l.s4 1966171168
        %v1112 = vunpack.c.0.s8 %v1111
        %v1113 = vlaneseq
        %v1114 = vshrl.u32 %v1113, 7
        %v1115 = vsub.s32 %v1112, %v1114
        %v1116 = vrot.slane %v1098, %v1115
        %v1117 = vcombine.low %v1109, %v1116
        %v1119 = vunpack.c.l.s4 1966171168
        %v1120 = vunpack.c.0.s8 %v1119
        %v1121 = vlaneseq
        %v1122 = vshrl.u32 %v1121, 7
        %v1123 = vsub.s32 %v1120, %v1122
        %v1124 = vrot.slane %v1117, %v1123
        %v1126 = vadd.f32 %v1093, %v1124
        %s1127 = sld [smem:[#allocation2 + $0x6a]]
        %v1128 = vstv %s1127
        %v1129 = vmul.f32 %v1128, %v630
        %v1130 = vmul.f32 %v1128, %v629
        %v1131 = vmul.f32 %v1128, %v631
        %v1135 = vcombine.low %v1129, %v1130
        %v1137 = vunpack.c.l.s4 1966171168
        %v1138 = vunpack.c.0.s8 %v1137
        %v1139 = vlaneseq
        %v1140 = vshrl.u32 %v1139, 7
        %v1141 = vsub.s32 %v1138, %v1140
        %v1142 = vrot.slane %v1135, %v1141
        %v1144 = vunpack.c.l.s4 1966171168
        %v1145 = vunpack.c.0.s8 %v1144
        %v1146 = vlaneseq
        %v1147 = vshrl.u32 %v1146, 7
        %v1148 = vsub.s32 %v1145, %v1147
        %v1149 = vrot.slane %v1131, %v1148
        %v1150 = vcombine.low %v1142, %v1149
        %v1152 = vunpack.c.l.s4 1966171168
        %v1153 = vunpack.c.0.s8 %v1152
        %v1154 = vlaneseq
        %v1155 = vshrl.u32 %v1154, 7
        %v1156 = vsub.s32 %v1153, %v1155
        %v1157 = vrot.slane %v1150, %v1156
        %v1159 = vadd.f32 %v1126, %v1157
        %1160 = vrot.lane.b32.xlu0 %v533, 96
        %v1161 = vpop.permute.xlu0 %1160
        %1162 = vrot.lane.b32.xlu0 %v537, 96
        %v1163 = vpop.permute.xlu0 %1162
        %1164 = vrot.lane.b32.xlu0 %v541, 96
        %v1165 = vpop.permute.xlu0 %1164
        %vm1166 = vcmp.lt.s32.totalorder %v552, 96
        %v1167 = vsel %vm1166, %v1163, %v1165
        %v1168 = vsel %vm1166, %v1161, %v1163
        %v1169 = vsel %vm1166, %v1165, %v1161
        %1170 = vrot.lane.b32.xlu0 %v561, 96
        %v1171 = vpop.permute.xlu0 %1170
        %1172 = vrot.lane.b32.xlu0 %v565, 96
        %v1173 = vpop.permute.xlu0 %1172
        %1174 = vrot.lane.b32.xlu0 %v569, 96
        %v1175 = vpop.permute.xlu0 %1174
        %v1176 = vsel %vm1166, %v1173, %v1175
        %v1177 = vsel %vm1166, %v1171, %v1173
        %v1178 = vsel %vm1166, %v1175, %v1171
        %1179 = vrot.lane.b32.xlu0 %v586, 96
        %v1180 = vpop.permute.xlu0 %1179
        %1181 = vrot.lane.b32.xlu0 %v590, 96
        %v1182 = vpop.permute.xlu0 %1181
        %1183 = vrot.lane.b32.xlu0 %v594, 96
        %v1184 = vpop.permute.xlu0 %1183
        %v1185 = vsel %vm1166, %v1182, %v1184
        %v1186 = vsel %vm1166, %v1180, %v1182
        %v1187 = vsel %vm1166, %v1184, %v1180
        %1188 = vrot.lane.b32.xlu0 %v611, 96
        %v1189 = vpop.permute.xlu0 %1188
        %1190 = vrot.lane.b32.xlu0 %v615, 96
        %v1191 = vpop.permute.xlu0 %1190
        %1192 = vrot.lane.b32.xlu0 %v619, 96
        %v1193 = vpop.permute.xlu0 %1192
        %v1194 = vsel %vm1166, %v1191, %v1193
        %v1195 = vsel %vm1166, %v1189, %v1191
        %v1196 = vsel %vm1166, %v1193, %v1189
        %s1197 = sld [smem:[#allocation2 + $0x2]]
        %v1198 = vstv %s1197
        %v1199 = vmul.f32 %v1198, %v1168
        %v1200 = vmul.f32 %v1198, %v1167
        %v1201 = vmul.f32 %v1198, %v1169
        %v1205 = vcombine.low %v1199, %v1200
        %v1207 = vunpack.c.l.s4 1966171168
        %v1208 = vunpack.c.0.s8 %v1207
        %v1209 = vlaneseq
        %v1210 = vshrl.u32 %v1209, 7
        %v1211 = vsub.s32 %v1208, %v1210
        %v1212 = vrot.slane %v1205, %v1211
        %v1214 = vunpack.c.l.s4 1966171168
        %v1215 = vunpack.c.0.s8 %v1214
        %v1216 = vlaneseq
        %v1217 = vshrl.u32 %v1216, 7
        %v1218 = vsub.s32 %v1215, %v1217
        %v1219 = vrot.slane %v1201, %v1218
        %v1220 = vcombine.low %v1212, %v1219
        %v1222 = vunpack.c.l.s4 1966171168
        %v1223 = vunpack.c.0.s8 %v1222
        %v1224 = vlaneseq
        %v1225 = vshrl.u32 %v1224, 7
        %v1226 = vsub.s32 %v1223, %v1225
        %v1227 = vrot.slane %v1220, %v1226
        %v1229 = vadd.f32 %v763, %v1227
        %s1230 = sld [smem:[#allocation2 + $0x9]]
        %v1231 = vstv %s1230
        %v1232 = vmul.f32 %v1231, %v1177
        %v1233 = vmul.f32 %v1231, %v1176
        %v1234 = vmul.f32 %v1231, %v1178
        %v1238 = vcombine.low %v1232, %v1233
        %v1240 = vunpack.c.l.s4 1966171168
        %v1241 = vunpack.c.0.s8 %v1240
        %v1242 = vlaneseq
        %v1243 = vshrl.u32 %v1242, 7
        %v1244 = vsub.s32 %v1241, %v1243
        %v1245 = vrot.slane %v1238, %v1244
        %v1247 = vunpack.c.l.s4 1966171168
        %v1248 = vunpack.c.0.s8 %v1247
        %v1249 = vlaneseq
        %v1250 = vshrl.u32 %v1249, 7
        %v1251 = vsub.s32 %v1248, %v1250
        %v1252 = vrot.slane %v1234, %v1251
        %v1253 = vcombine.low %v1245, %v1252
        %v1255 = vunpack.c.l.s4 1966171168
        %v1256 = vunpack.c.0.s8 %v1255
        %v1257 = vlaneseq
        %v1258 = vshrl.u32 %v1257, 7
        %v1259 = vsub.s32 %v1256, %v1258
        %v1260 = vrot.slane %v1253, %v1259
        %v1262 = vadd.f32 %v1229, %v1260
        %s1263 = sld [smem:[#allocation2 + $0x10]]
        %v1264 = vstv %s1263
        %v1265 = vmul.f32 %v1264, %v1186
        %v1266 = vmul.f32 %v1264, %v1185
        %v1267 = vmul.f32 %v1264, %v1187
        %v1271 = vcombine.low %v1265, %v1266
        %v1273 = vunpack.c.l.s4 1966171168
        %v1274 = vunpack.c.0.s8 %v1273
        %v1275 = vlaneseq
        %v1276 = vshrl.u32 %v1275, 7
        %v1277 = vsub.s32 %v1274, %v1276
        %v1278 = vrot.slane %v1271, %v1277
        %v1280 = vunpack.c.l.s4 1966171168
        %v1281 = vunpack.c.0.s8 %v1280
        %v1282 = vlaneseq
        %v1283 = vshrl.u32 %v1282, 7
        %v1284 = vsub.s32 %v1281, %v1283
        %v1285 = vrot.slane %v1267, %v1284
        %v1286 = vcombine.low %v1278, %v1285
        %v1288 = vunpack.c.l.s4 1966171168
        %v1289 = vunpack.c.0.s8 %v1288
        %v1290 = vlaneseq
        %v1291 = vshrl.u32 %v1290, 7
        %v1292 = vsub.s32 %v1289, %v1291
        %v1293 = vrot.slane %v1286, %v1292
        %v1295 = vadd.f32 %v1262, %v1293
        %s1296 = sld [smem:[#allocation2 + $0x17]]
        %v1297 = vstv %s1296
        %v1298 = vmul.f32 %v1297, %v1195
        %v1299 = vmul.f32 %v1297, %v1194
        %v1300 = vmul.f32 %v1297, %v1196
        %v1304 = vcombine.low %v1298, %v1299
        %v1306 = vunpack.c.l.s4 1966171168
        %v1307 = vunpack.c.0.s8 %v1306
        %v1308 = vlaneseq
        %v1309 = vshrl.u32 %v1308, 7
        %v1310 = vsub.s32 %v1307, %v1309
        %v1311 = vrot.slane %v1304, %v1310
        %v1313 = vunpack.c.l.s4 1966171168
        %v1314 = vunpack.c.0.s8 %v1313
        %v1315 = vlaneseq
        %v1316 = vshrl.u32 %v1315, 7
        %v1317 = vsub.s32 %v1314, %v1316
        %v1318 = vrot.slane %v1300, %v1317
        %v1319 = vcombine.low %v1311, %v1318
        %v1321 = vunpack.c.l.s4 1966171168
        %v1322 = vunpack.c.0.s8 %v1321
        %v1323 = vlaneseq
        %v1324 = vshrl.u32 %v1323, 7
        %v1325 = vsub.s32 %v1322, %v1324
        %v1326 = vrot.slane %v1319, %v1325
        %v1328 = vadd.f32 %v1295, %v1326
        %s1329 = sld [smem:[#allocation2 + $0x1e]]
        %v1330 = vstv %s1329
        %v1331 = vmul.f32 %v1330, %v1168
        %v1332 = vmul.f32 %v1330, %v1167
        %v1333 = vmul.f32 %v1330, %v1169
        %v1337 = vcombine.low %v1331, %v1332
        %v1339 = vunpack.c.l.s4 1966171168
        %v1340 = vunpack.c.0.s8 %v1339
        %v1341 = vlaneseq
        %v1342 = vshrl.u32 %v1341, 7
        %v1343 = vsub.s32 %v1340, %v1342
        %v1344 = vrot.slane %v1337, %v1343
        %v1346 = vunpack.c.l.s4 1966171168
        %v1347 = vunpack.c.0.s8 %v1346
        %v1348 = vlaneseq
        %v1349 = vshrl.u32 %v1348, 7
        %v1350 = vsub.s32 %v1347, %v1349
        %v1351 = vrot.slane %v1333, %v1350
        %v1352 = vcombine.low %v1344, %v1351
        %v1354 = vunpack.c.l.s4 1966171168
        %v1355 = vunpack.c.0.s8 %v1354
        %v1356 = vlaneseq
        %v1357 = vshrl.u32 %v1356, 7
        %v1358 = vsub.s32 %v1355, %v1357
        %v1359 = vrot.slane %v1352, %v1358
        %v1361 = vadd.f32 %v895, %v1359
        %s1362 = sld [smem:[#allocation2 + $0x25]]
        %v1363 = vstv %s1362
        %v1364 = vmul.f32 %v1363, %v1177
        %v1365 = vmul.f32 %v1363, %v1176
        %v1366 = vmul.f32 %v1363, %v1178
        %v1370 = vcombine.low %v1364, %v1365
        %v1372 = vunpack.c.l.s4 1966171168
        %v1373 = vunpack.c.0.s8 %v1372
        %v1374 = vlaneseq
        %v1375 = vshrl.u32 %v1374, 7
        %v1376 = vsub.s32 %v1373, %v1375
        %v1377 = vrot.slane %v1370, %v1376
        %v1379 = vunpack.c.l.s4 1966171168
        %v1380 = vunpack.c.0.s8 %v1379
        %v1381 = vlaneseq
        %v1382 = vshrl.u32 %v1381, 7
        %v1383 = vsub.s32 %v1380, %v1382
        %v1384 = vrot.slane %v1366, %v1383
        %v1385 = vcombine.low %v1377, %v1384
        %v1387 = vunpack.c.l.s4 1966171168
        %v1388 = vunpack.c.0.s8 %v1387
        %v1389 = vlaneseq
        %v1390 = vshrl.u32 %v1389, 7
        %v1391 = vsub.s32 %v1388, %v1390
        %v1392 = vrot.slane %v1385, %v1391
        %v1394 = vadd.f32 %v1361, %v1392
        %s1395 = sld [smem:[#allocation2 + $0x2c]]
        %v1396 = vstv %s1395
        %v1397 = vmul.f32 %v1396, %v1186
        %v1398 = vmul.f32 %v1396, %v1185
        %v1399 = vmul.f32 %v1396, %v1187
        %v1403 = vcombine.low %v1397, %v1398
        %v1405 = vunpack.c.l.s4 1966171168
        %v1406 = vunpack.c.0.s8 %v1405
        %v1407 = vlaneseq
        %v1408 = vshrl.u32 %v1407, 7
        %v1409 = vsub.s32 %v1406, %v1408
        %v1410 = vrot.slane %v1403, %v1409
        %v1412 = vunpack.c.l.s4 1966171168
        %v1413 = vunpack.c.0.s8 %v1412
        %v1414 = vlaneseq
        %v1415 = vshrl.u32 %v1414, 7
        %v1416 = vsub.s32 %v1413, %v1415
        %v1417 = vrot.slane %v1399, %v1416
        %v1418 = vcombine.low %v1410, %v1417
        %v1420 = vunpack.c.l.s4 1966171168
        %v1421 = vunpack.c.0.s8 %v1420
        %v1422 = vlaneseq
        %v1423 = vshrl.u32 %v1422, 7
        %v1424 = vsub.s32 %v1421, %v1423
        %v1425 = vrot.slane %v1418, %v1424
        %v1427 = vadd.f32 %v1394, %v1425
        %s1428 = sld [smem:[#allocation2 + $0x33]]
        %v1429 = vstv %s1428
        %v1430 = vmul.f32 %v1429, %v1195
        %v1431 = vmul.f32 %v1429, %v1194
        %v1432 = vmul.f32 %v1429, %v1196
        %v1436 = vcombine.low %v1430, %v1431
        %v1438 = vunpack.c.l.s4 1966171168
        %v1439 = vunpack.c.0.s8 %v1438
        %v1440 = vlaneseq
        %v1441 = vshrl.u32 %v1440, 7
        %v1442 = vsub.s32 %v1439, %v1441
        %v1443 = vrot.slane %v1436, %v1442
        %v1445 = vunpack.c.l.s4 1966171168
        %v1446 = vunpack.c.0.s8 %v1445
        %v1447 = vlaneseq
        %v1448 = vshrl.u32 %v1447, 7
        %v1449 = vsub.s32 %v1446, %v1448
        %v1450 = vrot.slane %v1432, %v1449
        %v1451 = vcombine.low %v1443, %v1450
        %v1453 = vunpack.c.l.s4 1966171168
        %v1454 = vunpack.c.0.s8 %v1453
        %v1455 = vlaneseq
        %v1456 = vshrl.u32 %v1455, 7
        %v1457 = vsub.s32 %v1454, %v1456
        %v1458 = vrot.slane %v1451, %v1457
        %v1460 = vadd.f32 %v1427, %v1458
        %s1461 = sld [smem:[#allocation2 + $0x3a]]
        %v1462 = vstv %s1461
        %v1463 = vmul.f32 %v1462, %v1168
        %v1464 = vmul.f32 %v1462, %v1167
        %v1465 = vmul.f32 %v1462, %v1169
        %v1469 = vcombine.low %v1463, %v1464
        %v1471 = vunpack.c.l.s4 1966171168
        %v1472 = vunpack.c.0.s8 %v1471
        %v1473 = vlaneseq
        %v1474 = vshrl.u32 %v1473, 7
        %v1475 = vsub.s32 %v1472, %v1474
        %v1476 = vrot.slane %v1469, %v1475
        %v1478 = vunpack.c.l.s4 1966171168
        %v1479 = vunpack.c.0.s8 %v1478
        %v1480 = vlaneseq
        %v1481 = vshrl.u32 %v1480, 7
        %v1482 = vsub.s32 %v1479, %v1481
        %v1483 = vrot.slane %v1465, %v1482
        %v1484 = vcombine.low %v1476, %v1483
        %v1486 = vunpack.c.l.s4 1966171168
        %v1487 = vunpack.c.0.s8 %v1486
        %v1488 = vlaneseq
        %v1489 = vshrl.u32 %v1488, 7
        %v1490 = vsub.s32 %v1487, %v1489
        %v1491 = vrot.slane %v1484, %v1490
        %v1493 = vadd.f32 %v1027, %v1491
        %s1494 = sld [smem:[#allocation2 + $0x41]]
        %v1495 = vstv %s1494
        %v1496 = vmul.f32 %v1495, %v1177
        %v1497 = vmul.f32 %v1495, %v1176
        %v1498 = vmul.f32 %v1495, %v1178
        %v1502 = vcombine.low %v1496, %v1497
        %v1504 = vunpack.c.l.s4 1966171168
        %v1505 = vunpack.c.0.s8 %v1504
        %v1506 = vlaneseq
        %v1507 = vshrl.u32 %v1506, 7
        %v1508 = vsub.s32 %v1505, %v1507
        %v1509 = vrot.slane %v1502, %v1508
        %v1511 = vunpack.c.l.s4 1966171168
        %v1512 = vunpack.c.0.s8 %v1511
        %v1513 = vlaneseq
        %v1514 = vshrl.u32 %v1513, 7
        %v1515 = vsub.s32 %v1512, %v1514
        %v1516 = vrot.slane %v1498, %v1515
        %v1517 = vcombine.low %v1509, %v1516
        %v1519 = vunpack.c.l.s4 1966171168
        %v1520 = vunpack.c.0.s8 %v1519
        %v1521 = vlaneseq
        %v1522 = vshrl.u32 %v1521, 7
        %v1523 = vsub.s32 %v1520, %v1522
        %v1524 = vrot.slane %v1517, %v1523
        %v1526 = vadd.f32 %v1493, %v1524
        %s1527 = sld [smem:[#allocation2 + $0x48]]
        %v1528 = vstv %s1527
        %v1529 = vmul.f32 %v1528, %v1186
        %v1530 = vmul.f32 %v1528, %v1185
        %v1531 = vmul.f32 %v1528, %v1187
        %v1535 = vcombine.low %v1529, %v1530
        %v1537 = vunpack.c.l.s4 1966171168
        %v1538 = vunpack.c.0.s8 %v1537
        %v1539 = vlaneseq
        %v1540 = vshrl.u32 %v1539, 7
        %v1541 = vsub.s32 %v1538, %v1540
        %v1542 = vrot.slane %v1535, %v1541
        %v1544 = vunpack.c.l.s4 1966171168
        %v1545 = vunpack.c.0.s8 %v1544
        %v1546 = vlaneseq
        %v1547 = vshrl.u32 %v1546, 7
        %v1548 = vsub.s32 %v1545, %v1547
        %v1549 = vrot.slane %v1531, %v1548
        %v1550 = vcombine.low %v1542, %v1549
        %v1552 = vunpack.c.l.s4 1966171168
        %v1553 = vunpack.c.0.s8 %v1552
        %v1554 = vlaneseq
        %v1555 = vshrl.u32 %v1554, 7
        %v1556 = vsub.s32 %v1553, %v1555
        %v1557 = vrot.slane %v1550, %v1556
        %v1559 = vadd.f32 %v1526, %v1557
        %s1560 = sld [smem:[#allocation2 + $0x4f]]
        %v1561 = vstv %s1560
        %v1562 = vmul.f32 %v1561, %v1195
        %v1563 = vmul.f32 %v1561, %v1194
        %v1564 = vmul.f32 %v1561, %v1196
        %v1568 = vcombine.low %v1562, %v1563
        %v1570 = vunpack.c.l.s4 1966171168
        %v1571 = vunpack.c.0.s8 %v1570
        %v1572 = vlaneseq
        %v1573 = vshrl.u32 %v1572, 7
        %v1574 = vsub.s32 %v1571, %v1573
        %v1575 = vrot.slane %v1568, %v1574
        %v1577 = vunpack.c.l.s4 1966171168
        %v1578 = vunpack.c.0.s8 %v1577
        %v1579 = vlaneseq
        %v1580 = vshrl.u32 %v1579, 7
        %v1581 = vsub.s32 %v1578, %v1580
        %v1582 = vrot.slane %v1564, %v1581
        %v1583 = vcombine.low %v1575, %v1582
        %v1585 = vunpack.c.l.s4 1966171168
        %v1586 = vunpack.c.0.s8 %v1585
        %v1587 = vlaneseq
        %v1588 = vshrl.u32 %v1587, 7
        %v1589 = vsub.s32 %v1586, %v1588
        %v1590 = vrot.slane %v1583, %v1589
        %v1592 = vadd.f32 %v1559, %v1590
        %s1593 = sld [smem:[#allocation2 + $0x56]]
        %v1594 = vstv %s1593
        %v1595 = vmul.f32 %v1594, %v1168
        %v1596 = vmul.f32 %v1594, %v1167
        %v1597 = vmul.f32 %v1594, %v1169
        %v1601 = vcombine.low %v1595, %v1596
        %v1603 = vunpack.c.l.s4 1966171168
        %v1604 = vunpack.c.0.s8 %v1603
        %v1605 = vlaneseq
        %v1606 = vshrl.u32 %v1605, 7
        %v1607 = vsub.s32 %v1604, %v1606
        %v1608 = vrot.slane %v1601, %v1607
        %v1610 = vunpack.c.l.s4 1966171168
        %v1611 = vunpack.c.0.s8 %v1610
        %v1612 = vlaneseq
        %v1613 = vshrl.u32 %v1612, 7
        %v1614 = vsub.s32 %v1611, %v1613
        %v1615 = vrot.slane %v1597, %v1614
        %v1616 = vcombine.low %v1608, %v1615
        %v1618 = vunpack.c.l.s4 1966171168
        %v1619 = vunpack.c.0.s8 %v1618
        %v1620 = vlaneseq
        %v1621 = vshrl.u32 %v1620, 7
        %v1622 = vsub.s32 %v1619, %v1621
        %v1623 = vrot.slane %v1616, %v1622
        %v1625 = vadd.f32 %v1159, %v1623
        %s1626 = sld [smem:[#allocation2 + $0x5d]]
        %v1627 = vstv %s1626
        %v1628 = vmul.f32 %v1627, %v1177
        %v1629 = vmul.f32 %v1627, %v1176
        %v1630 = vmul.f32 %v1627, %v1178
        %v1634 = vcombine.low %v1628, %v1629
        %v1636 = vunpack.c.l.s4 1966171168
        %v1637 = vunpack.c.0.s8 %v1636
        %v1638 = vlaneseq
        %v1639 = vshrl.u32 %v1638, 7
        %v1640 = vsub.s32 %v1637, %v1639
        %v1641 = vrot.slane %v1634, %v1640
        %v1643 = vunpack.c.l.s4 1966171168
        %v1644 = vunpack.c.0.s8 %v1643
        %v1645 = vlaneseq
        %v1646 = vshrl.u32 %v1645, 7
        %v1647 = vsub.s32 %v1644, %v1646
        %v1648 = vrot.slane %v1630, %v1647
        %v1649 = vcombine.low %v1641, %v1648
        %v1651 = vunpack.c.l.s4 1966171168
        %v1652 = vunpack.c.0.s8 %v1651
        %v1653 = vlaneseq
        %v1654 = vshrl.u32 %v1653, 7
        %v1655 = vsub.s32 %v1652, %v1654
        %v1656 = vrot.slane %v1649, %v1655
        %v1658 = vadd.f32 %v1625, %v1656
        %s1659 = sld [smem:[#allocation2 + $0x64]]
        %v1660 = vstv %s1659
        %v1661 = vmul.f32 %v1660, %v1186
        %v1662 = vmul.f32 %v1660, %v1185
        %v1663 = vmul.f32 %v1660, %v1187
        %v1667 = vcombine.low %v1661, %v1662
        %v1669 = vunpack.c.l.s4 1966171168
        %v1670 = vunpack.c.0.s8 %v1669
        %v1671 = vlaneseq
        %v1672 = vshrl.u32 %v1671, 7
        %v1673 = vsub.s32 %v1670, %v1672
        %v1674 = vrot.slane %v1667, %v1673
        %v1676 = vunpack.c.l.s4 1966171168
        %v1677 = vunpack.c.0.s8 %v1676
        %v1678 = vlaneseq
        %v1679 = vshrl.u32 %v1678, 7
        %v1680 = vsub.s32 %v1677, %v1679
        %v1681 = vrot.slane %v1663, %v1680
        %v1682 = vcombine.low %v1674, %v1681
        %v1684 = vunpack.c.l.s4 1966171168
        %v1685 = vunpack.c.0.s8 %v1684
        %v1686 = vlaneseq
        %v1687 = vshrl.u32 %v1686, 7
        %v1688 = vsub.s32 %v1685, %v1687
        %v1689 = vrot.slane %v1682, %v1688
        %v1691 = vadd.f32 %v1658, %v1689
        %s1692 = sld [smem:[#allocation2 + $0x6b]]
        %v1693 = vstv %s1692
        %v1694 = vmul.f32 %v1693, %v1195
        %v1695 = vmul.f32 %v1693, %v1194
        %v1696 = vmul.f32 %v1693, %v1196
        %v1700 = vcombine.low %v1694, %v1695
        %v1702 = vunpack.c.l.s4 1966171168
        %v1703 = vunpack.c.0.s8 %v1702
        %v1704 = vlaneseq
        %v1705 = vshrl.u32 %v1704, 7
        %v1706 = vsub.s32 %v1703, %v1705
        %v1707 = vrot.slane %v1700, %v1706
        %v1709 = vunpack.c.l.s4 1966171168
        %v1710 = vunpack.c.0.s8 %v1709
        %v1711 = vlaneseq
        %v1712 = vshrl.u32 %v1711, 7
        %v1713 = vsub.s32 %v1710, %v1712
        %v1714 = vrot.slane %v1696, %v1713
        %v1715 = vcombine.low %v1707, %v1714
        %v1717 = vunpack.c.l.s4 1966171168
        %v1718 = vunpack.c.0.s8 %v1717
        %v1719 = vlaneseq
        %v1720 = vshrl.u32 %v1719, 7
        %v1721 = vsub.s32 %v1718, %v1720
        %v1722 = vrot.slane %v1715, %v1721
        %v1724 = vadd.f32 %v1691, %v1722
        %1725 = vrot.lane.b32.xlu0 %v533, 80
        %v1726 = vpop.permute.xlu0 %1725
        %1727 = vrot.lane.b32.xlu0 %v537, 80
        %v1728 = vpop.permute.xlu0 %1727
        %1729 = vrot.lane.b32.xlu0 %v541, 80
        %v1730 = vpop.permute.xlu0 %1729
        %vm1731 = vcmp.lt.s32.totalorder %v552, 80
        %v1732 = vsel %vm1731, %v1728, %v1730
        %v1733 = vsel %vm1731, %v1726, %v1728
        %v1734 = vsel %vm1731, %v1730, %v1726
        %1735 = vrot.lane.b32.xlu0 %v561, 80
        %v1736 = vpop.permute.xlu0 %1735
        %1737 = vrot.lane.b32.xlu0 %v565, 80
        %v1738 = vpop.permute.xlu0 %1737
        %1739 = vrot.lane.b32.xlu0 %v569, 80
        %v1740 = vpop.permute.xlu0 %1739
        %v1741 = vsel %vm1731, %v1738, %v1740
        %v1742 = vsel %vm1731, %v1736, %v1738
        %v1743 = vsel %vm1731, %v1740, %v1736
        %1744 = vrot.lane.b32.xlu0 %v586, 80
        %v1745 = vpop.permute.xlu0 %1744
        %1746 = vrot.lane.b32.xlu0 %v590, 80
        %v1747 = vpop.permute.xlu0 %1746
        %1748 = vrot.lane.b32.xlu0 %v594, 80
        %v1749 = vpop.permute.xlu0 %1748
        %v1750 = vsel %vm1731, %v1747, %v1749
        %v1751 = vsel %vm1731, %v1745, %v1747
        %v1752 = vsel %vm1731, %v1749, %v1745
        %1753 = vrot.lane.b32.xlu0 %v611, 80
        %v1754 = vpop.permute.xlu0 %1753
        %1755 = vrot.lane.b32.xlu0 %v615, 80
        %v1756 = vpop.permute.xlu0 %1755
        %1757 = vrot.lane.b32.xlu0 %v619, 80
        %v1758 = vpop.permute.xlu0 %1757
        %v1759 = vsel %vm1731, %v1756, %v1758
        %v1760 = vsel %vm1731, %v1754, %v1756
        %v1761 = vsel %vm1731, %v1758, %v1754
        %s1762 = sld [smem:[#allocation2 + $0x3]]
        %v1763 = vstv %s1762
        %v1764 = vmul.f32 %v1763, %v1733
        %v1765 = vmul.f32 %v1763, %v1732
        %v1766 = vmul.f32 %v1763, %v1734
        %v1770 = vcombine.low %v1764, %v1765
        %v1772 = vunpack.c.l.s4 1966171168
        %v1773 = vunpack.c.0.s8 %v1772
        %v1774 = vlaneseq
        %v1775 = vshrl.u32 %v1774, 7
        %v1776 = vsub.s32 %v1773, %v1775
        %v1777 = vrot.slane %v1770, %v1776
        %v1779 = vunpack.c.l.s4 1966171168
        %v1780 = vunpack.c.0.s8 %v1779
        %v1781 = vlaneseq
        %v1782 = vshrl.u32 %v1781, 7
        %v1783 = vsub.s32 %v1780, %v1782
        %v1784 = vrot.slane %v1766, %v1783
        %v1785 = vcombine.low %v1777, %v1784
        %v1787 = vunpack.c.l.s4 1966171168
        %v1788 = vunpack.c.0.s8 %v1787
        %v1789 = vlaneseq
        %v1790 = vshrl.u32 %v1789, 7
        %v1791 = vsub.s32 %v1788, %v1790
        %v1792 = vrot.slane %v1785, %v1791
        %v1794 = vadd.f32 %v1328, %v1792
        %s1795 = sld [smem:[#allocation2 + $0xa]]
        %v1796 = vstv %s1795
        %v1797 = vmul.f32 %v1796, %v1742
        %v1798 = vmul.f32 %v1796, %v1741
        %v1799 = vmul.f32 %v1796, %v1743
        %v1803 = vcombine.low %v1797, %v1798
        %v1805 = vunpack.c.l.s4 1966171168
        %v1806 = vunpack.c.0.s8 %v1805
        %v1807 = vlaneseq
        %v1808 = vshrl.u32 %v1807, 7
        %v1809 = vsub.s32 %v1806, %v1808
        %v1810 = vrot.slane %v1803, %v1809
        %v1812 = vunpack.c.l.s4 1966171168
        %v1813 = vunpack.c.0.s8 %v1812
        %v1814 = vlaneseq
        %v1815 = vshrl.u32 %v1814, 7
        %v1816 = vsub.s32 %v1813, %v1815
        %v1817 = vrot.slane %v1799, %v1816
        %v1818 = vcombine.low %v1810, %v1817
        %v1820 = vunpack.c.l.s4 1966171168
        %v1821 = vunpack.c.0.s8 %v1820
        %v1822 = vlaneseq
        %v1823 = vshrl.u32 %v1822, 7
        %v1824 = vsub.s32 %v1821, %v1823
        %v1825 = vrot.slane %v1818, %v1824
        %v1827 = vadd.f32 %v1794, %v1825
        %s1828 = sld [smem:[#allocation2 + $0x11]]
        %v1829 = vstv %s1828
        %v1830 = vmul.f32 %v1829, %v1751
        %v1831 = vmul.f32 %v1829, %v1750
        %v1832 = vmul.f32 %v1829, %v1752
        %v1836 = vcombine.low %v1830, %v1831
        %v1838 = vunpack.c.l.s4 1966171168
        %v1839 = vunpack.c.0.s8 %v1838
        %v1840 = vlaneseq
        %v1841 = vshrl.u32 %v1840, 7
        %v1842 = vsub.s32 %v1839, %v1841
        %v1843 = vrot.slane %v1836, %v1842
        %v1845 = vunpack.c.l.s4 1966171168
        %v1846 = vunpack.c.0.s8 %v1845
        %v1847 = vlaneseq
        %v1848 = vshrl.u32 %v1847, 7
        %v1849 = vsub.s32 %v1846, %v1848
        %v1850 = vrot.slane %v1832, %v1849
        %v1851 = vcombine.low %v1843, %v1850
        %v1853 = vunpack.c.l.s4 1966171168
        %v1854 = vunpack.c.0.s8 %v1853
        %v1855 = vlaneseq
        %v1856 = vshrl.u32 %v1855, 7
        %v1857 = vsub.s32 %v1854, %v1856
        %v1858 = vrot.slane %v1851, %v1857
        %v1860 = vadd.f32 %v1827, %v1858
        %s1861 = sld [smem:[#allocation2 + $0x18]]
        %v1862 = vstv %s1861
        %v1863 = vmul.f32 %v1862, %v1760
        %v1864 = vmul.f32 %v1862, %v1759
        %v1865 = vmul.f32 %v1862, %v1761
        %v1869 = vcombine.low %v1863, %v1864
        %v1871 = vunpack.c.l.s4 1966171168
        %v1872 = vunpack.c.0.s8 %v1871
        %v1873 = vlaneseq
        %v1874 = vshrl.u32 %v1873, 7
        %v1875 = vsub.s32 %v1872, %v1874
        %v1876 = vrot.slane %v1869, %v1875
        %v1878 = vunpack.c.l.s4 1966171168
        %v1879 = vunpack.c.0.s8 %v1878
        %v1880 = vlaneseq
        %v1881 = vshrl.u32 %v1880, 7
        %v1882 = vsub.s32 %v1879, %v1881
        %v1883 = vrot.slane %v1865, %v1882
        %v1884 = vcombine.low %v1876, %v1883
        %v1886 = vunpack.c.l.s4 1966171168
        %v1887 = vunpack.c.0.s8 %v1886
        %v1888 = vlaneseq
        %v1889 = vshrl.u32 %v1888, 7
        %v1890 = vsub.s32 %v1887, %v1889
        %v1891 = vrot.slane %v1884, %v1890
        %v1893 = vadd.f32 %v1860, %v1891
        %s1894 = sld [smem:[#allocation2 + $0x1f]]
        %v1895 = vstv %s1894
        %v1896 = vmul.f32 %v1895, %v1733
        %v1897 = vmul.f32 %v1895, %v1732
        %v1898 = vmul.f32 %v1895, %v1734
        %v1902 = vcombine.low %v1896, %v1897
        %v1904 = vunpack.c.l.s4 1966171168
        %v1905 = vunpack.c.0.s8 %v1904
        %v1906 = vlaneseq
        %v1907 = vshrl.u32 %v1906, 7
        %v1908 = vsub.s32 %v1905, %v1907
        %v1909 = vrot.slane %v1902, %v1908
        %v1911 = vunpack.c.l.s4 1966171168
        %v1912 = vunpack.c.0.s8 %v1911
        %v1913 = vlaneseq
        %v1914 = vshrl.u32 %v1913, 7
        %v1915 = vsub.s32 %v1912, %v1914
        %v1916 = vrot.slane %v1898, %v1915
        %v1917 = vcombine.low %v1909, %v1916
        %v1919 = vunpack.c.l.s4 1966171168
        %v1920 = vunpack.c.0.s8 %v1919
        %v1921 = vlaneseq
        %v1922 = vshrl.u32 %v1921, 7
        %v1923 = vsub.s32 %v1920, %v1922
        %v1924 = vrot.slane %v1917, %v1923
        %v1926 = vadd.f32 %v1460, %v1924
        %s1927 = sld [smem:[#allocation2 + $0x26]]
        %v1928 = vstv %s1927
        %v1929 = vmul.f32 %v1928, %v1742
        %v1930 = vmul.f32 %v1928, %v1741
        %v1931 = vmul.f32 %v1928, %v1743
        %v1935 = vcombine.low %v1929, %v1930
        %v1937 = vunpack.c.l.s4 1966171168
        %v1938 = vunpack.c.0.s8 %v1937
        %v1939 = vlaneseq
        %v1940 = vshrl.u32 %v1939, 7
        %v1941 = vsub.s32 %v1938, %v1940
        %v1942 = vrot.slane %v1935, %v1941
        %v1944 = vunpack.c.l.s4 1966171168
        %v1945 = vunpack.c.0.s8 %v1944
        %v1946 = vlaneseq
        %v1947 = vshrl.u32 %v1946, 7
        %v1948 = vsub.s32 %v1945, %v1947
        %v1949 = vrot.slane %v1931, %v1948
        %v1950 = vcombine.low %v1942, %v1949
        %v1952 = vunpack.c.l.s4 1966171168
        %v1953 = vunpack.c.0.s8 %v1952
        %v1954 = vlaneseq
        %v1955 = vshrl.u32 %v1954, 7
        %v1956 = vsub.s32 %v1953, %v1955
        %v1957 = vrot.slane %v1950, %v1956
        %v1959 = vadd.f32 %v1926, %v1957
        %s1960 = sld [smem:[#allocation2 + $0x2d]]
        %v1961 = vstv %s1960
        %v1962 = vmul.f32 %v1961, %v1751
        %v1963 = vmul.f32 %v1961, %v1750
        %v1964 = vmul.f32 %v1961, %v1752
        %v1968 = vcombine.low %v1962, %v1963
        %v1970 = vunpack.c.l.s4 1966171168
        %v1971 = vunpack.c.0.s8 %v1970
        %v1972 = vlaneseq
        %v1973 = vshrl.u32 %v1972, 7
        %v1974 = vsub.s32 %v1971, %v1973
        %v1975 = vrot.slane %v1968, %v1974
        %v1977 = vunpack.c.l.s4 1966171168
        %v1978 = vunpack.c.0.s8 %v1977
        %v1979 = vlaneseq
        %v1980 = vshrl.u32 %v1979, 7
        %v1981 = vsub.s32 %v1978, %v1980
        %v1982 = vrot.slane %v1964, %v1981
        %v1983 = vcombine.low %v1975, %v1982
        %v1985 = vunpack.c.l.s4 1966171168
        %v1986 = vunpack.c.0.s8 %v1985
        %v1987 = vlaneseq
        %v1988 = vshrl.u32 %v1987, 7
        %v1989 = vsub.s32 %v1986, %v1988
        %v1990 = vrot.slane %v1983, %v1989
        %v1992 = vadd.f32 %v1959, %v1990
        %s1993 = sld [smem:[#allocation2 + $0x34]]
        %v1994 = vstv %s1993
        %v1995 = vmul.f32 %v1994, %v1760
        %v1996 = vmul.f32 %v1994, %v1759
        %v1997 = vmul.f32 %v1994, %v1761
        %v2001 = vcombine.low %v1995, %v1996
        %v2003 = vunpack.c.l.s4 1966171168
        %v2004 = vunpack.c.0.s8 %v2003
        %v2005 = vlaneseq
        %v2006 = vshrl.u32 %v2005, 7
        %v2007 = vsub.s32 %v2004, %v2006
        %v2008 = vrot.slane %v2001, %v2007
        %v2010 = vunpack.c.l.s4 1966171168
        %v2011 = vunpack.c.0.s8 %v2010
        %v2012 = vlaneseq
        %v2013 = vshrl.u32 %v2012, 7
        %v2014 = vsub.s32 %v2011, %v2013
        %v2015 = vrot.slane %v1997, %v2014
        %v2016 = vcombine.low %v2008, %v2015
        %v2018 = vunpack.c.l.s4 1966171168
        %v2019 = vunpack.c.0.s8 %v2018
        %v2020 = vlaneseq
        %v2021 = vshrl.u32 %v2020, 7
        %v2022 = vsub.s32 %v2019, %v2021
        %v2023 = vrot.slane %v2016, %v2022
        %v2025 = vadd.f32 %v1992, %v2023
        %s2026 = sld [smem:[#allocation2 + $0x3b]]
        %v2027 = vstv %s2026
        %v2028 = vmul.f32 %v2027, %v1733
        %v2029 = vmul.f32 %v2027, %v1732
        %v2030 = vmul.f32 %v2027, %v1734
        %v2034 = vcombine.low %v2028, %v2029
        %v2036 = vunpack.c.l.s4 1966171168
        %v2037 = vunpack.c.0.s8 %v2036
        %v2038 = vlaneseq
        %v2039 = vshrl.u32 %v2038, 7
        %v2040 = vsub.s32 %v2037, %v2039
        %v2041 = vrot.slane %v2034, %v2040
        %v2043 = vunpack.c.l.s4 1966171168
        %v2044 = vunpack.c.0.s8 %v2043
        %v2045 = vlaneseq
        %v2046 = vshrl.u32 %v2045, 7
        %v2047 = vsub.s32 %v2044, %v2046
        %v2048 = vrot.slane %v2030, %v2047
        %v2049 = vcombine.low %v2041, %v2048
        %v2051 = vunpack.c.l.s4 1966171168
        %v2052 = vunpack.c.0.s8 %v2051
        %v2053 = vlaneseq
        %v2054 = vshrl.u32 %v2053, 7
        %v2055 = vsub.s32 %v2052, %v2054
        %v2056 = vrot.slane %v2049, %v2055
        %v2058 = vadd.f32 %v1592, %v2056
        %s2059 = sld [smem:[#allocation2 + $0x42]]
        %v2060 = vstv %s2059
        %v2061 = vmul.f32 %v2060, %v1742
        %v2062 = vmul.f32 %v2060, %v1741
        %v2063 = vmul.f32 %v2060, %v1743
        %v2067 = vcombine.low %v2061, %v2062
        %v2069 = vunpack.c.l.s4 1966171168
        %v2070 = vunpack.c.0.s8 %v2069
        %v2071 = vlaneseq
        %v2072 = vshrl.u32 %v2071, 7
        %v2073 = vsub.s32 %v2070, %v2072
        %v2074 = vrot.slane %v2067, %v2073
        %v2076 = vunpack.c.l.s4 1966171168
        %v2077 = vunpack.c.0.s8 %v2076
        %v2078 = vlaneseq
        %v2079 = vshrl.u32 %v2078, 7
        %v2080 = vsub.s32 %v2077, %v2079
        %v2081 = vrot.slane %v2063, %v2080
        %v2082 = vcombine.low %v2074, %v2081
        %v2084 = vunpack.c.l.s4 1966171168
        %v2085 = vunpack.c.0.s8 %v2084
        %v2086 = vlaneseq
        %v2087 = vshrl.u32 %v2086, 7
        %v2088 = vsub.s32 %v2085, %v2087
        %v2089 = vrot.slane %v2082, %v2088
        %v2091 = vadd.f32 %v2058, %v2089
        %s2092 = sld [smem:[#allocation2 + $0x49]]
        %v2093 = vstv %s2092
        %v2094 = vmul.f32 %v2093, %v1751
        %v2095 = vmul.f32 %v2093, %v1750
        %v2096 = vmul.f32 %v2093, %v1752
        %v2100 = vcombine.low %v2094, %v2095
        %v2102 = vunpack.c.l.s4 1966171168
        %v2103 = vunpack.c.0.s8 %v2102
        %v2104 = vlaneseq
        %v2105 = vshrl.u32 %v2104, 7
        %v2106 = vsub.s32 %v2103, %v2105
        %v2107 = vrot.slane %v2100, %v2106
        %v2109 = vunpack.c.l.s4 1966171168
        %v2110 = vunpack.c.0.s8 %v2109
        %v2111 = vlaneseq
        %v2112 = vshrl.u32 %v2111, 7
        %v2113 = vsub.s32 %v2110, %v2112
        %v2114 = vrot.slane %v2096, %v2113
        %v2115 = vcombine.low %v2107, %v2114
        %v2117 = vunpack.c.l.s4 1966171168
        %v2118 = vunpack.c.0.s8 %v2117
        %v2119 = vlaneseq
        %v2120 = vshrl.u32 %v2119, 7
        %v2121 = vsub.s32 %v2118, %v2120
        %v2122 = vrot.slane %v2115, %v2121
        %v2124 = vadd.f32 %v2091, %v2122
        %s2125 = sld [smem:[#allocation2 + $0x50]]
        %v2126 = vstv %s2125
        %v2127 = vmul.f32 %v2126, %v1760
        %v2128 = vmul.f32 %v2126, %v1759
        %v2129 = vmul.f32 %v2126, %v1761
        %v2133 = vcombine.low %v2127, %v2128
        %v2135 = vunpack.c.l.s4 1966171168
        %v2136 = vunpack.c.0.s8 %v2135
        %v2137 = vlaneseq
        %v2138 = vshrl.u32 %v2137, 7
        %v2139 = vsub.s32 %v2136, %v2138
        %v2140 = vrot.slane %v2133, %v2139
        %v2142 = vunpack.c.l.s4 1966171168
        %v2143 = vunpack.c.0.s8 %v2142
        %v2144 = vlaneseq
        %v2145 = vshrl.u32 %v2144, 7
        %v2146 = vsub.s32 %v2143, %v2145
        %v2147 = vrot.slane %v2129, %v2146
        %v2148 = vcombine.low %v2140, %v2147
        %v2150 = vunpack.c.l.s4 1966171168
        %v2151 = vunpack.c.0.s8 %v2150
        %v2152 = vlaneseq
        %v2153 = vshrl.u32 %v2152, 7
        %v2154 = vsub.s32 %v2151, %v2153
        %v2155 = vrot.slane %v2148, %v2154
        %v2157 = vadd.f32 %v2124, %v2155
        %s2158 = sld [smem:[#allocation2 + $0x57]]
        %v2159 = vstv %s2158
        %v2160 = vmul.f32 %v2159, %v1733
        %v2161 = vmul.f32 %v2159, %v1732
        %v2162 = vmul.f32 %v2159, %v1734
        %v2166 = vcombine.low %v2160, %v2161
        %v2168 = vunpack.c.l.s4 1966171168
        %v2169 = vunpack.c.0.s8 %v2168
        %v2170 = vlaneseq
        %v2171 = vshrl.u32 %v2170, 7
        %v2172 = vsub.s32 %v2169, %v2171
        %v2173 = vrot.slane %v2166, %v2172
        %v2175 = vunpack.c.l.s4 1966171168
        %v2176 = vunpack.c.0.s8 %v2175
        %v2177 = vlaneseq
        %v2178 = vshrl.u32 %v2177, 7
        %v2179 = vsub.s32 %v2176, %v2178
        %v2180 = vrot.slane %v2162, %v2179
        %v2181 = vcombine.low %v2173, %v2180
        %v2183 = vunpack.c.l.s4 1966171168
        %v2184 = vunpack.c.0.s8 %v2183
        %v2185 = vlaneseq
        %v2186 = vshrl.u32 %v2185, 7
        %v2187 = vsub.s32 %v2184, %v2186
        %v2188 = vrot.slane %v2181, %v2187
        %v2190 = vadd.f32 %v1724, %v2188
        %s2191 = sld [smem:[#allocation2 + $0x5e]]
        %v2192 = vstv %s2191
        %v2193 = vmul.f32 %v2192, %v1742
        %v2194 = vmul.f32 %v2192, %v1741
        %v2195 = vmul.f32 %v2192, %v1743
        %v2199 = vcombine.low %v2193, %v2194
        %v2201 = vunpack.c.l.s4 1966171168
        %v2202 = vunpack.c.0.s8 %v2201
        %v2203 = vlaneseq
        %v2204 = vshrl.u32 %v2203, 7
        %v2205 = vsub.s32 %v2202, %v2204
        %v2206 = vrot.slane %v2199, %v2205
        %v2208 = vunpack.c.l.s4 1966171168
        %v2209 = vunpack.c.0.s8 %v2208
        %v2210 = vlaneseq
        %v2211 = vshrl.u32 %v2210, 7
        %v2212 = vsub.s32 %v2209, %v2211
        %v2213 = vrot.slane %v2195, %v2212
        %v2214 = vcombine.low %v2206, %v2213
        %v2216 = vunpack.c.l.s4 1966171168
        %v2217 = vunpack.c.0.s8 %v2216
        %v2218 = vlaneseq
        %v2219 = vshrl.u32 %v2218, 7
        %v2220 = vsub.s32 %v2217, %v2219
        %v2221 = vrot.slane %v2214, %v2220
        %v2223 = vadd.f32 %v2190, %v2221
        %s2224 = sld [smem:[#allocation2 + $0x65]]
        %v2225 = vstv %s2224
        %v2226 = vmul.f32 %v2225, %v1751
        %v2227 = vmul.f32 %v2225, %v1750
        %v2228 = vmul.f32 %v2225, %v1752
        %v2232 = vcombine.low %v2226, %v2227
        %v2234 = vunpack.c.l.s4 1966171168
        %v2235 = vunpack.c.0.s8 %v2234
        %v2236 = vlaneseq
        %v2237 = vshrl.u32 %v2236, 7
        %v2238 = vsub.s32 %v2235, %v2237
        %v2239 = vrot.slane %v2232, %v2238
        %v2241 = vunpack.c.l.s4 1966171168
        %v2242 = vunpack.c.0.s8 %v2241
        %v2243 = vlaneseq
        %v2244 = vshrl.u32 %v2243, 7
        %v2245 = vsub.s32 %v2242, %v2244
        %v2246 = vrot.slane %v2228, %v2245
        %v2247 = vcombine.low %v2239, %v2246
        %v2249 = vunpack.c.l.s4 1966171168
        %v2250 = vunpack.c.0.s8 %v2249
        %v2251 = vlaneseq
        %v2252 = vshrl.u32 %v2251, 7
        %v2253 = vsub.s32 %v2250, %v2252
        %v2254 = vrot.slane %v2247, %v2253
        %v2256 = vadd.f32 %v2223, %v2254
        %s2257 = sld [smem:[#allocation2 + $0x6c]]
        %v2258 = vstv %s2257
        %v2259 = vmul.f32 %v2258, %v1760
        %v2260 = vmul.f32 %v2258, %v1759
        %v2261 = vmul.f32 %v2258, %v1761
        %v2265 = vcombine.low %v2259, %v2260
        %v2267 = vunpack.c.l.s4 1966171168
        %v2268 = vunpack.c.0.s8 %v2267
        %v2269 = vlaneseq
        %v2270 = vshrl.u32 %v2269, 7
        %v2271 = vsub.s32 %v2268, %v2270
        %v2272 = vrot.slane %v2265, %v2271
        %v2274 = vunpack.c.l.s4 1966171168
        %v2275 = vunpack.c.0.s8 %v2274
        %v2276 = vlaneseq
        %v2277 = vshrl.u32 %v2276, 7
        %v2278 = vsub.s32 %v2275, %v2277
        %v2279 = vrot.slane %v2261, %v2278
        %v2280 = vcombine.low %v2272, %v2279
        %v2282 = vunpack.c.l.s4 1966171168
        %v2283 = vunpack.c.0.s8 %v2282
        %v2284 = vlaneseq
        %v2285 = vshrl.u32 %v2284, 7
        %v2286 = vsub.s32 %v2283, %v2285
        %v2287 = vrot.slane %v2280, %v2286
        %v2289 = vadd.f32 %v2256, %v2287
        %2290 = vrot.lane.b32.xlu0 %v533, 64
        %v2291 = vpop.permute.xlu0 %2290
        %2292 = vrot.lane.b32.xlu0 %v537, 64
        %v2293 = vpop.permute.xlu0 %2292
        %2294 = vrot.lane.b32.xlu0 %v541, 64
        %v2295 = vpop.permute.xlu0 %2294
        %vm2296 = vcmp.lt.s32.totalorder %v552, 64
        %v2297 = vsel %vm2296, %v2293, %v2295
        %v2298 = vsel %vm2296, %v2291, %v2293
        %v2299 = vsel %vm2296, %v2295, %v2291
        %2300 = vrot.lane.b32.xlu0 %v561, 64
        %v2301 = vpop.permute.xlu0 %2300
        %2302 = vrot.lane.b32.xlu0 %v565, 64
        %v2303 = vpop.permute.xlu0 %2302
        %2304 = vrot.lane.b32.xlu0 %v569, 64
        %v2305 = vpop.permute.xlu0 %2304
        %v2306 = vsel %vm2296, %v2303, %v2305
        %v2307 = vsel %vm2296, %v2301, %v2303
        %v2308 = vsel %vm2296, %v2305, %v2301
        %2309 = vrot.lane.b32.xlu0 %v586, 64
        %v2310 = vpop.permute.xlu0 %2309
        %2311 = vrot.lane.b32.xlu0 %v590, 64
        %v2312 = vpop.permute.xlu0 %2311
        %2313 = vrot.lane.b32.xlu0 %v594, 64
        %v2314 = vpop.permute.xlu0 %2313
        %v2315 = vsel %vm2296, %v2312, %v2314
        %v2316 = vsel %vm2296, %v2310, %v2312
        %v2317 = vsel %vm2296, %v2314, %v2310
        %2318 = vrot.lane.b32.xlu0 %v611, 64
        %v2319 = vpop.permute.xlu0 %2318
        %2320 = vrot.lane.b32.xlu0 %v615, 64
        %v2321 = vpop.permute.xlu0 %2320
        %2322 = vrot.lane.b32.xlu0 %v619, 64
        %v2323 = vpop.permute.xlu0 %2322
        %v2324 = vsel %vm2296, %v2321, %v2323
        %v2325 = vsel %vm2296, %v2319, %v2321
        %v2326 = vsel %vm2296, %v2323, %v2319
        %s2327 = sld [smem:[#allocation2 + $0x4]]
        %v2328 = vstv %s2327
        %v2329 = vmul.f32 %v2328, %v2298
        %v2330 = vmul.f32 %v2328, %v2297
        %v2331 = vmul.f32 %v2328, %v2299
        %v2335 = vcombine.low %v2329, %v2330
        %v2337 = vunpack.c.l.s4 1966171168
        %v2338 = vunpack.c.0.s8 %v2337
        %v2339 = vlaneseq
        %v2340 = vshrl.u32 %v2339, 7
        %v2341 = vsub.s32 %v2338, %v2340
        %v2342 = vrot.slane %v2335, %v2341
        %v2344 = vunpack.c.l.s4 1966171168
        %v2345 = vunpack.c.0.s8 %v2344
        %v2346 = vlaneseq
        %v2347 = vshrl.u32 %v2346, 7
        %v2348 = vsub.s32 %v2345, %v2347
        %v2349 = vrot.slane %v2331, %v2348
        %v2350 = vcombine.low %v2342, %v2349
        %v2352 = vunpack.c.l.s4 1966171168
        %v2353 = vunpack.c.0.s8 %v2352
        %v2354 = vlaneseq
        %v2355 = vshrl.u32 %v2354, 7
        %v2356 = vsub.s32 %v2353, %v2355
        %v2357 = vrot.slane %v2350, %v2356
        %v2359 = vadd.f32 %v1893, %v2357
        %s2360 = sld [smem:[#allocation2 + $0xb]]
        %v2361 = vstv %s2360
        %v2362 = vmul.f32 %v2361, %v2307
        %v2363 = vmul.f32 %v2361, %v2306
        %v2364 = vmul.f32 %v2361, %v2308
        %v2368 = vcombine.low %v2362, %v2363
        %v2370 = vunpack.c.l.s4 1966171168
        %v2371 = vunpack.c.0.s8 %v2370
        %v2372 = vlaneseq
        %v2373 = vshrl.u32 %v2372, 7
        %v2374 = vsub.s32 %v2371, %v2373
        %v2375 = vrot.slane %v2368, %v2374
        %v2377 = vunpack.c.l.s4 1966171168
        %v2378 = vunpack.c.0.s8 %v2377
        %v2379 = vlaneseq
        %v2380 = vshrl.u32 %v2379, 7
        %v2381 = vsub.s32 %v2378, %v2380
        %v2382 = vrot.slane %v2364, %v2381
        %v2383 = vcombine.low %v2375, %v2382
        %v2385 = vunpack.c.l.s4 1966171168
        %v2386 = vunpack.c.0.s8 %v2385
        %v2387 = vlaneseq
        %v2388 = vshrl.u32 %v2387, 7
        %v2389 = vsub.s32 %v2386, %v2388
        %v2390 = vrot.slane %v2383, %v2389
        %v2392 = vadd.f32 %v2359, %v2390
        %s2393 = sld [smem:[#allocation2 + $0x12]]
        %v2394 = vstv %s2393
        %v2395 = vmul.f32 %v2394, %v2316
        %v2396 = vmul.f32 %v2394, %v2315
        %v2397 = vmul.f32 %v2394, %v2317
        %v2401 = vcombine.low %v2395, %v2396
        %v2403 = vunpack.c.l.s4 1966171168
        %v2404 = vunpack.c.0.s8 %v2403
        %v2405 = vlaneseq
        %v2406 = vshrl.u32 %v2405, 7
        %v2407 = vsub.s32 %v2404, %v2406
        %v2408 = vrot.slane %v2401, %v2407
        %v2410 = vunpack.c.l.s4 1966171168
        %v2411 = vunpack.c.0.s8 %v2410
        %v2412 = vlaneseq
        %v2413 = vshrl.u32 %v2412, 7
        %v2414 = vsub.s32 %v2411, %v2413
        %v2415 = vrot.slane %v2397, %v2414
        %v2416 = vcombine.low %v2408, %v2415
        %v2418 = vunpack.c.l.s4 1966171168
        %v2419 = vunpack.c.0.s8 %v2418
        %v2420 = vlaneseq
        %v2421 = vshrl.u32 %v2420, 7
        %v2422 = vsub.s32 %v2419, %v2421
        %v2423 = vrot.slane %v2416, %v2422
        %v2425 = vadd.f32 %v2392, %v2423
        %s2426 = sld [smem:[#allocation2 + $0x19]]
        %v2427 = vstv %s2426
        %v2428 = vmul.f32 %v2427, %v2325
        %v2429 = vmul.f32 %v2427, %v2324
        %v2430 = vmul.f32 %v2427, %v2326
        %v2434 = vcombine.low %v2428, %v2429
        %v2436 = vunpack.c.l.s4 1966171168
        %v2437 = vunpack.c.0.s8 %v2436
        %v2438 = vlaneseq
        %v2439 = vshrl.u32 %v2438, 7
        %v2440 = vsub.s32 %v2437, %v2439
        %v2441 = vrot.slane %v2434, %v2440
        %v2443 = vunpack.c.l.s4 1966171168
        %v2444 = vunpack.c.0.s8 %v2443
        %v2445 = vlaneseq
        %v2446 = vshrl.u32 %v2445, 7
        %v2447 = vsub.s32 %v2444, %v2446
        %v2448 = vrot.slane %v2430, %v2447
        %v2449 = vcombine.low %v2441, %v2448
        %v2451 = vunpack.c.l.s4 1966171168
        %v2452 = vunpack.c.0.s8 %v2451
        %v2453 = vlaneseq
        %v2454 = vshrl.u32 %v2453, 7
        %v2455 = vsub.s32 %v2452, %v2454
        %v2456 = vrot.slane %v2449, %v2455
        %v2458 = vadd.f32 %v2425, %v2456
        %s2459 = sld [smem:[#allocation2 + $0x20]]
        %v2460 = vstv %s2459
        %v2461 = vmul.f32 %v2460, %v2298
        %v2462 = vmul.f32 %v2460, %v2297
        %v2463 = vmul.f32 %v2460, %v2299
        %v2467 = vcombine.low %v2461, %v2462
        %v2469 = vunpack.c.l.s4 1966171168
        %v2470 = vunpack.c.0.s8 %v2469
        %v2471 = vlaneseq
        %v2472 = vshrl.u32 %v2471, 7
        %v2473 = vsub.s32 %v2470, %v2472
        %v2474 = vrot.slane %v2467, %v2473
        %v2476 = vunpack.c.l.s4 1966171168
        %v2477 = vunpack.c.0.s8 %v2476
        %v2478 = vlaneseq
        %v2479 = vshrl.u32 %v2478, 7
        %v2480 = vsub.s32 %v2477, %v2479
        %v2481 = vrot.slane %v2463, %v2480
        %v2482 = vcombine.low %v2474, %v2481
        %v2484 = vunpack.c.l.s4 1966171168
        %v2485 = vunpack.c.0.s8 %v2484
        %v2486 = vlaneseq
        %v2487 = vshrl.u32 %v2486, 7
        %v2488 = vsub.s32 %v2485, %v2487
        %v2489 = vrot.slane %v2482, %v2488
        %v2491 = vadd.f32 %v2025, %v2489
        %s2492 = sld [smem:[#allocation2 + $0x27]]
        %v2493 = vstv %s2492
        %v2494 = vmul.f32 %v2493, %v2307
        %v2495 = vmul.f32 %v2493, %v2306
        %v2496 = vmul.f32 %v2493, %v2308
        %v2500 = vcombine.low %v2494, %v2495
        %v2502 = vunpack.c.l.s4 1966171168
        %v2503 = vunpack.c.0.s8 %v2502
        %v2504 = vlaneseq
        %v2505 = vshrl.u32 %v2504, 7
        %v2506 = vsub.s32 %v2503, %v2505
        %v2507 = vrot.slane %v2500, %v2506
        %v2509 = vunpack.c.l.s4 1966171168
        %v2510 = vunpack.c.0.s8 %v2509
        %v2511 = vlaneseq
        %v2512 = vshrl.u32 %v2511, 7
        %v2513 = vsub.s32 %v2510, %v2512
        %v2514 = vrot.slane %v2496, %v2513
        %v2515 = vcombine.low %v2507, %v2514
        %v2517 = vunpack.c.l.s4 1966171168
        %v2518 = vunpack.c.0.s8 %v2517
        %v2519 = vlaneseq
        %v2520 = vshrl.u32 %v2519, 7
        %v2521 = vsub.s32 %v2518, %v2520
        %v2522 = vrot.slane %v2515, %v2521
        %v2524 = vadd.f32 %v2491, %v2522
        %s2525 = sld [smem:[#allocation2 + $0x2e]]
        %v2526 = vstv %s2525
        %v2527 = vmul.f32 %v2526, %v2316
        %v2528 = vmul.f32 %v2526, %v2315
        %v2529 = vmul.f32 %v2526, %v2317
        %v2533 = vcombine.low %v2527, %v2528
        %v2535 = vunpack.c.l.s4 1966171168
        %v2536 = vunpack.c.0.s8 %v2535
        %v2537 = vlaneseq
        %v2538 = vshrl.u32 %v2537, 7
        %v2539 = vsub.s32 %v2536, %v2538
        %v2540 = vrot.slane %v2533, %v2539
        %v2542 = vunpack.c.l.s4 1966171168
        %v2543 = vunpack.c.0.s8 %v2542
        %v2544 = vlaneseq
        %v2545 = vshrl.u32 %v2544, 7
        %v2546 = vsub.s32 %v2543, %v2545
        %v2547 = vrot.slane %v2529, %v2546
        %v2548 = vcombine.low %v2540, %v2547
        %v2550 = vunpack.c.l.s4 1966171168
        %v2551 = vunpack.c.0.s8 %v2550
        %v2552 = vlaneseq
        %v2553 = vshrl.u32 %v2552, 7
        %v2554 = vsub.s32 %v2551, %v2553
        %v2555 = vrot.slane %v2548, %v2554
        %v2557 = vadd.f32 %v2524, %v2555
        %s2558 = sld [smem:[#allocation2 + $0x35]]
        %v2559 = vstv %s2558
        %v2560 = vmul.f32 %v2559, %v2325
        %v2561 = vmul.f32 %v2559, %v2324
        %v2562 = vmul.f32 %v2559, %v2326
        %v2566 = vcombine.low %v2560, %v2561
        %v2568 = vunpack.c.l.s4 1966171168
        %v2569 = vunpack.c.0.s8 %v2568
        %v2570 = vlaneseq
        %v2571 = vshrl.u32 %v2570, 7
        %v2572 = vsub.s32 %v2569, %v2571
        %v2573 = vrot.slane %v2566, %v2572
        %v2575 = vunpack.c.l.s4 1966171168
        %v2576 = vunpack.c.0.s8 %v2575
        %v2577 = vlaneseq
        %v2578 = vshrl.u32 %v2577, 7
        %v2579 = vsub.s32 %v2576, %v2578
        %v2580 = vrot.slane %v2562, %v2579
        %v2581 = vcombine.low %v2573, %v2580
        %v2583 = vunpack.c.l.s4 1966171168
        %v2584 = vunpack.c.0.s8 %v2583
        %v2585 = vlaneseq
        %v2586 = vshrl.u32 %v2585, 7
        %v2587 = vsub.s32 %v2584, %v2586
        %v2588 = vrot.slane %v2581, %v2587
        %v2590 = vadd.f32 %v2557, %v2588
        %s2591 = sld [smem:[#allocation2 + $0x3c]]
        %v2592 = vstv %s2591
        %v2593 = vmul.f32 %v2592, %v2298
        %v2594 = vmul.f32 %v2592, %v2297
        %v2595 = vmul.f32 %v2592, %v2299
        %v2599 = vcombine.low %v2593, %v2594
        %v2601 = vunpack.c.l.s4 1966171168
        %v2602 = vunpack.c.0.s8 %v2601
        %v2603 = vlaneseq
        %v2604 = vshrl.u32 %v2603, 7
        %v2605 = vsub.s32 %v2602, %v2604
        %v2606 = vrot.slane %v2599, %v2605
        %v2608 = vunpack.c.l.s4 1966171168
        %v2609 = vunpack.c.0.s8 %v2608
        %v2610 = vlaneseq
        %v2611 = vshrl.u32 %v2610, 7
        %v2612 = vsub.s32 %v2609, %v2611
        %v2613 = vrot.slane %v2595, %v2612
        %v2614 = vcombine.low %v2606, %v2613
        %v2616 = vunpack.c.l.s4 1966171168
        %v2617 = vunpack.c.0.s8 %v2616
        %v2618 = vlaneseq
        %v2619 = vshrl.u32 %v2618, 7
        %v2620 = vsub.s32 %v2617, %v2619
        %v2621 = vrot.slane %v2614, %v2620
        %v2623 = vadd.f32 %v2157, %v2621
        %s2624 = sld [smem:[#allocation2 + $0x43]]
        %v2625 = vstv %s2624
        %v2626 = vmul.f32 %v2625, %v2307
        %v2627 = vmul.f32 %v2625, %v2306
        %v2628 = vmul.f32 %v2625, %v2308
        %v2632 = vcombine.low %v2626, %v2627
        %v2634 = vunpack.c.l.s4 1966171168
        %v2635 = vunpack.c.0.s8 %v2634
        %v2636 = vlaneseq
        %v2637 = vshrl.u32 %v2636, 7
        %v2638 = vsub.s32 %v2635, %v2637
        %v2639 = vrot.slane %v2632, %v2638
        %v2641 = vunpack.c.l.s4 1966171168
        %v2642 = vunpack.c.0.s8 %v2641
        %v2643 = vlaneseq
        %v2644 = vshrl.u32 %v2643, 7
        %v2645 = vsub.s32 %v2642, %v2644
        %v2646 = vrot.slane %v2628, %v2645
        %v2647 = vcombine.low %v2639, %v2646
        %v2649 = vunpack.c.l.s4 1966171168
        %v2650 = vunpack.c.0.s8 %v2649
        %v2651 = vlaneseq
        %v2652 = vshrl.u32 %v2651, 7
        %v2653 = vsub.s32 %v2650, %v2652
        %v2654 = vrot.slane %v2647, %v2653
        %v2656 = vadd.f32 %v2623, %v2654
        %s2657 = sld [smem:[#allocation2 + $0x4a]]
        %v2658 = vstv %s2657
        %v2659 = vmul.f32 %v2658, %v2316
        %v2660 = vmul.f32 %v2658, %v2315
        %v2661 = vmul.f32 %v2658, %v2317
        %v2665 = vcombine.low %v2659, %v2660
        %v2667 = vunpack.c.l.s4 1966171168
        %v2668 = vunpack.c.0.s8 %v2667
        %v2669 = vlaneseq
        %v2670 = vshrl.u32 %v2669, 7
        %v2671 = vsub.s32 %v2668, %v2670
        %v2672 = vrot.slane %v2665, %v2671
        %v2674 = vunpack.c.l.s4 1966171168
        %v2675 = vunpack.c.0.s8 %v2674
        %v2676 = vlaneseq
        %v2677 = vshrl.u32 %v2676, 7
        %v2678 = vsub.s32 %v2675, %v2677
        %v2679 = vrot.slane %v2661, %v2678
        %v2680 = vcombine.low %v2672, %v2679
        %v2682 = vunpack.c.l.s4 1966171168
        %v2683 = vunpack.c.0.s8 %v2682
        %v2684 = vlaneseq
        %v2685 = vshrl.u32 %v2684, 7
        %v2686 = vsub.s32 %v2683, %v2685
        %v2687 = vrot.slane %v2680, %v2686
        %v2689 = vadd.f32 %v2656, %v2687
        %s2690 = sld [smem:[#allocation2 + $0x51]]
        %v2691 = vstv %s2690
        %v2692 = vmul.f32 %v2691, %v2325
        %v2693 = vmul.f32 %v2691, %v2324
        %v2694 = vmul.f32 %v2691, %v2326
        %v2698 = vcombine.low %v2692, %v2693
        %v2700 = vunpack.c.l.s4 1966171168
        %v2701 = vunpack.c.0.s8 %v2700
        %v2702 = vlaneseq
        %v2703 = vshrl.u32 %v2702, 7
        %v2704 = vsub.s32 %v2701, %v2703
        %v2705 = vrot.slane %v2698, %v2704
        %v2707 = vunpack.c.l.s4 1966171168
        %v2708 = vunpack.c.0.s8 %v2707
        %v2709 = vlaneseq
        %v2710 = vshrl.u32 %v2709, 7
        %v2711 = vsub.s32 %v2708, %v2710
        %v2712 = vrot.slane %v2694, %v2711
        %v2713 = vcombine.low %v2705, %v2712
        %v2715 = vunpack.c.l.s4 1966171168
        %v2716 = vunpack.c.0.s8 %v2715
        %v2717 = vlaneseq
        %v2718 = vshrl.u32 %v2717, 7
        %v2719 = vsub.s32 %v2716, %v2718
        %v2720 = vrot.slane %v2713, %v2719
        %v2722 = vadd.f32 %v2689, %v2720
        %s2723 = sld [smem:[#allocation2 + $0x58]]
        %v2724 = vstv %s2723
        %v2725 = vmul.f32 %v2724, %v2298
        %v2726 = vmul.f32 %v2724, %v2297
        %v2727 = vmul.f32 %v2724, %v2299
        %v2731 = vcombine.low %v2725, %v2726
        %v2733 = vunpack.c.l.s4 1966171168
        %v2734 = vunpack.c.0.s8 %v2733
        %v2735 = vlaneseq
        %v2736 = vshrl.u32 %v2735, 7
        %v2737 = vsub.s32 %v2734, %v2736
        %v2738 = vrot.slane %v2731, %v2737
        %v2740 = vunpack.c.l.s4 1966171168
        %v2741 = vunpack.c.0.s8 %v2740
        %v2742 = vlaneseq
        %v2743 = vshrl.u32 %v2742, 7
        %v2744 = vsub.s32 %v2741, %v2743
        %v2745 = vrot.slane %v2727, %v2744
        %v2746 = vcombine.low %v2738, %v2745
        %v2748 = vunpack.c.l.s4 1966171168
        %v2749 = vunpack.c.0.s8 %v2748
        %v2750 = vlaneseq
        %v2751 = vshrl.u32 %v2750, 7
        %v2752 = vsub.s32 %v2749, %v2751
        %v2753 = vrot.slane %v2746, %v2752
        %v2755 = vadd.f32 %v2289, %v2753
        %s2756 = sld [smem:[#allocation2 + $0x5f]]
        %v2757 = vstv %s2756
        %v2758 = vmul.f32 %v2757, %v2307
        %v2759 = vmul.f32 %v2757, %v2306
        %v2760 = vmul.f32 %v2757, %v2308
        %v2764 = vcombine.low %v2758, %v2759
        %v2766 = vunpack.c.l.s4 1966171168
        %v2767 = vunpack.c.0.s8 %v2766
        %v2768 = vlaneseq
        %v2769 = vshrl.u32 %v2768, 7
        %v2770 = vsub.s32 %v2767, %v2769
        %v2771 = vrot.slane %v2764, %v2770
        %v2773 = vunpack.c.l.s4 1966171168
        %v2774 = vunpack.c.0.s8 %v2773
        %v2775 = vlaneseq
        %v2776 = vshrl.u32 %v2775, 7
        %v2777 = vsub.s32 %v2774, %v2776
        %v2778 = vrot.slane %v2760, %v2777
        %v2779 = vcombine.low %v2771, %v2778
        %v2781 = vunpack.c.l.s4 1966171168
        %v2782 = vunpack.c.0.s8 %v2781
        %v2783 = vlaneseq
        %v2784 = vshrl.u32 %v2783, 7
        %v2785 = vsub.s32 %v2782, %v2784
        %v2786 = vrot.slane %v2779, %v2785
        %v2788 = vadd.f32 %v2755, %v2786
        %s2789 = sld [smem:[#allocation2 + $0x66]]
        %v2790 = vstv %s2789
        %v2791 = vmul.f32 %v2790, %v2316
        %v2792 = vmul.f32 %v2790, %v2315
        %v2793 = vmul.f32 %v2790, %v2317
        %v2797 = vcombine.low %v2791, %v2792
        %v2799 = vunpack.c.l.s4 1966171168
        %v2800 = vunpack.c.0.s8 %v2799
        %v2801 = vlaneseq
        %v2802 = vshrl.u32 %v2801, 7
        %v2803 = vsub.s32 %v2800, %v2802
        %v2804 = vrot.slane %v2797, %v2803
        %v2806 = vunpack.c.l.s4 1966171168
        %v2807 = vunpack.c.0.s8 %v2806
        %v2808 = vlaneseq
        %v2809 = vshrl.u32 %v2808, 7
        %v2810 = vsub.s32 %v2807, %v2809
        %v2811 = vrot.slane %v2793, %v2810
        %v2812 = vcombine.low %v2804, %v2811
        %v2814 = vunpack.c.l.s4 1966171168
        %v2815 = vunpack.c.0.s8 %v2814
        %v2816 = vlaneseq
        %v2817 = vshrl.u32 %v2816, 7
        %v2818 = vsub.s32 %v2815, %v2817
        %v2819 = vrot.slane %v2812, %v2818
        %v2821 = vadd.f32 %v2788, %v2819
        %s2822 = sld [smem:[#allocation2 + $0x6d]]
        %v2823 = vstv %s2822
        %v2824 = vmul.f32 %v2823, %v2325
        %v2825 = vmul.f32 %v2823, %v2324
        %v2826 = vmul.f32 %v2823, %v2326
        %v2830 = vcombine.low %v2824, %v2825
        %v2832 = vunpack.c.l.s4 1966171168
        %v2833 = vunpack.c.0.s8 %v2832
        %v2834 = vlaneseq
        %v2835 = vshrl.u32 %v2834, 7
        %v2836 = vsub.s32 %v2833, %v2835
        %v2837 = vrot.slane %v2830, %v2836
        %v2839 = vunpack.c.l.s4 1966171168
        %v2840 = vunpack.c.0.s8 %v2839
        %v2841 = vlaneseq
        %v2842 = vshrl.u32 %v2841, 7
        %v2843 = vsub.s32 %v2840, %v2842
        %v2844 = vrot.slane %v2826, %v2843
        %v2845 = vcombine.low %v2837, %v2844
        %v2847 = vunpack.c.l.s4 1966171168
        %v2848 = vunpack.c.0.s8 %v2847
        %v2849 = vlaneseq
        %v2850 = vshrl.u32 %v2849, 7
        %v2851 = vsub.s32 %v2848, %v2850
        %v2852 = vrot.slane %v2845, %v2851
        %v2854 = vadd.f32 %v2821, %v2852
        %2855 = vrot.lane.b32.xlu0 %v533, 48
        %v2856 = vpop.permute.xlu0 %2855
        %2857 = vrot.lane.b32.xlu0 %v537, 48
        %v2858 = vpop.permute.xlu0 %2857
        %2859 = vrot.lane.b32.xlu0 %v541, 48
        %v2860 = vpop.permute.xlu0 %2859
        %vm2861 = vcmp.lt.s32.totalorder %v552, 48
        %v2862 = vsel %vm2861, %v2858, %v2860
        %v2863 = vsel %vm2861, %v2856, %v2858
        %v2864 = vsel %vm2861, %v2860, %v2856
        %2865 = vrot.lane.b32.xlu0 %v561, 48
        %v2866 = vpop.permute.xlu0 %2865
        %2867 = vrot.lane.b32.xlu0 %v565, 48
        %v2868 = vpop.permute.xlu0 %2867
        %2869 = vrot.lane.b32.xlu0 %v569, 48
        %v2870 = vpop.permute.xlu0 %2869
        %v2871 = vsel %vm2861, %v2868, %v2870
        %v2872 = vsel %vm2861, %v2866, %v2868
        %v2873 = vsel %vm2861, %v2870, %v2866
        %2874 = vrot.lane.b32.xlu0 %v586, 48
        %v2875 = vpop.permute.xlu0 %2874
        %2876 = vrot.lane.b32.xlu0 %v590, 48
        %v2877 = vpop.permute.xlu0 %2876
        %2878 = vrot.lane.b32.xlu0 %v594, 48
        %v2879 = vpop.permute.xlu0 %2878
        %v2880 = vsel %vm2861, %v2877, %v2879
        %v2881 = vsel %vm2861, %v2875, %v2877
        %v2882 = vsel %vm2861, %v2879, %v2875
        %2883 = vrot.lane.b32.xlu0 %v611, 48
        %v2884 = vpop.permute.xlu0 %2883
        %2885 = vrot.lane.b32.xlu0 %v615, 48
        %v2886 = vpop.permute.xlu0 %2885
        %2887 = vrot.lane.b32.xlu0 %v619, 48
        %v2888 = vpop.permute.xlu0 %2887
        %v2889 = vsel %vm2861, %v2886, %v2888
        %v2890 = vsel %vm2861, %v2884, %v2886
        %v2891 = vsel %vm2861, %v2888, %v2884
        %s2892 = sld [smem:[#allocation2 + $0x5]]
        %v2893 = vstv %s2892
        %v2894 = vmul.f32 %v2893, %v2863
        %v2895 = vmul.f32 %v2893, %v2862
        %v2896 = vmul.f32 %v2893, %v2864
        %v2900 = vcombine.low %v2894, %v2895
        %v2902 = vunpack.c.l.s4 1966171168
        %v2903 = vunpack.c.0.s8 %v2902
        %v2904 = vlaneseq
        %v2905 = vshrl.u32 %v2904, 7
        %v2906 = vsub.s32 %v2903, %v2905
        %v2907 = vrot.slane %v2900, %v2906
        %v2909 = vunpack.c.l.s4 1966171168
        %v2910 = vunpack.c.0.s8 %v2909
        %v2911 = vlaneseq
        %v2912 = vshrl.u32 %v2911, 7
        %v2913 = vsub.s32 %v2910, %v2912
        %v2914 = vrot.slane %v2896, %v2913
        %v2915 = vcombine.low %v2907, %v2914
        %v2917 = vunpack.c.l.s4 1966171168
        %v2918 = vunpack.c.0.s8 %v2917
        %v2919 = vlaneseq
        %v2920 = vshrl.u32 %v2919, 7
        %v2921 = vsub.s32 %v2918, %v2920
        %v2922 = vrot.slane %v2915, %v2921
        %v2924 = vadd.f32 %v2458, %v2922
        %s2925 = sld [smem:[#allocation2 + $0xc]]
        %v2926 = vstv %s2925
        %v2927 = vmul.f32 %v2926, %v2872
        %v2928 = vmul.f32 %v2926, %v2871
        %v2929 = vmul.f32 %v2926, %v2873
        %v2933 = vcombine.low %v2927, %v2928
        %v2935 = vunpack.c.l.s4 1966171168
        %v2936 = vunpack.c.0.s8 %v2935
        %v2937 = vlaneseq
        %v2938 = vshrl.u32 %v2937, 7
        %v2939 = vsub.s32 %v2936, %v2938
        %v2940 = vrot.slane %v2933, %v2939
        %v2942 = vunpack.c.l.s4 1966171168
        %v2943 = vunpack.c.0.s8 %v2942
        %v2944 = vlaneseq
        %v2945 = vshrl.u32 %v2944, 7
        %v2946 = vsub.s32 %v2943, %v2945
        %v2947 = vrot.slane %v2929, %v2946
        %v2948 = vcombine.low %v2940, %v2947
        %v2950 = vunpack.c.l.s4 1966171168
        %v2951 = vunpack.c.0.s8 %v2950
        %v2952 = vlaneseq
        %v2953 = vshrl.u32 %v2952, 7
        %v2954 = vsub.s32 %v2951, %v2953
        %v2955 = vrot.slane %v2948, %v2954
        %v2957 = vadd.f32 %v2924, %v2955
        %s2958 = sld [smem:[#allocation2 + $0x13]]
        %v2959 = vstv %s2958
        %v2960 = vmul.f32 %v2959, %v2881
        %v2961 = vmul.f32 %v2959, %v2880
        %v2962 = vmul.f32 %v2959, %v2882
        %v2966 = vcombine.low %v2960, %v2961
        %v2968 = vunpack.c.l.s4 1966171168
        %v2969 = vunpack.c.0.s8 %v2968
        %v2970 = vlaneseq
        %v2971 = vshrl.u32 %v2970, 7
        %v2972 = vsub.s32 %v2969, %v2971
        %v2973 = vrot.slane %v2966, %v2972
        %v2975 = vunpack.c.l.s4 1966171168
        %v2976 = vunpack.c.0.s8 %v2975
        %v2977 = vlaneseq
        %v2978 = vshrl.u32 %v2977, 7
        %v2979 = vsub.s32 %v2976, %v2978
        %v2980 = vrot.slane %v2962, %v2979
        %v2981 = vcombine.low %v2973, %v2980
        %v2983 = vunpack.c.l.s4 1966171168
        %v2984 = vunpack.c.0.s8 %v2983
        %v2985 = vlaneseq
        %v2986 = vshrl.u32 %v2985, 7
        %v2987 = vsub.s32 %v2984, %v2986
        %v2988 = vrot.slane %v2981, %v2987
        %v2990 = vadd.f32 %v2957, %v2988
        %s2991 = sld [smem:[#allocation2 + $0x1a]]
        %v2992 = vstv %s2991
        %v2993 = vmul.f32 %v2992, %v2890
        %v2994 = vmul.f32 %v2992, %v2889
        %v2995 = vmul.f32 %v2992, %v2891
        %v2999 = vcombine.low %v2993, %v2994
        %v3001 = vunpack.c.l.s4 1966171168
        %v3002 = vunpack.c.0.s8 %v3001
        %v3003 = vlaneseq
        %v3004 = vshrl.u32 %v3003, 7
        %v3005 = vsub.s32 %v3002, %v3004
        %v3006 = vrot.slane %v2999, %v3005
        %v3008 = vunpack.c.l.s4 1966171168
        %v3009 = vunpack.c.0.s8 %v3008
        %v3010 = vlaneseq
        %v3011 = vshrl.u32 %v3010, 7
        %v3012 = vsub.s32 %v3009, %v3011
        %v3013 = vrot.slane %v2995, %v3012
        %v3014 = vcombine.low %v3006, %v3013
        %v3016 = vunpack.c.l.s4 1966171168
        %v3017 = vunpack.c.0.s8 %v3016
        %v3018 = vlaneseq
        %v3019 = vshrl.u32 %v3018, 7
        %v3020 = vsub.s32 %v3017, %v3019
        %v3021 = vrot.slane %v3014, %v3020
        %v3023 = vadd.f32 %v2990, %v3021
        %s3024 = sld [smem:[#allocation2 + $0x21]]
        %v3025 = vstv %s3024
        %v3026 = vmul.f32 %v3025, %v2863
        %v3027 = vmul.f32 %v3025, %v2862
        %v3028 = vmul.f32 %v3025, %v2864
        %v3032 = vcombine.low %v3026, %v3027
        %v3034 = vunpack.c.l.s4 1966171168
        %v3035 = vunpack.c.0.s8 %v3034
        %v3036 = vlaneseq
        %v3037 = vshrl.u32 %v3036, 7
        %v3038 = vsub.s32 %v3035, %v3037
        %v3039 = vrot.slane %v3032, %v3038
        %v3041 = vunpack.c.l.s4 1966171168
        %v3042 = vunpack.c.0.s8 %v3041
        %v3043 = vlaneseq
        %v3044 = vshrl.u32 %v3043, 7
        %v3045 = vsub.s32 %v3042, %v3044
        %v3046 = vrot.slane %v3028, %v3045
        %v3047 = vcombine.low %v3039, %v3046
        %v3049 = vunpack.c.l.s4 1966171168
        %v3050 = vunpack.c.0.s8 %v3049
        %v3051 = vlaneseq
        %v3052 = vshrl.u32 %v3051, 7
        %v3053 = vsub.s32 %v3050, %v3052
        %v3054 = vrot.slane %v3047, %v3053
        %v3056 = vadd.f32 %v2590, %v3054
        %s3057 = sld [smem:[#allocation2 + $0x28]]
        %v3058 = vstv %s3057
        %v3059 = vmul.f32 %v3058, %v2872
        %v3060 = vmul.f32 %v3058, %v2871
        %v3061 = vmul.f32 %v3058, %v2873
        %v3065 = vcombine.low %v3059, %v3060
        %v3067 = vunpack.c.l.s4 1966171168
        %v3068 = vunpack.c.0.s8 %v3067
        %v3069 = vlaneseq
        %v3070 = vshrl.u32 %v3069, 7
        %v3071 = vsub.s32 %v3068, %v3070
        %v3072 = vrot.slane %v3065, %v3071
        %v3074 = vunpack.c.l.s4 1966171168
        %v3075 = vunpack.c.0.s8 %v3074
        %v3076 = vlaneseq
        %v3077 = vshrl.u32 %v3076, 7
        %v3078 = vsub.s32 %v3075, %v3077
        %v3079 = vrot.slane %v3061, %v3078
        %v3080 = vcombine.low %v3072, %v3079
        %v3082 = vunpack.c.l.s4 1966171168
        %v3083 = vunpack.c.0.s8 %v3082
        %v3084 = vlaneseq
        %v3085 = vshrl.u32 %v3084, 7
        %v3086 = vsub.s32 %v3083, %v3085
        %v3087 = vrot.slane %v3080, %v3086
        %v3089 = vadd.f32 %v3056, %v3087
        %s3090 = sld [smem:[#allocation2 + $0x2f]]
        %v3091 = vstv %s3090
        %v3092 = vmul.f32 %v3091, %v2881
        %v3093 = vmul.f32 %v3091, %v2880
        %v3094 = vmul.f32 %v3091, %v2882
        %v3098 = vcombine.low %v3092, %v3093
        %v3100 = vunpack.c.l.s4 1966171168
        %v3101 = vunpack.c.0.s8 %v3100
        %v3102 = vlaneseq
        %v3103 = vshrl.u32 %v3102, 7
        %v3104 = vsub.s32 %v3101, %v3103
        %v3105 = vrot.slane %v3098, %v3104
        %v3107 = vunpack.c.l.s4 1966171168
        %v3108 = vunpack.c.0.s8 %v3107
        %v3109 = vlaneseq
        %v3110 = vshrl.u32 %v3109, 7
        %v3111 = vsub.s32 %v3108, %v3110
        %v3112 = vrot.slane %v3094, %v3111
        %v3113 = vcombine.low %v3105, %v3112
        %v3115 = vunpack.c.l.s4 1966171168
        %v3116 = vunpack.c.0.s8 %v3115
        %v3117 = vlaneseq
        %v3118 = vshrl.u32 %v3117, 7
        %v3119 = vsub.s32 %v3116, %v3118
        %v3120 = vrot.slane %v3113, %v3119
        %v3122 = vadd.f32 %v3089, %v3120
        %s3123 = sld [smem:[#allocation2 + $0x36]]
        %v3124 = vstv %s3123
        %v3125 = vmul.f32 %v3124, %v2890
        %v3126 = vmul.f32 %v3124, %v2889
        %v3127 = vmul.f32 %v3124, %v2891
        %v3131 = vcombine.low %v3125, %v3126
        %v3133 = vunpack.c.l.s4 1966171168
        %v3134 = vunpack.c.0.s8 %v3133
        %v3135 = vlaneseq
        %v3136 = vshrl.u32 %v3135, 7
        %v3137 = vsub.s32 %v3134, %v3136
        %v3138 = vrot.slane %v3131, %v3137
        %v3140 = vunpack.c.l.s4 1966171168
        %v3141 = vunpack.c.0.s8 %v3140
        %v3142 = vlaneseq
        %v3143 = vshrl.u32 %v3142, 7
        %v3144 = vsub.s32 %v3141, %v3143
        %v3145 = vrot.slane %v3127, %v3144
        %v3146 = vcombine.low %v3138, %v3145
        %v3148 = vunpack.c.l.s4 1966171168
        %v3149 = vunpack.c.0.s8 %v3148
        %v3150 = vlaneseq
        %v3151 = vshrl.u32 %v3150, 7
        %v3152 = vsub.s32 %v3149, %v3151
        %v3153 = vrot.slane %v3146, %v3152
        %v3155 = vadd.f32 %v3122, %v3153
        %s3156 = sld [smem:[#allocation2 + $0x3d]]
        %v3157 = vstv %s3156
        %v3158 = vmul.f32 %v3157, %v2863
        %v3159 = vmul.f32 %v3157, %v2862
        %v3160 = vmul.f32 %v3157, %v2864
        %v3164 = vcombine.low %v3158, %v3159
        %v3166 = vunpack.c.l.s4 1966171168
        %v3167 = vunpack.c.0.s8 %v3166
        %v3168 = vlaneseq
        %v3169 = vshrl.u32 %v3168, 7
        %v3170 = vsub.s32 %v3167, %v3169
        %v3171 = vrot.slane %v3164, %v3170
        %v3173 = vunpack.c.l.s4 1966171168
        %v3174 = vunpack.c.0.s8 %v3173
        %v3175 = vlaneseq
        %v3176 = vshrl.u32 %v3175, 7
        %v3177 = vsub.s32 %v3174, %v3176
        %v3178 = vrot.slane %v3160, %v3177
        %v3179 = vcombine.low %v3171, %v3178
        %v3181 = vunpack.c.l.s4 1966171168
        %v3182 = vunpack.c.0.s8 %v3181
        %v3183 = vlaneseq
        %v3184 = vshrl.u32 %v3183, 7
        %v3185 = vsub.s32 %v3182, %v3184
        %v3186 = vrot.slane %v3179, %v3185
        %v3188 = vadd.f32 %v2722, %v3186
        %s3189 = sld [smem:[#allocation2 + $0x44]]
        %v3190 = vstv %s3189
        %v3191 = vmul.f32 %v3190, %v2872
        %v3192 = vmul.f32 %v3190, %v2871
        %v3193 = vmul.f32 %v3190, %v2873
        %v3197 = vcombine.low %v3191, %v3192
        %v3199 = vunpack.c.l.s4 1966171168
        %v3200 = vunpack.c.0.s8 %v3199
        %v3201 = vlaneseq
        %v3202 = vshrl.u32 %v3201, 7
        %v3203 = vsub.s32 %v3200, %v3202
        %v3204 = vrot.slane %v3197, %v3203
        %v3206 = vunpack.c.l.s4 1966171168
        %v3207 = vunpack.c.0.s8 %v3206
        %v3208 = vlaneseq
        %v3209 = vshrl.u32 %v3208, 7
        %v3210 = vsub.s32 %v3207, %v3209
        %v3211 = vrot.slane %v3193, %v3210
        %v3212 = vcombine.low %v3204, %v3211
        %v3214 = vunpack.c.l.s4 1966171168
        %v3215 = vunpack.c.0.s8 %v3214
        %v3216 = vlaneseq
        %v3217 = vshrl.u32 %v3216, 7
        %v3218 = vsub.s32 %v3215, %v3217
        %v3219 = vrot.slane %v3212, %v3218
        %v3221 = vadd.f32 %v3188, %v3219
        %s3222 = sld [smem:[#allocation2 + $0x4b]]
        %v3223 = vstv %s3222
        %v3224 = vmul.f32 %v3223, %v2881
        %v3225 = vmul.f32 %v3223, %v2880
        %v3226 = vmul.f32 %v3223, %v2882
        %v3230 = vcombine.low %v3224, %v3225
        %v3232 = vunpack.c.l.s4 1966171168
        %v3233 = vunpack.c.0.s8 %v3232
        %v3234 = vlaneseq
        %v3235 = vshrl.u32 %v3234, 7
        %v3236 = vsub.s32 %v3233, %v3235
        %v3237 = vrot.slane %v3230, %v3236
        %v3239 = vunpack.c.l.s4 1966171168
        %v3240 = vunpack.c.0.s8 %v3239
        %v3241 = vlaneseq
        %v3242 = vshrl.u32 %v3241, 7
        %v3243 = vsub.s32 %v3240, %v3242
        %v3244 = vrot.slane %v3226, %v3243
        %v3245 = vcombine.low %v3237, %v3244
        %v3247 = vunpack.c.l.s4 1966171168
        %v3248 = vunpack.c.0.s8 %v3247
        %v3249 = vlaneseq
        %v3250 = vshrl.u32 %v3249, 7
        %v3251 = vsub.s32 %v3248, %v3250
        %v3252 = vrot.slane %v3245, %v3251
        %v3254 = vadd.f32 %v3221, %v3252
        %s3255 = sld [smem:[#allocation2 + $0x52]]
        %v3256 = vstv %s3255
        %v3257 = vmul.f32 %v3256, %v2890
        %v3258 = vmul.f32 %v3256, %v2889
        %v3259 = vmul.f32 %v3256, %v2891
        %v3263 = vcombine.low %v3257, %v3258
        %v3265 = vunpack.c.l.s4 1966171168
        %v3266 = vunpack.c.0.s8 %v3265
        %v3267 = vlaneseq
        %v3268 = vshrl.u32 %v3267, 7
        %v3269 = vsub.s32 %v3266, %v3268
        %v3270 = vrot.slane %v3263, %v3269
        %v3272 = vunpack.c.l.s4 1966171168
        %v3273 = vunpack.c.0.s8 %v3272
        %v3274 = vlaneseq
        %v3275 = vshrl.u32 %v3274, 7
        %v3276 = vsub.s32 %v3273, %v3275
        %v3277 = vrot.slane %v3259, %v3276
        %v3278 = vcombine.low %v3270, %v3277
        %v3280 = vunpack.c.l.s4 1966171168
        %v3281 = vunpack.c.0.s8 %v3280
        %v3282 = vlaneseq
        %v3283 = vshrl.u32 %v3282, 7
        %v3284 = vsub.s32 %v3281, %v3283
        %v3285 = vrot.slane %v3278, %v3284
        %v3287 = vadd.f32 %v3254, %v3285
        %s3288 = sld [smem:[#allocation2 + $0x59]]
        %v3289 = vstv %s3288
        %v3290 = vmul.f32 %v3289, %v2863
        %v3291 = vmul.f32 %v3289, %v2862
        %v3292 = vmul.f32 %v3289, %v2864
        %v3296 = vcombine.low %v3290, %v3291
        %v3298 = vunpack.c.l.s4 1966171168
        %v3299 = vunpack.c.0.s8 %v3298
        %v3300 = vlaneseq
        %v3301 = vshrl.u32 %v3300, 7
        %v3302 = vsub.s32 %v3299, %v3301
        %v3303 = vrot.slane %v3296, %v3302
        %v3305 = vunpack.c.l.s4 1966171168
        %v3306 = vunpack.c.0.s8 %v3305
        %v3307 = vlaneseq
        %v3308 = vshrl.u32 %v3307, 7
        %v3309 = vsub.s32 %v3306, %v3308
        %v3310 = vrot.slane %v3292, %v3309
        %v3311 = vcombine.low %v3303, %v3310
        %v3313 = vunpack.c.l.s4 1966171168
        %v3314 = vunpack.c.0.s8 %v3313
        %v3315 = vlaneseq
        %v3316 = vshrl.u32 %v3315, 7
        %v3317 = vsub.s32 %v3314, %v3316
        %v3318 = vrot.slane %v3311, %v3317
        %v3320 = vadd.f32 %v2854, %v3318
        %s3321 = sld [smem:[#allocation2 + $0x60]]
        %v3322 = vstv %s3321
        %v3323 = vmul.f32 %v3322, %v2872
        %v3324 = vmul.f32 %v3322, %v2871
        %v3325 = vmul.f32 %v3322, %v2873
        %v3329 = vcombine.low %v3323, %v3324
        %v3331 = vunpack.c.l.s4 1966171168
        %v3332 = vunpack.c.0.s8 %v3331
        %v3333 = vlaneseq
        %v3334 = vshrl.u32 %v3333, 7
        %v3335 = vsub.s32 %v3332, %v3334
        %v3336 = vrot.slane %v3329, %v3335
        %v3338 = vunpack.c.l.s4 1966171168
        %v3339 = vunpack.c.0.s8 %v3338
        %v3340 = vlaneseq
        %v3341 = vshrl.u32 %v3340, 7
        %v3342 = vsub.s32 %v3339, %v3341
        %v3343 = vrot.slane %v3325, %v3342
        %v3344 = vcombine.low %v3336, %v3343
        %v3346 = vunpack.c.l.s4 1966171168
        %v3347 = vunpack.c.0.s8 %v3346
        %v3348 = vlaneseq
        %v3349 = vshrl.u32 %v3348, 7
        %v3350 = vsub.s32 %v3347, %v3349
        %v3351 = vrot.slane %v3344, %v3350
        %v3353 = vadd.f32 %v3320, %v3351
        %s3354 = sld [smem:[#allocation2 + $0x67]]
        %v3355 = vstv %s3354
        %v3356 = vmul.f32 %v3355, %v2881
        %v3357 = vmul.f32 %v3355, %v2880
        %v3358 = vmul.f32 %v3355, %v2882
        %v3362 = vcombine.low %v3356, %v3357
        %v3364 = vunpack.c.l.s4 1966171168
        %v3365 = vunpack.c.0.s8 %v3364
        %v3366 = vlaneseq
        %v3367 = vshrl.u32 %v3366, 7
        %v3368 = vsub.s32 %v3365, %v3367
        %v3369 = vrot.slane %v3362, %v3368
        %v3371 = vunpack.c.l.s4 1966171168
        %v3372 = vunpack.c.0.s8 %v3371
        %v3373 = vlaneseq
        %v3374 = vshrl.u32 %v3373, 7
        %v3375 = vsub.s32 %v3372, %v3374
        %v3376 = vrot.slane %v3358, %v3375
        %v3377 = vcombine.low %v3369, %v3376
        %v3379 = vunpack.c.l.s4 1966171168
        %v3380 = vunpack.c.0.s8 %v3379
        %v3381 = vlaneseq
        %v3382 = vshrl.u32 %v3381, 7
        %v3383 = vsub.s32 %v3380, %v3382
        %v3384 = vrot.slane %v3377, %v3383
        %v3386 = vadd.f32 %v3353, %v3384
        %s3387 = sld [smem:[#allocation2 + $0x6e]]
        %v3388 = vstv %s3387
        %v3389 = vmul.f32 %v3388, %v2890
        %v3390 = vmul.f32 %v3388, %v2889
        %v3391 = vmul.f32 %v3388, %v2891
        %v3395 = vcombine.low %v3389, %v3390
        %v3397 = vunpack.c.l.s4 1966171168
        %v3398 = vunpack.c.0.s8 %v3397
        %v3399 = vlaneseq
        %v3400 = vshrl.u32 %v3399, 7
        %v3401 = vsub.s32 %v3398, %v3400
        %v3402 = vrot.slane %v3395, %v3401
        %v3404 = vunpack.c.l.s4 1966171168
        %v3405 = vunpack.c.0.s8 %v3404
        %v3406 = vlaneseq
        %v3407 = vshrl.u32 %v3406, 7
        %v3408 = vsub.s32 %v3405, %v3407
        %v3409 = vrot.slane %v3391, %v3408
        %v3410 = vcombine.low %v3402, %v3409
        %v3412 = vunpack.c.l.s4 1966171168
        %v3413 = vunpack.c.0.s8 %v3412
        %v3414 = vlaneseq
        %v3415 = vshrl.u32 %v3414, 7
        %v3416 = vsub.s32 %v3413, %v3415
        %v3417 = vrot.slane %v3410, %v3416
        %v3419 = vadd.f32 %v3386, %v3417
        %3420 = vrot.lane.b32.xlu0 %v533, 32
        %v3421 = vpop.permute.xlu0 %3420
        %3422 = vrot.lane.b32.xlu0 %v537, 32
        %v3423 = vpop.permute.xlu0 %3422
        %3424 = vrot.lane.b32.xlu0 %v541, 32
        %v3425 = vpop.permute.xlu0 %3424
        %vm3426 = vcmp.lt.s32.totalorder %v552, 32
        %v3427 = vsel %vm3426, %v3423, %v3425
        %v3428 = vsel %vm3426, %v3421, %v3423
        %v3429 = vsel %vm3426, %v3425, %v3421
        %3430 = vrot.lane.b32.xlu0 %v561, 32
        %v3431 = vpop.permute.xlu0 %3430
        %3432 = vrot.lane.b32.xlu0 %v565, 32
        %v3433 = vpop.permute.xlu0 %3432
        %3434 = vrot.lane.b32.xlu0 %v569, 32
        %v3435 = vpop.permute.xlu0 %3434
        %v3436 = vsel %vm3426, %v3433, %v3435
        %v3437 = vsel %vm3426, %v3431, %v3433
        %v3438 = vsel %vm3426, %v3435, %v3431
        %3439 = vrot.lane.b32.xlu0 %v586, 32
        %v3440 = vpop.permute.xlu0 %3439
        %3441 = vrot.lane.b32.xlu0 %v590, 32
        %v3442 = vpop.permute.xlu0 %3441
        %3443 = vrot.lane.b32.xlu0 %v594, 32
        %v3444 = vpop.permute.xlu0 %3443
        %v3445 = vsel %vm3426, %v3442, %v3444
        %v3446 = vsel %vm3426, %v3440, %v3442
        %v3447 = vsel %vm3426, %v3444, %v3440
        %3448 = vrot.lane.b32.xlu0 %v611, 32
        %v3449 = vpop.permute.xlu0 %3448
        %3450 = vrot.lane.b32.xlu0 %v615, 32
        %v3451 = vpop.permute.xlu0 %3450
        %3452 = vrot.lane.b32.xlu0 %v619, 32
        %v3453 = vpop.permute.xlu0 %3452
        %v3454 = vsel %vm3426, %v3451, %v3453
        %v3455 = vsel %vm3426, %v3449, %v3451
        %v3456 = vsel %vm3426, %v3453, %v3449
        %s3457 = sld [smem:[#allocation2 + $0x6]]
        %v3458 = vstv %s3457
        %v3459 = vmul.f32 %v3458, %v3428
        %v3460 = vmul.f32 %v3458, %v3427
        %v3461 = vmul.f32 %v3458, %v3429
        %v3465 = vcombine.low %v3459, %v3460
        %v3467 = vunpack.c.l.s4 1966171168
        %v3468 = vunpack.c.0.s8 %v3467
        %v3469 = vlaneseq
        %v3470 = vshrl.u32 %v3469, 7
        %v3471 = vsub.s32 %v3468, %v3470
        %v3472 = vrot.slane %v3465, %v3471
        %v3474 = vunpack.c.l.s4 1966171168
        %v3475 = vunpack.c.0.s8 %v3474
        %v3476 = vlaneseq
        %v3477 = vshrl.u32 %v3476, 7
        %v3478 = vsub.s32 %v3475, %v3477
        %v3479 = vrot.slane %v3461, %v3478
        %v3480 = vcombine.low %v3472, %v3479
        %v3482 = vunpack.c.l.s4 1966171168
        %v3483 = vunpack.c.0.s8 %v3482
        %v3484 = vlaneseq
        %v3485 = vshrl.u32 %v3484, 7
        %v3486 = vsub.s32 %v3483, %v3485
        %v3487 = vrot.slane %v3480, %v3486
        %v3489 = vadd.f32 %v3023, %v3487
        %s3490 = sld [smem:[#allocation2 + $0xd]]
        %v3491 = vstv %s3490
        %v3492 = vmul.f32 %v3491, %v3437
        %v3493 = vmul.f32 %v3491, %v3436
        %v3494 = vmul.f32 %v3491, %v3438
        %v3498 = vcombine.low %v3492, %v3493
        %v3500 = vunpack.c.l.s4 1966171168
        %v3501 = vunpack.c.0.s8 %v3500
        %v3502 = vlaneseq
        %v3503 = vshrl.u32 %v3502, 7
        %v3504 = vsub.s32 %v3501, %v3503
        %v3505 = vrot.slane %v3498, %v3504
        %v3507 = vunpack.c.l.s4 1966171168
        %v3508 = vunpack.c.0.s8 %v3507
        %v3509 = vlaneseq
        %v3510 = vshrl.u32 %v3509, 7
        %v3511 = vsub.s32 %v3508, %v3510
        %v3512 = vrot.slane %v3494, %v3511
        %v3513 = vcombine.low %v3505, %v3512
        %v3515 = vunpack.c.l.s4 1966171168
        %v3516 = vunpack.c.0.s8 %v3515
        %v3517 = vlaneseq
        %v3518 = vshrl.u32 %v3517, 7
        %v3519 = vsub.s32 %v3516, %v3518
        %v3520 = vrot.slane %v3513, %v3519
        %v3522 = vadd.f32 %v3489, %v3520
        %s3523 = sld [smem:[#allocation2 + $0x14]]
        %v3524 = vstv %s3523
        %v3525 = vmul.f32 %v3524, %v3446
        %v3526 = vmul.f32 %v3524, %v3445
        %v3527 = vmul.f32 %v3524, %v3447
        %v3531 = vcombine.low %v3525, %v3526
        %v3533 = vunpack.c.l.s4 1966171168
        %v3534 = vunpack.c.0.s8 %v3533
        %v3535 = vlaneseq
        %v3536 = vshrl.u32 %v3535, 7
        %v3537 = vsub.s32 %v3534, %v3536
        %v3538 = vrot.slane %v3531, %v3537
        %v3540 = vunpack.c.l.s4 1966171168
        %v3541 = vunpack.c.0.s8 %v3540
        %v3542 = vlaneseq
        %v3543 = vshrl.u32 %v3542, 7
        %v3544 = vsub.s32 %v3541, %v3543
        %v3545 = vrot.slane %v3527, %v3544
        %v3546 = vcombine.low %v3538, %v3545
        %v3548 = vunpack.c.l.s4 1966171168
        %v3549 = vunpack.c.0.s8 %v3548
        %v3550 = vlaneseq
        %v3551 = vshrl.u32 %v3550, 7
        %v3552 = vsub.s32 %v3549, %v3551
        %v3553 = vrot.slane %v3546, %v3552
        %v3555 = vadd.f32 %v3522, %v3553
        %s3556 = sld [smem:[#allocation2 + $0x1b]]
        %v3557 = vstv %s3556
        %v3558 = vmul.f32 %v3557, %v3455
        %v3559 = vmul.f32 %v3557, %v3454
        %v3560 = vmul.f32 %v3557, %v3456
        %v3564 = vcombine.low %v3558, %v3559
        %v3566 = vunpack.c.l.s4 1966171168
        %v3567 = vunpack.c.0.s8 %v3566
        %v3568 = vlaneseq
        %v3569 = vshrl.u32 %v3568, 7
        %v3570 = vsub.s32 %v3567, %v3569
        %v3571 = vrot.slane %v3564, %v3570
        %v3573 = vunpack.c.l.s4 1966171168
        %v3574 = vunpack.c.0.s8 %v3573
        %v3575 = vlaneseq
        %v3576 = vshrl.u32 %v3575, 7
        %v3577 = vsub.s32 %v3574, %v3576
        %v3578 = vrot.slane %v3560, %v3577
        %v3579 = vcombine.low %v3571, %v3578
        %v3581 = vunpack.c.l.s4 1966171168
        %v3582 = vunpack.c.0.s8 %v3581
        %v3583 = vlaneseq
        %v3584 = vshrl.u32 %v3583, 7
        %v3585 = vsub.s32 %v3582, %v3584
        %v3586 = vrot.slane %v3579, %v3585
        %v3588 = vadd.f32 %v3555, %v3586
        %s3589 = sld [smem:[#allocation2 + $0x22]]
        %v3590 = vstv %s3589
        %v3591 = vmul.f32 %v3590, %v3428
        %v3592 = vmul.f32 %v3590, %v3427
        %v3593 = vmul.f32 %v3590, %v3429
        %v3597 = vcombine.low %v3591, %v3592
        %v3599 = vunpack.c.l.s4 1966171168
        %v3600 = vunpack.c.0.s8 %v3599
        %v3601 = vlaneseq
        %v3602 = vshrl.u32 %v3601, 7
        %v3603 = vsub.s32 %v3600, %v3602
        %v3604 = vrot.slane %v3597, %v3603
        %v3606 = vunpack.c.l.s4 1966171168
        %v3607 = vunpack.c.0.s8 %v3606
        %v3608 = vlaneseq
        %v3609 = vshrl.u32 %v3608, 7
        %v3610 = vsub.s32 %v3607, %v3609
        %v3611 = vrot.slane %v3593, %v3610
        %v3612 = vcombine.low %v3604, %v3611
        %v3614 = vunpack.c.l.s4 1966171168
        %v3615 = vunpack.c.0.s8 %v3614
        %v3616 = vlaneseq
        %v3617 = vshrl.u32 %v3616, 7
        %v3618 = vsub.s32 %v3615, %v3617
        %v3619 = vrot.slane %v3612, %v3618
        %v3621 = vadd.f32 %v3155, %v3619
        %s3622 = sld [smem:[#allocation2 + $0x29]]
        %v3623 = vstv %s3622
        %v3624 = vmul.f32 %v3623, %v3437
        %v3625 = vmul.f32 %v3623, %v3436
        %v3626 = vmul.f32 %v3623, %v3438
        %v3630 = vcombine.low %v3624, %v3625
        %v3632 = vunpack.c.l.s4 1966171168
        %v3633 = vunpack.c.0.s8 %v3632
        %v3634 = vlaneseq
        %v3635 = vshrl.u32 %v3634, 7
        %v3636 = vsub.s32 %v3633, %v3635
        %v3637 = vrot.slane %v3630, %v3636
        %v3639 = vunpack.c.l.s4 1966171168
        %v3640 = vunpack.c.0.s8 %v3639
        %v3641 = vlaneseq
        %v3642 = vshrl.u32 %v3641, 7
        %v3643 = vsub.s32 %v3640, %v3642
        %v3644 = vrot.slane %v3626, %v3643
        %v3645 = vcombine.low %v3637, %v3644
        %v3647 = vunpack.c.l.s4 1966171168
        %v3648 = vunpack.c.0.s8 %v3647
        %v3649 = vlaneseq
        %v3650 = vshrl.u32 %v3649, 7
        %v3651 = vsub.s32 %v3648, %v3650
        %v3652 = vrot.slane %v3645, %v3651
        %v3654 = vadd.f32 %v3621, %v3652
        %s3655 = sld [smem:[#allocation2 + $0x30]]
        %v3656 = vstv %s3655
        %v3657 = vmul.f32 %v3656, %v3446
        %v3658 = vmul.f32 %v3656, %v3445
        %v3659 = vmul.f32 %v3656, %v3447
        %v3663 = vcombine.low %v3657, %v3658
        %v3665 = vunpack.c.l.s4 1966171168
        %v3666 = vunpack.c.0.s8 %v3665
        %v3667 = vlaneseq
        %v3668 = vshrl.u32 %v3667, 7
        %v3669 = vsub.s32 %v3666, %v3668
        %v3670 = vrot.slane %v3663, %v3669
        %v3672 = vunpack.c.l.s4 1966171168
        %v3673 = vunpack.c.0.s8 %v3672
        %v3674 = vlaneseq
        %v3675 = vshrl.u32 %v3674, 7
        %v3676 = vsub.s32 %v3673, %v3675
        %v3677 = vrot.slane %v3659, %v3676
        %v3678 = vcombine.low %v3670, %v3677
        %v3680 = vunpack.c.l.s4 1966171168
        %v3681 = vunpack.c.0.s8 %v3680
        %v3682 = vlaneseq
        %v3683 = vshrl.u32 %v3682, 7
        %v3684 = vsub.s32 %v3681, %v3683
        %v3685 = vrot.slane %v3678, %v3684
        %v3687 = vadd.f32 %v3654, %v3685
        %s3688 = sld [smem:[#allocation2 + $0x37]]
        %v3689 = vstv %s3688
        %v3690 = vmul.f32 %v3689, %v3455
        %v3691 = vmul.f32 %v3689, %v3454
        %v3692 = vmul.f32 %v3689, %v3456
        %v3696 = vcombine.low %v3690, %v3691
        %v3698 = vunpack.c.l.s4 1966171168
        %v3699 = vunpack.c.0.s8 %v3698
        %v3700 = vlaneseq
        %v3701 = vshrl.u32 %v3700, 7
        %v3702 = vsub.s32 %v3699, %v3701
        %v3703 = vrot.slane %v3696, %v3702
        %v3705 = vunpack.c.l.s4 1966171168
        %v3706 = vunpack.c.0.s8 %v3705
        %v3707 = vlaneseq
        %v3708 = vshrl.u32 %v3707, 7
        %v3709 = vsub.s32 %v3706, %v3708
        %v3710 = vrot.slane %v3692, %v3709
        %v3711 = vcombine.low %v3703, %v3710
        %v3713 = vunpack.c.l.s4 1966171168
        %v3714 = vunpack.c.0.s8 %v3713
        %v3715 = vlaneseq
        %v3716 = vshrl.u32 %v3715, 7
        %v3717 = vsub.s32 %v3714, %v3716
        %v3718 = vrot.slane %v3711, %v3717
        %v3720 = vadd.f32 %v3687, %v3718
        %s3721 = sld [smem:[#allocation2 + $0x3e]]
        %v3722 = vstv %s3721
        %v3723 = vmul.f32 %v3722, %v3428
        %v3724 = vmul.f32 %v3722, %v3427
        %v3725 = vmul.f32 %v3722, %v3429
        %v3729 = vcombine.low %v3723, %v3724
        %v3731 = vunpack.c.l.s4 1966171168
        %v3732 = vunpack.c.0.s8 %v3731
        %v3733 = vlaneseq
        %v3734 = vshrl.u32 %v3733, 7
        %v3735 = vsub.s32 %v3732, %v3734
        %v3736 = vrot.slane %v3729, %v3735
        %v3738 = vunpack.c.l.s4 1966171168
        %v3739 = vunpack.c.0.s8 %v3738
        %v3740 = vlaneseq
        %v3741 = vshrl.u32 %v3740, 7
        %v3742 = vsub.s32 %v3739, %v3741
        %v3743 = vrot.slane %v3725, %v3742
        %v3744 = vcombine.low %v3736, %v3743
        %v3746 = vunpack.c.l.s4 1966171168
        %v3747 = vunpack.c.0.s8 %v3746
        %v3748 = vlaneseq
        %v3749 = vshrl.u32 %v3748, 7
        %v3750 = vsub.s32 %v3747, %v3749
        %v3751 = vrot.slane %v3744, %v3750
        %v3753 = vadd.f32 %v3287, %v3751
        %s3754 = sld [smem:[#allocation2 + $0x45]]
        %v3755 = vstv %s3754
        %v3756 = vmul.f32 %v3755, %v3437
        %v3757 = vmul.f32 %v3755, %v3436
        %v3758 = vmul.f32 %v3755, %v3438
        %v3762 = vcombine.low %v3756, %v3757
        %v3764 = vunpack.c.l.s4 1966171168
        %v3765 = vunpack.c.0.s8 %v3764
        %v3766 = vlaneseq
        %v3767 = vshrl.u32 %v3766, 7
        %v3768 = vsub.s32 %v3765, %v3767
        %v3769 = vrot.slane %v3762, %v3768
        %v3771 = vunpack.c.l.s4 1966171168
        %v3772 = vunpack.c.0.s8 %v3771
        %v3773 = vlaneseq
        %v3774 = vshrl.u32 %v3773, 7
        %v3775 = vsub.s32 %v3772, %v3774
        %v3776 = vrot.slane %v3758, %v3775
        %v3777 = vcombine.low %v3769, %v3776
        %v3779 = vunpack.c.l.s4 1966171168
        %v3780 = vunpack.c.0.s8 %v3779
        %v3781 = vlaneseq
        %v3782 = vshrl.u32 %v3781, 7
        %v3783 = vsub.s32 %v3780, %v3782
        %v3784 = vrot.slane %v3777, %v3783
        %v3786 = vadd.f32 %v3753, %v3784
        %s3787 = sld [smem:[#allocation2 + $0x4c]]
        %v3788 = vstv %s3787
        %v3789 = vmul.f32 %v3788, %v3446
        %v3790 = vmul.f32 %v3788, %v3445
        %v3791 = vmul.f32 %v3788, %v3447
        %v3795 = vcombine.low %v3789, %v3790
        %v3797 = vunpack.c.l.s4 1966171168
        %v3798 = vunpack.c.0.s8 %v3797
        %v3799 = vlaneseq
        %v3800 = vshrl.u32 %v3799, 7
        %v3801 = vsub.s32 %v3798, %v3800
        %v3802 = vrot.slane %v3795, %v3801
        %v3804 = vunpack.c.l.s4 1966171168
        %v3805 = vunpack.c.0.s8 %v3804
        %v3806 = vlaneseq
        %v3807 = vshrl.u32 %v3806, 7
        %v3808 = vsub.s32 %v3805, %v3807
        %v3809 = vrot.slane %v3791, %v3808
        %v3810 = vcombine.low %v3802, %v3809
        %v3812 = vunpack.c.l.s4 1966171168
        %v3813 = vunpack.c.0.s8 %v3812
        %v3814 = vlaneseq
        %v3815 = vshrl.u32 %v3814, 7
        %v3816 = vsub.s32 %v3813, %v3815
        %v3817 = vrot.slane %v3810, %v3816
        %v3819 = vadd.f32 %v3786, %v3817
        %s3820 = sld [smem:[#allocation2 + $0x53]]
        %v3821 = vstv %s3820
        %v3822 = vmul.f32 %v3821, %v3455
        %v3823 = vmul.f32 %v3821, %v3454
        %v3824 = vmul.f32 %v3821, %v3456
        %v3828 = vcombine.low %v3822, %v3823
        %v3830 = vunpack.c.l.s4 1966171168
        %v3831 = vunpack.c.0.s8 %v3830
        %v3832 = vlaneseq
        %v3833 = vshrl.u32 %v3832, 7
        %v3834 = vsub.s32 %v3831, %v3833
        %v3835 = vrot.slane %v3828, %v3834
        %v3837 = vunpack.c.l.s4 1966171168
        %v3838 = vunpack.c.0.s8 %v3837
        %v3839 = vlaneseq
        %v3840 = vshrl.u32 %v3839, 7
        %v3841 = vsub.s32 %v3838, %v3840
        %v3842 = vrot.slane %v3824, %v3841
        %v3843 = vcombine.low %v3835, %v3842
        %v3845 = vunpack.c.l.s4 1966171168
        %v3846 = vunpack.c.0.s8 %v3845
        %v3847 = vlaneseq
        %v3848 = vshrl.u32 %v3847, 7
        %v3849 = vsub.s32 %v3846, %v3848
        %v3850 = vrot.slane %v3843, %v3849
        %v3852 = vadd.f32 %v3819, %v3850
        %s3853 = sld [smem:[#allocation2 + $0x5a]]
        %v3854 = vstv %s3853
        %v3855 = vmul.f32 %v3854, %v3428
        %v3856 = vmul.f32 %v3854, %v3427
        %v3857 = vmul.f32 %v3854, %v3429
        %v3861 = vcombine.low %v3855, %v3856
        %v3863 = vunpack.c.l.s4 1966171168
        %v3864 = vunpack.c.0.s8 %v3863
        %v3865 = vlaneseq
        %v3866 = vshrl.u32 %v3865, 7
        %v3867 = vsub.s32 %v3864, %v3866
        %v3868 = vrot.slane %v3861, %v3867
        %v3870 = vunpack.c.l.s4 1966171168
        %v3871 = vunpack.c.0.s8 %v3870
        %v3872 = vlaneseq
        %v3873 = vshrl.u32 %v3872, 7
        %v3874 = vsub.s32 %v3871, %v3873
        %v3875 = vrot.slane %v3857, %v3874
        %v3876 = vcombine.low %v3868, %v3875
        %v3878 = vunpack.c.l.s4 1966171168
        %v3879 = vunpack.c.0.s8 %v3878
        %v3880 = vlaneseq
        %v3881 = vshrl.u32 %v3880, 7
        %v3882 = vsub.s32 %v3879, %v3881
        %v3883 = vrot.slane %v3876, %v3882
        %v3885 = vadd.f32 %v3419, %v3883
        %s3886 = sld [smem:[#allocation2 + $0x61]]
        %v3887 = vstv %s3886
        %v3888 = vmul.f32 %v3887, %v3437
        %v3889 = vmul.f32 %v3887, %v3436
        %v3890 = vmul.f32 %v3887, %v3438
        %v3894 = vcombine.low %v3888, %v3889
        %v3896 = vunpack.c.l.s4 1966171168
        %v3897 = vunpack.c.0.s8 %v3896
        %v3898 = vlaneseq
        %v3899 = vshrl.u32 %v3898, 7
        %v3900 = vsub.s32 %v3897, %v3899
        %v3901 = vrot.slane %v3894, %v3900
        %v3903 = vunpack.c.l.s4 1966171168
        %v3904 = vunpack.c.0.s8 %v3903
        %v3905 = vlaneseq
        %v3906 = vshrl.u32 %v3905, 7
        %v3907 = vsub.s32 %v3904, %v3906
        %v3908 = vrot.slane %v3890, %v3907
        %v3909 = vcombine.low %v3901, %v3908
        %v3911 = vunpack.c.l.s4 1966171168
        %v3912 = vunpack.c.0.s8 %v3911
        %v3913 = vlaneseq
        %v3914 = vshrl.u32 %v3913, 7
        %v3915 = vsub.s32 %v3912, %v3914
        %v3916 = vrot.slane %v3909, %v3915
        %v3918 = vadd.f32 %v3885, %v3916
        %s3919 = sld [smem:[#allocation2 + $0x68]]
        %v3920 = vstv %s3919
        %v3921 = vmul.f32 %v3920, %v3446
        %v3922 = vmul.f32 %v3920, %v3445
        %v3923 = vmul.f32 %v3920, %v3447
        %v3927 = vcombine.low %v3921, %v3922
        %v3929 = vunpack.c.l.s4 1966171168
        %v3930 = vunpack.c.0.s8 %v3929
        %v3931 = vlaneseq
        %v3932 = vshrl.u32 %v3931, 7
        %v3933 = vsub.s32 %v3930, %v3932
        %v3934 = vrot.slane %v3927, %v3933
        %v3936 = vunpack.c.l.s4 1966171168
        %v3937 = vunpack.c.0.s8 %v3936
        %v3938 = vlaneseq
        %v3939 = vshrl.u32 %v3938, 7
        %v3940 = vsub.s32 %v3937, %v3939
        %v3941 = vrot.slane %v3923, %v3940
        %v3942 = vcombine.low %v3934, %v3941
        %v3944 = vunpack.c.l.s4 1966171168
        %v3945 = vunpack.c.0.s8 %v3944
        %v3946 = vlaneseq
        %v3947 = vshrl.u32 %v3946, 7
        %v3948 = vsub.s32 %v3945, %v3947
        %v3949 = vrot.slane %v3942, %v3948
        %v3951 = vadd.f32 %v3918, %v3949
        %s3952 = sld [smem:[#allocation2 + $0x6f]]
        %v3953 = vstv %s3952
        %v3954 = vmul.f32 %v3953, %v3455
        %v3955 = vmul.f32 %v3953, %v3454
        %v3956 = vmul.f32 %v3953, %v3456
        %v3960 = vcombine.low %v3954, %v3955
        %v3962 = vunpack.c.l.s4 1966171168
        %v3963 = vunpack.c.0.s8 %v3962
        %v3964 = vlaneseq
        %v3965 = vshrl.u32 %v3964, 7
        %v3966 = vsub.s32 %v3963, %v3965
        %v3967 = vrot.slane %v3960, %v3966
        %v3969 = vunpack.c.l.s4 1966171168
        %v3970 = vunpack.c.0.s8 %v3969
        %v3971 = vlaneseq
        %v3972 = vshrl.u32 %v3971, 7
        %v3973 = vsub.s32 %v3970, %v3972
        %v3974 = vrot.slane %v3956, %v3973
        %v3975 = vcombine.low %v3967, %v3974
        %v3977 = vunpack.c.l.s4 1966171168
        %v3978 = vunpack.c.0.s8 %v3977
        %v3979 = vlaneseq
        %v3980 = vshrl.u32 %v3979, 7
        %v3981 = vsub.s32 %v3978, %v3980
        %v3982 = vrot.slane %v3975, %v3981
        %v3984 = vadd.f32 %v3951, %v3982
        %s3985 = sld [smem:[#allocation4]]
        %v3986 = vstv %s3985
        %v3987 = vadd.f32 %v3588, %v3986
        %s3988 = sld [smem:[#allocation4 + $0x1]]
        %v3989 = vstv %s3988
        %v3990 = vadd.f32 %v3720, %v3989
        %s3991 = sld [smem:[#allocation4 + $0x2]]
        %v3992 = vstv %s3991
        %v3993 = vadd.f32 %v3852, %v3992
        %s3994 = sld [smem:[#allocation4 + $0x3]]
        %v3995 = vstv %s3994
        %v3996 = vadd.f32 %v3984, %v3995
        %3997 = vrot.lane.b32.xlu0 %v533, 3
        %v3998 = vpop.permute.xlu0 %3997
        %3999 = vrot.lane.b32.xlu0 %v537, 3
        %v4000 = vpop.permute.xlu0 %3999
        %4001 = vrot.lane.b32.xlu0 %v541, 3
        %v4002 = vpop.permute.xlu0 %4001
        %vm4003 = vcmp.lt.s32.totalorder %v552, 3
        %v4004 = vsel %vm4003, %v4000, %v4002
        %v4005 = vsel %vm4003, %v3998, %v4000
        %v4006 = vsel %vm4003, %v4002, %v3998
        %4007 = vrot.lane.b32.xlu0 %v561, 3
        %v4008 = vpop.permute.xlu0 %4007
        %4009 = vrot.lane.b32.xlu0 %v565, 3
        %v4010 = vpop.permute.xlu0 %4009
        %4011 = vrot.lane.b32.xlu0 %v569, 3
        %v4012 = vpop.permute.xlu0 %4011
        %v4013 = vsel %vm4003, %v4010, %v4012
        %v4014 = vsel %vm4003, %v4008, %v4010
        %v4015 = vsel %vm4003, %v4012, %v4008
        %4016 = vrot.lane.b32.xlu0 %v586, 3
        %v4017 = vpop.permute.xlu0 %4016
        %4018 = vrot.lane.b32.xlu0 %v590, 3
        %v4019 = vpop.permute.xlu0 %4018
        %4020 = vrot.lane.b32.xlu0 %v594, 3
        %v4021 = vpop.permute.xlu0 %4020
        %v4022 = vsel %vm4003, %v4019, %v4021
        %v4023 = vsel %vm4003, %v4017, %v4019
        %v4024 = vsel %vm4003, %v4021, %v4017
        %4025 = vrot.lane.b32.xlu0 %v611, 3
        %v4026 = vpop.permute.xlu0 %4025
        %4027 = vrot.lane.b32.xlu0 %v615, 3
        %v4028 = vpop.permute.xlu0 %4027
        %4029 = vrot.lane.b32.xlu0 %v619, 3
        %v4030 = vpop.permute.xlu0 %4029
        %v4031 = vsel %vm4003, %v4028, %v4030
        %v4032 = vsel %vm4003, %v4026, %v4028
        %v4033 = vsel %vm4003, %v4030, %v4026
        %s4034 = sld [smem:[#allocation9]]
        %v4035 = vstv %s4034
        %v4036 = vmul.f32 %v4035, %v4006
        %v4037 = vmul.f32 %v4035, %v4005
        %v4038 = vmul.f32 %v4035, %v4004
        %s4039 = sld [smem:[#allocation9 + $0x7]]
        %v4040 = vstv %s4039
        %v4041 = vmul.f32 %v4040, %v4015
        %v4042 = vmul.f32 %v4040, %v4014
        %v4043 = vmul.f32 %v4040, %v4013
        %v4044 = vadd.f32 %v4036, %v4041
        %v4045 = vadd.f32 %v4037, %v4042
        %v4046 = vadd.f32 %v4038, %v4043
        %s4047 = sld [smem:[#allocation9 + $0xe]]
        %v4048 = vstv %s4047
        %v4049 = vmul.f32 %v4048, %v4024
        %v4050 = vmul.f32 %v4048, %v4023
        %v4051 = vmul.f32 %v4048, %v4022
        %v4052 = vadd.f32 %v4044, %v4049
        %v4053 = vadd.f32 %v4045, %v4050
        %v4054 = vadd.f32 %v4046, %v4051
        %s4055 = sld [smem:[#allocation9 + $0x15]]
        %v4056 = vstv %s4055
        %v4057 = vmul.f32 %v4056, %v4033
        %v4058 = vmul.f32 %v4056, %v4032
        %v4059 = vmul.f32 %v4056, %v4031
        %v4060 = vadd.f32 %v4052, %v4057
        %v4061 = vadd.f32 %v4053, %v4058
        %v4062 = vadd.f32 %v4054, %v4059
        %s4063 = sld [smem:[#allocation9 + $0x1c]]
        %v4064 = vstv %s4063
        %v4065 = vmul.f32 %v4064, %v4006
        %v4066 = vmul.f32 %v4064, %v4005
        %v4067 = vmul.f32 %v4064, %v4004
        %s4068 = sld [smem:[#allocation9 + $0x23]]
        %v4069 = vstv %s4068
        %v4070 = vmul.f32 %v4069, %v4015
        %v4071 = vmul.f32 %v4069, %v4014
        %v4072 = vmul.f32 %v4069, %v4013
        %v4073 = vadd.f32 %v4065, %v4070
        %v4074 = vadd.f32 %v4066, %v4071
        %v4075 = vadd.f32 %v4067, %v4072
        %s4076 = sld [smem:[#allocation9 + $0x2a]]
        %v4077 = vstv %s4076
        %v4078 = vmul.f32 %v4077, %v4024
        %v4079 = vmul.f32 %v4077, %v4023
        %v4080 = vmul.f32 %v4077, %v4022
        %v4081 = vadd.f32 %v4073, %v4078
        %v4082 = vadd.f32 %v4074, %v4079
        %v4083 = vadd.f32 %v4075, %v4080
        %s4084 = sld [smem:[#allocation9 + $0x31]]
        %v4085 = vstv %s4084
        %v4086 = vmul.f32 %v4085, %v4033
        %v4087 = vmul.f32 %v4085, %v4032
        %v4088 = vmul.f32 %v4085, %v4031
        %v4089 = vadd.f32 %v4081, %v4086
        %v4090 = vadd.f32 %v4082, %v4087
        %v4091 = vadd.f32 %v4083, %v4088
        %s4092 = sld [smem:[#allocation9 + $0x38]]
        %v4093 = vstv %s4092
        %v4094 = vmul.f32 %v4093, %v4006
        %v4095 = vmul.f32 %v4093, %v4005
        %v4096 = vmul.f32 %v4093, %v4004
        %s4097 = sld [smem:[#allocation9 + $0x3f]]
        %v4098 = vstv %s4097
        %v4099 = vmul.f32 %v4098, %v4015
        %v4100 = vmul.f32 %v4098, %v4014
        %v4101 = vmul.f32 %v4098, %v4013
        %v4102 = vadd.f32 %v4094, %v4099
        %v4103 = vadd.f32 %v4095, %v4100
        %v4104 = vadd.f32 %v4096, %v4101
        %s4105 = sld [smem:[#allocation9 + $0x46]]
        %v4106 = vstv %s4105
        %v4107 = vmul.f32 %v4106, %v4024
        %v4108 = vmul.f32 %v4106, %v4023
        %v4109 = vmul.f32 %v4106, %v4022
        %v4110 = vadd.f32 %v4102, %v4107
        %v4111 = vadd.f32 %v4103, %v4108
        %v4112 = vadd.f32 %v4104, %v4109
        %s4113 = sld [smem:[#allocation9 + $0x4d]]
        %v4114 = vstv %s4113
        %v4115 = vmul.f32 %v4114, %v4033
        %v4116 = vmul.f32 %v4114, %v4032
        %v4117 = vmul.f32 %v4114, %v4031
        %v4118 = vadd.f32 %v4110, %v4115
        %v4119 = vadd.f32 %v4111, %v4116
        %v4120 = vadd.f32 %v4112, %v4117
        %s4121 = sld [smem:[#allocation9 + $0x54]]
        %v4122 = vstv %s4121
        %v4123 = vmul.f32 %v4122, %v4006
        %v4124 = vmul.f32 %v4122, %v4005
        %v4125 = vmul.f32 %v4122, %v4004
        %s4126 = sld [smem:[#allocation9 + $0x5b]]
        %v4127 = vstv %s4126
        %v4128 = vmul.f32 %v4127, %v4015
        %v4129 = vmul.f32 %v4127, %v4014
        %v4130 = vmul.f32 %v4127, %v4013
        %v4131 = vadd.f32 %v4123, %v4128
        %v4132 = vadd.f32 %v4124, %v4129
        %v4133 = vadd.f32 %v4125, %v4130
        %s4134 = sld [smem:[#allocation9 + $0x62]]
        %v4135 = vstv %s4134
        %v4136 = vmul.f32 %v4135, %v4024
        %v4137 = vmul.f32 %v4135, %v4023
        %v4138 = vmul.f32 %v4135, %v4022
        %v4139 = vadd.f32 %v4131, %v4136
        %v4140 = vadd.f32 %v4132, %v4137
        %v4141 = vadd.f32 %v4133, %v4138
        %s4142 = sld [smem:[#allocation9 + $0x69]]
        %v4143 = vstv %s4142
        %v4144 = vmul.f32 %v4143, %v4033
        %v4145 = vmul.f32 %v4143, %v4032
        %v4146 = vmul.f32 %v4143, %v4031
        %v4147 = vadd.f32 %v4139, %v4144
        %v4148 = vadd.f32 %v4140, %v4145
        %v4149 = vadd.f32 %v4141, %v4146
        %4150 = vrot.lane.b32.xlu0 %v533, 2
        %v4151 = vpop.permute.xlu0 %4150
        %4152 = vrot.lane.b32.xlu0 %v537, 2
        %v4153 = vpop.permute.xlu0 %4152
        %4154 = vrot.lane.b32.xlu0 %v541, 2
        %v4155 = vpop.permute.xlu0 %4154
        %vm4156 = vcmp.lt.s32.totalorder %v552, 2
        %v4157 = vsel %vm4156, %v4153, %v4155
        %v4158 = vsel %vm4156, %v4151, %v4153
        %v4159 = vsel %vm4156, %v4155, %v4151
        %4160 = vrot.lane.b32.xlu0 %v561, 2
        %v4161 = vpop.permute.xlu0 %4160
        %4162 = vrot.lane.b32.xlu0 %v565, 2
        %v4163 = vpop.permute.xlu0 %4162
        %4164 = vrot.lane.b32.xlu0 %v569, 2
        %v4165 = vpop.permute.xlu0 %4164
        %v4166 = vsel %vm4156, %v4163, %v4165
        %v4167 = vsel %vm4156, %v4161, %v4163
        %v4168 = vsel %vm4156, %v4165, %v4161
        %4169 = vrot.lane.b32.xlu0 %v586, 2
        %v4170 = vpop.permute.xlu0 %4169
        %4171 = vrot.lane.b32.xlu0 %v590, 2
        %v4172 = vpop.permute.xlu0 %4171
        %4173 = vrot.lane.b32.xlu0 %v594, 2
        %v4174 = vpop.permute.xlu0 %4173
        %v4175 = vsel %vm4156, %v4172, %v4174
        %v4176 = vsel %vm4156, %v4170, %v4172
        %v4177 = vsel %vm4156, %v4174, %v4170
        %4178 = vrot.lane.b32.xlu0 %v611, 2
        %v4179 = vpop.permute.xlu0 %4178
        %4180 = vrot.lane.b32.xlu0 %v615, 2
        %v4181 = vpop.permute.xlu0 %4180
        %4182 = vrot.lane.b32.xlu0 %v619, 2
        %v4183 = vpop.permute.xlu0 %4182
        %v4184 = vsel %vm4156, %v4181, %v4183
        %v4185 = vsel %vm4156, %v4179, %v4181
        %v4186 = vsel %vm4156, %v4183, %v4179
        %s4187 = sld [smem:[#allocation9 + $0x1]]
        %v4188 = vstv %s4187
        %v4189 = vmul.f32 %v4188, %v4159
        %v4190 = vmul.f32 %v4188, %v4158
        %v4191 = vmul.f32 %v4188, %v4157
        %v4192 = vadd.f32 %v4060, %v4189
        %v4193 = vadd.f32 %v4061, %v4190
        %v4194 = vadd.f32 %v4062, %v4191
        %s4195 = sld [smem:[#allocation9 + $0x8]]
        %v4196 = vstv %s4195
        %v4197 = vmul.f32 %v4196, %v4168
        %v4198 = vmul.f32 %v4196, %v4167
        %v4199 = vmul.f32 %v4196, %v4166
        %v4200 = vadd.f32 %v4192, %v4197
        %v4201 = vadd.f32 %v4193, %v4198
        %v4202 = vadd.f32 %v4194, %v4199
        %s4203 = sld [smem:[#allocation9 + $0xf]]
        %v4204 = vstv %s4203
        %v4205 = vmul.f32 %v4204, %v4177
        %v4206 = vmul.f32 %v4204, %v4176
        %v4207 = vmul.f32 %v4204, %v4175
        %v4208 = vadd.f32 %v4200, %v4205
        %v4209 = vadd.f32 %v4201, %v4206
        %v4210 = vadd.f32 %v4202, %v4207
        %s4211 = sld [smem:[#allocation9 + $0x16]]
        %v4212 = vstv %s4211
        %v4213 = vmul.f32 %v4212, %v4186
        %v4214 = vmul.f32 %v4212, %v4185
        %v4215 = vmul.f32 %v4212, %v4184
        %v4216 = vadd.f32 %v4208, %v4213
        %v4217 = vadd.f32 %v4209, %v4214
        %v4218 = vadd.f32 %v4210, %v4215
        %s4219 = sld [smem:[#allocation9 + $0x1d]]
        %v4220 = vstv %s4219
        %v4221 = vmul.f32 %v4220, %v4159
        %v4222 = vmul.f32 %v4220, %v4158
        %v4223 = vmul.f32 %v4220, %v4157
        %v4224 = vadd.f32 %v4089, %v4221
        %v4225 = vadd.f32 %v4090, %v4222
        %v4226 = vadd.f32 %v4091, %v4223
        %s4227 = sld [smem:[#allocation9 + $0x24]]
        %v4228 = vstv %s4227
        %v4229 = vmul.f32 %v4228, %v4168
        %v4230 = vmul.f32 %v4228, %v4167
        %v4231 = vmul.f32 %v4228, %v4166
        %v4232 = vadd.f32 %v4224, %v4229
        %v4233 = vadd.f32 %v4225, %v4230
        %v4234 = vadd.f32 %v4226, %v4231
        %s4235 = sld [smem:[#allocation9 + $0x2b]]
        %v4236 = vstv %s4235
        %v4237 = vmul.f32 %v4236, %v4177
        %v4238 = vmul.f32 %v4236, %v4176
        %v4239 = vmul.f32 %v4236, %v4175
        %v4240 = vadd.f32 %v4232, %v4237
        %v4241 = vadd.f32 %v4233, %v4238
        %v4242 = vadd.f32 %v4234, %v4239
        %s4243 = sld [smem:[#allocation9 + $0x32]]
        %v4244 = vstv %s4243
        %v4245 = vmul.f32 %v4244, %v4186
        %v4246 = vmul.f32 %v4244, %v4185
        %v4247 = vmul.f32 %v4244, %v4184
        %v4248 = vadd.f32 %v4240, %v4245
        %v4249 = vadd.f32 %v4241, %v4246
        %v4250 = vadd.f32 %v4242, %v4247
        %s4251 = sld [smem:[#allocation9 + $0x39]]
        %v4252 = vstv %s4251
        %v4253 = vmul.f32 %v4252, %v4159
        %v4254 = vmul.f32 %v4252, %v4158
        %v4255 = vmul.f32 %v4252, %v4157
        %v4256 = vadd.f32 %v4118, %v4253
        %v4257 = vadd.f32 %v4119, %v4254
        %v4258 = vadd.f32 %v4120, %v4255
        %s4259 = sld [smem:[#allocation9 + $0x40]]
        %v4260 = vstv %s4259
        %v4261 = vmul.f32 %v4260, %v4168
        %v4262 = vmul.f32 %v4260, %v4167
        %v4263 = vmul.f32 %v4260, %v4166
        %v4264 = vadd.f32 %v4256, %v4261
        %v4265 = vadd.f32 %v4257, %v4262
        %v4266 = vadd.f32 %v4258, %v4263
        %s4267 = sld [smem:[#allocation9 + $0x47]]
        %v4268 = vstv %s4267
        %v4269 = vmul.f32 %v4268, %v4177
        %v4270 = vmul.f32 %v4268, %v4176
        %v4271 = vmul.f32 %v4268, %v4175
        %v4272 = vadd.f32 %v4264, %v4269
        %v4273 = vadd.f32 %v4265, %v4270
        %v4274 = vadd.f32 %v4266, %v4271
        %s4275 = sld [smem:[#allocation9 + $0x4e]]
        %v4276 = vstv %s4275
        %v4277 = vmul.f32 %v4276, %v4186
        %v4278 = vmul.f32 %v4276, %v4185
        %v4279 = vmul.f32 %v4276, %v4184
        %v4280 = vadd.f32 %v4272, %v4277
        %v4281 = vadd.f32 %v4273, %v4278
        %v4282 = vadd.f32 %v4274, %v4279
        %s4283 = sld [smem:[#allocation9 + $0x55]]
        %v4284 = vstv %s4283
        %v4285 = vmul.f32 %v4284, %v4159
        %v4286 = vmul.f32 %v4284, %v4158
        %v4287 = vmul.f32 %v4284, %v4157
        %v4288 = vadd.f32 %v4147, %v4285
        %v4289 = vadd.f32 %v4148, %v4286
        %v4290 = vadd.f32 %v4149, %v4287
        %s4291 = sld [smem:[#allocation9 + $0x5c]]
        %v4292 = vstv %s4291
        %v4293 = vmul.f32 %v4292, %v4168
        %v4294 = vmul.f32 %v4292, %v4167
        %v4295 = vmul.f32 %v4292, %v4166
        %v4296 = vadd.f32 %v4288, %v4293
        %v4297 = vadd.f32 %v4289, %v4294
        %v4298 = vadd.f32 %v4290, %v4295
        %s4299 = sld [smem:[#allocation9 + $0x63]]
        %v4300 = vstv %s4299
        %v4301 = vmul.f32 %v4300, %v4177
        %v4302 = vmul.f32 %v4300, %v4176
        %v4303 = vmul.f32 %v4300, %v4175
        %v4304 = vadd.f32 %v4296, %v4301
        %v4305 = vadd.f32 %v4297, %v4302
        %v4306 = vadd.f32 %v4298, %v4303
        %s4307 = sld [smem:[#allocation9 + $0x6a]]
        %v4308 = vstv %s4307
        %v4309 = vmul.f32 %v4308, %v4186
        %v4310 = vmul.f32 %v4308, %v4185
        %v4311 = vmul.f32 %v4308, %v4184
        %v4312 = vadd.f32 %v4304, %v4309
        %v4313 = vadd.f32 %v4305, %v4310
        %v4314 = vadd.f32 %v4306, %v4311
        %4315 = vrot.lane.b32.xlu0 %v533, 1
        %v4316 = vpop.permute.xlu0 %4315
        %4317 = vrot.lane.b32.xlu0 %v537, 1
        %v4318 = vpop.permute.xlu0 %4317
        %4319 = vrot.lane.b32.xlu0 %v541, 1
        %v4320 = vpop.permute.xlu0 %4319
        %vm4321 = vcmp.lt.s32.totalorder %v552, 1
        %v4322 = vsel %vm4321, %v4318, %v4320
        %v4323 = vsel %vm4321, %v4316, %v4318
        %v4324 = vsel %vm4321, %v4320, %v4316
        %4325 = vrot.lane.b32.xlu0 %v561, 1
        %v4326 = vpop.permute.xlu0 %4325
        %4327 = vrot.lane.b32.xlu0 %v565, 1
        %v4328 = vpop.permute.xlu0 %4327
        %4329 = vrot.lane.b32.xlu0 %v569, 1
        %v4330 = vpop.permute.xlu0 %4329
        %v4331 = vsel %vm4321, %v4328, %v4330
        %v4332 = vsel %vm4321, %v4326, %v4328
        %v4333 = vsel %vm4321, %v4330, %v4326
        %4334 = vrot.lane.b32.xlu0 %v586, 1
        %v4335 = vpop.permute.xlu0 %4334
        %4336 = vrot.lane.b32.xlu0 %v590, 1
        %v4337 = vpop.permute.xlu0 %4336
        %4338 = vrot.lane.b32.xlu0 %v594, 1
        %v4339 = vpop.permute.xlu0 %4338
        %v4340 = vsel %vm4321, %v4337, %v4339
        %v4341 = vsel %vm4321, %v4335, %v4337
        %v4342 = vsel %vm4321, %v4339, %v4335
        %4343 = vrot.lane.b32.xlu0 %v611, 1
        %v4344 = vpop.permute.xlu0 %4343
        %4345 = vrot.lane.b32.xlu0 %v615, 1
        %v4346 = vpop.permute.xlu0 %4345
        %4347 = vrot.lane.b32.xlu0 %v619, 1
        %v4348 = vpop.permute.xlu0 %4347
        %v4349 = vsel %vm4321, %v4346, %v4348
        %v4350 = vsel %vm4321, %v4344, %v4346
        %v4351 = vsel %vm4321, %v4348, %v4344
        %s4352 = sld [smem:[#allocation9 + $0x2]]
        %v4353 = vstv %s4352
        %v4354 = vmul.f32 %v4353, %v4324
        %v4355 = vmul.f32 %v4353, %v4323
        %v4356 = vmul.f32 %v4353, %v4322
        %v4357 = vadd.f32 %v4216, %v4354
        %v4358 = vadd.f32 %v4217, %v4355
        %v4359 = vadd.f32 %v4218, %v4356
        %s4360 = sld [smem:[#allocation9 + $0x9]]
        %v4361 = vstv %s4360
        %v4362 = vmul.f32 %v4361, %v4333
        %v4363 = vmul.f32 %v4361, %v4332
        %v4364 = vmul.f32 %v4361, %v4331
        %v4365 = vadd.f32 %v4357, %v4362
        %v4366 = vadd.f32 %v4358, %v4363
        %v4367 = vadd.f32 %v4359, %v4364
        %s4368 = sld [smem:[#allocation9 + $0x10]]
        %v4369 = vstv %s4368
        %v4370 = vmul.f32 %v4369, %v4342
        %v4371 = vmul.f32 %v4369, %v4341
        %v4372 = vmul.f32 %v4369, %v4340
        %v4373 = vadd.f32 %v4365, %v4370
        %v4374 = vadd.f32 %v4366, %v4371
        %v4375 = vadd.f32 %v4367, %v4372
        %s4376 = sld [smem:[#allocation9 + $0x17]]
        %v4377 = vstv %s4376
        %v4378 = vmul.f32 %v4377, %v4351
        %v4379 = vmul.f32 %v4377, %v4350
        %v4380 = vmul.f32 %v4377, %v4349
        %v4381 = vadd.f32 %v4373, %v4378
        %v4382 = vadd.f32 %v4374, %v4379
        %v4383 = vadd.f32 %v4375, %v4380
        %s4384 = sld [smem:[#allocation9 + $0x1e]]
        %v4385 = vstv %s4384
        %v4386 = vmul.f32 %v4385, %v4324
        %v4387 = vmul.f32 %v4385, %v4323
        %v4388 = vmul.f32 %v4385, %v4322
        %v4389 = vadd.f32 %v4248, %v4386
        %v4390 = vadd.f32 %v4249, %v4387
        %v4391 = vadd.f32 %v4250, %v4388
        %s4392 = sld [smem:[#allocation9 + $0x25]]
        %v4393 = vstv %s4392
        %v4394 = vmul.f32 %v4393, %v4333
        %v4395 = vmul.f32 %v4393, %v4332
        %v4396 = vmul.f32 %v4393, %v4331
        %v4397 = vadd.f32 %v4389, %v4394
        %v4398 = vadd.f32 %v4390, %v4395
        %v4399 = vadd.f32 %v4391, %v4396
        %s4400 = sld [smem:[#allocation9 + $0x2c]]
        %v4401 = vstv %s4400
        %v4402 = vmul.f32 %v4401, %v4342
        %v4403 = vmul.f32 %v4401, %v4341
        %v4404 = vmul.f32 %v4401, %v4340
        %v4405 = vadd.f32 %v4397, %v4402
        %v4406 = vadd.f32 %v4398, %v4403
        %v4407 = vadd.f32 %v4399, %v4404
        %s4408 = sld [smem:[#allocation9 + $0x33]]
        %v4409 = vstv %s4408
        %v4410 = vmul.f32 %v4409, %v4351
        %v4411 = vmul.f32 %v4409, %v4350
        %v4412 = vmul.f32 %v4409, %v4349
        %v4413 = vadd.f32 %v4405, %v4410
        %v4414 = vadd.f32 %v4406, %v4411
        %v4415 = vadd.f32 %v4407, %v4412
        %s4416 = sld [smem:[#allocation9 + $0x3a]]
        %v4417 = vstv %s4416
        %v4418 = vmul.f32 %v4417, %v4324
        %v4419 = vmul.f32 %v4417, %v4323
        %v4420 = vmul.f32 %v4417, %v4322
        %v4421 = vadd.f32 %v4280, %v4418
        %v4422 = vadd.f32 %v4281, %v4419
        %v4423 = vadd.f32 %v4282, %v4420
        %s4424 = sld [smem:[#allocation9 + $0x41]]
        %v4425 = vstv %s4424
        %v4426 = vmul.f32 %v4425, %v4333
        %v4427 = vmul.f32 %v4425, %v4332
        %v4428 = vmul.f32 %v4425, %v4331
        %v4429 = vadd.f32 %v4421, %v4426
        %v4430 = vadd.f32 %v4422, %v4427
        %v4431 = vadd.f32 %v4423, %v4428
        %s4432 = sld [smem:[#allocation9 + $0x48]]
        %v4433 = vstv %s4432
        %v4434 = vmul.f32 %v4433, %v4342
        %v4435 = vmul.f32 %v4433, %v4341
        %v4436 = vmul.f32 %v4433, %v4340
        %v4437 = vadd.f32 %v4429, %v4434
        %v4438 = vadd.f32 %v4430, %v4435
        %v4439 = vadd.f32 %v4431, %v4436
        %s4440 = sld [smem:[#allocation9 + $0x4f]]
        %v4441 = vstv %s4440
        %v4442 = vmul.f32 %v4441, %v4351
        %v4443 = vmul.f32 %v4441, %v4350
        %v4444 = vmul.f32 %v4441, %v4349
        %v4445 = vadd.f32 %v4437, %v4442
        %v4446 = vadd.f32 %v4438, %v4443
        %v4447 = vadd.f32 %v4439, %v4444
        %s4448 = sld [smem:[#allocation9 + $0x56]]
        %v4449 = vstv %s4448
        %v4450 = vmul.f32 %v4449, %v4324
        %v4451 = vmul.f32 %v4449, %v4323
        %v4452 = vmul.f32 %v4449, %v4322
        %v4453 = vadd.f32 %v4312, %v4450
        %v4454 = vadd.f32 %v4313, %v4451
        %v4455 = vadd.f32 %v4314, %v4452
        %s4456 = sld [smem:[#allocation9 + $0x5d]]
        %v4457 = vstv %s4456
        %v4458 = vmul.f32 %v4457, %v4333
        %v4459 = vmul.f32 %v4457, %v4332
        %v4460 = vmul.f32 %v4457, %v4331
        %v4461 = vadd.f32 %v4453, %v4458
        %v4462 = vadd.f32 %v4454, %v4459
        %v4463 = vadd.f32 %v4455, %v4460
        %s4464 = sld [smem:[#allocation9 + $0x64]]
        %v4465 = vstv %s4464
        %v4466 = vmul.f32 %v4465, %v4342
        %v4467 = vmul.f32 %v4465, %v4341
        %v4468 = vmul.f32 %v4465, %v4340
        %v4469 = vadd.f32 %v4461, %v4466
        %v4470 = vadd.f32 %v4462, %v4467
        %v4471 = vadd.f32 %v4463, %v4468
        %s4472 = sld [smem:[#allocation9 + $0x6b]]
        %v4473 = vstv %s4472
        %v4474 = vmul.f32 %v4473, %v4351
        %v4475 = vmul.f32 %v4473, %v4350
        %v4476 = vmul.f32 %v4473, %v4349
        %v4477 = vadd.f32 %v4469, %v4474
        %v4478 = vadd.f32 %v4470, %v4475
        %v4479 = vadd.f32 %v4471, %v4476
        %s4480 = sld [smem:[#allocation9 + $0x3]]
        %v4481 = vstv %s4480
        %v4482 = vmul.f32 %v4481, %v462
        %v4484 = vlaneseq
        %v4485 = vshrl.u32 %v4484, 7
        %v4486 = vsub.s32 0, %v4485
        %v4487 = vrot.slane %v4482, %v4486
        %v4488 = vlaneseq
        %v4489 = vshrl.u32 %v4488, 7
        %v4490 = vsub.s32 1, %v4489
        %v4491 = vrot.slane %v4482, %v4490
        %v4492 = vlaneseq
        %v4493 = vshrl.u32 %v4492, 7
        %v4494 = vsub.s32 2, %v4493
        %v4495 = vrot.slane %v4482, %v4494
        %v4499 = vadd.f32 %v4381, %v4487
        %v4500 = vadd.f32 %v4382, %v4491
        %v4501 = vadd.f32 %v4383, %v4495
        %s4502 = sld [smem:[#allocation9 + $0xa]]
        %v4503 = vstv %s4502
        %v4504 = vmul.f32 %v4503, %v464
        %v4506 = vlaneseq
        %v4507 = vshrl.u32 %v4506, 7
        %v4508 = vsub.s32 0, %v4507
        %v4509 = vrot.slane %v4504, %v4508
        %v4510 = vlaneseq
        %v4511 = vshrl.u32 %v4510, 7
        %v4512 = vsub.s32 1, %v4511
        %v4513 = vrot.slane %v4504, %v4512
        %v4514 = vlaneseq
        %v4515 = vshrl.u32 %v4514, 7
        %v4516 = vsub.s32 2, %v4515
        %v4517 = vrot.slane %v4504, %v4516
        %v4521 = vadd.f32 %v4499, %v4509
        %v4522 = vadd.f32 %v4500, %v4513
        %v4523 = vadd.f32 %v4501, %v4517
        %s4524 = sld [smem:[#allocation9 + $0x11]]
        %v4525 = vstv %s4524
        %v4526 = vmul.f32 %v4525, %v466
        %v4528 = vlaneseq
        %v4529 = vshrl.u32 %v4528, 7
        %v4530 = vsub.s32 0, %v4529
        %v4531 = vrot.slane %v4526, %v4530
        %v4532 = vlaneseq
        %v4533 = vshrl.u32 %v4532, 7
        %v4534 = vsub.s32 1, %v4533
        %v4535 = vrot.slane %v4526, %v4534
        %v4536 = vlaneseq
        %v4537 = vshrl.u32 %v4536, 7
        %v4538 = vsub.s32 2, %v4537
        %v4539 = vrot.slane %v4526, %v4538
        %v4543 = vadd.f32 %v4521, %v4531
        %v4544 = vadd.f32 %v4522, %v4535
        %v4545 = vadd.f32 %v4523, %v4539
        %s4546 = sld [smem:[#allocation9 + $0x18]]
        %v4547 = vstv %s4546
        %v4548 = vmul.f32 %v4547, %v468
        %v4550 = vlaneseq
        %v4551 = vshrl.u32 %v4550, 7
        %v4552 = vsub.s32 0, %v4551
        %v4553 = vrot.slane %v4548, %v4552
        %v4554 = vlaneseq
        %v4555 = vshrl.u32 %v4554, 7
        %v4556 = vsub.s32 1, %v4555
        %v4557 = vrot.slane %v4548, %v4556
        %v4558 = vlaneseq
        %v4559 = vshrl.u32 %v4558, 7
        %v4560 = vsub.s32 2, %v4559
        %v4561 = vrot.slane %v4548, %v4560
        %v4565 = vadd.f32 %v4543, %v4553
        %v4566 = vadd.f32 %v4544, %v4557
        %v4567 = vadd.f32 %v4545, %v4561
        %s4568 = sld [smem:[#allocation9 + $0x1f]]
        %v4569 = vstv %s4568
        %v4570 = vmul.f32 %v4569, %v462
        %v4572 = vlaneseq
        %v4573 = vshrl.u32 %v4572, 7
        %v4574 = vsub.s32 0, %v4573
        %v4575 = vrot.slane %v4570, %v4574
        %v4576 = vlaneseq
        %v4577 = vshrl.u32 %v4576, 7
        %v4578 = vsub.s32 1, %v4577
        %v4579 = vrot.slane %v4570, %v4578
        %v4580 = vlaneseq
        %v4581 = vshrl.u32 %v4580, 7
        %v4582 = vsub.s32 2, %v4581
        %v4583 = vrot.slane %v4570, %v4582
        %v4587 = vadd.f32 %v4413, %v4575
        %v4588 = vadd.f32 %v4414, %v4579
        %v4589 = vadd.f32 %v4415, %v4583
        %s4590 = sld [smem:[#allocation9 + $0x26]]
        %v4591 = vstv %s4590
        %v4592 = vmul.f32 %v4591, %v464
        %v4594 = vlaneseq
        %v4595 = vshrl.u32 %v4594, 7
        %v4596 = vsub.s32 0, %v4595
        %v4597 = vrot.slane %v4592, %v4596
        %v4598 = vlaneseq
        %v4599 = vshrl.u32 %v4598, 7
        %v4600 = vsub.s32 1, %v4599
        %v4601 = vrot.slane %v4592, %v4600
        %v4602 = vlaneseq
        %v4603 = vshrl.u32 %v4602, 7
        %v4604 = vsub.s32 2, %v4603
        %v4605 = vrot.slane %v4592, %v4604
        %v4609 = vadd.f32 %v4587, %v4597
        %v4610 = vadd.f32 %v4588, %v4601
        %v4611 = vadd.f32 %v4589, %v4605
        %s4612 = sld [smem:[#allocation9 + $0x2d]]
        %v4613 = vstv %s4612
        %v4614 = vmul.f32 %v4613, %v466
        %v4616 = vlaneseq
        %v4617 = vshrl.u32 %v4616, 7
        %v4618 = vsub.s32 0, %v4617
        %v4619 = vrot.slane %v4614, %v4618
        %v4620 = vlaneseq
        %v4621 = vshrl.u32 %v4620, 7
        %v4622 = vsub.s32 1, %v4621
        %v4623 = vrot.slane %v4614, %v4622
        %v4624 = vlaneseq
        %v4625 = vshrl.u32 %v4624, 7
        %v4626 = vsub.s32 2, %v4625
        %v4627 = vrot.slane %v4614, %v4626
        %v4631 = vadd.f32 %v4609, %v4619
        %v4632 = vadd.f32 %v4610, %v4623
        %v4633 = vadd.f32 %v4611, %v4627
        %s4634 = sld [smem:[#allocation9 + $0x34]]
        %v4635 = vstv %s4634
        %v4636 = vmul.f32 %v4635, %v468
        %v4638 = vlaneseq
        %v4639 = vshrl.u32 %v4638, 7
        %v4640 = vsub.s32 0, %v4639
        %v4641 = vrot.slane %v4636, %v4640
        %v4642 = vlaneseq
        %v4643 = vshrl.u32 %v4642, 7
        %v4644 = vsub.s32 1, %v4643
        %v4645 = vrot.slane %v4636, %v4644
        %v4646 = vlaneseq
        %v4647 = vshrl.u32 %v4646, 7
        %v4648 = vsub.s32 2, %v4647
        %v4649 = vrot.slane %v4636, %v4648
        %v4653 = vadd.f32 %v4631, %v4641
        %v4654 = vadd.f32 %v4632, %v4645
        %v4655 = vadd.f32 %v4633, %v4649
        %s4656 = sld [smem:[#allocation9 + $0x3b]]
        %v4657 = vstv %s4656
        %v4658 = vmul.f32 %v4657, %v462
        %v4660 = vlaneseq
        %v4661 = vshrl.u32 %v4660, 7
        %v4662 = vsub.s32 0, %v4661
        %v4663 = vrot.slane %v4658, %v4662
        %v4664 = vlaneseq
        %v4665 = vshrl.u32 %v4664, 7
        %v4666 = vsub.s32 1, %v4665
        %v4667 = vrot.slane %v4658, %v4666
        %v4668 = vlaneseq
        %v4669 = vshrl.u32 %v4668, 7
        %v4670 = vsub.s32 2, %v4669
        %v4671 = vrot.slane %v4658, %v4670
        %v4675 = vadd.f32 %v4445, %v4663
        %v4676 = vadd.f32 %v4446, %v4667
        %v4677 = vadd.f32 %v4447, %v4671
        %s4678 = sld [smem:[#allocation9 + $0x42]]
        %v4679 = vstv %s4678
        %v4680 = vmul.f32 %v4679, %v464
        %v4682 = vlaneseq
        %v4683 = vshrl.u32 %v4682, 7
        %v4684 = vsub.s32 0, %v4683
        %v4685 = vrot.slane %v4680, %v4684
        %v4686 = vlaneseq
        %v4687 = vshrl.u32 %v4686, 7
        %v4688 = vsub.s32 1, %v4687
        %v4689 = vrot.slane %v4680, %v4688
        %v4690 = vlaneseq
        %v4691 = vshrl.u32 %v4690, 7
        %v4692 = vsub.s32 2, %v4691
        %v4693 = vrot.slane %v4680, %v4692
        %v4697 = vadd.f32 %v4675, %v4685
        %v4698 = vadd.f32 %v4676, %v4689
        %v4699 = vadd.f32 %v4677, %v4693
        %s4700 = sld [smem:[#allocation9 + $0x49]]
        %v4701 = vstv %s4700
        %v4702 = vmul.f32 %v4701, %v466
        %v4704 = vlaneseq
        %v4705 = vshrl.u32 %v4704, 7
        %v4706 = vsub.s32 0, %v4705
        %v4707 = vrot.slane %v4702, %v4706
        %v4708 = vlaneseq
        %v4709 = vshrl.u32 %v4708, 7
        %v4710 = vsub.s32 1, %v4709
        %v4711 = vrot.slane %v4702, %v4710
        %v4712 = vlaneseq
        %v4713 = vshrl.u32 %v4712, 7
        %v4714 = vsub.s32 2, %v4713
        %v4715 = vrot.slane %v4702, %v4714
        %v4719 = vadd.f32 %v4697, %v4707
        %v4720 = vadd.f32 %v4698, %v4711
        %v4721 = vadd.f32 %v4699, %v4715
        %s4722 = sld [smem:[#allocation9 + $0x50]]
        %v4723 = vstv %s4722
        %v4724 = vmul.f32 %v4723, %v468
        %v4726 = vlaneseq
        %v4727 = vshrl.u32 %v4726, 7
        %v4728 = vsub.s32 0, %v4727
        %v4729 = vrot.slane %v4724, %v4728
        %v4730 = vlaneseq
        %v4731 = vshrl.u32 %v4730, 7
        %v4732 = vsub.s32 1, %v4731
        %v4733 = vrot.slane %v4724, %v4732
        %v4734 = vlaneseq
        %v4735 = vshrl.u32 %v4734, 7
        %v4736 = vsub.s32 2, %v4735
        %v4737 = vrot.slane %v4724, %v4736
        %v4741 = vadd.f32 %v4719, %v4729
        %v4742 = vadd.f32 %v4720, %v4733
        %v4743 = vadd.f32 %v4721, %v4737
        %s4744 = sld [smem:[#allocation9 + $0x57]]
        %v4745 = vstv %s4744
        %v4746 = vmul.f32 %v4745, %v462
        %v4748 = vlaneseq
        %v4749 = vshrl.u32 %v4748, 7
        %v4750 = vsub.s32 0, %v4749
        %v4751 = vrot.slane %v4746, %v4750
        %v4752 = vlaneseq
        %v4753 = vshrl.u32 %v4752, 7
        %v4754 = vsub.s32 1, %v4753
        %v4755 = vrot.slane %v4746, %v4754
        %v4756 = vlaneseq
        %v4757 = vshrl.u32 %v4756, 7
        %v4758 = vsub.s32 2, %v4757
        %v4759 = vrot.slane %v4746, %v4758
        %v4763 = vadd.f32 %v4477, %v4751
        %v4764 = vadd.f32 %v4478, %v4755
        %v4765 = vadd.f32 %v4479, %v4759
        %s4766 = sld [smem:[#allocation9 + $0x5e]]
        %v4767 = vstv %s4766
        %v4768 = vmul.f32 %v4767, %v464
        %v4770 = vlaneseq
        %v4771 = vshrl.u32 %v4770, 7
        %v4772 = vsub.s32 0, %v4771
        %v4773 = vrot.slane %v4768, %v4772
        %v4774 = vlaneseq
        %v4775 = vshrl.u32 %v4774, 7
        %v4776 = vsub.s32 1, %v4775
        %v4777 = vrot.slane %v4768, %v4776
        %v4778 = vlaneseq
        %v4779 = vshrl.u32 %v4778, 7
        %v4780 = vsub.s32 2, %v4779
        %v4781 = vrot.slane %v4768, %v4780
        %v4785 = vadd.f32 %v4763, %v4773
        %v4786 = vadd.f32 %v4764, %v4777
        %v4787 = vadd.f32 %v4765, %v4781
        %s4788 = sld [smem:[#allocation9 + $0x65]]
        %v4789 = vstv %s4788
        %v4790 = vmul.f32 %v4789, %v466
        %v4792 = vlaneseq
        %v4793 = vshrl.u32 %v4792, 7
        %v4794 = vsub.s32 0, %v4793
        %v4795 = vrot.slane %v4790, %v4794
        %v4796 = vlaneseq
        %v4797 = vshrl.u32 %v4796, 7
        %v4798 = vsub.s32 1, %v4797
        %v4799 = vrot.slane %v4790, %v4798
        %v4800 = vlaneseq
        %v4801 = vshrl.u32 %v4800, 7
        %v4802 = vsub.s32 2, %v4801
        %v4803 = vrot.slane %v4790, %v4802
        %v4807 = vadd.f32 %v4785, %v4795
        %v4808 = vadd.f32 %v4786, %v4799
        %v4809 = vadd.f32 %v4787, %v4803
        %s4810 = sld [smem:[#allocation9 + $0x6c]]
        %v4811 = vstv %s4810
        %v4812 = vmul.f32 %v4811, %v468
        %v4814 = vlaneseq
        %v4815 = vshrl.u32 %v4814, 7
        %v4816 = vsub.s32 0, %v4815
        %v4817 = vrot.slane %v4812, %v4816
        %v4818 = vlaneseq
        %v4819 = vshrl.u32 %v4818, 7
        %v4820 = vsub.s32 1, %v4819
        %v4821 = vrot.slane %v4812, %v4820
        %v4822 = vlaneseq
        %v4823 = vshrl.u32 %v4822, 7
        %v4824 = vsub.s32 2, %v4823
        %v4825 = vrot.slane %v4812, %v4824
        %v4829 = vadd.f32 %v4807, %v4817
        %v4830 = vadd.f32 %v4808, %v4821
        %v4831 = vadd.f32 %v4809, %v4825
        %4832 = vrot.lane.b32.xlu0 %v533, 127
        %v4833 = vpop.permute.xlu0 %4832
        %4834 = vrot.lane.b32.xlu0 %v537, 127
        %v4835 = vpop.permute.xlu0 %4834
        %4836 = vrot.lane.b32.xlu0 %v541, 127
        %v4837 = vpop.permute.xlu0 %4836
        %vm4838 = vcmp.lt.s32.totalorder %v552, 127
        %v4839 = vsel %vm4838, %v4835, %v4837
        %v4840 = vsel %vm4838, %v4833, %v4835
        %v4841 = vsel %vm4838, %v4837, %v4833
        %4842 = vrot.lane.b32.xlu0 %v561, 127
        %v4843 = vpop.permute.xlu0 %4842
        %4844 = vrot.lane.b32.xlu0 %v565, 127
        %v4845 = vpop.permute.xlu0 %4844
        %4846 = vrot.lane.b32.xlu0 %v569, 127
        %v4847 = vpop.permute.xlu0 %4846
        %v4848 = vsel %vm4838, %v4845, %v4847
        %v4849 = vsel %vm4838, %v4843, %v4845
        %v4850 = vsel %vm4838, %v4847, %v4843
        %4851 = vrot.lane.b32.xlu0 %v586, 127
        %v4852 = vpop.permute.xlu0 %4851
        %4853 = vrot.lane.b32.xlu0 %v590, 127
        %v4854 = vpop.permute.xlu0 %4853
        %4855 = vrot.lane.b32.xlu0 %v594, 127
        %v4856 = vpop.permute.xlu0 %4855
        %v4857 = vsel %vm4838, %v4854, %v4856
        %v4858 = vsel %vm4838, %v4852, %v4854
        %v4859 = vsel %vm4838, %v4856, %v4852
        %4860 = vrot.lane.b32.xlu0 %v611, 127
        %v4861 = vpop.permute.xlu0 %4860
        %4862 = vrot.lane.b32.xlu0 %v615, 127
        %v4863 = vpop.permute.xlu0 %4862
        %4864 = vrot.lane.b32.xlu0 %v619, 127
        %v4865 = vpop.permute.xlu0 %4864
        %v4866 = vsel %vm4838, %v4863, %v4865
        %v4867 = vsel %vm4838, %v4861, %v4863
        %v4868 = vsel %vm4838, %v4865, %v4861
        %s4869 = sld [smem:[#allocation9 + $0x4]]
        %v4870 = vstv %s4869
        %v4871 = vmul.f32 %v4870, %v4840
        %v4872 = vmul.f32 %v4870, %v4839
        %v4873 = vmul.f32 %v4870, %v4841
        %v4874 = vadd.f32 %v4565, %v4871
        %v4875 = vadd.f32 %v4566, %v4872
        %v4876 = vadd.f32 %v4567, %v4873
        %s4877 = sld [smem:[#allocation9 + $0xb]]
        %v4878 = vstv %s4877
        %v4879 = vmul.f32 %v4878, %v4849
        %v4880 = vmul.f32 %v4878, %v4848
        %v4881 = vmul.f32 %v4878, %v4850
        %v4882 = vadd.f32 %v4874, %v4879
        %v4883 = vadd.f32 %v4875, %v4880
        %v4884 = vadd.f32 %v4876, %v4881
        %s4885 = sld [smem:[#allocation9 + $0x12]]
        %v4886 = vstv %s4885
        %v4887 = vmul.f32 %v4886, %v4858
        %v4888 = vmul.f32 %v4886, %v4857
        %v4889 = vmul.f32 %v4886, %v4859
        %v4890 = vadd.f32 %v4882, %v4887
        %v4891 = vadd.f32 %v4883, %v4888
        %v4892 = vadd.f32 %v4884, %v4889
        %s4893 = sld [smem:[#allocation9 + $0x19]]
        %v4894 = vstv %s4893
        %v4895 = vmul.f32 %v4894, %v4867
        %v4896 = vmul.f32 %v4894, %v4866
        %v4897 = vmul.f32 %v4894, %v4868
        %v4898 = vadd.f32 %v4890, %v4895
        %v4899 = vadd.f32 %v4891, %v4896
        %v4900 = vadd.f32 %v4892, %v4897
        %s4901 = sld [smem:[#allocation9 + $0x20]]
        %v4902 = vstv %s4901
        %v4903 = vmul.f32 %v4902, %v4840
        %v4904 = vmul.f32 %v4902, %v4839
        %v4905 = vmul.f32 %v4902, %v4841
        %v4906 = vadd.f32 %v4653, %v4903
        %v4907 = vadd.f32 %v4654, %v4904
        %v4908 = vadd.f32 %v4655, %v4905
        %s4909 = sld [smem:[#allocation9 + $0x27]]
        %v4910 = vstv %s4909
        %v4911 = vmul.f32 %v4910, %v4849
        %v4912 = vmul.f32 %v4910, %v4848
        %v4913 = vmul.f32 %v4910, %v4850
        %v4914 = vadd.f32 %v4906, %v4911
        %v4915 = vadd.f32 %v4907, %v4912
        %v4916 = vadd.f32 %v4908, %v4913
        %s4917 = sld [smem:[#allocation9 + $0x2e]]
        %v4918 = vstv %s4917
        %v4919 = vmul.f32 %v4918, %v4858
        %v4920 = vmul.f32 %v4918, %v4857
        %v4921 = vmul.f32 %v4918, %v4859
        %v4922 = vadd.f32 %v4914, %v4919
        %v4923 = vadd.f32 %v4915, %v4920
        %v4924 = vadd.f32 %v4916, %v4921
        %s4925 = sld [smem:[#allocation9 + $0x35]]
        %v4926 = vstv %s4925
        %v4927 = vmul.f32 %v4926, %v4867
        %v4928 = vmul.f32 %v4926, %v4866
        %v4929 = vmul.f32 %v4926, %v4868
        %v4930 = vadd.f32 %v4922, %v4927
        %v4931 = vadd.f32 %v4923, %v4928
        %v4932 = vadd.f32 %v4924, %v4929
        %s4933 = sld [smem:[#allocation9 + $0x3c]]
        %v4934 = vstv %s4933
        %v4935 = vmul.f32 %v4934, %v4840
        %v4936 = vmul.f32 %v4934, %v4839
        %v4937 = vmul.f32 %v4934, %v4841
        %v4938 = vadd.f32 %v4741, %v4935
        %v4939 = vadd.f32 %v4742, %v4936
        %v4940 = vadd.f32 %v4743, %v4937
        %s4941 = sld [smem:[#allocation9 + $0x43]]
        %v4942 = vstv %s4941
        %v4943 = vmul.f32 %v4942, %v4849
        %v4944 = vmul.f32 %v4942, %v4848
        %v4945 = vmul.f32 %v4942, %v4850
        %v4946 = vadd.f32 %v4938, %v4943
        %v4947 = vadd.f32 %v4939, %v4944
        %v4948 = vadd.f32 %v4940, %v4945
        %s4949 = sld [smem:[#allocation9 + $0x4a]]
        %v4950 = vstv %s4949
        %v4951 = vmul.f32 %v4950, %v4858
        %v4952 = vmul.f32 %v4950, %v4857
        %v4953 = vmul.f32 %v4950, %v4859
        %v4954 = vadd.f32 %v4946, %v4951
        %v4955 = vadd.f32 %v4947, %v4952
        %v4956 = vadd.f32 %v4948, %v4953
        %s4957 = sld [smem:[#allocation9 + $0x51]]
        %v4958 = vstv %s4957
        %v4959 = vmul.f32 %v4958, %v4867
        %v4960 = vmul.f32 %v4958, %v4866
        %v4961 = vmul.f32 %v4958, %v4868
        %v4962 = vadd.f32 %v4954, %v4959
        %v4963 = vadd.f32 %v4955, %v4960
        %v4964 = vadd.f32 %v4956, %v4961
        %s4965 = sld [smem:[#allocation9 + $0x58]]
        %v4966 = vstv %s4965
        %v4967 = vmul.f32 %v4966, %v4840
        %v4968 = vmul.f32 %v4966, %v4839
        %v4969 = vmul.f32 %v4966, %v4841
        %v4970 = vadd.f32 %v4829, %v4967
        %v4971 = vadd.f32 %v4830, %v4968
        %v4972 = vadd.f32 %v4831, %v4969
        %s4973 = sld [smem:[#allocation9 + $0x5f]]
        %v4974 = vstv %s4973
        %v4975 = vmul.f32 %v4974, %v4849
        %v4976 = vmul.f32 %v4974, %v4848
        %v4977 = vmul.f32 %v4974, %v4850
        %v4978 = vadd.f32 %v4970, %v4975
        %v4979 = vadd.f32 %v4971, %v4976
        %v4980 = vadd.f32 %v4972, %v4977
        %s4981 = sld [smem:[#allocation9 + $0x66]]
        %v4982 = vstv %s4981
        %v4983 = vmul.f32 %v4982, %v4858
        %v4984 = vmul.f32 %v4982, %v4857
        %v4985 = vmul.f32 %v4982, %v4859
        %v4986 = vadd.f32 %v4978, %v4983
        %v4987 = vadd.f32 %v4979, %v4984
        %v4988 = vadd.f32 %v4980, %v4985
        %s4989 = sld [smem:[#allocation9 + $0x6d]]
        %v4990 = vstv %s4989
        %v4991 = vmul.f32 %v4990, %v4867
        %v4992 = vmul.f32 %v4990, %v4866
        %v4993 = vmul.f32 %v4990, %v4868
        %v4994 = vadd.f32 %v4986, %v4991
        %v4995 = vadd.f32 %v4987, %v4992
        %v4996 = vadd.f32 %v4988, %v4993
        %4997 = vrot.lane.b32.xlu0 %v533, 126
        %v4998 = vpop.permute.xlu0 %4997
        %4999 = vrot.lane.b32.xlu0 %v537, 126
        %v5000 = vpop.permute.xlu0 %4999
        %5001 = vrot.lane.b32.xlu0 %v541, 126
        %v5002 = vpop.permute.xlu0 %5001
        %vm5003 = vcmp.lt.s32.totalorder %v552, 126
        %v5004 = vsel %vm5003, %v5000, %v5002
        %v5005 = vsel %vm5003, %v4998, %v5000
        %v5006 = vsel %vm5003, %v5002, %v4998
        %5007 = vrot.lane.b32.xlu0 %v561, 126
        %v5008 = vpop.permute.xlu0 %5007
        %5009 = vrot.lane.b32.xlu0 %v565, 126
        %v5010 = vpop.permute.xlu0 %5009
        %5011 = vrot.lane.b32.xlu0 %v569, 126
        %v5012 = vpop.permute.xlu0 %5011
        %v5013 = vsel %vm5003, %v5010, %v5012
        %v5014 = vsel %vm5003, %v5008, %v5010
        %v5015 = vsel %vm5003, %v5012, %v5008
        %5016 = vrot.lane.b32.xlu0 %v586, 126
        %v5017 = vpop.permute.xlu0 %5016
        %5018 = vrot.lane.b32.xlu0 %v590, 126
        %v5019 = vpop.permute.xlu0 %5018
        %5020 = vrot.lane.b32.xlu0 %v594, 126
        %v5021 = vpop.permute.xlu0 %5020
        %v5022 = vsel %vm5003, %v5019, %v5021
        %v5023 = vsel %vm5003, %v5017, %v5019
        %v5024 = vsel %vm5003, %v5021, %v5017
        %5025 = vrot.lane.b32.xlu0 %v611, 126
        %v5026 = vpop.permute.xlu0 %5025
        %5027 = vrot.lane.b32.xlu0 %v615, 126
        %v5028 = vpop.permute.xlu0 %5027
        %5029 = vrot.lane.b32.xlu0 %v619, 126
        %v5030 = vpop.permute.xlu0 %5029
        %v5031 = vsel %vm5003, %v5028, %v5030
        %v5032 = vsel %vm5003, %v5026, %v5028
        %v5033 = vsel %vm5003, %v5030, %v5026
        %s5034 = sld [smem:[#allocation9 + $0x5]]
        %v5035 = vstv %s5034
        %v5036 = vmul.f32 %v5035, %v5005
        %v5037 = vmul.f32 %v5035, %v5004
        %v5038 = vmul.f32 %v5035, %v5006
        %v5039 = vadd.f32 %v4898, %v5036
        %v5040 = vadd.f32 %v4899, %v5037
        %v5041 = vadd.f32 %v4900, %v5038
        %s5042 = sld [smem:[#allocation9 + $0xc]]
        %v5043 = vstv %s5042
        %v5044 = vmul.f32 %v5043, %v5014
        %v5045 = vmul.f32 %v5043, %v5013
        %v5046 = vmul.f32 %v5043, %v5015
        %v5047 = vadd.f32 %v5039, %v5044
        %v5048 = vadd.f32 %v5040, %v5045
        %v5049 = vadd.f32 %v5041, %v5046
        %s5050 = sld [smem:[#allocation9 + $0x13]]
        %v5051 = vstv %s5050
        %v5052 = vmul.f32 %v5051, %v5023
        %v5053 = vmul.f32 %v5051, %v5022
        %v5054 = vmul.f32 %v5051, %v5024
        %v5055 = vadd.f32 %v5047, %v5052
        %v5056 = vadd.f32 %v5048, %v5053
        %v5057 = vadd.f32 %v5049, %v5054
        %s5058 = sld [smem:[#allocation9 + $0x1a]]
        %v5059 = vstv %s5058
        %v5060 = vmul.f32 %v5059, %v5032
        %v5061 = vmul.f32 %v5059, %v5031
        %v5062 = vmul.f32 %v5059, %v5033
        %v5063 = vadd.f32 %v5055, %v5060
        %v5064 = vadd.f32 %v5056, %v5061
        %v5065 = vadd.f32 %v5057, %v5062
        %s5066 = sld [smem:[#allocation9 + $0x21]]
        %v5067 = vstv %s5066
        %v5068 = vmul.f32 %v5067, %v5005
        %v5069 = vmul.f32 %v5067, %v5004
        %v5070 = vmul.f32 %v5067, %v5006
        %v5071 = vadd.f32 %v4930, %v5068
        %v5072 = vadd.f32 %v4931, %v5069
        %v5073 = vadd.f32 %v4932, %v5070
        %s5074 = sld [smem:[#allocation9 + $0x28]]
        %v5075 = vstv %s5074
        %v5076 = vmul.f32 %v5075, %v5014
        %v5077 = vmul.f32 %v5075, %v5013
        %v5078 = vmul.f32 %v5075, %v5015
        %v5079 = vadd.f32 %v5071, %v5076
        %v5080 = vadd.f32 %v5072, %v5077
        %v5081 = vadd.f32 %v5073, %v5078
        %s5082 = sld [smem:[#allocation9 + $0x2f]]
        %v5083 = vstv %s5082
        %v5084 = vmul.f32 %v5083, %v5023
        %v5085 = vmul.f32 %v5083, %v5022
        %v5086 = vmul.f32 %v5083, %v5024
        %v5087 = vadd.f32 %v5079, %v5084
        %v5088 = vadd.f32 %v5080, %v5085
        %v5089 = vadd.f32 %v5081, %v5086
        %s5090 = sld [smem:[#allocation9 + $0x36]]
        %v5091 = vstv %s5090
        %v5092 = vmul.f32 %v5091, %v5032
        %v5093 = vmul.f32 %v5091, %v5031
        %v5094 = vmul.f32 %v5091, %v5033
        %v5095 = vadd.f32 %v5087, %v5092
        %v5096 = vadd.f32 %v5088, %v5093
        %v5097 = vadd.f32 %v5089, %v5094
        %s5098 = sld [smem:[#allocation9 + $0x3d]]
        %v5099 = vstv %s5098
        %v5100 = vmul.f32 %v5099, %v5005
        %v5101 = vmul.f32 %v5099, %v5004
        %v5102 = vmul.f32 %v5099, %v5006
        %v5103 = vadd.f32 %v4962, %v5100
        %v5104 = vadd.f32 %v4963, %v5101
        %v5105 = vadd.f32 %v4964, %v5102
        %s5106 = sld [smem:[#allocation9 + $0x44]]
        %v5107 = vstv %s5106
        %v5108 = vmul.f32 %v5107, %v5014
        %v5109 = vmul.f32 %v5107, %v5013
        %v5110 = vmul.f32 %v5107, %v5015
        %v5111 = vadd.f32 %v5103, %v5108
        %v5112 = vadd.f32 %v5104, %v5109
        %v5113 = vadd.f32 %v5105, %v5110
        %s5114 = sld [smem:[#allocation9 + $0x4b]]
        %v5115 = vstv %s5114
        %v5116 = vmul.f32 %v5115, %v5023
        %v5117 = vmul.f32 %v5115, %v5022
        %v5118 = vmul.f32 %v5115, %v5024
        %v5119 = vadd.f32 %v5111, %v5116
        %v5120 = vadd.f32 %v5112, %v5117
        %v5121 = vadd.f32 %v5113, %v5118
        %s5122 = sld [smem:[#allocation9 + $0x52]]
        %v5123 = vstv %s5122
        %v5124 = vmul.f32 %v5123, %v5032
        %v5125 = vmul.f32 %v5123, %v5031
        %v5126 = vmul.f32 %v5123, %v5033
        %v5127 = vadd.f32 %v5119, %v5124
        %v5128 = vadd.f32 %v5120, %v5125
        %v5129 = vadd.f32 %v5121, %v5126
        %s5130 = sld [smem:[#allocation9 + $0x59]]
        %v5131 = vstv %s5130
        %v5132 = vmul.f32 %v5131, %v5005
        %v5133 = vmul.f32 %v5131, %v5004
        %v5134 = vmul.f32 %v5131, %v5006
        %v5135 = vadd.f32 %v4994, %v5132
        %v5136 = vadd.f32 %v4995, %v5133
        %v5137 = vadd.f32 %v4996, %v5134
        %s5138 = sld [smem:[#allocation9 + $0x60]]
        %v5139 = vstv %s5138
        %v5140 = vmul.f32 %v5139, %v5014
        %v5141 = vmul.f32 %v5139, %v5013
        %v5142 = vmul.f32 %v5139, %v5015
        %v5143 = vadd.f32 %v5135, %v5140
        %v5144 = vadd.f32 %v5136, %v5141
        %v5145 = vadd.f32 %v5137, %v5142
        %s5146 = sld [smem:[#allocation9 + $0x67]]
        %v5147 = vstv %s5146
        %v5148 = vmul.f32 %v5147, %v5023
        %v5149 = vmul.f32 %v5147, %v5022
        %v5150 = vmul.f32 %v5147, %v5024
        %v5151 = vadd.f32 %v5143, %v5148
        %v5152 = vadd.f32 %v5144, %v5149
        %v5153 = vadd.f32 %v5145, %v5150
        %s5154 = sld [smem:[#allocation9 + $0x6e]]
        %v5155 = vstv %s5154
        %v5156 = vmul.f32 %v5155, %v5032
        %v5157 = vmul.f32 %v5155, %v5031
        %v5158 = vmul.f32 %v5155, %v5033
        %v5159 = vadd.f32 %v5151, %v5156
        %v5160 = vadd.f32 %v5152, %v5157
        %v5161 = vadd.f32 %v5153, %v5158
        %5162 = vrot.lane.b32.xlu0 %v533, 125
        %v5163 = vpop.permute.xlu0 %5162
        %5164 = vrot.lane.b32.xlu0 %v537, 125
        %v5165 = vpop.permute.xlu0 %5164
        %5166 = vrot.lane.b32.xlu0 %v541, 125
        %v5167 = vpop.permute.xlu0 %5166
        %vm5168 = vcmp.lt.s32.totalorder %v552, 125
        %v5169 = vsel %vm5168, %v5165, %v5167
        %v5170 = vsel %vm5168, %v5163, %v5165
        %v5171 = vsel %vm5168, %v5167, %v5163
        %5172 = vrot.lane.b32.xlu0 %v561, 125
        %v5173 = vpop.permute.xlu0 %5172
        %5174 = vrot.lane.b32.xlu0 %v565, 125
        %v5175 = vpop.permute.xlu0 %5174
        %5176 = vrot.lane.b32.xlu0 %v569, 125
        %v5177 = vpop.permute.xlu0 %5176
        %v5178 = vsel %vm5168, %v5175, %v5177
        %v5179 = vsel %vm5168, %v5173, %v5175
        %v5180 = vsel %vm5168, %v5177, %v5173
        %5181 = vrot.lane.b32.xlu0 %v586, 125
        %v5182 = vpop.permute.xlu0 %5181
        %5183 = vrot.lane.b32.xlu0 %v590, 125
        %v5184 = vpop.permute.xlu0 %5183
        %5185 = vrot.lane.b32.xlu0 %v594, 125
        %v5186 = vpop.permute.xlu0 %5185
        %v5187 = vsel %vm5168, %v5184, %v5186
        %v5188 = vsel %vm5168, %v5182, %v5184
        %v5189 = vsel %vm5168, %v5186, %v5182
        %5190 = vrot.lane.b32.xlu0 %v611, 125
        %v5191 = vpop.permute.xlu0 %5190
        %5192 = vrot.lane.b32.xlu0 %v615, 125
        %v5193 = vpop.permute.xlu0 %5192
        %5194 = vrot.lane.b32.xlu0 %v619, 125
        %v5195 = vpop.permute.xlu0 %5194
        %v5196 = vsel %vm5168, %v5193, %v5195
        %v5197 = vsel %vm5168, %v5191, %v5193
        %v5198 = vsel %vm5168, %v5195, %v5191
        %s5199 = sld [smem:[#allocation9 + $0x6]]
        %v5200 = vstv %s5199
        %v5201 = vmul.f32 %v5200, %v5170
        %v5202 = vmul.f32 %v5200, %v5169
        %v5203 = vmul.f32 %v5200, %v5171
        %v5204 = vadd.f32 %v5063, %v5201
        %v5205 = vadd.f32 %v5064, %v5202
        %v5206 = vadd.f32 %v5065, %v5203
        %s5207 = sld [smem:[#allocation9 + $0xd]]
        %v5208 = vstv %s5207
        %v5209 = vmul.f32 %v5208, %v5179
        %v5210 = vmul.f32 %v5208, %v5178
        %v5211 = vmul.f32 %v5208, %v5180
        %v5212 = vadd.f32 %v5204, %v5209
        %v5213 = vadd.f32 %v5205, %v5210
        %v5214 = vadd.f32 %v5206, %v5211
        %s5215 = sld [smem:[#allocation9 + $0x14]]
        %v5216 = vstv %s5215
        %v5217 = vmul.f32 %v5216, %v5188
        %v5218 = vmul.f32 %v5216, %v5187
        %v5219 = vmul.f32 %v5216, %v5189
        %v5220 = vadd.f32 %v5212, %v5217
        %v5221 = vadd.f32 %v5213, %v5218
        %v5222 = vadd.f32 %v5214, %v5219
        %s5223 = sld [smem:[#allocation9 + $0x1b]]
        %v5224 = vstv %s5223
        %v5225 = vmul.f32 %v5224, %v5197
        %v5226 = vmul.f32 %v5224, %v5196
        %v5227 = vmul.f32 %v5224, %v5198
        %v5228 = vadd.f32 %v5220, %v5225
        %v5229 = vadd.f32 %v5221, %v5226
        %v5230 = vadd.f32 %v5222, %v5227
        %s5231 = sld [smem:[#allocation9 + $0x22]]
        %v5232 = vstv %s5231
        %v5233 = vmul.f32 %v5232, %v5170
        %v5234 = vmul.f32 %v5232, %v5169
        %v5235 = vmul.f32 %v5232, %v5171
        %v5236 = vadd.f32 %v5095, %v5233
        %v5237 = vadd.f32 %v5096, %v5234
        %v5238 = vadd.f32 %v5097, %v5235
        %s5239 = sld [smem:[#allocation9 + $0x29]]
        %v5240 = vstv %s5239
        %v5241 = vmul.f32 %v5240, %v5179
        %v5242 = vmul.f32 %v5240, %v5178
        %v5243 = vmul.f32 %v5240, %v5180
        %v5244 = vadd.f32 %v5236, %v5241
        %v5245 = vadd.f32 %v5237, %v5242
        %v5246 = vadd.f32 %v5238, %v5243
        %s5247 = sld [smem:[#allocation9 + $0x30]]
        %v5248 = vstv %s5247
        %v5249 = vmul.f32 %v5248, %v5188
        %v5250 = vmul.f32 %v5248, %v5187
        %v5251 = vmul.f32 %v5248, %v5189
        %v5252 = vadd.f32 %v5244, %v5249
        %v5253 = vadd.f32 %v5245, %v5250
        %v5254 = vadd.f32 %v5246, %v5251
        %s5255 = sld [smem:[#allocation9 + $0x37]]
        %v5256 = vstv %s5255
        %v5257 = vmul.f32 %v5256, %v5197
        %v5258 = vmul.f32 %v5256, %v5196
        %v5259 = vmul.f32 %v5256, %v5198
        %v5260 = vadd.f32 %v5252, %v5257
        %v5261 = vadd.f32 %v5253, %v5258
        %v5262 = vadd.f32 %v5254, %v5259
        %s5263 = sld [smem:[#allocation9 + $0x3e]]
        %v5264 = vstv %s5263
        %v5265 = vmul.f32 %v5264, %v5170
        %v5266 = vmul.f32 %v5264, %v5169
        %v5267 = vmul.f32 %v5264, %v5171
        %v5268 = vadd.f32 %v5127, %v5265
        %v5269 = vadd.f32 %v5128, %v5266
        %v5270 = vadd.f32 %v5129, %v5267
        %s5271 = sld [smem:[#allocation9 + $0x45]]
        %v5272 = vstv %s5271
        %v5273 = vmul.f32 %v5272, %v5179
        %v5274 = vmul.f32 %v5272, %v5178
        %v5275 = vmul.f32 %v5272, %v5180
        %v5276 = vadd.f32 %v5268, %v5273
        %v5277 = vadd.f32 %v5269, %v5274
        %v5278 = vadd.f32 %v5270, %v5275
        %s5279 = sld [smem:[#allocation9 + $0x4c]]
        %v5280 = vstv %s5279
        %v5281 = vmul.f32 %v5280, %v5188
        %v5282 = vmul.f32 %v5280, %v5187
        %v5283 = vmul.f32 %v5280, %v5189
        %v5284 = vadd.f32 %v5276, %v5281
        %v5285 = vadd.f32 %v5277, %v5282
        %v5286 = vadd.f32 %v5278, %v5283
        %s5287 = sld [smem:[#allocation9 + $0x53]]
        %v5288 = vstv %s5287
        %v5289 = vmul.f32 %v5288, %v5197
        %v5290 = vmul.f32 %v5288, %v5196
        %v5291 = vmul.f32 %v5288, %v5198
        %v5292 = vadd.f32 %v5284, %v5289
        %v5293 = vadd.f32 %v5285, %v5290
        %v5294 = vadd.f32 %v5286, %v5291
        %s5295 = sld [smem:[#allocation9 + $0x5a]]
        %v5296 = vstv %s5295
        %v5297 = vmul.f32 %v5296, %v5170
        %v5298 = vmul.f32 %v5296, %v5169
        %v5299 = vmul.f32 %v5296, %v5171
        %v5300 = vadd.f32 %v5159, %v5297
        %v5301 = vadd.f32 %v5160, %v5298
        %v5302 = vadd.f32 %v5161, %v5299
        %s5303 = sld [smem:[#allocation9 + $0x61]]
        %v5304 = vstv %s5303
        %v5305 = vmul.f32 %v5304, %v5179
        %v5306 = vmul.f32 %v5304, %v5178
        %v5307 = vmul.f32 %v5304, %v5180
        %v5308 = vadd.f32 %v5300, %v5305
        %v5309 = vadd.f32 %v5301, %v5306
        %v5310 = vadd.f32 %v5302, %v5307
        %s5311 = sld [smem:[#allocation9 + $0x68]]
        %v5312 = vstv %s5311
        %v5313 = vmul.f32 %v5312, %v5188
        %v5314 = vmul.f32 %v5312, %v5187
        %v5315 = vmul.f32 %v5312, %v5189
        %v5316 = vadd.f32 %v5308, %v5313
        %v5317 = vadd.f32 %v5309, %v5314
        %v5318 = vadd.f32 %v5310, %v5315
        %s5319 = sld [smem:[#allocation9 + $0x6f]]
        %v5320 = vstv %s5319
        %v5321 = vmul.f32 %v5320, %v5197
        %v5322 = vmul.f32 %v5320, %v5196
        %v5323 = vmul.f32 %v5320, %v5198
        %v5324 = vadd.f32 %v5316, %v5321
        %v5325 = vadd.f32 %v5317, %v5322
        %v5326 = vadd.f32 %v5318, %v5323
        %s5327 = sld [smem:[#allocation10]]
        %v5328 = vstv %s5327
        %v5329 = vadd.f32 %v5228, %v5328
        %v5330 = vadd.f32 %v5229, %v5328
        %v5331 = vadd.f32 %v5230, %v5328
        %s5332 = sld [smem:[#allocation10 + $0x1]]
        %v5333 = vstv %s5332
        %v5334 = vadd.f32 %v5260, %v5333
        %v5335 = vadd.f32 %v5261, %v5333
        %v5336 = vadd.f32 %v5262, %v5333
        %s5337 = sld [smem:[#allocation10 + $0x2]]
        %v5338 = vstv %s5337
        %v5339 = vadd.f32 %v5292, %v5338
        %v5340 = vadd.f32 %v5293, %v5338
        %v5341 = vadd.f32 %v5294, %v5338
        %s5342 = sld [smem:[#allocation10 + $0x3]]
        %v5343 = vstv %s5342
        %v5344 = vadd.f32 %v5324, %v5343
        %v5345 = vadd.f32 %v5325, %v5343
        %v5346 = vadd.f32 %v5326, %v5343
        %s5347 = scalar_lea.vmem %s1, 7
        %v5348 = vld [vmem:[%s5347] ss:$8 sm:$0x7]
        %v5350 = vlaneseq
        %v5351 = vshrl.u32 %v5350, 7
        %v5352 = vsub.s32 0, %v5351
        %v5353 = vrot.slane %v5348, %v5352
        %v5354 = vlaneseq
        %v5355 = vshrl.u32 %v5354, 7
        %v5356 = vsub.s32 1, %v5355
        %v5357 = vrot.slane %v5348, %v5356
        %v5358 = vlaneseq
        %v5359 = vshrl.u32 %v5358, 7
        %v5360 = vsub.s32 2, %v5359
        %v5361 = vrot.slane %v5348, %v5360
        %v5365 = vmul.f32 %v5329, %v5353
        %v5366 = vmul.f32 %v5330, %v5357
        %v5367 = vmul.f32 %v5331, %v5361
        %v5368 = vmul.f32 %v5334, %v5353
        %v5369 = vmul.f32 %v5335, %v5357
        %v5370 = vmul.f32 %v5336, %v5361
        %v5371 = vmul.f32 %v5339, %v5353
        %v5372 = vmul.f32 %v5340, %v5357
        %v5373 = vmul.f32 %v5341, %v5361
        %v5374 = vmul.f32 %v5344, %v5353
        %v5375 = vmul.f32 %v5345, %v5357
        %v5376 = vmul.f32 %v5346, %v5361
        %v5377 = vld [vmem:[%s1] ss:$8 sm:$0x7]
        %v5379 = vlaneseq
        %v5380 = vshrl.u32 %v5379, 7
        %v5381 = vsub.s32 0, %v5380
        %v5382 = vrot.slane %v3987, %v5381
        %v5383 = vlaneseq
        %v5384 = vshrl.u32 %v5383, 7
        %v5385 = vsub.s32 1, %v5384
        %v5386 = vrot.slane %v3987, %v5385
        %v5387 = vlaneseq
        %v5388 = vshrl.u32 %v5387, 7
        %v5389 = vsub.s32 2, %v5388
        %v5390 = vrot.slane %v3987, %v5389
        %5394 = vrot.lane.b32.xlu0 %v5382, 3
        %v5395 = vpop.permute.xlu0 %5394
        %5396 = vrot.lane.b32.xlu0 %v5386, 3
        %v5397 = vpop.permute.xlu0 %5396
        %5398 = vrot.lane.b32.xlu0 %v5390, 3
        %v5399 = vpop.permute.xlu0 %5398
        %v5400 = vsel %vm4003, %v5395, %v5397
        %v5401 = vsel %vm4003, %v5399, %v5395
        %v5403 = vlaneseq
        %v5404 = vshrl.u32 %v5403, 7
        %v5405 = vsub.s32 0, %v5404
        %v5406 = vrot.slane %v5377, %v5405
        %v5407 = vlaneseq
        %v5408 = vshrl.u32 %v5407, 7
        %v5409 = vsub.s32 1, %v5408
        %v5410 = vrot.slane %v5377, %v5409
        %v5413 = vmul.f32 %v5401, %v5406
        %v5414 = vmul.f32 %v5400, %v5410
        %v5416 = vlaneseq
        %v5417 = vshrl.u32 %v5416, 7
        %v5418 = vsub.s32 0, %v5417
        %v5419 = vrot.slane %v3990, %v5418
        %v5420 = vlaneseq
        %v5421 = vshrl.u32 %v5420, 7
        %v5422 = vsub.s32 1, %v5421
        %v5423 = vrot.slane %v3990, %v5422
        %v5424 = vlaneseq
        %v5425 = vshrl.u32 %v5424, 7
        %v5426 = vsub.s32 2, %v5425
        %v5427 = vrot.slane %v3990, %v5426
        %5431 = vrot.lane.b32.xlu0 %v5419, 3
        %v5432 = vpop.permute.xlu0 %5431
        %5433 = vrot.lane.b32.xlu0 %v5423, 3
        %v5434 = vpop.permute.xlu0 %5433
        %5435 = vrot.lane.b32.xlu0 %v5427, 3
        %v5436 = vpop.permute.xlu0 %5435
        %v5437 = vsel %vm4003, %v5432, %v5434
        %v5438 = vsel %vm4003, %v5436, %v5432
        %v5439 = vmul.f32 %v5438, %v5406
        %v5440 = vmul.f32 %v5437, %v5410
        %v5442 = vlaneseq
        %v5443 = vshrl.u32 %v5442, 7
        %v5444 = vsub.s32 0, %v5443
        %v5445 = vrot.slane %v3993, %v5444
        %v5446 = vlaneseq
        %v5447 = vshrl.u32 %v5446, 7
        %v5448 = vsub.s32 1, %v5447
        %v5449 = vrot.slane %v3993, %v5448
        %v5450 = vlaneseq
        %v5451 = vshrl.u32 %v5450, 7
        %v5452 = vsub.s32 2, %v5451
        %v5453 = vrot.slane %v3993, %v5452
        %5457 = vrot.lane.b32.xlu0 %v5445, 3
        %v5458 = vpop.permute.xlu0 %5457
        %5459 = vrot.lane.b32.xlu0 %v5449, 3
        %v5460 = vpop.permute.xlu0 %5459
        %5461 = vrot.lane.b32.xlu0 %v5453, 3
        %v5462 = vpop.permute.xlu0 %5461
        %v5463 = vsel %vm4003, %v5458, %v5460
        %v5464 = vsel %vm4003, %v5462, %v5458
        %v5465 = vmul.f32 %v5464, %v5406
        %v5466 = vmul.f32 %v5463, %v5410
        %v5468 = vlaneseq
        %v5469 = vshrl.u32 %v5468, 7
        %v5470 = vsub.s32 0, %v5469
        %v5471 = vrot.slane %v3996, %v5470
        %v5472 = vlaneseq
        %v5473 = vshrl.u32 %v5472, 7
        %v5474 = vsub.s32 1, %v5473
        %v5475 = vrot.slane %v3996, %v5474
        %v5476 = vlaneseq
        %v5477 = vshrl.u32 %v5476, 7
        %v5478 = vsub.s32 2, %v5477
        %v5479 = vrot.slane %v3996, %v5478
        %5483 = vrot.lane.b32.xlu0 %v5471, 3
        %v5484 = vpop.permute.xlu0 %5483
        %5485 = vrot.lane.b32.xlu0 %v5475, 3
        %v5486 = vpop.permute.xlu0 %5485
        %5487 = vrot.lane.b32.xlu0 %v5479, 3
        %v5488 = vpop.permute.xlu0 %5487
        %v5489 = vsel %vm4003, %v5484, %v5486
        %v5490 = vsel %vm4003, %v5488, %v5484
        %v5491 = vmul.f32 %v5490, %v5406
        %v5492 = vmul.f32 %v5489, %v5410
        %s5493 = sld [smem:[#allocation6]]
        %v5494 = vstv %s5493
        %v5495 = vmul.f32 %v5494, %v5413
        %v5496 = vmul.f32 %v5494, %v5414
        %s5497 = sld [smem:[#allocation6 + $0x7]]
        %v5498 = vstv %s5497
        %v5499 = vmul.f32 %v5498, %v5439
        %v5500 = vmul.f32 %v5498, %v5440
        %v5501 = vadd.f32 %v5495, %v5499
        %v5502 = vadd.f32 %v5496, %v5500
        %s5503 = sld [smem:[#allocation6 + $0xe]]
        %v5504 = vstv %s5503
        %v5505 = vmul.f32 %v5504, %v5465
        %v5506 = vmul.f32 %v5504, %v5466
        %v5507 = vadd.f32 %v5501, %v5505
        %v5508 = vadd.f32 %v5502, %v5506
        %s5509 = sld [smem:[#allocation6 + $0x15]]
        %v5510 = vstv %s5509
        %v5511 = vmul.f32 %v5510, %v5491
        %v5512 = vmul.f32 %v5510, %v5492
        %v5513 = vadd.f32 %v5507, %v5511
        %v5514 = vadd.f32 %v5508, %v5512
        %s5515 = sld [smem:[#allocation6 + $0x1c]]
        %v5516 = vstv %s5515
        %v5517 = vmul.f32 %v5516, %v5413
        %v5518 = vmul.f32 %v5516, %v5414
        %s5519 = sld [smem:[#allocation6 + $0x23]]
        %v5520 = vstv %s5519
        %v5521 = vmul.f32 %v5520, %v5439
        %v5522 = vmul.f32 %v5520, %v5440
        %v5523 = vadd.f32 %v5517, %v5521
        %v5524 = vadd.f32 %v5518, %v5522
        %s5525 = sld [smem:[#allocation6 + $0x2a]]
        %v5526 = vstv %s5525
        %v5527 = vmul.f32 %v5526, %v5465
        %v5528 = vmul.f32 %v5526, %v5466
        %v5529 = vadd.f32 %v5523, %v5527
        %v5530 = vadd.f32 %v5524, %v5528
        %s5531 = sld [smem:[#allocation6 + $0x31]]
        %v5532 = vstv %s5531
        %v5533 = vmul.f32 %v5532, %v5491
        %v5534 = vmul.f32 %v5532, %v5492
        %v5535 = vadd.f32 %v5529, %v5533
        %v5536 = vadd.f32 %v5530, %v5534
        %s5537 = sld [smem:[#allocation6 + $0x38]]
        %v5538 = vstv %s5537
        %v5539 = vmul.f32 %v5538, %v5413
        %v5540 = vmul.f32 %v5538, %v5414
        %s5541 = sld [smem:[#allocation6 + $0x3f]]
        %v5542 = vstv %s5541
        %v5543 = vmul.f32 %v5542, %v5439
        %v5544 = vmul.f32 %v5542, %v5440
        %v5545 = vadd.f32 %v5539, %v5543
        %v5546 = vadd.f32 %v5540, %v5544
        %s5547 = sld [smem:[#allocation6 + $0x46]]
        %v5548 = vstv %s5547
        %v5549 = vmul.f32 %v5548, %v5465
        %v5550 = vmul.f32 %v5548, %v5466
        %v5551 = vadd.f32 %v5545, %v5549
        %v5552 = vadd.f32 %v5546, %v5550
        %s5553 = sld [smem:[#allocation6 + $0x4d]]
        %v5554 = vstv %s5553
        %v5555 = vmul.f32 %v5554, %v5491
        %v5556 = vmul.f32 %v5554, %v5492
        %v5557 = vadd.f32 %v5551, %v5555
        %v5558 = vadd.f32 %v5552, %v5556
        %s5559 = sld [smem:[#allocation6 + $0x54]]
        %v5560 = vstv %s5559
        %v5561 = vmul.f32 %v5560, %v5413
        %v5562 = vmul.f32 %v5560, %v5414
        %s5563 = sld [smem:[#allocation6 + $0x5b]]
        %v5564 = vstv %s5563
        %v5565 = vmul.f32 %v5564, %v5439
        %v5566 = vmul.f32 %v5564, %v5440
        %v5567 = vadd.f32 %v5561, %v5565
        %v5568 = vadd.f32 %v5562, %v5566
        %s5569 = sld [smem:[#allocation6 + $0x62]]
        %v5570 = vstv %s5569
        %v5571 = vmul.f32 %v5570, %v5465
        %v5572 = vmul.f32 %v5570, %v5466
        %v5573 = vadd.f32 %v5567, %v5571
        %v5574 = vadd.f32 %v5568, %v5572
        %s5575 = sld [smem:[#allocation6 + $0x69]]
        %v5576 = vstv %s5575
        %v5577 = vmul.f32 %v5576, %v5491
        %v5578 = vmul.f32 %v5576, %v5492
        %v5579 = vadd.f32 %v5573, %v5577
        %v5580 = vadd.f32 %v5574, %v5578
        %s5581 = scalar_lea.vmem %s1, 1
        %v5582 = vld [vmem:[%s5581] ss:$8 sm:$0x7]
        %5583 = vrot.lane.b32.xlu0 %v5382, 2
        %v5584 = vpop.permute.xlu0 %5583
        %5585 = vrot.lane.b32.xlu0 %v5386, 2
        %v5586 = vpop.permute.xlu0 %5585
        %5587 = vrot.lane.b32.xlu0 %v5390, 2
        %v5588 = vpop.permute.xlu0 %5587
        %v5589 = vsel %vm4156, %v5584, %v5586
        %v5590 = vsel %vm4156, %v5588, %v5584
        %v5592 = vlaneseq
        %v5593 = vshrl.u32 %v5592, 7
        %v5594 = vsub.s32 0, %v5593
        %v5595 = vrot.slane %v5582, %v5594
        %v5596 = vlaneseq
        %v5597 = vshrl.u32 %v5596, 7
        %v5598 = vsub.s32 1, %v5597
        %v5599 = vrot.slane %v5582, %v5598
        %v5602 = vmul.f32 %v5590, %v5595
        %v5603 = vmul.f32 %v5589, %v5599
        %5604 = vrot.lane.b32.xlu0 %v5419, 2
        %v5605 = vpop.permute.xlu0 %5604
        %5606 = vrot.lane.b32.xlu0 %v5423, 2
        %v5607 = vpop.permute.xlu0 %5606
        %5608 = vrot.lane.b32.xlu0 %v5427, 2
        %v5609 = vpop.permute.xlu0 %5608
        %v5610 = vsel %vm4156, %v5605, %v5607
        %v5611 = vsel %vm4156, %v5609, %v5605
        %v5612 = vmul.f32 %v5611, %v5595
        %v5613 = vmul.f32 %v5610, %v5599
        %5614 = vrot.lane.b32.xlu0 %v5445, 2
        %v5615 = vpop.permute.xlu0 %5614
        %5616 = vrot.lane.b32.xlu0 %v5449, 2
        %v5617 = vpop.permute.xlu0 %5616
        %5618 = vrot.lane.b32.xlu0 %v5453, 2
        %v5619 = vpop.permute.xlu0 %5618
        %v5620 = vsel %vm4156, %v5615, %v5617
        %v5621 = vsel %vm4156, %v5619, %v5615
        %v5622 = vmul.f32 %v5621, %v5595
        %v5623 = vmul.f32 %v5620, %v5599
        %5624 = vrot.lane.b32.xlu0 %v5471, 2
        %v5625 = vpop.permute.xlu0 %5624
        %5626 = vrot.lane.b32.xlu0 %v5475, 2
        %v5627 = vpop.permute.xlu0 %5626
        %5628 = vrot.lane.b32.xlu0 %v5479, 2
        %v5629 = vpop.permute.xlu0 %5628
        %v5630 = vsel %vm4156, %v5625, %v5627
        %v5631 = vsel %vm4156, %v5629, %v5625
        %v5632 = vmul.f32 %v5631, %v5595
        %v5633 = vmul.f32 %v5630, %v5599
        %s5634 = sld [smem:[#allocation6 + $0x1]]
        %v5635 = vstv %s5634
        %v5636 = vmul.f32 %v5635, %v5602
        %v5637 = vmul.f32 %v5635, %v5603
        %v5638 = vadd.f32 %v5513, %v5636
        %v5639 = vadd.f32 %v5514, %v5637
        %s5640 = sld [smem:[#allocation6 + $0x8]]
        %v5641 = vstv %s5640
        %v5642 = vmul.f32 %v5641, %v5612
        %v5643 = vmul.f32 %v5641, %v5613
        %v5644 = vadd.f32 %v5638, %v5642
        %v5645 = vadd.f32 %v5639, %v5643
        %s5646 = sld [smem:[#allocation6 + $0xf]]
        %v5647 = vstv %s5646
        %v5648 = vmul.f32 %v5647, %v5622
        %v5649 = vmul.f32 %v5647, %v5623
        %v5650 = vadd.f32 %v5644, %v5648
        %v5651 = vadd.f32 %v5645, %v5649
        %s5652 = sld [smem:[#allocation6 + $0x16]]
        %v5653 = vstv %s5652
        %v5654 = vmul.f32 %v5653, %v5632
        %v5655 = vmul.f32 %v5653, %v5633
        %v5656 = vadd.f32 %v5650, %v5654
        %v5657 = vadd.f32 %v5651, %v5655
        %s5658 = sld [smem:[#allocation6 + $0x1d]]
        %v5659 = vstv %s5658
        %v5660 = vmul.f32 %v5659, %v5602
        %v5661 = vmul.f32 %v5659, %v5603
        %v5662 = vadd.f32 %v5535, %v5660
        %v5663 = vadd.f32 %v5536, %v5661
        %s5664 = sld [smem:[#allocation6 + $0x24]]
        %v5665 = vstv %s5664
        %v5666 = vmul.f32 %v5665, %v5612
        %v5667 = vmul.f32 %v5665, %v5613
        %v5668 = vadd.f32 %v5662, %v5666
        %v5669 = vadd.f32 %v5663, %v5667
        %s5670 = sld [smem:[#allocation6 + $0x2b]]
        %v5671 = vstv %s5670
        %v5672 = vmul.f32 %v5671, %v5622
        %v5673 = vmul.f32 %v5671, %v5623
        %v5674 = vadd.f32 %v5668, %v5672
        %v5675 = vadd.f32 %v5669, %v5673
        %s5676 = sld [smem:[#allocation6 + $0x32]]
        %v5677 = vstv %s5676
        %v5678 = vmul.f32 %v5677, %v5632
        %v5679 = vmul.f32 %v5677, %v5633
        %v5680 = vadd.f32 %v5674, %v5678
        %v5681 = vadd.f32 %v5675, %v5679
        %s5682 = sld [smem:[#allocation6 + $0x39]]
        %v5683 = vstv %s5682
        %v5684 = vmul.f32 %v5683, %v5602
        %v5685 = vmul.f32 %v5683, %v5603
        %v5686 = vadd.f32 %v5557, %v5684
        %v5687 = vadd.f32 %v5558, %v5685
        %s5688 = sld [smem:[#allocation6 + $0x40]]
        %v5689 = vstv %s5688
        %v5690 = vmul.f32 %v5689, %v5612
        %v5691 = vmul.f32 %v5689, %v5613
        %v5692 = vadd.f32 %v5686, %v5690
        %v5693 = vadd.f32 %v5687, %v5691
        %s5694 = sld [smem:[#allocation6 + $0x47]]
        %v5695 = vstv %s5694
        %v5696 = vmul.f32 %v5695, %v5622
        %v5697 = vmul.f32 %v5695, %v5623
        %v5698 = vadd.f32 %v5692, %v5696
        %v5699 = vadd.f32 %v5693, %v5697
        %s5700 = sld [smem:[#allocation6 + $0x4e]]
        %v5701 = vstv %s5700
        %v5702 = vmul.f32 %v5701, %v5632
        %v5703 = vmul.f32 %v5701, %v5633
        %v5704 = vadd.f32 %v5698, %v5702
        %v5705 = vadd.f32 %v5699, %v5703
        %s5706 = sld [smem:[#allocation6 + $0x55]]
        %v5707 = vstv %s5706
        %v5708 = vmul.f32 %v5707, %v5602
        %v5709 = vmul.f32 %v5707, %v5603
        %v5710 = vadd.f32 %v5579, %v5708
        %v5711 = vadd.f32 %v5580, %v5709
        %s5712 = sld [smem:[#allocation6 + $0x5c]]
        %v5713 = vstv %s5712
        %v5714 = vmul.f32 %v5713, %v5612
        %v5715 = vmul.f32 %v5713, %v5613
        %v5716 = vadd.f32 %v5710, %v5714
        %v5717 = vadd.f32 %v5711, %v5715
        %s5718 = sld [smem:[#allocation6 + $0x63]]
        %v5719 = vstv %s5718
        %v5720 = vmul.f32 %v5719, %v5622
        %v5721 = vmul.f32 %v5719, %v5623
        %v5722 = vadd.f32 %v5716, %v5720
        %v5723 = vadd.f32 %v5717, %v5721
        %s5724 = sld [smem:[#allocation6 + $0x6a]]
        %v5725 = vstv %s5724
        %v5726 = vmul.f32 %v5725, %v5632
        %v5727 = vmul.f32 %v5725, %v5633
        %v5728 = vadd.f32 %v5722, %v5726
        %v5729 = vadd.f32 %v5723, %v5727
        %s5730 = scalar_lea.vmem %s1, 2
        %v5731 = vld [vmem:[%s5730] ss:$8 sm:$0x7]
        %5732 = vrot.lane.b32.xlu0 %v5382, 1
        %v5733 = vpop.permute.xlu0 %5732
        %5734 = vrot.lane.b32.xlu0 %v5386, 1
        %v5735 = vpop.permute.xlu0 %5734
        %5736 = vrot.lane.b32.xlu0 %v5390, 1
        %v5737 = vpop.permute.xlu0 %5736
        %v5738 = vsel %vm4321, %v5733, %v5735
        %v5739 = vsel %vm4321, %v5737, %v5733
        %v5741 = vlaneseq
        %v5742 = vshrl.u32 %v5741, 7
        %v5743 = vsub.s32 0, %v5742
        %v5744 = vrot.slane %v5731, %v5743
        %v5745 = vlaneseq
        %v5746 = vshrl.u32 %v5745, 7
        %v5747 = vsub.s32 1, %v5746
        %v5748 = vrot.slane %v5731, %v5747
        %v5751 = vmul.f32 %v5739, %v5744
        %v5752 = vmul.f32 %v5738, %v5748
        %5753 = vrot.lane.b32.xlu0 %v5419, 1
        %v5754 = vpop.permute.xlu0 %5753
        %5755 = vrot.lane.b32.xlu0 %v5423, 1
        %v5756 = vpop.permute.xlu0 %5755
        %5757 = vrot.lane.b32.xlu0 %v5427, 1
        %v5758 = vpop.permute.xlu0 %5757
        %v5759 = vsel %vm4321, %v5754, %v5756
        %v5760 = vsel %vm4321, %v5758, %v5754
        %v5761 = vmul.f32 %v5760, %v5744
        %v5762 = vmul.f32 %v5759, %v5748
        %5763 = vrot.lane.b32.xlu0 %v5445, 1
        %v5764 = vpop.permute.xlu0 %5763
        %5765 = vrot.lane.b32.xlu0 %v5449, 1
        %v5766 = vpop.permute.xlu0 %5765
        %5767 = vrot.lane.b32.xlu0 %v5453, 1
        %v5768 = vpop.permute.xlu0 %5767
        %v5769 = vsel %vm4321, %v5764, %v5766
        %v5770 = vsel %vm4321, %v5768, %v5764
        %v5771 = vmul.f32 %v5770, %v5744
        %v5772 = vmul.f32 %v5769, %v5748
        %5773 = vrot.lane.b32.xlu0 %v5471, 1
        %v5774 = vpop.permute.xlu0 %5773
        %5775 = vrot.lane.b32.xlu0 %v5475, 1
        %v5776 = vpop.permute.xlu0 %5775
        %5777 = vrot.lane.b32.xlu0 %v5479, 1
        %v5778 = vpop.permute.xlu0 %5777
        %v5779 = vsel %vm4321, %v5774, %v5776
        %v5780 = vsel %vm4321, %v5778, %v5774
        %v5781 = vmul.f32 %v5780, %v5744
        %v5782 = vmul.f32 %v5779, %v5748
        %s5783 = sld [smem:[#allocation6 + $0x2]]
        %v5784 = vstv %s5783
        %v5785 = vmul.f32 %v5784, %v5751
        %v5786 = vmul.f32 %v5784, %v5752
        %v5787 = vadd.f32 %v5656, %v5785
        %v5788 = vadd.f32 %v5657, %v5786
        %s5789 = sld [smem:[#allocation6 + $0x9]]
        %v5790 = vstv %s5789
        %v5791 = vmul.f32 %v5790, %v5761
        %v5792 = vmul.f32 %v5790, %v5762
        %v5793 = vadd.f32 %v5787, %v5791
        %v5794 = vadd.f32 %v5788, %v5792
        %s5795 = sld [smem:[#allocation6 + $0x10]]
        %v5796 = vstv %s5795
        %v5797 = vmul.f32 %v5796, %v5771
        %v5798 = vmul.f32 %v5796, %v5772
        %v5799 = vadd.f32 %v5793, %v5797
        %v5800 = vadd.f32 %v5794, %v5798
        %s5801 = sld [smem:[#allocation6 + $0x17]]
        %v5802 = vstv %s5801
        %v5803 = vmul.f32 %v5802, %v5781
        %v5804 = vmul.f32 %v5802, %v5782
        %v5805 = vadd.f32 %v5799, %v5803
        %v5806 = vadd.f32 %v5800, %v5804
        %s5807 = sld [smem:[#allocation6 + $0x1e]]
        %v5808 = vstv %s5807
        %v5809 = vmul.f32 %v5808, %v5751
        %v5810 = vmul.f32 %v5808, %v5752
        %v5811 = vadd.f32 %v5680, %v5809
        %v5812 = vadd.f32 %v5681, %v5810
        %s5813 = sld [smem:[#allocation6 + $0x25]]
        %v5814 = vstv %s5813
        %v5815 = vmul.f32 %v5814, %v5761
        %v5816 = vmul.f32 %v5814, %v5762
        %v5817 = vadd.f32 %v5811, %v5815
        %v5818 = vadd.f32 %v5812, %v5816
        %s5819 = sld [smem:[#allocation6 + $0x2c]]
        %v5820 = vstv %s5819
        %v5821 = vmul.f32 %v5820, %v5771
        %v5822 = vmul.f32 %v5820, %v5772
        %v5823 = vadd.f32 %v5817, %v5821
        %v5824 = vadd.f32 %v5818, %v5822
        %s5825 = sld [smem:[#allocation6 + $0x33]]
        %v5826 = vstv %s5825
        %v5827 = vmul.f32 %v5826, %v5781
        %v5828 = vmul.f32 %v5826, %v5782
        %v5829 = vadd.f32 %v5823, %v5827
        %v5830 = vadd.f32 %v5824, %v5828
        %s5831 = sld [smem:[#allocation6 + $0x3a]]
        %v5832 = vstv %s5831
        %v5833 = vmul.f32 %v5832, %v5751
        %v5834 = vmul.f32 %v5832, %v5752
        %v5835 = vadd.f32 %v5704, %v5833
        %v5836 = vadd.f32 %v5705, %v5834
        %s5837 = sld [smem:[#allocation6 + $0x41]]
        %v5838 = vstv %s5837
        %v5839 = vmul.f32 %v5838, %v5761
        %v5840 = vmul.f32 %v5838, %v5762
        %v5841 = vadd.f32 %v5835, %v5839
        %v5842 = vadd.f32 %v5836, %v5840
        %s5843 = sld [smem:[#allocation6 + $0x48]]
        %v5844 = vstv %s5843
        %v5845 = vmul.f32 %v5844, %v5771
        %v5846 = vmul.f32 %v5844, %v5772
        %v5847 = vadd.f32 %v5841, %v5845
        %v5848 = vadd.f32 %v5842, %v5846
        %s5849 = sld [smem:[#allocation6 + $0x4f]]
        %v5850 = vstv %s5849
        %v5851 = vmul.f32 %v5850, %v5781
        %v5852 = vmul.f32 %v5850, %v5782
        %v5853 = vadd.f32 %v5847, %v5851
        %v5854 = vadd.f32 %v5848, %v5852
        %s5855 = sld [smem:[#allocation6 + $0x56]]
        %v5856 = vstv %s5855
        %v5857 = vmul.f32 %v5856, %v5751
        %v5858 = vmul.f32 %v5856, %v5752
        %v5859 = vadd.f32 %v5728, %v5857
        %v5860 = vadd.f32 %v5729, %v5858
        %s5861 = sld [smem:[#allocation6 + $0x5d]]
        %v5862 = vstv %s5861
        %v5863 = vmul.f32 %v5862, %v5761
        %v5864 = vmul.f32 %v5862, %v5762
        %v5865 = vadd.f32 %v5859, %v5863
        %v5866 = vadd.f32 %v5860, %v5864
        %s5867 = sld [smem:[#allocation6 + $0x64]]
        %v5868 = vstv %s5867
        %v5869 = vmul.f32 %v5868, %v5771
        %v5870 = vmul.f32 %v5868, %v5772
        %v5871 = vadd.f32 %v5865, %v5869
        %v5872 = vadd.f32 %v5866, %v5870
        %s5873 = sld [smem:[#allocation6 + $0x6b]]
        %v5874 = vstv %s5873
        %v5875 = vmul.f32 %v5874, %v5781
        %v5876 = vmul.f32 %v5874, %v5782
        %v5877 = vadd.f32 %v5871, %v5875
        %v5878 = vadd.f32 %v5872, %v5876
        %s5879 = sld [smem:[#allocation6 + $0x3]]
        %v5880 = vstv %s5879
        %v5881 = vmul.f32 %v5880, %v3987
        %v5883 = vlaneseq
        %v5884 = vshrl.u32 %v5883, 7
        %v5885 = vsub.s32 0, %v5884
        %v5886 = vrot.slane %v5881, %v5885
        %v5887 = vlaneseq
        %v5888 = vshrl.u32 %v5887, 7
        %v5889 = vsub.s32 1, %v5888
        %v5890 = vrot.slane %v5881, %v5889
        %v5893 = vadd.f32 %v5805, %v5886
        %v5894 = vadd.f32 %v5806, %v5890
        %s5895 = sld [smem:[#allocation6 + $0xa]]
        %v5896 = vstv %s5895
        %v5897 = vmul.f32 %v5896, %v3990
        %v5899 = vlaneseq
        %v5900 = vshrl.u32 %v5899, 7
        %v5901 = vsub.s32 0, %v5900
        %v5902 = vrot.slane %v5897, %v5901
        %v5903 = vlaneseq
        %v5904 = vshrl.u32 %v5903, 7
        %v5905 = vsub.s32 1, %v5904
        %v5906 = vrot.slane %v5897, %v5905
        %v5909 = vadd.f32 %v5893, %v5902
        %v5910 = vadd.f32 %v5894, %v5906
        %s5911 = sld [smem:[#allocation6 + $0x11]]
        %v5912 = vstv %s5911
        %v5913 = vmul.f32 %v5912, %v3993
        %v5915 = vlaneseq
        %v5916 = vshrl.u32 %v5915, 7
        %v5917 = vsub.s32 0, %v5916
        %v5918 = vrot.slane %v5913, %v5917
        %v5919 = vlaneseq
        %v5920 = vshrl.u32 %v5919, 7
        %v5921 = vsub.s32 1, %v5920
        %v5922 = vrot.slane %v5913, %v5921
        %v5925 = vadd.f32 %v5909, %v5918
        %v5926 = vadd.f32 %v5910, %v5922
        %s5927 = sld [smem:[#allocation6 + $0x18]]
        %v5928 = vstv %s5927
        %v5929 = vmul.f32 %v5928, %v3996
        %v5931 = vlaneseq
        %v5932 = vshrl.u32 %v5931, 7
        %v5933 = vsub.s32 0, %v5932
        %v5934 = vrot.slane %v5929, %v5933
        %v5935 = vlaneseq
        %v5936 = vshrl.u32 %v5935, 7
        %v5937 = vsub.s32 1, %v5936
        %v5938 = vrot.slane %v5929, %v5937
        %v5941 = vadd.f32 %v5925, %v5934
        %v5942 = vadd.f32 %v5926, %v5938
        %s5943 = sld [smem:[#allocation6 + $0x1f]]
        %v5944 = vstv %s5943
        %v5945 = vmul.f32 %v5944, %v3987
        %v5947 = vlaneseq
        %v5948 = vshrl.u32 %v5947, 7
        %v5949 = vsub.s32 0, %v5948
        %v5950 = vrot.slane %v5945, %v5949
        %v5951 = vlaneseq
        %v5952 = vshrl.u32 %v5951, 7
        %v5953 = vsub.s32 1, %v5952
        %v5954 = vrot.slane %v5945, %v5953
        %v5957 = vadd.f32 %v5829, %v5950
        %v5958 = vadd.f32 %v5830, %v5954
        %s5959 = sld [smem:[#allocation6 + $0x26]]
        %v5960 = vstv %s5959
        %v5961 = vmul.f32 %v5960, %v3990
        %v5963 = vlaneseq
        %v5964 = vshrl.u32 %v5963, 7
        %v5965 = vsub.s32 0, %v5964
        %v5966 = vrot.slane %v5961, %v5965
        %v5967 = vlaneseq
        %v5968 = vshrl.u32 %v5967, 7
        %v5969 = vsub.s32 1, %v5968
        %v5970 = vrot.slane %v5961, %v5969
        %v5973 = vadd.f32 %v5957, %v5966
        %v5974 = vadd.f32 %v5958, %v5970
        %s5975 = sld [smem:[#allocation6 + $0x2d]]
        %v5976 = vstv %s5975
        %v5977 = vmul.f32 %v5976, %v3993
        %v5979 = vlaneseq
        %v5980 = vshrl.u32 %v5979, 7
        %v5981 = vsub.s32 0, %v5980
        %v5982 = vrot.slane %v5977, %v5981
        %v5983 = vlaneseq
        %v5984 = vshrl.u32 %v5983, 7
        %v5985 = vsub.s32 1, %v5984
        %v5986 = vrot.slane %v5977, %v5985
        %v5989 = vadd.f32 %v5973, %v5982
        %v5990 = vadd.f32 %v5974, %v5986
        %s5991 = sld [smem:[#allocation6 + $0x34]]
        %v5992 = vstv %s5991
        %v5993 = vmul.f32 %v5992, %v3996
        %v5995 = vlaneseq
        %v5996 = vshrl.u32 %v5995, 7
        %v5997 = vsub.s32 0, %v5996
        %v5998 = vrot.slane %v5993, %v5997
        %v5999 = vlaneseq
        %v6000 = vshrl.u32 %v5999, 7
        %v6001 = vsub.s32 1, %v6000
        %v6002 = vrot.slane %v5993, %v6001
        %v6005 = vadd.f32 %v5989, %v5998
        %v6006 = vadd.f32 %v5990, %v6002
        %s6007 = sld [smem:[#allocation6 + $0x3b]]
        %v6008 = vstv %s6007
        %v6009 = vmul.f32 %v6008, %v3987
        %v6011 = vlaneseq
        %v6012 = vshrl.u32 %v6011, 7
        %v6013 = vsub.s32 0, %v6012
        %v6014 = vrot.slane %v6009, %v6013
        %v6015 = vlaneseq
        %v6016 = vshrl.u32 %v6015, 7
        %v6017 = vsub.s32 1, %v6016
        %v6018 = vrot.slane %v6009, %v6017
        %v6021 = vadd.f32 %v5853, %v6014
        %v6022 = vadd.f32 %v5854, %v6018
        %s6023 = sld [smem:[#allocation6 + $0x42]]
        %v6024 = vstv %s6023
        %v6025 = vmul.f32 %v6024, %v3990
        %v6027 = vlaneseq
        %v6028 = vshrl.u32 %v6027, 7
        %v6029 = vsub.s32 0, %v6028
        %v6030 = vrot.slane %v6025, %v6029
        %v6031 = vlaneseq
        %v6032 = vshrl.u32 %v6031, 7
        %v6033 = vsub.s32 1, %v6032
        %v6034 = vrot.slane %v6025, %v6033
        %v6037 = vadd.f32 %v6021, %v6030
        %v6038 = vadd.f32 %v6022, %v6034
        %s6039 = sld [smem:[#allocation6 + $0x49]]
        %v6040 = vstv %s6039
        %v6041 = vmul.f32 %v6040, %v3993
        %v6043 = vlaneseq
        %v6044 = vshrl.u32 %v6043, 7
        %v6045 = vsub.s32 0, %v6044
        %v6046 = vrot.slane %v6041, %v6045
        %v6047 = vlaneseq
        %v6048 = vshrl.u32 %v6047, 7
        %v6049 = vsub.s32 1, %v6048
        %v6050 = vrot.slane %v6041, %v6049
        %v6053 = vadd.f32 %v6037, %v6046
        %v6054 = vadd.f32 %v6038, %v6050
        %s6055 = sld [smem:[#allocation6 + $0x50]]
        %v6056 = vstv %s6055
        %v6057 = vmul.f32 %v6056, %v3996
        %v6059 = vlaneseq
        %v6060 = vshrl.u32 %v6059, 7
        %v6061 = vsub.s32 0, %v6060
        %v6062 = vrot.slane %v6057, %v6061
        %v6063 = vlaneseq
        %v6064 = vshrl.u32 %v6063, 7
        %v6065 = vsub.s32 1, %v6064
        %v6066 = vrot.slane %v6057, %v6065
        %v6069 = vadd.f32 %v6053, %v6062
        %v6070 = vadd.f32 %v6054, %v6066
        %s6071 = sld [smem:[#allocation6 + $0x57]]
        %v6072 = vstv %s6071
        %v6073 = vmul.f32 %v6072, %v3987
        %v6075 = vlaneseq
        %v6076 = vshrl.u32 %v6075, 7
        %v6077 = vsub.s32 0, %v6076
        %v6078 = vrot.slane %v6073, %v6077
        %v6079 = vlaneseq
        %v6080 = vshrl.u32 %v6079, 7
        %v6081 = vsub.s32 1, %v6080
        %v6082 = vrot.slane %v6073, %v6081
        %v6085 = vadd.f32 %v5877, %v6078
        %v6086 = vadd.f32 %v5878, %v6082
        %s6087 = sld [smem:[#allocation6 + $0x5e]]
        %v6088 = vstv %s6087
        %v6089 = vmul.f32 %v6088, %v3990
        %v6091 = vlaneseq
        %v6092 = vshrl.u32 %v6091, 7
        %v6093 = vsub.s32 0, %v6092
        %v6094 = vrot.slane %v6089, %v6093
        %v6095 = vlaneseq
        %v6096 = vshrl.u32 %v6095, 7
        %v6097 = vsub.s32 1, %v6096
        %v6098 = vrot.slane %v6089, %v6097
        %v6101 = vadd.f32 %v6085, %v6094
        %v6102 = vadd.f32 %v6086, %v6098
        %s6103 = sld [smem:[#allocation6 + $0x65]]
        %v6104 = vstv %s6103
        %v6105 = vmul.f32 %v6104, %v3993
        %v6107 = vlaneseq
        %v6108 = vshrl.u32 %v6107, 7
        %v6109 = vsub.s32 0, %v6108
        %v6110 = vrot.slane %v6105, %v6109
        %v6111 = vlaneseq
        %v6112 = vshrl.u32 %v6111, 7
        %v6113 = vsub.s32 1, %v6112
        %v6114 = vrot.slane %v6105, %v6113
        %v6117 = vadd.f32 %v6101, %v6110
        %v6118 = vadd.f32 %v6102, %v6114
        %s6119 = sld [smem:[#allocation6 + $0x6c]]
        %v6120 = vstv %s6119
        %v6121 = vmul.f32 %v6120, %v3996
        %v6123 = vlaneseq
        %v6124 = vshrl.u32 %v6123, 7
        %v6125 = vsub.s32 0, %v6124
        %v6126 = vrot.slane %v6121, %v6125
        %v6127 = vlaneseq
        %v6128 = vshrl.u32 %v6127, 7
        %v6129 = vsub.s32 1, %v6128
        %v6130 = vrot.slane %v6121, %v6129
        %v6133 = vadd.f32 %v6117, %v6126
        %v6134 = vadd.f32 %v6118, %v6130
        %s6135 = scalar_lea.vmem %s1, 4
        %v6136 = vld [vmem:[%s6135] ss:$8 sm:$0x7]
        %6137 = vrot.lane.b32.xlu0 %v5382, 127
        %v6138 = vpop.permute.xlu0 %6137
        %6139 = vrot.lane.b32.xlu0 %v5386, 127
        %v6140 = vpop.permute.xlu0 %6139
        %6141 = vrot.lane.b32.xlu0 %v5390, 127
        %v6142 = vpop.permute.xlu0 %6141
        %v6143 = vsel %vm4838, %v6140, %v6142
        %v6144 = vsel %vm4838, %v6138, %v6140
        %v6146 = vlaneseq
        %v6147 = vshrl.u32 %v6146, 7
        %v6148 = vsub.s32 0, %v6147
        %v6149 = vrot.slane %v6136, %v6148
        %v6150 = vlaneseq
        %v6151 = vshrl.u32 %v6150, 7
        %v6152 = vsub.s32 1, %v6151
        %v6153 = vrot.slane %v6136, %v6152
        %v6156 = vmul.f32 %v6144, %v6149
        %v6157 = vmul.f32 %v6143, %v6153
        %6158 = vrot.lane.b32.xlu0 %v5419, 127
        %v6159 = vpop.permute.xlu0 %6158
        %6160 = vrot.lane.b32.xlu0 %v5423, 127
        %v6161 = vpop.permute.xlu0 %6160
        %6162 = vrot.lane.b32.xlu0 %v5427, 127
        %v6163 = vpop.permute.xlu0 %6162
        %v6164 = vsel %vm4838, %v6161, %v6163
        %v6165 = vsel %vm4838, %v6159, %v6161
        %v6166 = vmul.f32 %v6165, %v6149
        %v6167 = vmul.f32 %v6164, %v6153
        %6168 = vrot.lane.b32.xlu0 %v5445, 127
        %v6169 = vpop.permute.xlu0 %6168
        %6170 = vrot.lane.b32.xlu0 %v5449, 127
        %v6171 = vpop.permute.xlu0 %6170
        %6172 = vrot.lane.b32.xlu0 %v5453, 127
        %v6173 = vpop.permute.xlu0 %6172
        %v6174 = vsel %vm4838, %v6171, %v6173
        %v6175 = vsel %vm4838, %v6169, %v6171
        %v6176 = vmul.f32 %v6175, %v6149
        %v6177 = vmul.f32 %v6174, %v6153
        %6178 = vrot.lane.b32.xlu0 %v5471, 127
        %v6179 = vpop.permute.xlu0 %6178
        %6180 = vrot.lane.b32.xlu0 %v5475, 127
        %v6181 = vpop.permute.xlu0 %6180
        %6182 = vrot.lane.b32.xlu0 %v5479, 127
        %v6183 = vpop.permute.xlu0 %6182
        %v6184 = vsel %vm4838, %v6181, %v6183
        %v6185 = vsel %vm4838, %v6179, %v6181
        %v6186 = vmul.f32 %v6185, %v6149
        %v6187 = vmul.f32 %v6184, %v6153
        %s6188 = sld [smem:[#allocation6 + $0x4]]
        %v6189 = vstv %s6188
        %v6190 = vmul.f32 %v6189, %v6156
        %v6191 = vmul.f32 %v6189, %v6157
        %v6192 = vadd.f32 %v5941, %v6190
        %v6193 = vadd.f32 %v5942, %v6191
        %s6194 = sld [smem:[#allocation6 + $0xb]]
        %v6195 = vstv %s6194
        %v6196 = vmul.f32 %v6195, %v6166
        %v6197 = vmul.f32 %v6195, %v6167
        %v6198 = vadd.f32 %v6192, %v6196
        %v6199 = vadd.f32 %v6193, %v6197
        %s6200 = sld [smem:[#allocation6 + $0x12]]
        %v6201 = vstv %s6200
        %v6202 = vmul.f32 %v6201, %v6176
        %v6203 = vmul.f32 %v6201, %v6177
        %v6204 = vadd.f32 %v6198, %v6202
        %v6205 = vadd.f32 %v6199, %v6203
        %s6206 = sld [smem:[#allocation6 + $0x19]]
        %v6207 = vstv %s6206
        %v6208 = vmul.f32 %v6207, %v6186
        %v6209 = vmul.f32 %v6207, %v6187
        %v6210 = vadd.f32 %v6204, %v6208
        %v6211 = vadd.f32 %v6205, %v6209
        %s6212 = sld [smem:[#allocation6 + $0x20]]
        %v6213 = vstv %s6212
        %v6214 = vmul.f32 %v6213, %v6156
        %v6215 = vmul.f32 %v6213, %v6157
        %v6216 = vadd.f32 %v6005, %v6214
        %v6217 = vadd.f32 %v6006, %v6215
        %s6218 = sld [smem:[#allocation6 + $0x27]]
        %v6219 = vstv %s6218
        %v6220 = vmul.f32 %v6219, %v6166
        %v6221 = vmul.f32 %v6219, %v6167
        %v6222 = vadd.f32 %v6216, %v6220
        %v6223 = vadd.f32 %v6217, %v6221
        %s6224 = sld [smem:[#allocation6 + $0x2e]]
        %v6225 = vstv %s6224
        %v6226 = vmul.f32 %v6225, %v6176
        %v6227 = vmul.f32 %v6225, %v6177
        %v6228 = vadd.f32 %v6222, %v6226
        %v6229 = vadd.f32 %v6223, %v6227
        %s6230 = sld [smem:[#allocation6 + $0x35]]
        %v6231 = vstv %s6230
        %v6232 = vmul.f32 %v6231, %v6186
        %v6233 = vmul.f32 %v6231, %v6187
        %v6234 = vadd.f32 %v6228, %v6232
        %v6235 = vadd.f32 %v6229, %v6233
        %s6236 = sld [smem:[#allocation6 + $0x3c]]
        %v6237 = vstv %s6236
        %v6238 = vmul.f32 %v6237, %v6156
        %v6239 = vmul.f32 %v6237, %v6157
        %v6240 = vadd.f32 %v6069, %v6238
        %v6241 = vadd.f32 %v6070, %v6239
        %s6242 = sld [smem:[#allocation6 + $0x43]]
        %v6243 = vstv %s6242
        %v6244 = vmul.f32 %v6243, %v6166
        %v6245 = vmul.f32 %v6243, %v6167
        %v6246 = vadd.f32 %v6240, %v6244
        %v6247 = vadd.f32 %v6241, %v6245
        %s6248 = sld [smem:[#allocation6 + $0x4a]]
        %v6249 = vstv %s6248
        %v6250 = vmul.f32 %v6249, %v6176
        %v6251 = vmul.f32 %v6249, %v6177
        %v6252 = vadd.f32 %v6246, %v6250
        %v6253 = vadd.f32 %v6247, %v6251
        %s6254 = sld [smem:[#allocation6 + $0x51]]
        %v6255 = vstv %s6254
        %v6256 = vmul.f32 %v6255, %v6186
        %v6257 = vmul.f32 %v6255, %v6187
        %v6258 = vadd.f32 %v6252, %v6256
        %v6259 = vadd.f32 %v6253, %v6257
        %s6260 = sld [smem:[#allocation6 + $0x58]]
        %v6261 = vstv %s6260
        %v6262 = vmul.f32 %v6261, %v6156
        %v6263 = vmul.f32 %v6261, %v6157
        %v6264 = vadd.f32 %v6133, %v6262
        %v6265 = vadd.f32 %v6134, %v6263
        %s6266 = sld [smem:[#allocation6 + $0x5f]]
        %v6267 = vstv %s6266
        %v6268 = vmul.f32 %v6267, %v6166
        %v6269 = vmul.f32 %v6267, %v6167
        %v6270 = vadd.f32 %v6264, %v6268
        %v6271 = vadd.f32 %v6265, %v6269
        %s6272 = sld [smem:[#allocation6 + $0x66]]
        %v6273 = vstv %s6272
        %v6274 = vmul.f32 %v6273, %v6176
        %v6275 = vmul.f32 %v6273, %v6177
        %v6276 = vadd.f32 %v6270, %v6274
        %v6277 = vadd.f32 %v6271, %v6275
        %s6278 = sld [smem:[#allocation6 + $0x6d]]
        %v6279 = vstv %s6278
        %v6280 = vmul.f32 %v6279, %v6186
        %v6281 = vmul.f32 %v6279, %v6187
        %v6282 = vadd.f32 %v6276, %v6280
        %v6283 = vadd.f32 %v6277, %v6281
        %s6284 = scalar_lea.vmem %s1, 5
        %v6285 = vld [vmem:[%s6284] ss:$8 sm:$0x7]
        %6286 = vrot.lane.b32.xlu0 %v5382, 126
        %v6287 = vpop.permute.xlu0 %6286
        %6288 = vrot.lane.b32.xlu0 %v5386, 126
        %v6289 = vpop.permute.xlu0 %6288
        %6290 = vrot.lane.b32.xlu0 %v5390, 126
        %v6291 = vpop.permute.xlu0 %6290
        %v6292 = vsel %vm5003, %v6289, %v6291
        %v6293 = vsel %vm5003, %v6287, %v6289
        %v6295 = vlaneseq
        %v6296 = vshrl.u32 %v6295, 7
        %v6297 = vsub.s32 0, %v6296
        %v6298 = vrot.slane %v6285, %v6297
        %v6299 = vlaneseq
        %v6300 = vshrl.u32 %v6299, 7
        %v6301 = vsub.s32 1, %v6300
        %v6302 = vrot.slane %v6285, %v6301
        %v6305 = vmul.f32 %v6293, %v6298
        %v6306 = vmul.f32 %v6292, %v6302
        %6307 = vrot.lane.b32.xlu0 %v5419, 126
        %v6308 = vpop.permute.xlu0 %6307
        %6309 = vrot.lane.b32.xlu0 %v5423, 126
        %v6310 = vpop.permute.xlu0 %6309
        %6311 = vrot.lane.b32.xlu0 %v5427, 126
        %v6312 = vpop.permute.xlu0 %6311
        %v6313 = vsel %vm5003, %v6310, %v6312
        %v6314 = vsel %vm5003, %v6308, %v6310
        %v6315 = vmul.f32 %v6314, %v6298
        %v6316 = vmul.f32 %v6313, %v6302
        %6317 = vrot.lane.b32.xlu0 %v5445, 126
        %v6318 = vpop.permute.xlu0 %6317
        %6319 = vrot.lane.b32.xlu0 %v5449, 126
        %v6320 = vpop.permute.xlu0 %6319
        %6321 = vrot.lane.b32.xlu0 %v5453, 126
        %v6322 = vpop.permute.xlu0 %6321
        %v6323 = vsel %vm5003, %v6320, %v6322
        %v6324 = vsel %vm5003, %v6318, %v6320
        %v6325 = vmul.f32 %v6324, %v6298
        %v6326 = vmul.f32 %v6323, %v6302
        %6327 = vrot.lane.b32.xlu0 %v5471, 126
        %v6328 = vpop.permute.xlu0 %6327
        %6329 = vrot.lane.b32.xlu0 %v5475, 126
        %v6330 = vpop.permute.xlu0 %6329
        %6331 = vrot.lane.b32.xlu0 %v5479, 126
        %v6332 = vpop.permute.xlu0 %6331
        %v6333 = vsel %vm5003, %v6330, %v6332
        %v6334 = vsel %vm5003, %v6328, %v6330
        %v6335 = vmul.f32 %v6334, %v6298
        %v6336 = vmul.f32 %v6333, %v6302
        %s6337 = sld [smem:[#allocation6 + $0x5]]
        %v6338 = vstv %s6337
        %v6339 = vmul.f32 %v6338, %v6305
        %v6340 = vmul.f32 %v6338, %v6306
        %v6341 = vadd.f32 %v6210, %v6339
        %v6342 = vadd.f32 %v6211, %v6340
        %s6343 = sld [smem:[#allocation6 + $0xc]]
        %v6344 = vstv %s6343
        %v6345 = vmul.f32 %v6344, %v6315
        %v6346 = vmul.f32 %v6344, %v6316
        %v6347 = vadd.f32 %v6341, %v6345
        %v6348 = vadd.f32 %v6342, %v6346
        %s6349 = sld [smem:[#allocation6 + $0x13]]
        %v6350 = vstv %s6349
        %v6351 = vmul.f32 %v6350, %v6325
        %v6352 = vmul.f32 %v6350, %v6326
        %v6353 = vadd.f32 %v6347, %v6351
        %v6354 = vadd.f32 %v6348, %v6352
        %s6355 = sld [smem:[#allocation6 + $0x1a]]
        %v6356 = vstv %s6355
        %v6357 = vmul.f32 %v6356, %v6335
        %v6358 = vmul.f32 %v6356, %v6336
        %v6359 = vadd.f32 %v6353, %v6357
        %v6360 = vadd.f32 %v6354, %v6358
        %s6361 = sld [smem:[#allocation6 + $0x21]]
        %v6362 = vstv %s6361
        %v6363 = vmul.f32 %v6362, %v6305
        %v6364 = vmul.f32 %v6362, %v6306
        %v6365 = vadd.f32 %v6234, %v6363
        %v6366 = vadd.f32 %v6235, %v6364
        %s6367 = sld [smem:[#allocation6 + $0x28]]
        %v6368 = vstv %s6367
        %v6369 = vmul.f32 %v6368, %v6315
        %v6370 = vmul.f32 %v6368, %v6316
        %v6371 = vadd.f32 %v6365, %v6369
        %v6372 = vadd.f32 %v6366, %v6370
        %s6373 = sld [smem:[#allocation6 + $0x2f]]
        %v6374 = vstv %s6373
        %v6375 = vmul.f32 %v6374, %v6325
        %v6376 = vmul.f32 %v6374, %v6326
        %v6377 = vadd.f32 %v6371, %v6375
        %v6378 = vadd.f32 %v6372, %v6376
        %s6379 = sld [smem:[#allocation6 + $0x36]]
        %v6380 = vstv %s6379
        %v6381 = vmul.f32 %v6380, %v6335
        %v6382 = vmul.f32 %v6380, %v6336
        %v6383 = vadd.f32 %v6377, %v6381
        %v6384 = vadd.f32 %v6378, %v6382
        %s6385 = sld [smem:[#allocation6 + $0x3d]]
        %v6386 = vstv %s6385
        %v6387 = vmul.f32 %v6386, %v6305
        %v6388 = vmul.f32 %v6386, %v6306
        %v6389 = vadd.f32 %v6258, %v6387
        %v6390 = vadd.f32 %v6259, %v6388
        %s6391 = sld [smem:[#allocation6 + $0x44]]
        %v6392 = vstv %s6391
        %v6393 = vmul.f32 %v6392, %v6315
        %v6394 = vmul.f32 %v6392, %v6316
        %v6395 = vadd.f32 %v6389, %v6393
        %v6396 = vadd.f32 %v6390, %v6394
        %s6397 = sld [smem:[#allocation6 + $0x4b]]
        %v6398 = vstv %s6397
        %v6399 = vmul.f32 %v6398, %v6325
        %v6400 = vmul.f32 %v6398, %v6326
        %v6401 = vadd.f32 %v6395, %v6399
        %v6402 = vadd.f32 %v6396, %v6400
        %s6403 = sld [smem:[#allocation6 + $0x52]]
        %v6404 = vstv %s6403
        %v6405 = vmul.f32 %v6404, %v6335
        %v6406 = vmul.f32 %v6404, %v6336
        %v6407 = vadd.f32 %v6401, %v6405
        %v6408 = vadd.f32 %v6402, %v6406
        %s6409 = sld [smem:[#allocation6 + $0x59]]
        %v6410 = vstv %s6409
        %v6411 = vmul.f32 %v6410, %v6305
        %v6412 = vmul.f32 %v6410, %v6306
        %v6413 = vadd.f32 %v6282, %v6411
        %v6414 = vadd.f32 %v6283, %v6412
        %s6415 = sld [smem:[#allocation6 + $0x60]]
        %v6416 = vstv %s6415
        %v6417 = vmul.f32 %v6416, %v6315
        %v6418 = vmul.f32 %v6416, %v6316
        %v6419 = vadd.f32 %v6413, %v6417
        %v6420 = vadd.f32 %v6414, %v6418
        %s6421 = sld [smem:[#allocation6 + $0x67]]
        %v6422 = vstv %s6421
        %v6423 = vmul.f32 %v6422, %v6325
        %v6424 = vmul.f32 %v6422, %v6326
        %v6425 = vadd.f32 %v6419, %v6423
        %v6426 = vadd.f32 %v6420, %v6424
        %s6427 = sld [smem:[#allocation6 + $0x6e]]
        %v6428 = vstv %s6427
        %v6429 = vmul.f32 %v6428, %v6335
        %v6430 = vmul.f32 %v6428, %v6336
        %v6431 = vadd.f32 %v6425, %v6429
        %v6432 = vadd.f32 %v6426, %v6430
        %s6433 = scalar_lea.vmem %s1, 6
        %v6434 = vld [vmem:[%s6433] ss:$8 sm:$0x7]
        %6435 = vrot.lane.b32.xlu0 %v5382, 125
        %v6436 = vpop.permute.xlu0 %6435
        %6437 = vrot.lane.b32.xlu0 %v5386, 125
        %v6438 = vpop.permute.xlu0 %6437
        %6439 = vrot.lane.b32.xlu0 %v5390, 125
        %v6440 = vpop.permute.xlu0 %6439
        %v6441 = vsel %vm5168, %v6438, %v6440
        %v6442 = vsel %vm5168, %v6436, %v6438
        %v6444 = vlaneseq
        %v6445 = vshrl.u32 %v6444, 7
        %v6446 = vsub.s32 0, %v6445
        %v6447 = vrot.slane %v6434, %v6446
        %v6448 = vlaneseq
        %v6449 = vshrl.u32 %v6448, 7
        %v6450 = vsub.s32 1, %v6449
        %v6451 = vrot.slane %v6434, %v6450
        %v6454 = vmul.f32 %v6442, %v6447
        %v6455 = vmul.f32 %v6441, %v6451
        %6456 = vrot.lane.b32.xlu0 %v5419, 125
        %v6457 = vpop.permute.xlu0 %6456
        %6458 = vrot.lane.b32.xlu0 %v5423, 125
        %v6459 = vpop.permute.xlu0 %6458
        %6460 = vrot.lane.b32.xlu0 %v5427, 125
        %v6461 = vpop.permute.xlu0 %6460
        %v6462 = vsel %vm5168, %v6459, %v6461
        %v6463 = vsel %vm5168, %v6457, %v6459
        %v6464 = vmul.f32 %v6463, %v6447
        %v6465 = vmul.f32 %v6462, %v6451
        %6466 = vrot.lane.b32.xlu0 %v5445, 125
        %v6467 = vpop.permute.xlu0 %6466
        %6468 = vrot.lane.b32.xlu0 %v5449, 125
        %v6469 = vpop.permute.xlu0 %6468
        %6470 = vrot.lane.b32.xlu0 %v5453, 125
        %v6471 = vpop.permute.xlu0 %6470
        %v6472 = vsel %vm5168, %v6469, %v6471
        %v6473 = vsel %vm5168, %v6467, %v6469
        %v6474 = vmul.f32 %v6473, %v6447
        %v6475 = vmul.f32 %v6472, %v6451
        %6476 = vrot.lane.b32.xlu0 %v5471, 125
        %v6477 = vpop.permute.xlu0 %6476
        %6478 = vrot.lane.b32.xlu0 %v5475, 125
        %v6479 = vpop.permute.xlu0 %6478
        %6480 = vrot.lane.b32.xlu0 %v5479, 125
        %v6481 = vpop.permute.xlu0 %6480
        %v6482 = vsel %vm5168, %v6479, %v6481
        %v6483 = vsel %vm5168, %v6477, %v6479
        %v6484 = vmul.f32 %v6483, %v6447
        %v6485 = vmul.f32 %v6482, %v6451
        %s6486 = sld [smem:[#allocation6 + $0x6]]
        %v6487 = vstv %s6486
        %v6488 = vmul.f32 %v6487, %v6454
        %v6489 = vmul.f32 %v6487, %v6455
        %v6490 = vadd.f32 %v6359, %v6488
        %v6491 = vadd.f32 %v6360, %v6489
        %s6492 = sld [smem:[#allocation6 + $0xd]]
        %v6493 = vstv %s6492
        %v6494 = vmul.f32 %v6493, %v6464
        %v6495 = vmul.f32 %v6493, %v6465
        %v6496 = vadd.f32 %v6490, %v6494
        %v6497 = vadd.f32 %v6491, %v6495
        %s6498 = sld [smem:[#allocation6 + $0x14]]
        %v6499 = vstv %s6498
        %v6500 = vmul.f32 %v6499, %v6474
        %v6501 = vmul.f32 %v6499, %v6475
        %v6502 = vadd.f32 %v6496, %v6500
        %v6503 = vadd.f32 %v6497, %v6501
        %s6504 = sld [smem:[#allocation6 + $0x1b]]
        %v6505 = vstv %s6504
        %v6506 = vmul.f32 %v6505, %v6484
        %v6507 = vmul.f32 %v6505, %v6485
        %v6508 = vadd.f32 %v6502, %v6506
        %v6509 = vadd.f32 %v6503, %v6507
        %s6510 = sld [smem:[#allocation6 + $0x22]]
        %v6511 = vstv %s6510
        %v6512 = vmul.f32 %v6511, %v6454
        %v6513 = vmul.f32 %v6511, %v6455
        %v6514 = vadd.f32 %v6383, %v6512
        %v6515 = vadd.f32 %v6384, %v6513
        %s6516 = sld [smem:[#allocation6 + $0x29]]
        %v6517 = vstv %s6516
        %v6518 = vmul.f32 %v6517, %v6464
        %v6519 = vmul.f32 %v6517, %v6465
        %v6520 = vadd.f32 %v6514, %v6518
        %v6521 = vadd.f32 %v6515, %v6519
        %s6522 = sld [smem:[#allocation6 + $0x30]]
        %v6523 = vstv %s6522
        %v6524 = vmul.f32 %v6523, %v6474
        %v6525 = vmul.f32 %v6523, %v6475
        %v6526 = vadd.f32 %v6520, %v6524
        %v6527 = vadd.f32 %v6521, %v6525
        %s6528 = sld [smem:[#allocation6 + $0x37]]
        %v6529 = vstv %s6528
        %v6530 = vmul.f32 %v6529, %v6484
        %v6531 = vmul.f32 %v6529, %v6485
        %v6532 = vadd.f32 %v6526, %v6530
        %v6533 = vadd.f32 %v6527, %v6531
        %s6534 = sld [smem:[#allocation6 + $0x3e]]
        %v6535 = vstv %s6534
        %v6536 = vmul.f32 %v6535, %v6454
        %v6537 = vmul.f32 %v6535, %v6455
        %v6538 = vadd.f32 %v6407, %v6536
        %v6539 = vadd.f32 %v6408, %v6537
        %s6540 = sld [smem:[#allocation6 + $0x45]]
        %v6541 = vstv %s6540
        %v6542 = vmul.f32 %v6541, %v6464
        %v6543 = vmul.f32 %v6541, %v6465
        %v6544 = vadd.f32 %v6538, %v6542
        %v6545 = vadd.f32 %v6539, %v6543
        %s6546 = sld [smem:[#allocation6 + $0x4c]]
        %v6547 = vstv %s6546
        %v6548 = vmul.f32 %v6547, %v6474
        %v6549 = vmul.f32 %v6547, %v6475
        %v6550 = vadd.f32 %v6544, %v6548
        %v6551 = vadd.f32 %v6545, %v6549
        %s6552 = sld [smem:[#allocation6 + $0x53]]
        %v6553 = vstv %s6552
        %v6554 = vmul.f32 %v6553, %v6484
        %v6555 = vmul.f32 %v6553, %v6485
        %v6556 = vadd.f32 %v6550, %v6554
        %v6557 = vadd.f32 %v6551, %v6555
        %s6558 = sld [smem:[#allocation6 + $0x5a]]
        %v6559 = vstv %s6558
        %v6560 = vmul.f32 %v6559, %v6454
        %v6561 = vmul.f32 %v6559, %v6455
        %v6562 = vadd.f32 %v6431, %v6560
        %v6563 = vadd.f32 %v6432, %v6561
        %s6564 = sld [smem:[#allocation6 + $0x61]]
        %v6565 = vstv %s6564
        %v6566 = vmul.f32 %v6565, %v6464
        %v6567 = vmul.f32 %v6565, %v6465
        %v6568 = vadd.f32 %v6562, %v6566
        %v6569 = vadd.f32 %v6563, %v6567
        %s6570 = sld [smem:[#allocation6 + $0x68]]
        %v6571 = vstv %s6570
        %v6572 = vmul.f32 %v6571, %v6474
        %v6573 = vmul.f32 %v6571, %v6475
        %v6574 = vadd.f32 %v6568, %v6572
        %v6575 = vadd.f32 %v6569, %v6573
        %s6576 = sld [smem:[#allocation6 + $0x6f]]
        %v6577 = vstv %s6576
        %v6578 = vmul.f32 %v6577, %v6484
        %v6579 = vmul.f32 %v6577, %v6485
        %v6580 = vadd.f32 %v6574, %v6578
        %v6581 = vadd.f32 %v6575, %v6579
        %s6582 = sld [smem:[#allocation7]]
        %v6583 = vstv %s6582
        %v6584 = vadd.f32 %v6508, %v6583
        %v6585 = vadd.f32 %v6509, %v6583
        %s6586 = sld [smem:[#allocation7 + $0x1]]
        %v6587 = vstv %s6586
        %v6588 = vadd.f32 %v6532, %v6587
        %v6589 = vadd.f32 %v6533, %v6587
        %s6590 = sld [smem:[#allocation7 + $0x2]]
        %v6591 = vstv %s6590
        %v6592 = vadd.f32 %v6556, %v6591
        %v6593 = vadd.f32 %v6557, %v6591
        %s6594 = sld [smem:[#allocation7 + $0x3]]
        %v6595 = vstv %s6594
        %v6596 = vadd.f32 %v6580, %v6595
        %v6597 = vadd.f32 %v6581, %v6595
        %s6598 = sld [smem:[#allocation12]]
        %v6599 = vstv %s6598
        %v6600 = vmul.f32 %v6599, %v5365
        %v6601 = vmul.f32 %v6599, %v5366
        %s6602 = sld [smem:[#allocation12 + $0x7]]
        %v6603 = vstv %s6602
        %v6604 = vmul.f32 %v6603, %v5368
        %v6605 = vmul.f32 %v6603, %v5369
        %v6606 = vadd.f32 %v6600, %v6604
        %v6607 = vadd.f32 %v6601, %v6605
        %s6608 = sld [smem:[#allocation12 + $0xe]]
        %v6609 = vstv %s6608
        %v6610 = vmul.f32 %v6609, %v5371
        %v6611 = vmul.f32 %v6609, %v5372
        %v6612 = vadd.f32 %v6606, %v6610
        %v6613 = vadd.f32 %v6607, %v6611
        %s6614 = sld [smem:[#allocation12 + $0x15]]
        %v6615 = vstv %s6614
        %v6616 = vmul.f32 %v6615, %v5374
        %v6617 = vmul.f32 %v6615, %v5375
        %v6618 = vadd.f32 %v6612, %v6616
        %v6619 = vadd.f32 %v6613, %v6617
        %s6620 = sld [smem:[#allocation12 + $0x1c]]
        %v6621 = vstv %s6620
        %v6622 = vmul.f32 %v6621, %v5365
        %v6623 = vmul.f32 %v6621, %v5366
        %s6624 = sld [smem:[#allocation12 + $0x23]]
        %v6625 = vstv %s6624
        %v6626 = vmul.f32 %v6625, %v5368
        %v6627 = vmul.f32 %v6625, %v5369
        %v6628 = vadd.f32 %v6622, %v6626
        %v6629 = vadd.f32 %v6623, %v6627
        %s6630 = sld [smem:[#allocation12 + $0x2a]]
        %v6631 = vstv %s6630
        %v6632 = vmul.f32 %v6631, %v5371
        %v6633 = vmul.f32 %v6631, %v5372
        %v6634 = vadd.f32 %v6628, %v6632
        %v6635 = vadd.f32 %v6629, %v6633
        %s6636 = sld [smem:[#allocation12 + $0x31]]
        %v6637 = vstv %s6636
        %v6638 = vmul.f32 %v6637, %v5374
        %v6639 = vmul.f32 %v6637, %v5375
        %v6640 = vadd.f32 %v6634, %v6638
        %v6641 = vadd.f32 %v6635, %v6639
        %s6642 = sld [smem:[#allocation12 + $0x38]]
        %v6643 = vstv %s6642
        %v6644 = vmul.f32 %v6643, %v5365
        %v6645 = vmul.f32 %v6643, %v5366
        %s6646 = sld [smem:[#allocation12 + $0x3f]]
        %v6647 = vstv %s6646
        %v6648 = vmul.f32 %v6647, %v5368
        %v6649 = vmul.f32 %v6647, %v5369
        %v6650 = vadd.f32 %v6644, %v6648
        %v6651 = vadd.f32 %v6645, %v6649
        %s6652 = sld [smem:[#allocation12 + $0x46]]
        %v6653 = vstv %s6652
        %v6654 = vmul.f32 %v6653, %v5371
        %v6655 = vmul.f32 %v6653, %v5372
        %v6656 = vadd.f32 %v6650, %v6654
        %v6657 = vadd.f32 %v6651, %v6655
        %s6658 = sld [smem:[#allocation12 + $0x4d]]
        %v6659 = vstv %s6658
        %v6660 = vmul.f32 %v6659, %v5374
        %v6661 = vmul.f32 %v6659, %v5375
        %v6662 = vadd.f32 %v6656, %v6660
        %v6663 = vadd.f32 %v6657, %v6661
        %s6664 = sld [smem:[#allocation12 + $0x54]]
        %v6665 = vstv %s6664
        %v6666 = vmul.f32 %v6665, %v5365
        %v6667 = vmul.f32 %v6665, %v5366
        %s6668 = sld [smem:[#allocation12 + $0x5b]]
        %v6669 = vstv %s6668
        %v6670 = vmul.f32 %v6669, %v5368
        %v6671 = vmul.f32 %v6669, %v5369
        %v6672 = vadd.f32 %v6666, %v6670
        %v6673 = vadd.f32 %v6667, %v6671
        %s6674 = sld [smem:[#allocation12 + $0x62]]
        %v6675 = vstv %s6674
        %v6676 = vmul.f32 %v6675, %v5371
        %v6677 = vmul.f32 %v6675, %v5372
        %v6678 = vadd.f32 %v6672, %v6676
        %v6679 = vadd.f32 %v6673, %v6677
        %s6680 = sld [smem:[#allocation12 + $0x69]]
        %v6681 = vstv %s6680
        %v6682 = vmul.f32 %v6681, %v5374
        %v6683 = vmul.f32 %v6681, %v5375
        %v6684 = vadd.f32 %v6678, %v6682
        %v6685 = vadd.f32 %v6679, %v6683
        %6686 = vrot.lane.b32.xlu0 %v5365, 112
        %v6687 = vpop.permute.xlu0 %6686
        %6688 = vrot.lane.b32.xlu0 %v5366, 112
        %v6689 = vpop.permute.xlu0 %6688
        %6690 = vrot.lane.b32.xlu0 %v5367, 112
        %v6691 = vpop.permute.xlu0 %6690
        %v6692 = vsel %vm553, %v6689, %v6691
        %v6693 = vsel %vm553, %v6687, %v6689
        %6694 = vrot.lane.b32.xlu0 %v5368, 112
        %v6695 = vpop.permute.xlu0 %6694
        %6696 = vrot.lane.b32.xlu0 %v5369, 112
        %v6697 = vpop.permute.xlu0 %6696
        %6698 = vrot.lane.b32.xlu0 %v5370, 112
        %v6699 = vpop.permute.xlu0 %6698
        %v6700 = vsel %vm553, %v6697, %v6699
        %v6701 = vsel %vm553, %v6695, %v6697
        %6702 = vrot.lane.b32.xlu0 %v5371, 112
        %v6703 = vpop.permute.xlu0 %6702
        %6704 = vrot.lane.b32.xlu0 %v5372, 112
        %v6705 = vpop.permute.xlu0 %6704
        %6706 = vrot.lane.b32.xlu0 %v5373, 112
        %v6707 = vpop.permute.xlu0 %6706
        %v6708 = vsel %vm553, %v6705, %v6707
        %v6709 = vsel %vm553, %v6703, %v6705
        %6710 = vrot.lane.b32.xlu0 %v5374, 112
        %v6711 = vpop.permute.xlu0 %6710
        %6712 = vrot.lane.b32.xlu0 %v5375, 112
        %v6713 = vpop.permute.xlu0 %6712
        %6714 = vrot.lane.b32.xlu0 %v5376, 112
        %v6715 = vpop.permute.xlu0 %6714
        %v6716 = vsel %vm553, %v6713, %v6715
        %v6717 = vsel %vm553, %v6711, %v6713
        %s6718 = sld [smem:[#allocation12 + $0x1]]
        %v6719 = vstv %s6718
        %v6720 = vmul.f32 %v6719, %v6693
        %v6721 = vmul.f32 %v6719, %v6692
        %v6722 = vadd.f32 %v6618, %v6720
        %v6723 = vadd.f32 %v6619, %v6721
        %s6724 = sld [smem:[#allocation12 + $0x8]]
        %v6725 = vstv %s6724
        %v6726 = vmul.f32 %v6725, %v6701
        %v6727 = vmul.f32 %v6725, %v6700
        %v6728 = vadd.f32 %v6722, %v6726
        %v6729 = vadd.f32 %v6723, %v6727
        %s6730 = sld [smem:[#allocation12 + $0xf]]
        %v6731 = vstv %s6730
        %v6732 = vmul.f32 %v6731, %v6709
        %v6733 = vmul.f32 %v6731, %v6708
        %v6734 = vadd.f32 %v6728, %v6732
        %v6735 = vadd.f32 %v6729, %v6733
        %s6736 = sld [smem:[#allocation12 + $0x16]]
        %v6737 = vstv %s6736
        %v6738 = vmul.f32 %v6737, %v6717
        %v6739 = vmul.f32 %v6737, %v6716
        %v6740 = vadd.f32 %v6734, %v6738
        %v6741 = vadd.f32 %v6735, %v6739
        %s6742 = sld [smem:[#allocation12 + $0x1d]]
        %v6743 = vstv %s6742
        %v6744 = vmul.f32 %v6743, %v6693
        %v6745 = vmul.f32 %v6743, %v6692
        %v6746 = vadd.f32 %v6640, %v6744
        %v6747 = vadd.f32 %v6641, %v6745
        %s6748 = sld [smem:[#allocation12 + $0x24]]
        %v6749 = vstv %s6748
        %v6750 = vmul.f32 %v6749, %v6701
        %v6751 = vmul.f32 %v6749, %v6700
        %v6752 = vadd.f32 %v6746, %v6750
        %v6753 = vadd.f32 %v6747, %v6751
        %s6754 = sld [smem:[#allocation12 + $0x2b]]
        %v6755 = vstv %s6754
        %v6756 = vmul.f32 %v6755, %v6709
        %v6757 = vmul.f32 %v6755, %v6708
        %v6758 = vadd.f32 %v6752, %v6756
        %v6759 = vadd.f32 %v6753, %v6757
        %s6760 = sld [smem:[#allocation12 + $0x32]]
        %v6761 = vstv %s6760
        %v6762 = vmul.f32 %v6761, %v6717
        %v6763 = vmul.f32 %v6761, %v6716
        %v6764 = vadd.f32 %v6758, %v6762
        %v6765 = vadd.f32 %v6759, %v6763
        %s6766 = sld [smem:[#allocation12 + $0x39]]
        %v6767 = vstv %s6766
        %v6768 = vmul.f32 %v6767, %v6693
        %v6769 = vmul.f32 %v6767, %v6692
        %v6770 = vadd.f32 %v6662, %v6768
        %v6771 = vadd.f32 %v6663, %v6769
        %s6772 = sld [smem:[#allocation12 + $0x40]]
        %v6773 = vstv %s6772
        %v6774 = vmul.f32 %v6773, %v6701
        %v6775 = vmul.f32 %v6773, %v6700
        %v6776 = vadd.f32 %v6770, %v6774
        %v6777 = vadd.f32 %v6771, %v6775
        %s6778 = sld [smem:[#allocation12 + $0x47]]
        %v6779 = vstv %s6778
        %v6780 = vmul.f32 %v6779, %v6709
        %v6781 = vmul.f32 %v6779, %v6708
        %v6782 = vadd.f32 %v6776, %v6780
        %v6783 = vadd.f32 %v6777, %v6781
        %s6784 = sld [smem:[#allocation12 + $0x4e]]
        %v6785 = vstv %s6784
        %v6786 = vmul.f32 %v6785, %v6717
        %v6787 = vmul.f32 %v6785, %v6716
        %v6788 = vadd.f32 %v6782, %v6786
        %v6789 = vadd.f32 %v6783, %v6787
        %s6790 = sld [smem:[#allocation12 + $0x55]]
        %v6791 = vstv %s6790
        %v6792 = vmul.f32 %v6791, %v6693
        %v6793 = vmul.f32 %v6791, %v6692
        %v6794 = vadd.f32 %v6684, %v6792
        %v6795 = vadd.f32 %v6685, %v6793
        %s6796 = sld [smem:[#allocation12 + $0x5c]]
        %v6797 = vstv %s6796
        %v6798 = vmul.f32 %v6797, %v6701
        %v6799 = vmul.f32 %v6797, %v6700
        %v6800 = vadd.f32 %v6794, %v6798
        %v6801 = vadd.f32 %v6795, %v6799
        %s6802 = sld [smem:[#allocation12 + $0x63]]
        %v6803 = vstv %s6802
        %v6804 = vmul.f32 %v6803, %v6709
        %v6805 = vmul.f32 %v6803, %v6708
        %v6806 = vadd.f32 %v6800, %v6804
        %v6807 = vadd.f32 %v6801, %v6805
        %s6808 = sld [smem:[#allocation12 + $0x6a]]
        %v6809 = vstv %s6808
        %v6810 = vmul.f32 %v6809, %v6717
        %v6811 = vmul.f32 %v6809, %v6716
        %v6812 = vadd.f32 %v6806, %v6810
        %v6813 = vadd.f32 %v6807, %v6811
        %6814 = vrot.lane.b32.xlu0 %v5365, 96
        %v6815 = vpop.permute.xlu0 %6814
        %6816 = vrot.lane.b32.xlu0 %v5366, 96
        %v6817 = vpop.permute.xlu0 %6816
        %6818 = vrot.lane.b32.xlu0 %v5367, 96
        %v6819 = vpop.permute.xlu0 %6818
        %v6820 = vsel %vm1166, %v6817, %v6819
        %v6821 = vsel %vm1166, %v6815, %v6817
        %6822 = vrot.lane.b32.xlu0 %v5368, 96
        %v6823 = vpop.permute.xlu0 %6822
        %6824 = vrot.lane.b32.xlu0 %v5369, 96
        %v6825 = vpop.permute.xlu0 %6824
        %6826 = vrot.lane.b32.xlu0 %v5370, 96
        %v6827 = vpop.permute.xlu0 %6826
        %v6828 = vsel %vm1166, %v6825, %v6827
        %v6829 = vsel %vm1166, %v6823, %v6825
        %6830 = vrot.lane.b32.xlu0 %v5371, 96
        %v6831 = vpop.permute.xlu0 %6830
        %6832 = vrot.lane.b32.xlu0 %v5372, 96
        %v6833 = vpop.permute.xlu0 %6832
        %6834 = vrot.lane.b32.xlu0 %v5373, 96
        %v6835 = vpop.permute.xlu0 %6834
        %v6836 = vsel %vm1166, %v6833, %v6835
        %v6837 = vsel %vm1166, %v6831, %v6833
        %6838 = vrot.lane.b32.xlu0 %v5374, 96
        %v6839 = vpop.permute.xlu0 %6838
        %6840 = vrot.lane.b32.xlu0 %v5375, 96
        %v6841 = vpop.permute.xlu0 %6840
        %6842 = vrot.lane.b32.xlu0 %v5376, 96
        %v6843 = vpop.permute.xlu0 %6842
        %v6844 = vsel %vm1166, %v6841, %v6843
        %v6845 = vsel %vm1166, %v6839, %v6841
        %s6846 = sld [smem:[#allocation12 + $0x2]]
        %v6847 = vstv %s6846
        %v6848 = vmul.f32 %v6847, %v6821
        %v6849 = vmul.f32 %v6847, %v6820
        %v6850 = vadd.f32 %v6740, %v6848
        %v6851 = vadd.f32 %v6741, %v6849
        %s6852 = sld [smem:[#allocation12 + $0x9]]
        %v6853 = vstv %s6852
        %v6854 = vmul.f32 %v6853, %v6829
        %v6855 = vmul.f32 %v6853, %v6828
        %v6856 = vadd.f32 %v6850, %v6854
        %v6857 = vadd.f32 %v6851, %v6855
        %s6858 = sld [smem:[#allocation12 + $0x10]]
        %v6859 = vstv %s6858
        %v6860 = vmul.f32 %v6859, %v6837
        %v6861 = vmul.f32 %v6859, %v6836
        %v6862 = vadd.f32 %v6856, %v6860
        %v6863 = vadd.f32 %v6857, %v6861
        %s6864 = sld [smem:[#allocation12 + $0x17]]
        %v6865 = vstv %s6864
        %v6866 = vmul.f32 %v6865, %v6845
        %v6867 = vmul.f32 %v6865, %v6844
        %v6868 = vadd.f32 %v6862, %v6866
        %v6869 = vadd.f32 %v6863, %v6867
        %s6870 = sld [smem:[#allocation12 + $0x1e]]
        %v6871 = vstv %s6870
        %v6872 = vmul.f32 %v6871, %v6821
        %v6873 = vmul.f32 %v6871, %v6820
        %v6874 = vadd.f32 %v6764, %v6872
        %v6875 = vadd.f32 %v6765, %v6873
        %s6876 = sld [smem:[#allocation12 + $0x25]]
        %v6877 = vstv %s6876
        %v6878 = vmul.f32 %v6877, %v6829
        %v6879 = vmul.f32 %v6877, %v6828
        %v6880 = vadd.f32 %v6874, %v6878
        %v6881 = vadd.f32 %v6875, %v6879
        %s6882 = sld [smem:[#allocation12 + $0x2c]]
        %v6883 = vstv %s6882
        %v6884 = vmul.f32 %v6883, %v6837
        %v6885 = vmul.f32 %v6883, %v6836
        %v6886 = vadd.f32 %v6880, %v6884
        %v6887 = vadd.f32 %v6881, %v6885
        %s6888 = sld [smem:[#allocation12 + $0x33]]
        %v6889 = vstv %s6888
        %v6890 = vmul.f32 %v6889, %v6845
        %v6891 = vmul.f32 %v6889, %v6844
        %v6892 = vadd.f32 %v6886, %v6890
        %v6893 = vadd.f32 %v6887, %v6891
        %s6894 = sld [smem:[#allocation12 + $0x3a]]
        %v6895 = vstv %s6894
        %v6896 = vmul.f32 %v6895, %v6821
        %v6897 = vmul.f32 %v6895, %v6820
        %v6898 = vadd.f32 %v6788, %v6896
        %v6899 = vadd.f32 %v6789, %v6897
        %s6900 = sld [smem:[#allocation12 + $0x41]]
        %v6901 = vstv %s6900
        %v6902 = vmul.f32 %v6901, %v6829
        %v6903 = vmul.f32 %v6901, %v6828
        %v6904 = vadd.f32 %v6898, %v6902
        %v6905 = vadd.f32 %v6899, %v6903
        %s6906 = sld [smem:[#allocation12 + $0x48]]
        %v6907 = vstv %s6906
        %v6908 = vmul.f32 %v6907, %v6837
        %v6909 = vmul.f32 %v6907, %v6836
        %v6910 = vadd.f32 %v6904, %v6908
        %v6911 = vadd.f32 %v6905, %v6909
        %s6912 = sld [smem:[#allocation12 + $0x4f]]
        %v6913 = vstv %s6912
        %v6914 = vmul.f32 %v6913, %v6845
        %v6915 = vmul.f32 %v6913, %v6844
        %v6916 = vadd.f32 %v6910, %v6914
        %v6917 = vadd.f32 %v6911, %v6915
        %s6918 = sld [smem:[#allocation12 + $0x56]]
        %v6919 = vstv %s6918
        %v6920 = vmul.f32 %v6919, %v6821
        %v6921 = vmul.f32 %v6919, %v6820
        %v6922 = vadd.f32 %v6812, %v6920
        %v6923 = vadd.f32 %v6813, %v6921
        %s6924 = sld [smem:[#allocation12 + $0x5d]]
        %v6925 = vstv %s6924
        %v6926 = vmul.f32 %v6925, %v6829
        %v6927 = vmul.f32 %v6925, %v6828
        %v6928 = vadd.f32 %v6922, %v6926
        %v6929 = vadd.f32 %v6923, %v6927
        %s6930 = sld [smem:[#allocation12 + $0x64]]
        %v6931 = vstv %s6930
        %v6932 = vmul.f32 %v6931, %v6837
        %v6933 = vmul.f32 %v6931, %v6836
        %v6934 = vadd.f32 %v6928, %v6932
        %v6935 = vadd.f32 %v6929, %v6933
        %s6936 = sld [smem:[#allocation12 + $0x6b]]
        %v6937 = vstv %s6936
        %v6938 = vmul.f32 %v6937, %v6845
        %v6939 = vmul.f32 %v6937, %v6844
        %v6940 = vadd.f32 %v6934, %v6938
        %v6941 = vadd.f32 %v6935, %v6939
        %6942 = vrot.lane.b32.xlu0 %v5365, 80
        %v6943 = vpop.permute.xlu0 %6942
        %6944 = vrot.lane.b32.xlu0 %v5366, 80
        %v6945 = vpop.permute.xlu0 %6944
        %6946 = vrot.lane.b32.xlu0 %v5367, 80
        %v6947 = vpop.permute.xlu0 %6946
        %v6948 = vsel %vm1731, %v6945, %v6947
        %v6949 = vsel %vm1731, %v6943, %v6945
        %6950 = vrot.lane.b32.xlu0 %v5368, 80
        %v6951 = vpop.permute.xlu0 %6950
        %6952 = vrot.lane.b32.xlu0 %v5369, 80
        %v6953 = vpop.permute.xlu0 %6952
        %6954 = vrot.lane.b32.xlu0 %v5370, 80
        %v6955 = vpop.permute.xlu0 %6954
        %v6956 = vsel %vm1731, %v6953, %v6955
        %v6957 = vsel %vm1731, %v6951, %v6953
        %6958 = vrot.lane.b32.xlu0 %v5371, 80
        %v6959 = vpop.permute.xlu0 %6958
        %6960 = vrot.lane.b32.xlu0 %v5372, 80
        %v6961 = vpop.permute.xlu0 %6960
        %6962 = vrot.lane.b32.xlu0 %v5373, 80
        %v6963 = vpop.permute.xlu0 %6962
        %v6964 = vsel %vm1731, %v6961, %v6963
        %v6965 = vsel %vm1731, %v6959, %v6961
        %6966 = vrot.lane.b32.xlu0 %v5374, 80
        %v6967 = vpop.permute.xlu0 %6966
        %6968 = vrot.lane.b32.xlu0 %v5375, 80
        %v6969 = vpop.permute.xlu0 %6968
        %6970 = vrot.lane.b32.xlu0 %v5376, 80
        %v6971 = vpop.permute.xlu0 %6970
        %v6972 = vsel %vm1731, %v6969, %v6971
        %v6973 = vsel %vm1731, %v6967, %v6969
        %s6974 = sld [smem:[#allocation12 + $0x3]]
        %v6975 = vstv %s6974
        %v6976 = vmul.f32 %v6975, %v6949
        %v6977 = vmul.f32 %v6975, %v6948
        %v6978 = vadd.f32 %v6868, %v6976
        %v6979 = vadd.f32 %v6869, %v6977
        %s6980 = sld [smem:[#allocation12 + $0xa]]
        %v6981 = vstv %s6980
        %v6982 = vmul.f32 %v6981, %v6957
        %v6983 = vmul.f32 %v6981, %v6956
        %v6984 = vadd.f32 %v6978, %v6982
        %v6985 = vadd.f32 %v6979, %v6983
        %s6986 = sld [smem:[#allocation12 + $0x11]]
        %v6987 = vstv %s6986
        %v6988 = vmul.f32 %v6987, %v6965
        %v6989 = vmul.f32 %v6987, %v6964
        %v6990 = vadd.f32 %v6984, %v6988
        %v6991 = vadd.f32 %v6985, %v6989
        %s6992 = sld [smem:[#allocation12 + $0x18]]
        %v6993 = vstv %s6992
        %v6994 = vmul.f32 %v6993, %v6973
        %v6995 = vmul.f32 %v6993, %v6972
        %v6996 = vadd.f32 %v6990, %v6994
        %v6997 = vadd.f32 %v6991, %v6995
        %s6998 = sld [smem:[#allocation12 + $0x1f]]
        %v6999 = vstv %s6998
        %v7000 = vmul.f32 %v6999, %v6949
        %v7001 = vmul.f32 %v6999, %v6948
        %v7002 = vadd.f32 %v6892, %v7000
        %v7003 = vadd.f32 %v6893, %v7001
        %s7004 = sld [smem:[#allocation12 + $0x26]]
        %v7005 = vstv %s7004
        %v7006 = vmul.f32 %v7005, %v6957
        %v7007 = vmul.f32 %v7005, %v6956
        %v7008 = vadd.f32 %v7002, %v7006
        %v7009 = vadd.f32 %v7003, %v7007
        %s7010 = sld [smem:[#allocation12 + $0x2d]]
        %v7011 = vstv %s7010
        %v7012 = vmul.f32 %v7011, %v6965
        %v7013 = vmul.f32 %v7011, %v6964
        %v7014 = vadd.f32 %v7008, %v7012
        %v7015 = vadd.f32 %v7009, %v7013
        %s7016 = sld [smem:[#allocation12 + $0x34]]
        %v7017 = vstv %s7016
        %v7018 = vmul.f32 %v7017, %v6973
        %v7019 = vmul.f32 %v7017, %v6972
        %v7020 = vadd.f32 %v7014, %v7018
        %v7021 = vadd.f32 %v7015, %v7019
        %s7022 = sld [smem:[#allocation12 + $0x3b]]
        %v7023 = vstv %s7022
        %v7024 = vmul.f32 %v7023, %v6949
        %v7025 = vmul.f32 %v7023, %v6948
        %v7026 = vadd.f32 %v6916, %v7024
        %v7027 = vadd.f32 %v6917, %v7025
        %s7028 = sld [smem:[#allocation12 + $0x42]]
        %v7029 = vstv %s7028
        %v7030 = vmul.f32 %v7029, %v6957
        %v7031 = vmul.f32 %v7029, %v6956
        %v7032 = vadd.f32 %v7026, %v7030
        %v7033 = vadd.f32 %v7027, %v7031
        %s7034 = sld [smem:[#allocation12 + $0x49]]
        %v7035 = vstv %s7034
        %v7036 = vmul.f32 %v7035, %v6965
        %v7037 = vmul.f32 %v7035, %v6964
        %v7038 = vadd.f32 %v7032, %v7036
        %v7039 = vadd.f32 %v7033, %v7037
        %s7040 = sld [smem:[#allocation12 + $0x50]]
        %v7041 = vstv %s7040
        %v7042 = vmul.f32 %v7041, %v6973
        %v7043 = vmul.f32 %v7041, %v6972
        %v7044 = vadd.f32 %v7038, %v7042
        %v7045 = vadd.f32 %v7039, %v7043
        %s7046 = sld [smem:[#allocation12 + $0x57]]
        %v7047 = vstv %s7046
        %v7048 = vmul.f32 %v7047, %v6949
        %v7049 = vmul.f32 %v7047, %v6948
        %v7050 = vadd.f32 %v6940, %v7048
        %v7051 = vadd.f32 %v6941, %v7049
        %s7052 = sld [smem:[#allocation12 + $0x5e]]
        %v7053 = vstv %s7052
        %v7054 = vmul.f32 %v7053, %v6957
        %v7055 = vmul.f32 %v7053, %v6956
        %v7056 = vadd.f32 %v7050, %v7054
        %v7057 = vadd.f32 %v7051, %v7055
        %s7058 = sld [smem:[#allocation12 + $0x65]]
        %v7059 = vstv %s7058
        %v7060 = vmul.f32 %v7059, %v6965
        %v7061 = vmul.f32 %v7059, %v6964
        %v7062 = vadd.f32 %v7056, %v7060
        %v7063 = vadd.f32 %v7057, %v7061
        %s7064 = sld [smem:[#allocation12 + $0x6c]]
        %v7065 = vstv %s7064
        %v7066 = vmul.f32 %v7065, %v6973
        %v7067 = vmul.f32 %v7065, %v6972
        %v7068 = vadd.f32 %v7062, %v7066
        %v7069 = vadd.f32 %v7063, %v7067
        %7070 = vrot.lane.b32.xlu0 %v5365, 64
        %v7071 = vpop.permute.xlu0 %7070
        %7072 = vrot.lane.b32.xlu0 %v5366, 64
        %v7073 = vpop.permute.xlu0 %7072
        %7074 = vrot.lane.b32.xlu0 %v5367, 64
        %v7075 = vpop.permute.xlu0 %7074
        %v7076 = vsel %vm2296, %v7073, %v7075
        %v7077 = vsel %vm2296, %v7071, %v7073
        %7078 = vrot.lane.b32.xlu0 %v5368, 64
        %v7079 = vpop.permute.xlu0 %7078
        %7080 = vrot.lane.b32.xlu0 %v5369, 64
        %v7081 = vpop.permute.xlu0 %7080
        %7082 = vrot.lane.b32.xlu0 %v5370, 64
        %v7083 = vpop.permute.xlu0 %7082
        %v7084 = vsel %vm2296, %v7081, %v7083
        %v7085 = vsel %vm2296, %v7079, %v7081
        %7086 = vrot.lane.b32.xlu0 %v5371, 64
        %v7087 = vpop.permute.xlu0 %7086
        %7088 = vrot.lane.b32.xlu0 %v5372, 64
        %v7089 = vpop.permute.xlu0 %7088
        %7090 = vrot.lane.b32.xlu0 %v5373, 64
        %v7091 = vpop.permute.xlu0 %7090
        %v7092 = vsel %vm2296, %v7089, %v7091
        %v7093 = vsel %vm2296, %v7087, %v7089
        %7094 = vrot.lane.b32.xlu0 %v5374, 64
        %v7095 = vpop.permute.xlu0 %7094
        %7096 = vrot.lane.b32.xlu0 %v5375, 64
        %v7097 = vpop.permute.xlu0 %7096
        %7098 = vrot.lane.b32.xlu0 %v5376, 64
        %v7099 = vpop.permute.xlu0 %7098
        %v7100 = vsel %vm2296, %v7097, %v7099
        %v7101 = vsel %vm2296, %v7095, %v7097
        %s7102 = sld [smem:[#allocation12 + $0x4]]
        %v7103 = vstv %s7102
        %v7104 = vmul.f32 %v7103, %v7077
        %v7105 = vmul.f32 %v7103, %v7076
        %v7106 = vadd.f32 %v6996, %v7104
        %v7107 = vadd.f32 %v6997, %v7105
        %s7108 = sld [smem:[#allocation12 + $0xb]]
        %v7109 = vstv %s7108
        %v7110 = vmul.f32 %v7109, %v7085
        %v7111 = vmul.f32 %v7109, %v7084
        %v7112 = vadd.f32 %v7106, %v7110
        %v7113 = vadd.f32 %v7107, %v7111
        %s7114 = sld [smem:[#allocation12 + $0x12]]
        %v7115 = vstv %s7114
        %v7116 = vmul.f32 %v7115, %v7093
        %v7117 = vmul.f32 %v7115, %v7092
        %v7118 = vadd.f32 %v7112, %v7116
        %v7119 = vadd.f32 %v7113, %v7117
        %s7120 = sld [smem:[#allocation12 + $0x19]]
        %v7121 = vstv %s7120
        %v7122 = vmul.f32 %v7121, %v7101
        %v7123 = vmul.f32 %v7121, %v7100
        %v7124 = vadd.f32 %v7118, %v7122
        %v7125 = vadd.f32 %v7119, %v7123
        %s7126 = sld [smem:[#allocation12 + $0x20]]
        %v7127 = vstv %s7126
        %v7128 = vmul.f32 %v7127, %v7077
        %v7129 = vmul.f32 %v7127, %v7076
        %v7130 = vadd.f32 %v7020, %v7128
        %v7131 = vadd.f32 %v7021, %v7129
        %s7132 = sld [smem:[#allocation12 + $0x27]]
        %v7133 = vstv %s7132
        %v7134 = vmul.f32 %v7133, %v7085
        %v7135 = vmul.f32 %v7133, %v7084
        %v7136 = vadd.f32 %v7130, %v7134
        %v7137 = vadd.f32 %v7131, %v7135
        %s7138 = sld [smem:[#allocation12 + $0x2e]]
        %v7139 = vstv %s7138
        %v7140 = vmul.f32 %v7139, %v7093
        %v7141 = vmul.f32 %v7139, %v7092
        %v7142 = vadd.f32 %v7136, %v7140
        %v7143 = vadd.f32 %v7137, %v7141
        %s7144 = sld [smem:[#allocation12 + $0x35]]
        %v7145 = vstv %s7144
        %v7146 = vmul.f32 %v7145, %v7101
        %v7147 = vmul.f32 %v7145, %v7100
        %v7148 = vadd.f32 %v7142, %v7146
        %v7149 = vadd.f32 %v7143, %v7147
        %s7150 = sld [smem:[#allocation12 + $0x3c]]
        %v7151 = vstv %s7150
        %v7152 = vmul.f32 %v7151, %v7077
        %v7153 = vmul.f32 %v7151, %v7076
        %v7154 = vadd.f32 %v7044, %v7152
        %v7155 = vadd.f32 %v7045, %v7153
        %s7156 = sld [smem:[#allocation12 + $0x43]]
        %v7157 = vstv %s7156
        %v7158 = vmul.f32 %v7157, %v7085
        %v7159 = vmul.f32 %v7157, %v7084
        %v7160 = vadd.f32 %v7154, %v7158
        %v7161 = vadd.f32 %v7155, %v7159
        %s7162 = sld [smem:[#allocation12 + $0x4a]]
        %v7163 = vstv %s7162
        %v7164 = vmul.f32 %v7163, %v7093
        %v7165 = vmul.f32 %v7163, %v7092
        %v7166 = vadd.f32 %v7160, %v7164
        %v7167 = vadd.f32 %v7161, %v7165
        %s7168 = sld [smem:[#allocation12 + $0x51]]
        %v7169 = vstv %s7168
        %v7170 = vmul.f32 %v7169, %v7101
        %v7171 = vmul.f32 %v7169, %v7100
        %v7172 = vadd.f32 %v7166, %v7170
        %v7173 = vadd.f32 %v7167, %v7171
        %s7174 = sld [smem:[#allocation12 + $0x58]]
        %v7175 = vstv %s7174
        %v7176 = vmul.f32 %v7175, %v7077
        %v7177 = vmul.f32 %v7175, %v7076
        %v7178 = vadd.f32 %v7068, %v7176
        %v7179 = vadd.f32 %v7069, %v7177
        %s7180 = sld [smem:[#allocation12 + $0x5f]]
        %v7181 = vstv %s7180
        %v7182 = vmul.f32 %v7181, %v7085
        %v7183 = vmul.f32 %v7181, %v7084
        %v7184 = vadd.f32 %v7178, %v7182
        %v7185 = vadd.f32 %v7179, %v7183
        %s7186 = sld [smem:[#allocation12 + $0x66]]
        %v7187 = vstv %s7186
        %v7188 = vmul.f32 %v7187, %v7093
        %v7189 = vmul.f32 %v7187, %v7092
        %v7190 = vadd.f32 %v7184, %v7188
        %v7191 = vadd.f32 %v7185, %v7189
        %s7192 = sld [smem:[#allocation12 + $0x6d]]
        %v7193 = vstv %s7192
        %v7194 = vmul.f32 %v7193, %v7101
        %v7195 = vmul.f32 %v7193, %v7100
        %v7196 = vadd.f32 %v7190, %v7194
        %v7197 = vadd.f32 %v7191, %v7195
        %7198 = vrot.lane.b32.xlu0 %v5365, 48
        %v7199 = vpop.permute.xlu0 %7198
        %7200 = vrot.lane.b32.xlu0 %v5366, 48
        %v7201 = vpop.permute.xlu0 %7200
        %7202 = vrot.lane.b32.xlu0 %v5367, 48
        %v7203 = vpop.permute.xlu0 %7202
        %v7204 = vsel %vm2861, %v7201, %v7203
        %v7205 = vsel %vm2861, %v7199, %v7201
        %7206 = vrot.lane.b32.xlu0 %v5368, 48
        %v7207 = vpop.permute.xlu0 %7206
        %7208 = vrot.lane.b32.xlu0 %v5369, 48
        %v7209 = vpop.permute.xlu0 %7208
        %7210 = vrot.lane.b32.xlu0 %v5370, 48
        %v7211 = vpop.permute.xlu0 %7210
        %v7212 = vsel %vm2861, %v7209, %v7211
        %v7213 = vsel %vm2861, %v7207, %v7209
        %7214 = vrot.lane.b32.xlu0 %v5371, 48
        %v7215 = vpop.permute.xlu0 %7214
        %7216 = vrot.lane.b32.xlu0 %v5372, 48
        %v7217 = vpop.permute.xlu0 %7216
        %7218 = vrot.lane.b32.xlu0 %v5373, 48
        %v7219 = vpop.permute.xlu0 %7218
        %v7220 = vsel %vm2861, %v7217, %v7219
        %v7221 = vsel %vm2861, %v7215, %v7217
        %7222 = vrot.lane.b32.xlu0 %v5374, 48
        %v7223 = vpop.permute.xlu0 %7222
        %7224 = vrot.lane.b32.xlu0 %v5375, 48
        %v7225 = vpop.permute.xlu0 %7224
        %7226 = vrot.lane.b32.xlu0 %v5376, 48
        %v7227 = vpop.permute.xlu0 %7226
        %v7228 = vsel %vm2861, %v7225, %v7227
        %v7229 = vsel %vm2861, %v7223, %v7225
        %s7230 = sld [smem:[#allocation12 + $0x5]]
        %v7231 = vstv %s7230
        %v7232 = vmul.f32 %v7231, %v7205
        %v7233 = vmul.f32 %v7231, %v7204
        %v7234 = vadd.f32 %v7124, %v7232
        %v7235 = vadd.f32 %v7125, %v7233
        %s7236 = sld [smem:[#allocation12 + $0xc]]
        %v7237 = vstv %s7236
        %v7238 = vmul.f32 %v7237, %v7213
        %v7239 = vmul.f32 %v7237, %v7212
        %v7240 = vadd.f32 %v7234, %v7238
        %v7241 = vadd.f32 %v7235, %v7239
        %s7242 = sld [smem:[#allocation12 + $0x13]]
        %v7243 = vstv %s7242
        %v7244 = vmul.f32 %v7243, %v7221
        %v7245 = vmul.f32 %v7243, %v7220
        %v7246 = vadd.f32 %v7240, %v7244
        %v7247 = vadd.f32 %v7241, %v7245
        %s7248 = sld [smem:[#allocation12 + $0x1a]]
        %v7249 = vstv %s7248
        %v7250 = vmul.f32 %v7249, %v7229
        %v7251 = vmul.f32 %v7249, %v7228
        %v7252 = vadd.f32 %v7246, %v7250
        %v7253 = vadd.f32 %v7247, %v7251
        %s7254 = sld [smem:[#allocation12 + $0x21]]
        %v7255 = vstv %s7254
        %v7256 = vmul.f32 %v7255, %v7205
        %v7257 = vmul.f32 %v7255, %v7204
        %v7258 = vadd.f32 %v7148, %v7256
        %v7259 = vadd.f32 %v7149, %v7257
        %s7260 = sld [smem:[#allocation12 + $0x28]]
        %v7261 = vstv %s7260
        %v7262 = vmul.f32 %v7261, %v7213
        %v7263 = vmul.f32 %v7261, %v7212
        %v7264 = vadd.f32 %v7258, %v7262
        %v7265 = vadd.f32 %v7259, %v7263
        %s7266 = sld [smem:[#allocation12 + $0x2f]]
        %v7267 = vstv %s7266
        %v7268 = vmul.f32 %v7267, %v7221
        %v7269 = vmul.f32 %v7267, %v7220
        %v7270 = vadd.f32 %v7264, %v7268
        %v7271 = vadd.f32 %v7265, %v7269
        %s7272 = sld [smem:[#allocation12 + $0x36]]
        %v7273 = vstv %s7272
        %v7274 = vmul.f32 %v7273, %v7229
        %v7275 = vmul.f32 %v7273, %v7228
        %v7276 = vadd.f32 %v7270, %v7274
        %v7277 = vadd.f32 %v7271, %v7275
        %s7278 = sld [smem:[#allocation12 + $0x3d]]
        %v7279 = vstv %s7278
        %v7280 = vmul.f32 %v7279, %v7205
        %v7281 = vmul.f32 %v7279, %v7204
        %v7282 = vadd.f32 %v7172, %v7280
        %v7283 = vadd.f32 %v7173, %v7281
        %s7284 = sld [smem:[#allocation12 + $0x44]]
        %v7285 = vstv %s7284
        %v7286 = vmul.f32 %v7285, %v7213
        %v7287 = vmul.f32 %v7285, %v7212
        %v7288 = vadd.f32 %v7282, %v7286
        %v7289 = vadd.f32 %v7283, %v7287
        %s7290 = sld [smem:[#allocation12 + $0x4b]]
        %v7291 = vstv %s7290
        %v7292 = vmul.f32 %v7291, %v7221
        %v7293 = vmul.f32 %v7291, %v7220
        %v7294 = vadd.f32 %v7288, %v7292
        %v7295 = vadd.f32 %v7289, %v7293
        %s7296 = sld [smem:[#allocation12 + $0x52]]
        %v7297 = vstv %s7296
        %v7298 = vmul.f32 %v7297, %v7229
        %v7299 = vmul.f32 %v7297, %v7228
        %v7300 = vadd.f32 %v7294, %v7298
        %v7301 = vadd.f32 %v7295, %v7299
        %s7302 = sld [smem:[#allocation12 + $0x59]]
        %v7303 = vstv %s7302
        %v7304 = vmul.f32 %v7303, %v7205
        %v7305 = vmul.f32 %v7303, %v7204
        %v7306 = vadd.f32 %v7196, %v7304
        %v7307 = vadd.f32 %v7197, %v7305
        %s7308 = sld [smem:[#allocation12 + $0x60]]
        %v7309 = vstv %s7308
        %v7310 = vmul.f32 %v7309, %v7213
        %v7311 = vmul.f32 %v7309, %v7212
        %v7312 = vadd.f32 %v7306, %v7310
        %v7313 = vadd.f32 %v7307, %v7311
        %s7314 = sld [smem:[#allocation12 + $0x67]]
        %v7315 = vstv %s7314
        %v7316 = vmul.f32 %v7315, %v7221
        %v7317 = vmul.f32 %v7315, %v7220
        %v7318 = vadd.f32 %v7312, %v7316
        %v7319 = vadd.f32 %v7313, %v7317
        %s7320 = sld [smem:[#allocation12 + $0x6e]]
        %v7321 = vstv %s7320
        %v7322 = vmul.f32 %v7321, %v7229
        %v7323 = vmul.f32 %v7321, %v7228
        %v7324 = vadd.f32 %v7318, %v7322
        %v7325 = vadd.f32 %v7319, %v7323
        %7326 = vrot.lane.b32.xlu0 %v5365, 32
        %v7327 = vpop.permute.xlu0 %7326
        %7328 = vrot.lane.b32.xlu0 %v5366, 32
        %v7329 = vpop.permute.xlu0 %7328
        %7330 = vrot.lane.b32.xlu0 %v5367, 32
        %v7331 = vpop.permute.xlu0 %7330
        %v7332 = vsel %vm3426, %v7329, %v7331
        %v7333 = vsel %vm3426, %v7327, %v7329
        %7334 = vrot.lane.b32.xlu0 %v5368, 32
        %v7335 = vpop.permute.xlu0 %7334
        %7336 = vrot.lane.b32.xlu0 %v5369, 32
        %v7337 = vpop.permute.xlu0 %7336
        %7338 = vrot.lane.b32.xlu0 %v5370, 32
        %v7339 = vpop.permute.xlu0 %7338
        %v7340 = vsel %vm3426, %v7337, %v7339
        %v7341 = vsel %vm3426, %v7335, %v7337
        %7342 = vrot.lane.b32.xlu0 %v5371, 32
        %v7343 = vpop.permute.xlu0 %7342
        %7344 = vrot.lane.b32.xlu0 %v5372, 32
        %v7345 = vpop.permute.xlu0 %7344
        %7346 = vrot.lane.b32.xlu0 %v5373, 32
        %v7347 = vpop.permute.xlu0 %7346
        %v7348 = vsel %vm3426, %v7345, %v7347
        %v7349 = vsel %vm3426, %v7343, %v7345
        %7350 = vrot.lane.b32.xlu0 %v5374, 32
        %v7351 = vpop.permute.xlu0 %7350
        %7352 = vrot.lane.b32.xlu0 %v5375, 32
        %v7353 = vpop.permute.xlu0 %7352
        %7354 = vrot.lane.b32.xlu0 %v5376, 32
        %v7355 = vpop.permute.xlu0 %7354
        %v7356 = vsel %vm3426, %v7353, %v7355
        %v7357 = vsel %vm3426, %v7351, %v7353
        %s7358 = sld [smem:[#allocation12 + $0x6]]
        %v7359 = vstv %s7358
        %v7360 = vmul.f32 %v7359, %v7333
        %v7361 = vmul.f32 %v7359, %v7332
        %v7362 = vadd.f32 %v7252, %v7360
        %v7363 = vadd.f32 %v7253, %v7361
        %s7364 = sld [smem:[#allocation12 + $0xd]]
        %v7365 = vstv %s7364
        %v7366 = vmul.f32 %v7365, %v7341
        %v7367 = vmul.f32 %v7365, %v7340
        %v7368 = vadd.f32 %v7362, %v7366
        %v7369 = vadd.f32 %v7363, %v7367
        %s7370 = sld [smem:[#allocation12 + $0x14]]
        %v7371 = vstv %s7370
        %v7372 = vmul.f32 %v7371, %v7349
        %v7373 = vmul.f32 %v7371, %v7348
        %v7374 = vadd.f32 %v7368, %v7372
        %v7375 = vadd.f32 %v7369, %v7373
        %s7376 = sld [smem:[#allocation12 + $0x1b]]
        %v7377 = vstv %s7376
        %v7378 = vmul.f32 %v7377, %v7357
        %v7379 = vmul.f32 %v7377, %v7356
        %v7380 = vadd.f32 %v7374, %v7378
        %v7381 = vadd.f32 %v7375, %v7379
        %s7382 = sld [smem:[#allocation12 + $0x22]]
        %v7383 = vstv %s7382
        %v7384 = vmul.f32 %v7383, %v7333
        %v7385 = vmul.f32 %v7383, %v7332
        %v7386 = vadd.f32 %v7276, %v7384
        %v7387 = vadd.f32 %v7277, %v7385
        %s7388 = sld [smem:[#allocation12 + $0x29]]
        %v7389 = vstv %s7388
        %v7390 = vmul.f32 %v7389, %v7341
        %v7391 = vmul.f32 %v7389, %v7340
        %v7392 = vadd.f32 %v7386, %v7390
        %v7393 = vadd.f32 %v7387, %v7391
        %s7394 = sld [smem:[#allocation12 + $0x30]]
        %v7395 = vstv %s7394
        %v7396 = vmul.f32 %v7395, %v7349
        %v7397 = vmul.f32 %v7395, %v7348
        %v7398 = vadd.f32 %v7392, %v7396
        %v7399 = vadd.f32 %v7393, %v7397
        %s7400 = sld [smem:[#allocation12 + $0x37]]
        %v7401 = vstv %s7400
        %v7402 = vmul.f32 %v7401, %v7357
        %v7403 = vmul.f32 %v7401, %v7356
        %v7404 = vadd.f32 %v7398, %v7402
        %v7405 = vadd.f32 %v7399, %v7403
        %s7406 = sld [smem:[#allocation12 + $0x3e]]
        %v7407 = vstv %s7406
        %v7408 = vmul.f32 %v7407, %v7333
        %v7409 = vmul.f32 %v7407, %v7332
        %v7410 = vadd.f32 %v7300, %v7408
        %v7411 = vadd.f32 %v7301, %v7409
        %s7412 = sld [smem:[#allocation12 + $0x45]]
        %v7413 = vstv %s7412
        %v7414 = vmul.f32 %v7413, %v7341
        %v7415 = vmul.f32 %v7413, %v7340
        %v7416 = vadd.f32 %v7410, %v7414
        %v7417 = vadd.f32 %v7411, %v7415
        %s7418 = sld [smem:[#allocation12 + $0x4c]]
        %v7419 = vstv %s7418
        %v7420 = vmul.f32 %v7419, %v7349
        %v7421 = vmul.f32 %v7419, %v7348
        %v7422 = vadd.f32 %v7416, %v7420
        %v7423 = vadd.f32 %v7417, %v7421
        %s7424 = sld [smem:[#allocation12 + $0x53]]
        %v7425 = vstv %s7424
        %v7426 = vmul.f32 %v7425, %v7357
        %v7427 = vmul.f32 %v7425, %v7356
        %v7428 = vadd.f32 %v7422, %v7426
        %v7429 = vadd.f32 %v7423, %v7427
        %s7430 = sld [smem:[#allocation12 + $0x5a]]
        %v7431 = vstv %s7430
        %v7432 = vmul.f32 %v7431, %v7333
        %v7433 = vmul.f32 %v7431, %v7332
        %v7434 = vadd.f32 %v7324, %v7432
        %v7435 = vadd.f32 %v7325, %v7433
        %s7436 = sld [smem:[#allocation12 + $0x61]]
        %v7437 = vstv %s7436
        %v7438 = vmul.f32 %v7437, %v7341
        %v7439 = vmul.f32 %v7437, %v7340
        %v7440 = vadd.f32 %v7434, %v7438
        %v7441 = vadd.f32 %v7435, %v7439
        %s7442 = sld [smem:[#allocation12 + $0x68]]
        %v7443 = vstv %s7442
        %v7444 = vmul.f32 %v7443, %v7349
        %v7445 = vmul.f32 %v7443, %v7348
        %v7446 = vadd.f32 %v7440, %v7444
        %v7447 = vadd.f32 %v7441, %v7445
        %s7448 = sld [smem:[#allocation12 + $0x6f]]
        %v7449 = vstv %s7448
        %v7450 = vmul.f32 %v7449, %v7357
        %v7451 = vmul.f32 %v7449, %v7356
        %v7452 = vadd.f32 %v7446, %v7450
        %v7453 = vadd.f32 %v7447, %v7451
        %s7454 = sld [smem:[#allocation13]]
        %v7455 = vstv %s7454
        %v7456 = vadd.f32 %v7380, %v7455
        %v7457 = vadd.f32 %v7381, %v7455
        %s7458 = sld [smem:[#allocation13 + $0x1]]
        %v7459 = vstv %s7458
        %v7460 = vadd.f32 %v7404, %v7459
        %v7461 = vadd.f32 %v7405, %v7459
        %s7462 = sld [smem:[#allocation13 + $0x2]]
        %v7463 = vstv %s7462
        %v7464 = vadd.f32 %v7428, %v7463
        %v7465 = vadd.f32 %v7429, %v7463
        %s7466 = sld [smem:[#allocation13 + $0x3]]
        %v7467 = vstv %s7466
        %v7468 = vadd.f32 %v7452, %v7467
        %v7469 = vadd.f32 %v7453, %v7467
        %v7470 = vadd.f32 %v6584, %v7456
        %v7471 = vadd.f32 %v6585, %v7457
        %v7474 = vcombine.low %v7470, %v7471
        %v7476 = vunpack.c.l.s4 1966171168
        %v7477 = vunpack.c.0.s8 %v7476
        %v7478 = vlaneseq
        %v7479 = vshrl.u32 %v7478, 7
        %v7480 = vsub.s32 %v7477, %v7479
        %v7481 = vrot.slane %v7474, %v7480
        %v7483 = vunpack.c.l.s4 1966171168
        %v7484 = vunpack.c.0.s8 %v7483
        %v7485 = vlaneseq
        %v7486 = vshrl.u32 %v7485, 7
        %v7487 = vsub.s32 %v7484, %v7486
        %v7488 = vrot.slane %v7481, %v7487
        %v7490 = vlaneseq
        %vm7491 = vcmp.ge.s32.totalorder %v7490, 0
        %vm7492 = vcmp.lt.s32.totalorder %v7490, 256
        %vm7493 = vmand %vm7491, %vm7492
        %7494 = vst.msk [vmem:[%s461] ss:$4 sm:$0x3] %vm7493, %v7488
        %v7495 = vadd.f32 %v6588, %v7460
        %v7496 = vadd.f32 %v6589, %v7461
        %v7499 = vcombine.low %v7495, %v7496
        %v7501 = vunpack.c.l.s4 1966171168
        %v7502 = vunpack.c.0.s8 %v7501
        %v7503 = vlaneseq
        %v7504 = vshrl.u32 %v7503, 7
        %v7505 = vsub.s32 %v7502, %v7504
        %v7506 = vrot.slane %v7499, %v7505
        %v7508 = vunpack.c.l.s4 1966171168
        %v7509 = vunpack.c.0.s8 %v7508
        %v7510 = vlaneseq
        %v7511 = vshrl.u32 %v7510, 7
        %v7512 = vsub.s32 %v7509, %v7511
        %v7513 = vrot.slane %v7506, %v7512
        %s7515 = scalar_lea.vmem %s461, 1
        %7516 = vst.msk [vmem:[%s7515] ss:$4 sm:$0x3] %vm7493, %v7513
        %v7517 = vadd.f32 %v6592, %v7464
        %v7518 = vadd.f32 %v6593, %v7465
        %v7521 = vcombine.low %v7517, %v7518
        %v7523 = vunpack.c.l.s4 1966171168
        %v7524 = vunpack.c.0.s8 %v7523
        %v7525 = vlaneseq
        %v7526 = vshrl.u32 %v7525, 7
        %v7527 = vsub.s32 %v7524, %v7526
        %v7528 = vrot.slane %v7521, %v7527
        %v7530 = vunpack.c.l.s4 1966171168
        %v7531 = vunpack.c.0.s8 %v7530
        %v7532 = vlaneseq
        %v7533 = vshrl.u32 %v7532, 7
        %v7534 = vsub.s32 %v7531, %v7533
        %v7535 = vrot.slane %v7528, %v7534
        %s7537 = scalar_lea.vmem %s461, 2
        %7538 = vst.msk [vmem:[%s7537] ss:$4 sm:$0x3] %vm7493, %v7535
        %v7539 = vadd.f32 %v6596, %v7468
        %v7540 = vadd.f32 %v6597, %v7469
        %v7543 = vcombine.low %v7539, %v7540
        %v7545 = vunpack.c.l.s4 1966171168
        %v7546 = vunpack.c.0.s8 %v7545
        %v7547 = vlaneseq
        %v7548 = vshrl.u32 %v7547, 7
        %v7549 = vsub.s32 %v7546, %v7548
        %v7550 = vrot.slane %v7543, %v7549
        %v7552 = vunpack.c.l.s4 1966171168
        %v7553 = vunpack.c.0.s8 %v7552
        %v7554 = vlaneseq
        %v7555 = vshrl.u32 %v7554, 7
        %v7556 = vsub.s32 %v7553, %v7555
        %v7557 = vrot.slane %v7550, %v7556
        %s7559 = scalar_lea.vmem %s461, 3
        %7560 = vst.msk [vmem:[%s7559] ss:$4 sm:$0x3] %vm7493, %v7557
        %p7561 = scmp.lt.s32.totalorder %s26, 1
        %s7562 = scalar_select %p7561, %s26, 1
        %s7563 = smul.addr %s7562, 2
        %s7564 = smul.addr %s7563, 4
        %s7565 = scalar_lea.vmem %s10, %s7564
        // Predicated region
        $region93: #{gcn_forward.1} parent=59 // pred_check
          %p7566 = pneg %p259
        $region94: #{gcn_forward.1} parent=59 // pred_check_branch
          %7568 = sbr.rel (%p7566) target = $region96
        $region95: #{gcn_forward.1} parent=59 // pred_region
          _
        $region96: #{gcn_forward.1} parent=59 // pred_fallthru
          _
      $region60: #{gcn_forward.1} parent=5 // pred_fallthru
        _
      %p7569 = scmp.le.s32.totalorder 2, %s21
      // Predicated region
      $region97: #{gcn_forward.1} parent=5 // pred_check
        %p7570 = pneg %p7569
      $region98: #{gcn_forward.1} parent=5 // pred_check_branch
        %7572 = sbr.rel (%p7570) target = $region100
      $region99: #{gcn_forward.1} parent=5 // pred_region
        %s7573 = ssub.s32 %s21, 2
        // Predicated region
        $region101: #{gcn_forward.1} parent=99 // pred_check
          %p7574 = pneg %p265
        $region102: #{gcn_forward.1} parent=99 // pred_check_branch
          %7576 = sbr.rel (%p7574) target = $region104
        $region103: #{gcn_forward.1} parent=99 // pred_region
          %p7577 = scmp.lt.s32.totalorder %s27, 1
          %s7578 = scalar_select %p7577, %s27, 1
          %s7579 = smul.addr %s7578, 2
          %s7580 = smul.addr %s7579, 4
          %s7581 = scalar_lea.vmem %s10, %s7580
        $region104: #{gcn_forward.1} parent=99 // pred_fallthru
          _
      $region100: #{gcn_forward.1} parent=5 // pred_fallthru
        _
    $region6: #{gcn_forward.1} parent=1 // loop_footer
      %s25 = sadd.s32 1, %s21
    $region7: #{gcn_forward.1} parent=1 // loop_footer_branch
      %20 = sbr.rel target = $region3
    $region8: #{gcn_forward.1} parent=1 // loop_exit
      _
    %7582 = vsyncpa [#allocation3], 1
    %s7583 = scalar_lea.sflag [#allocation3], 1
    %7584 = vsyncpa %s7583, 1
    %7585 = vsyncpa [#allocation5], 1
    %7586 = vsyncpa [#allocation8], 1
    %7587 = vsyncpa [#allocation11], 1
    %7588 = vsyncpa [#allocation14], 1

</llo_original>
